<compile_context>
chip_gen: v6e
topology: v6e:2x2x1
jax: 0.10.0
libtpu: 0.0.40
codegen_flags: <defaults>
</compile_context>

<pallas_src>
import functools

import jax
import jax.numpy as jnp
from jax.experimental import pallas as pl
from jax.experimental.pallas import tpu as pltpu


def _round_up(n, m):
    return (n + m - 1) // m * m


# ----------------------------------------------------------------------------
# Fused forward kernel (one grid step = one batch tile of `tb` samples)
# ----------------------------------------------------------------------------
def _fused_forward_kernel(x_ref, b1e_ref, b1o_ref, r1_ref,
                          b2e_ref, b2o_ref, r2_ref,
                          wfc1_ref, rfc1_ref, wfc2_ref, rfc2_ref,
                          out_ref, *, tb):
    bf16 = jnp.bfloat16

    def banded_conv_pool(xin_bf, we_ref, wo_ref, bias_row, out_rows, pooled_rows):
        """Conv as 5 accumulating banded MXU matmuls (even/odd output cols) + 2x2 pool.

        xin_bf: (in_rows*tb, K) bf16, rows ordered (spatial_row, sample).
        Width pooling = elementwise max of the even/odd raw accumulators; height
        pooling = max of adjacent spatial-row slices.  Bias + ReLU are applied AFTER
        pooling (exact: relu(x+b) is monotone in x and b is constant inside a pool
        window) and the result is cast to bf16 exactly once.
        Returns (pooled_rows, tb, Lout) bf16.
        """
        acc_e = None
        acc_o = None
        for kh in range(5):                                   # short static loop -> unrolled
            xs = xin_bf[kh * tb:(kh + out_rows) * tb, :]      # already bf16, no cast
            de = jnp.dot(xs, we_ref[kh], preferred_element_type=jnp.float32)
            do = jnp.dot(xs, wo_ref[kh], preferred_element_type=jnp.float32)
            acc_e = de if acc_e is None else acc_e + de
            acc_o = do if acc_o is None else acc_o + do
        pw = jnp.maximum(acc_e, acc_o)                        # width 2x max-pool (raw f32)
        p3 = pw.reshape(pooled_rows, 2 * tb, pw.shape[-1])    # layout-preserving split
        ph = jnp.maximum(p3[:, :tb, :], p3[:, tb:, :])        # height 2x max-pool (raw f32)
        return jnp.maximum(ph + bias_row, 0.0).astype(bf16)   # bias+ReLU once, bf16 once

    # ----- conv1 (1->16, k=5) + ReLU + 2x2 max-pool -------------------------------
    # x block: (28, tb, 28) bf16 = (H, batch, W); flatten rows to (spatial_row, sample).
    xf = x_ref[...].reshape(28 * tb, 28)                                 # (28*tb, 28) bf16
    p1 = banded_conv_pool(xf, b1e_ref, b1o_ref, r1_ref[...], 24, 12)     # (12, tb, 256) bf16

    # ----- conv2 (16->32, k=5) + ReLU + 2x2 max-pool ------------------------------
    p1f = p1.reshape(12 * tb, 256)                                       # lanes = (w, cin) + pad
    p2 = banded_conv_pool(p1f, b2e_ref, b2o_ref, r2_ref[...], 8, 4)      # (4, tb, 128) bf16

    # ----- flatten + fc1 (512->256) + ReLU + fc2 (256->emb_pad) -------------------
    feats = jnp.concatenate([p2[0], p2[1], p2[2], p2[3]], axis=-1)       # (tb, 512) lanes=(h,w,c)
    h = jnp.dot(feats, wfc1_ref[...], preferred_element_type=jnp.float32)
    h = jnp.maximum(h + rfc1_ref[...], 0.0).astype(bf16)                 # (tb, 256) bf16
    o = jnp.dot(h, wfc2_ref[...], preferred_element_type=jnp.float32)
    out_ref[...] = (o + rfc2_ref[...]).astype(out_ref.dtype)             # (tb, 128) lane-dense


# ----------------------------------------------------------------------------
# One-time weight repacking (host/XLA glue, done once outside the hot path)
# ----------------------------------------------------------------------------
def prepare_params(params):
    w1 = params["w1"].astype(jnp.float32)      # (16, 1, 5, 5)
    b1 = params["b1"].astype(jnp.float32)      # (16,)
    w2 = params["w2"].astype(jnp.float32)      # (32, 16, 5, 5)
    b2 = params["b2"].astype(jnp.float32)      # (32,)
    wfc1 = params["wfc1"].astype(jnp.float32)  # (256, 512)
    bfc1 = params["bfc1"].astype(jnp.float32)  # (256,)
    wfc2 = params["wfc2"].astype(jnp.float32)  # (emb, 256)
    bfc2 = params["bfc2"].astype(jnp.float32)  # (emb,)
    emb = wfc2.shape[0]
    out_w = _round_up(emb, 128)                # lane-dense output width

    # conv1 banded weights: contract 28 input-width lanes -> (12 cols x 16 cout) lanes,
    # zero-padded 192 -> 256 so conv1/pool1 tiles are full vregs and conv2's K is 256.
    # Separate matrices for even / odd output columns fuse the width max-pool.
    w1t = jnp.transpose(w1[:, 0], (1, 2, 0))                            # (kh, kw, cout)
    b1e = jnp.zeros((5, 28, 256), jnp.float32)
    b1o = jnp.zeros((5, 28, 256), jnp.float32)
    for jo in range(12):
        b1e = b1e.at[:, 2 * jo:2 * jo + 5, jo * 16:(jo + 1) * 16].set(w1t)
        b1o = b1o.at[:, 2 * jo + 1:2 * jo + 6, jo * 16:(jo + 1) * 16].set(w1t)
    r1 = jnp.pad(jnp.tile(b1, 12), (0, 256 - 192)).reshape(1, 256)

    # conv2 banded weights: contract (12 width x 16 cin)=192 lanes (K padded to 256,
    # rows 192..255 stay zero to match the padded conv1 output) -> (4 cols x 32)=128.
    w2t = jnp.transpose(w2, (2, 3, 1, 0)).reshape(5, 5 * 16, 32)        # (kh, kw*16+cin, cout)
    b2e = jnp.zeros((5, 256, 128), jnp.float32)
    b2o = jnp.zeros((5, 256, 128), jnp.float32)
    for jo in range(4):
        b2e = b2e.at[:, (2 * jo) * 16:(2 * jo + 5) * 16, jo * 32:(jo + 1) * 32].set(w2t)
        b2o = b2o.at[:, (2 * jo + 1) * 16:(2 * jo + 6) * 16, jo * 32:(jo + 1) * 32].set(w2t)
    r2 = jnp.tile(b2, 4).reshape(1, 128)

    # fc1: fold nn.Flatten's NCHW order into a row permutation of the weight.
    # Kernel feature order is h*128 + w*32 + c; torch flatten order is c*16 + h*4 + w.
    wk1 = jnp.transpose(wfc1.reshape(256, 32, 4, 4), (2, 3, 1, 0)).reshape(512, 256)

    # fc2: pre-transpose, pad embedding dim to a multiple of 128 (sliced off in wrapper).
    wk2 = jnp.pad(wfc2.T, ((0, 0), (0, out_w - emb)))

    return {
        "b1e": b1e.astype(jnp.bfloat16), "b1o": b1o.astype(jnp.bfloat16), "r1": r1,
        "b2e": b2e.astype(jnp.bfloat16), "b2o": b2o.astype(jnp.bfloat16), "r2": r2,
        "wk1": wk1.astype(jnp.bfloat16), "rfc1": bfc1.reshape(1, 256),
        "wk2": wk2.astype(jnp.bfloat16),
        "rfc2": jnp.pad(bfc2, (0, out_w - emb)).reshape(1, out_w),
    }


# ----------------------------------------------------------------------------
# Forward pass (mirrors SimpleConvEmbNet.forward) — a single pallas_call
# ----------------------------------------------------------------------------
def _pick_batch_tile(n):
    # Largest tile up to 256 (multiple of 16 for bf16 sublane packing), preferring
    # >= 2 grid steps so v7x's two TensorCores both get work on the "parallel" axis.
    return max(16, min(256, _round_up((n + 1) // 2, 16)))


def simple_conv_emb_net(x_nchw, kp, emb_dim=50):
    n, c, h, w = x_nchw.shape
    assert (c, h, w) == (1, 28, 28), "SimpleConvEmbNet expects 1x28x28 inputs"
    out_w = kp["wk2"].shape[1]

    tb = _pick_batch_tile(n)
    n_pad = _round_up(n, tb)

    # bf16 BEFORE the transpose: the kernel feeds bf16 to the MXU anyway, and this
    # halves both the wrapper transpose's HBM pass and the kernel's input DMA.
    # TODO(synk): accept inputs already laid out as (28, N, 28) bf16 from upstream to
    # drop this HBM transpose pass entirely.
    x = x_nchw.reshape(n, 28, 28).astype(jnp.bfloat16)
    if n_pad != n:
        x = jnp.pad(x, ((0, n_pad - n), (0, 0), (0, 0)))
    xk = jnp.transpose(x, (1, 0, 2))                  # (28, n_pad, 28) = (H, batch, W)

    def wspec(shape):                                 # weights: full block, VMEM-resident
        nd = len(shape)
        return pl.BlockSpec(shape, lambda b, nd=nd: (0,) * nd)

    out = pl.pallas_call(
        functools.partial(_fused_forward_kernel, tb=tb),
        out_shape=jax.ShapeDtypeStruct((n_pad, out_w), jnp.float32),
        grid=(n_pad // tb,),
        in_specs=[
            pl.BlockSpec((28, tb, 28), lambda b: (0, b, 0)),      # input images (bf16)
            wspec(kp["b1e"].shape), wspec(kp["b1o"].shape), wspec(kp["r1"].shape),
            wspec(kp["b2e"].shape), wspec(kp["b2o"].shape), wspec(kp["r2"].shape),
            wspec(kp["wk1"].shape), wspec(kp["rfc1"].shape),
            wspec(kp["wk2"].shape), wspec(kp["rfc2"].shape),
        ],
        out_specs=pl.BlockSpec((tb, out_w), lambda b: (b, 0)),
        compiler_params=pltpu.CompilerParams(
            dimension_semantics=("parallel",),
            # Explicit scoped-VMEM budget: fits tb=256 (~30 MiB peak incl. f32 conv
            # accumulators + double-buffered bf16 input + ~1.2 MiB weights) on every
            # generation — above v5e's 16 MiB default scoped limit and below v7x's
            # 64 MiB/TC physical capacity.
            vmem_limit_bytes=56 * 1024 * 1024),
    )(xk, kp["b1e"], kp["b1o"], kp["r1"], kp["b2e"], kp["b2o"], kp["r2"],
      kp["wk1"], kp["rfc1"], kp["wk2"], kp["rfc2"])

    return out[:n, :emb_dim]


# ----------------------------------------------------------------------------
# Deterministic synthetic parameters (PyTorch default-init-like uniform bounds)
# ----------------------------------------------------------------------------
def init_params(key, emb_dim=50):
    ks = jax.random.split(key, 8)

    def u(k, shape, fan_in):
        bound = 1.0 / jnp.sqrt(jnp.float32(fan_in))
        return jax.random.uniform(k, shape, jnp.float32, -bound, bound)

    return {
        "w1": u(ks[0], (16, 1, 5, 5), 1 * 5 * 5),
        "b1": u(ks[1], (16,), 1 * 5 * 5),
        "w2": u(ks[2], (32, 16, 5, 5), 16 * 5 * 5),
        "b2": u(ks[3], (32,), 16 * 5 * 5),
        "wfc1": u(ks[4], (256, 32 * 4 * 4), 32 * 4 * 4),
        "bfc1": u(ks[5], (256,), 32 * 4 * 4),
        "wfc2": u(ks[6], (emb_dim, 256), 256),
        "bfc2": u(ks[7], (emb_dim,), 256),
    }


if __name__ == "__main__":
    key = jax.random.PRNGKey(0)
    kx, kp_key = jax.random.split(key)
    # Fashion-MNIST geometry is baked into the module (28x28 -> 4x4 before fc).
    x = jax.random.normal(kx, (2, 1, 28, 28), dtype=jnp.float32)
    params = init_params(kp_key, emb_dim=50)
    kparams = prepare_params(params)      # one-time weight repacking

    fwd = jax.jit(functools.partial(simple_conv_emb_net, emb_dim=50))
    out = jax.block_until_ready(fwd(x, kparams))
    assert out.shape == (2, 50), out.shape
    assert out.dtype == jnp.float32
    # NOTE: bf16 MXU inputs with f32 accumulation -> ~1e-2 relative tolerance vs. an
    # f32 PyTorch reference; the bias/ReLU-after-pool and single-cast reorderings are
    # exactly numerics-preserving relative to the previous kernel.
    print("KERNEL_OK")
</pallas_src>

<mosaic_0001>
module attributes {stable_mosaic.version = 11 : i64} {
  func.func @_fused_forward_kernel(%arg0: i32, %arg1: memref<28x16x28xbf16, #tpu.memory_space<vmem>>, %arg2: memref<5x28x256xbf16, #tpu.memory_space<vmem>>, %arg3: memref<5x28x256xbf16, #tpu.memory_space<vmem>>, %arg4: memref<1x256xf32, #tpu.memory_space<vmem>>, %arg5: memref<5x256x128xbf16, #tpu.memory_space<vmem>>, %arg6: memref<5x256x128xbf16, #tpu.memory_space<vmem>>, %arg7: memref<1x128xf32, #tpu.memory_space<vmem>>, %arg8: memref<512x256xbf16, #tpu.memory_space<vmem>>, %arg9: memref<1x256xf32, #tpu.memory_space<vmem>>, %arg10: memref<256x128xbf16, #tpu.memory_space<vmem>>, %arg11: memref<1x128xf32, #tpu.memory_space<vmem>>, %arg12: memref<16x128xf32, #tpu.memory_space<vmem>>) attributes {dimension_semantics = [#tpu.dimension_semantics<parallel>], iteration_bounds = array<i64: 1>, scalar_prefetch = 0 : i64, scratch_operands = 0 : i64, tpu.core_type = #tpu.core_type<tc>, window_params = [{transform_indices = @transform_0, window_bounds = array<i64: 28, 16, 28>}, {pipeline_mode = #tpu.pipeline_mode<synchronous>, transform_indices = @transform_1, window_bounds = array<i64: 5, 28, 256>}, {pipeline_mode = #tpu.pipeline_mode<synchronous>, transform_indices = @transform_2, window_bounds = array<i64: 5, 28, 256>}, {pipeline_mode = #tpu.pipeline_mode<synchronous>, transform_indices = @transform_3, window_bounds = array<i64: 1, 256>}, {pipeline_mode = #tpu.pipeline_mode<synchronous>, transform_indices = @transform_4, window_bounds = array<i64: 5, 256, 128>}, {pipeline_mode = #tpu.pipeline_mode<synchronous>, transform_indices = @transform_5, window_bounds = array<i64: 5, 256, 128>}, {pipeline_mode = #tpu.pipeline_mode<synchronous>, transform_indices = @transform_6, window_bounds = array<i64: 1, 128>}, {pipeline_mode = #tpu.pipeline_mode<synchronous>, transform_indices = @transform_7, window_bounds = array<i64: 512, 256>}, {pipeline_mode = #tpu.pipeline_mode<synchronous>, transform_indices = @transform_8, window_bounds = array<i64: 1, 256>}, {pipeline_mode = #tpu.pipeline_mode<synchronous>, transform_indices = @transform_9, window_bounds = array<i64: 256, 128>}, {pipeline_mode = #tpu.pipeline_mode<synchronous>, transform_indices = @transform_10, window_bounds = array<i64: 1, 128>}, {transform_indices = @transform_11, window_bounds = array<i64: 16, 128>}]} {
    %c0 = arith.constant 0 : index
    %c0_0 = arith.constant 0 : index
    %c0_1 = arith.constant 0 : index
    %0 = vector.load %arg1[%c0, %c0_0, %c0_1] : memref<28x16x28xbf16, #tpu.memory_space<vmem>>, vector<28x16x28xbf16>
    %1 = vector.shape_cast %0 : vector<28x16x28xbf16> to vector<448x28xbf16>
    %c0_2 = arith.constant 0 : index
    %c0_3 = arith.constant 0 : index
    %2 = vector.load %arg4[%c0_2, %c0_3] : memref<1x256xf32, #tpu.memory_space<vmem>>, vector<1x256xf32>
    %3 = vector.extract_strided_slice %1 {offsets = [0, 0], sizes = [384, 28], strides = [1, 1]} : vector<448x28xbf16> to vector<384x28xbf16>
    %c0_4 = arith.constant 0 : index
    %c0_5 = arith.constant 0 : index
    %c0_6 = arith.constant 0 : index
    %4 = vector.load %arg2[%c0_4, %c0_5, %c0_6] : memref<5x28x256xbf16, #tpu.memory_space<vmem>>, vector<1x28x256xbf16>
    %5 = vector.shape_cast %4 : vector<1x28x256xbf16> to vector<28x256xbf16>
    %cst = arith.constant dense<0.000000e+00> : vector<384x256xf32>
    %6 = tpu.matmul %3, %5, %cst {dimension_numbers = #tpu.dot_dimension_numbers<[1], [0], [0], [1], [0, 0, 1, 1], [], []>} : vector<384x28xbf16>, vector<28x256xbf16>, vector<384x256xf32> -> vector<384x256xf32>
    %c0_7 = arith.constant 0 : index
    %c0_8 = arith.constant 0 : index
    %c0_9 = arith.constant 0 : index
    %7 = vector.load %arg3[%c0_7, %c0_8, %c0_9] : memref<5x28x256xbf16, #tpu.memory_space<vmem>>, vector<1x28x256xbf16>
    %8 = vector.shape_cast %7 : vector<1x28x256xbf16> to vector<28x256xbf16>
    %cst_10 = arith.constant dense<0.000000e+00> : vector<384x256xf32>
    %9 = tpu.matmul %3, %8, %cst_10 {dimension_numbers = #tpu.dot_dimension_numbers<[1], [0], [0], [1], [0, 0, 1, 1], [], []>} : vector<384x28xbf16>, vector<28x256xbf16>, vector<384x256xf32> -> vector<384x256xf32>
    %10 = vector.extract_strided_slice %1 {offsets = [16, 0], sizes = [384, 28], strides = [1, 1]} : vector<448x28xbf16> to vector<384x28xbf16>
    %c1 = arith.constant 1 : index
    %c0_11 = arith.constant 0 : index
    %c0_12 = arith.constant 0 : index
    %11 = vector.load %arg2[%c1, %c0_11, %c0_12] : memref<5x28x256xbf16, #tpu.memory_space<vmem>>, vector<1x28x256xbf16>
    %12 = vector.shape_cast %11 : vector<1x28x256xbf16> to vector<28x256xbf16>
    %cst_13 = arith.constant dense<0.000000e+00> : vector<384x256xf32>
    %13 = tpu.matmul %10, %12, %cst_13 {dimension_numbers = #tpu.dot_dimension_numbers<[1], [0], [0], [1], [0, 0, 1, 1], [], []>} : vector<384x28xbf16>, vector<28x256xbf16>, vector<384x256xf32> -> vector<384x256xf32>
    %c1_14 = arith.constant 1 : index
    %c0_15 = arith.constant 0 : index
    %c0_16 = arith.constant 0 : index
    %14 = vector.load %arg3[%c1_14, %c0_15, %c0_16] : memref<5x28x256xbf16, #tpu.memory_space<vmem>>, vector<1x28x256xbf16>
    %15 = vector.shape_cast %14 : vector<1x28x256xbf16> to vector<28x256xbf16>
    %cst_17 = arith.constant dense<0.000000e+00> : vector<384x256xf32>
    %16 = tpu.matmul %10, %15, %cst_17 {dimension_numbers = #tpu.dot_dimension_numbers<[1], [0], [0], [1], [0, 0, 1, 1], [], []>} : vector<384x28xbf16>, vector<28x256xbf16>, vector<384x256xf32> -> vector<384x256xf32>
    %17 = arith.addf %6, %13 : vector<384x256xf32>
    %18 = arith.addf %9, %16 : vector<384x256xf32>
    %19 = vector.extract_strided_slice %1 {offsets = [32, 0], sizes = [384, 28], strides = [1, 1]} : vector<448x28xbf16> to vector<384x28xbf16>
    %c2 = arith.constant 2 : index
    %c0_18 = arith.constant 0 : index
    %c0_19 = arith.constant 0 : index
    %20 = vector.load %arg2[%c2, %c0_18, %c0_19] : memref<5x28x256xbf16, #tpu.memory_space<vmem>>, vector<1x28x256xbf16>
    %21 = vector.shape_cast %20 : vector<1x28x256xbf16> to vector<28x256xbf16>
    %cst_20 = arith.constant dense<0.000000e+00> : vector<384x256xf32>
    %22 = tpu.matmul %19, %21, %cst_20 {dimension_numbers = #tpu.dot_dimension_numbers<[1], [0], [0], [1], [0, 0, 1, 1], [], []>} : vector<384x28xbf16>, vector<28x256xbf16>, vector<384x256xf32> -> vector<384x256xf32>
    %c2_21 = arith.constant 2 : index
    %c0_22 = arith.constant 0 : index
    %c0_23 = arith.constant 0 : index
    %23 = vector.load %arg3[%c2_21, %c0_22, %c0_23] : memref<5x28x256xbf16, #tpu.memory_space<vmem>>, vector<1x28x256xbf16>
    %24 = vector.shape_cast %23 : vector<1x28x256xbf16> to vector<28x256xbf16>
    %cst_24 = arith.constant dense<0.000000e+00> : vector<384x256xf32>
    %25 = tpu.matmul %19, %24, %cst_24 {dimension_numbers = #tpu.dot_dimension_numbers<[1], [0], [0], [1], [0, 0, 1, 1], [], []>} : vector<384x28xbf16>, vector<28x256xbf16>, vector<384x256xf32> -> vector<384x256xf32>
    %26 = arith.addf %17, %22 : vector<384x256xf32>
    %27 = arith.addf %18, %25 : vector<384x256xf32>
    %28 = vector.extract_strided_slice %1 {offsets = [48, 0], sizes = [384, 28], strides = [1, 1]} : vector<448x28xbf16> to vector<384x28xbf16>
    %c3 = arith.constant 3 : index
    %c0_25 = arith.constant 0 : index
    %c0_26 = arith.constant 0 : index
    %29 = vector.load %arg2[%c3, %c0_25, %c0_26] : memref<5x28x256xbf16, #tpu.memory_space<vmem>>, vector<1x28x256xbf16>
    %30 = vector.shape_cast %29 : vector<1x28x256xbf16> to vector<28x256xbf16>
    %cst_27 = arith.constant dense<0.000000e+00> : vector<384x256xf32>
    %31 = tpu.matmul %28, %30, %cst_27 {dimension_numbers = #tpu.dot_dimension_numbers<[1], [0], [0], [1], [0, 0, 1, 1], [], []>} : vector<384x28xbf16>, vector<28x256xbf16>, vector<384x256xf32> -> vector<384x256xf32>
    %c3_28 = arith.constant 3 : index
    %c0_29 = arith.constant 0 : index
    %c0_30 = arith.constant 0 : index
    %32 = vector.load %arg3[%c3_28, %c0_29, %c0_30] : memref<5x28x256xbf16, #tpu.memory_space<vmem>>, vector<1x28x256xbf16>
    %33 = vector.shape_cast %32 : vector<1x28x256xbf16> to vector<28x256xbf16>
    %cst_31 = arith.constant dense<0.000000e+00> : vector<384x256xf32>
    %34 = tpu.matmul %28, %33, %cst_31 {dimension_numbers = #tpu.dot_dimension_numbers<[1], [0], [0], [1], [0, 0, 1, 1], [], []>} : vector<384x28xbf16>, vector<28x256xbf16>, vector<384x256xf32> -> vector<384x256xf32>
    %35 = arith.addf %26, %31 : vector<384x256xf32>
    %36 = arith.addf %27, %34 : vector<384x256xf32>
    %37 = vector.extract_strided_slice %1 {offsets = [64, 0], sizes = [384, 28], strides = [1, 1]} : vector<448x28xbf16> to vector<384x28xbf16>
    %c4 = arith.constant 4 : index
    %c0_32 = arith.constant 0 : index
    %c0_33 = arith.constant 0 : index
    %38 = vector.load %arg2[%c4, %c0_32, %c0_33] : memref<5x28x256xbf16, #tpu.memory_space<vmem>>, vector<1x28x256xbf16>
    %39 = vector.shape_cast %38 : vector<1x28x256xbf16> to vector<28x256xbf16>
    %cst_34 = arith.constant dense<0.000000e+00> : vector<384x256xf32>
    %40 = tpu.matmul %37, %39, %cst_34 {dimension_numbers = #tpu.dot_dimension_numbers<[1], [0], [0], [1], [0, 0, 1, 1], [], []>} : vector<384x28xbf16>, vector<28x256xbf16>, vector<384x256xf32> -> vector<384x256xf32>
    %c4_35 = arith.constant 4 : index
    %c0_36 = arith.constant 0 : index
    %c0_37 = arith.constant 0 : index
    %41 = vector.load %arg3[%c4_35, %c0_36, %c0_37] : memref<5x28x256xbf16, #tpu.memory_space<vmem>>, vector<1x28x256xbf16>
    %42 = vector.shape_cast %41 : vector<1x28x256xbf16> to vector<28x256xbf16>
    %cst_38 = arith.constant dense<0.000000e+00> : vector<384x256xf32>
    %43 = tpu.matmul %37, %42, %cst_38 {dimension_numbers = #tpu.dot_dimension_numbers<[1], [0], [0], [1], [0, 0, 1, 1], [], []>} : vector<384x28xbf16>, vector<28x256xbf16>, vector<384x256xf32> -> vector<384x256xf32>
    %44 = arith.addf %35, %40 : vector<384x256xf32>
    %45 = arith.addf %36, %43 : vector<384x256xf32>
    %46 = arith.maximumf %44, %45 : vector<384x256xf32>
    %47 = vector.shape_cast %46 : vector<384x256xf32> to vector<12x32x256xf32>
    %48 = vector.extract_strided_slice %47 {offsets = [0, 0, 0], sizes = [12, 16, 256], strides = [1, 1, 1]} : vector<12x32x256xf32> to vector<12x16x256xf32>
    %49 = vector.extract_strided_slice %47 {offsets = [0, 16, 0], sizes = [12, 16, 256], strides = [1, 1, 1]} : vector<12x32x256xf32> to vector<12x16x256xf32>
    %50 = arith.maximumf %48, %49 : vector<12x16x256xf32>
    %51 = vector.shape_cast %2 : vector<1x256xf32> to vector<1x1x256xf32>
    %52 = vector.broadcast %51 : vector<1x1x256xf32> to vector<12x16x256xf32>
    %53 = arith.addf %50, %52 : vector<12x16x256xf32>
    %cst_39 = arith.constant 0.000000e+00 : f32
    %54 = vector.broadcast %cst_39 : f32 to vector<12x16x256xf32>
    %55 = arith.maximumf %53, %54 : vector<12x16x256xf32>
    %56 = arith.truncf %55 : vector<12x16x256xf32> to vector<12x16x256xbf16>
    %57 = vector.shape_cast %56 : vector<12x16x256xbf16> to vector<192x256xbf16>
    %c0_40 = arith.constant 0 : index
    %c0_41 = arith.constant 0 : index
    %58 = vector.load %arg7[%c0_40, %c0_41] : memref<1x128xf32, #tpu.memory_space<vmem>>, vector<1x128xf32>
    %59 = vector.extract_strided_slice %57 {offsets = [0, 0], sizes = [128, 256], strides = [1, 1]} : vector<192x256xbf16> to vector<128x256xbf16>
    %c0_42 = arith.constant 0 : index
    %c0_43 = arith.constant 0 : index
    %c0_44 = arith.constant 0 : index
    %60 = vector.load %arg5[%c0_42, %c0_43, %c0_44] : memref<5x256x128xbf16, #tpu.memory_space<vmem>>, vector<1x256x128xbf16>
    %61 = vector.shape_cast %60 : vector<1x256x128xbf16> to vector<256x128xbf16>
    %cst_45 = arith.constant dense<0.000000e+00> : vector<128x128xf32>
    %62 = tpu.matmul %59, %61, %cst_45 {dimension_numbers = #tpu.dot_dimension_numbers<[1], [0], [0], [1], [0, 0, 1, 1], [], []>} : vector<128x256xbf16>, vector<256x128xbf16>, vector<128x128xf32> -> vector<128x128xf32>
    %c0_46 = arith.constant 0 : index
    %c0_47 = arith.constant 0 : index
    %c0_48 = arith.constant 0 : index
    %63 = vector.load %arg6[%c0_46, %c0_47, %c0_48] : memref<5x256x128xbf16, #tpu.memory_space<vmem>>, vector<1x256x128xbf16>
    %64 = vector.shape_cast %63 : vector<1x256x128xbf16> to vector<256x128xbf16>
    %cst_49 = arith.constant dense<0.000000e+00> : vector<128x128xf32>
    %65 = tpu.matmul %59, %64, %cst_49 {dimension_numbers = #tpu.dot_dimension_numbers<[1], [0], [0], [1], [0, 0, 1, 1], [], []>} : vector<128x256xbf16>, vector<256x128xbf16>, vector<128x128xf32> -> vector<128x128xf32>
    %66 = vector.extract_strided_slice %57 {offsets = [16, 0], sizes = [128, 256], strides = [1, 1]} : vector<192x256xbf16> to vector<128x256xbf16>
    %c1_50 = arith.constant 1 : index
    %c0_51 = arith.constant 0 : index
    %c0_52 = arith.constant 0 : index
    %67 = vector.load %arg5[%c1_50, %c0_51, %c0_52] : memref<5x256x128xbf16, #tpu.memory_space<vmem>>, vector<1x256x128xbf16>
    %68 = vector.shape_cast %67 : vector<1x256x128xbf16> to vector<256x128xbf16>
    %cst_53 = arith.constant dense<0.000000e+00> : vector<128x128xf32>
    %69 = tpu.matmul %66, %68, %cst_53 {dimension_numbers = #tpu.dot_dimension_numbers<[1], [0], [0], [1], [0, 0, 1, 1], [], []>} : vector<128x256xbf16>, vector<256x128xbf16>, vector<128x128xf32> -> vector<128x128xf32>
    %c1_54 = arith.constant 1 : index
    %c0_55 = arith.constant 0 : index
    %c0_56 = arith.constant 0 : index
    %70 = vector.load %arg6[%c1_54, %c0_55, %c0_56] : memref<5x256x128xbf16, #tpu.memory_space<vmem>>, vector<1x256x128xbf16>
    %71 = vector.shape_cast %70 : vector<1x256x128xbf16> to vector<256x128xbf16>
    %cst_57 = arith.constant dense<0.000000e+00> : vector<128x128xf32>
    %72 = tpu.matmul %66, %71, %cst_57 {dimension_numbers = #tpu.dot_dimension_numbers<[1], [0], [0], [1], [0, 0, 1, 1], [], []>} : vector<128x256xbf16>, vector<256x128xbf16>, vector<128x128xf32> -> vector<128x128xf32>
    %73 = arith.addf %62, %69 : vector<128x128xf32>
    %74 = arith.addf %65, %72 : vector<128x128xf32>
    %75 = vector.extract_strided_slice %57 {offsets = [32, 0], sizes = [128, 256], strides = [1, 1]} : vector<192x256xbf16> to vector<128x256xbf16>
    %c2_58 = arith.constant 2 : index
    %c0_59 = arith.constant 0 : index
    %c0_60 = arith.constant 0 : index
    %76 = vector.load %arg5[%c2_58, %c0_59, %c0_60] : memref<5x256x128xbf16, #tpu.memory_space<vmem>>, vector<1x256x128xbf16>
    %77 = vector.shape_cast %76 : vector<1x256x128xbf16> to vector<256x128xbf16>
    %cst_61 = arith.constant dense<0.000000e+00> : vector<128x128xf32>
    %78 = tpu.matmul %75, %77, %cst_61 {dimension_numbers = #tpu.dot_dimension_numbers<[1], [0], [0], [1], [0, 0, 1, 1], [], []>} : vector<128x256xbf16>, vector<256x128xbf16>, vector<128x128xf32> -> vector<128x128xf32>
    %c2_62 = arith.constant 2 : index
    %c0_63 = arith.constant 0 : index
    %c0_64 = arith.constant 0 : index
    %79 = vector.load %arg6[%c2_62, %c0_63, %c0_64] : memref<5x256x128xbf16, #tpu.memory_space<vmem>>, vector<1x256x128xbf16>
    %80 = vector.shape_cast %79 : vector<1x256x128xbf16> to vector<256x128xbf16>
    %cst_65 = arith.constant dense<0.000000e+00> : vector<128x128xf32>
    %81 = tpu.matmul %75, %80, %cst_65 {dimension_numbers = #tpu.dot_dimension_numbers<[1], [0], [0], [1], [0, 0, 1, 1], [], []>} : vector<128x256xbf16>, vector<256x128xbf16>, vector<128x128xf32> -> vector<128x128xf32>
    %82 = arith.addf %73, %78 : vector<128x128xf32>
    %83 = arith.addf %74, %81 : vector<128x128xf32>
    %84 = vector.extract_strided_slice %57 {offsets = [48, 0], sizes = [128, 256], strides = [1, 1]} : vector<192x256xbf16> to vector<128x256xbf16>
    %c3_66 = arith.constant 3 : index
    %c0_67 = arith.constant 0 : index
    %c0_68 = arith.constant 0 : index
    %85 = vector.load %arg5[%c3_66, %c0_67, %c0_68] : memref<5x256x128xbf16, #tpu.memory_space<vmem>>, vector<1x256x128xbf16>
    %86 = vector.shape_cast %85 : vector<1x256x128xbf16> to vector<256x128xbf16>
    %cst_69 = arith.constant dense<0.000000e+00> : vector<128x128xf32>
    %87 = tpu.matmul %84, %86, %cst_69 {dimension_numbers = #tpu.dot_dimension_numbers<[1], [0], [0], [1], [0, 0, 1, 1], [], []>} : vector<128x256xbf16>, vector<256x128xbf16>, vector<128x128xf32> -> vector<128x128xf32>
    %c3_70 = arith.constant 3 : index
    %c0_71 = arith.constant 0 : index
    %c0_72 = arith.constant 0 : index
    %88 = vector.load %arg6[%c3_70, %c0_71, %c0_72] : memref<5x256x128xbf16, #tpu.memory_space<vmem>>, vector<1x256x128xbf16>
    %89 = vector.shape_cast %88 : vector<1x256x128xbf16> to vector<256x128xbf16>
    %cst_73 = arith.constant dense<0.000000e+00> : vector<128x128xf32>
    %90 = tpu.matmul %84, %89, %cst_73 {dimension_numbers = #tpu.dot_dimension_numbers<[1], [0], [0], [1], [0, 0, 1, 1], [], []>} : vector<128x256xbf16>, vector<256x128xbf16>, vector<128x128xf32> -> vector<128x128xf32>
    %91 = arith.addf %82, %87 : vector<128x128xf32>
    %92 = arith.addf %83, %90 : vector<128x128xf32>
    %93 = vector.extract_strided_slice %57 {offsets = [64, 0], sizes = [128, 256], strides = [1, 1]} : vector<192x256xbf16> to vector<128x256xbf16>
    %c4_74 = arith.constant 4 : index
    %c0_75 = arith.constant 0 : index
    %c0_76 = arith.constant 0 : index
    %94 = vector.load %arg5[%c4_74, %c0_75, %c0_76] : memref<5x256x128xbf16, #tpu.memory_space<vmem>>, vector<1x256x128xbf16>
    %95 = vector.shape_cast %94 : vector<1x256x128xbf16> to vector<256x128xbf16>
    %cst_77 = arith.constant dense<0.000000e+00> : vector<128x128xf32>
    %96 = tpu.matmul %93, %95, %cst_77 {dimension_numbers = #tpu.dot_dimension_numbers<[1], [0], [0], [1], [0, 0, 1, 1], [], []>} : vector<128x256xbf16>, vector<256x128xbf16>, vector<128x128xf32> -> vector<128x128xf32>
    %c4_78 = arith.constant 4 : index
    %c0_79 = arith.constant 0 : index
    %c0_80 = arith.constant 0 : index
    %97 = vector.load %arg6[%c4_78, %c0_79, %c0_80] : memref<5x256x128xbf16, #tpu.memory_space<vmem>>, vector<1x256x128xbf16>
    %98 = vector.shape_cast %97 : vector<1x256x128xbf16> to vector<256x128xbf16>
    %cst_81 = arith.constant dense<0.000000e+00> : vector<128x128xf32>
    %99 = tpu.matmul %93, %98, %cst_81 {dimension_numbers = #tpu.dot_dimension_numbers<[1], [0], [0], [1], [0, 0, 1, 1], [], []>} : vector<128x256xbf16>, vector<256x128xbf16>, vector<128x128xf32> -> vector<128x128xf32>
    %100 = arith.addf %91, %96 : vector<128x128xf32>
    %101 = arith.addf %92, %99 : vector<128x128xf32>
    %102 = arith.maximumf %100, %101 : vector<128x128xf32>
    %103 = vector.shape_cast %102 : vector<128x128xf32> to vector<4x32x128xf32>
    %104 = vector.extract_strided_slice %103 {offsets = [0, 0, 0], sizes = [4, 16, 128], strides = [1, 1, 1]} : vector<4x32x128xf32> to vector<4x16x128xf32>
    %105 = vector.extract_strided_slice %103 {offsets = [0, 16, 0], sizes = [4, 16, 128], strides = [1, 1, 1]} : vector<4x32x128xf32> to vector<4x16x128xf32>
    %106 = arith.maximumf %104, %105 : vector<4x16x128xf32>
    %107 = vector.shape_cast %58 : vector<1x128xf32> to vector<1x1x128xf32>
    %108 = vector.broadcast %107 : vector<1x1x128xf32> to vector<4x16x128xf32>
    %109 = arith.addf %106, %108 : vector<4x16x128xf32>
    %cst_82 = arith.constant 0.000000e+00 : f32
    %110 = vector.broadcast %cst_82 : f32 to vector<4x16x128xf32>
    %111 = arith.maximumf %109, %110 : vector<4x16x128xf32>
    %112 = arith.truncf %111 : vector<4x16x128xf32> to vector<4x16x128xbf16>
    %113 = vector.extract_strided_slice %112 {offsets = [0, 0, 0], sizes = [1, 16, 128], strides = [1, 1, 1]} : vector<4x16x128xbf16> to vector<1x16x128xbf16>
    %114 = vector.shape_cast %113 : vector<1x16x128xbf16> to vector<16x128xbf16>
    %115 = vector.extract_strided_slice %112 {offsets = [1, 0, 0], sizes = [1, 16, 128], strides = [1, 1, 1]} : vector<4x16x128xbf16> to vector<1x16x128xbf16>
    %116 = vector.shape_cast %115 : vector<1x16x128xbf16> to vector<16x128xbf16>
    %117 = vector.extract_strided_slice %112 {offsets = [2, 0, 0], sizes = [1, 16, 128], strides = [1, 1, 1]} : vector<4x16x128xbf16> to vector<1x16x128xbf16>
    %118 = vector.shape_cast %117 : vector<1x16x128xbf16> to vector<16x128xbf16>
    %119 = vector.extract_strided_slice %112 {offsets = [3, 0, 0], sizes = [1, 16, 128], strides = [1, 1, 1]} : vector<4x16x128xbf16> to vector<1x16x128xbf16>
    %120 = vector.shape_cast %119 : vector<1x16x128xbf16> to vector<16x128xbf16>
    %121 = tpu.concatenate %114, %116, %118, %120 in 1 : vector<16x128xbf16>, vector<16x128xbf16>, vector<16x128xbf16>, vector<16x128xbf16> -> vector<16x512xbf16>
    %c0_83 = arith.constant 0 : index
    %c0_84 = arith.constant 0 : index
    %122 = vector.load %arg8[%c0_83, %c0_84] : memref<512x256xbf16, #tpu.memory_space<vmem>>, vector<512x256xbf16>
    %cst_85 = arith.constant dense<0.000000e+00> : vector<16x256xf32>
    %123 = tpu.matmul %121, %122, %cst_85 {dimension_numbers = #tpu.dot_dimension_numbers<[1], [0], [0], [1], [0, 0, 1, 1], [], []>} : vector<16x512xbf16>, vector<512x256xbf16>, vector<16x256xf32> -> vector<16x256xf32>
    %c0_86 = arith.constant 0 : index
    %c0_87 = arith.constant 0 : index
    %124 = vector.load %arg9[%c0_86, %c0_87] : memref<1x256xf32, #tpu.memory_space<vmem>>, vector<1x256xf32>
    %125 = vector.broadcast %124 : vector<1x256xf32> to vector<16x256xf32>
    %126 = arith.addf %123, %125 : vector<16x256xf32>
    %cst_88 = arith.constant 0.000000e+00 : f32
    %127 = vector.broadcast %cst_88 : f32 to vector<16x256xf32>
    %128 = arith.maximumf %126, %127 : vector<16x256xf32>
    %129 = arith.truncf %128 : vector<16x256xf32> to vector<16x256xbf16>
    %c0_89 = arith.constant 0 : index
    %c0_90 = arith.constant 0 : index
    %130 = vector.load %arg10[%c0_89, %c0_90] : memref<256x128xbf16, #tpu.memory_space<vmem>>, vector<256x128xbf16>
    %cst_91 = arith.constant dense<0.000000e+00> : vector<16x128xf32>
    %131 = tpu.matmul %129, %130, %cst_91 {dimension_numbers = #tpu.dot_dimension_numbers<[1], [0], [0], [1], [0, 0, 1, 1], [], []>} : vector<16x256xbf16>, vector<256x128xbf16>, vector<16x128xf32> -> vector<16x128xf32>
    %c0_92 = arith.constant 0 : index
    %c0_93 = arith.constant 0 : index
    %132 = vector.load %arg11[%c0_92, %c0_93] : memref<1x128xf32, #tpu.memory_space<vmem>>, vector<1x128xf32>
    %133 = vector.broadcast %132 : vector<1x128xf32> to vector<16x128xf32>
    %134 = arith.addf %131, %133 : vector<16x128xf32>
    %c0_94 = arith.constant 0 : index
    %c0_95 = arith.constant 0 : index
    %135 = vector.load %arg12[%c0_94, %c0_95] : memref<16x128xf32, #tpu.memory_space<vmem>>, vector<16x128xf32>
    tpu.vector_store %arg12[%c0_94, %c0_95], %134 {strides = array<i32>} : memref<16x128xf32, #tpu.memory_space<vmem>>, vector<16x128xf32>,
    return
  }
  func.func @transform_0(%arg0: i32) -> (i32, i32, i32) {
    %c0_i32 = arith.constant 0 : i32
    %c0_i32_0 = arith.constant 0 : i32
    %c0_i32_1 = arith.constant 0 : i32
    return %c0_i32, %arg0, %c0_i32_0 : i32, i32, i32
  }
  func.func @transform_1(%arg0: i32) -> (i32, i32, i32) {
    %c0_i32 = arith.constant 0 : i32
    %c0_i32_0 = arith.constant 0 : i32
    %c0_i32_1 = arith.constant 0 : i32
    %c0_i32_2 = arith.constant 0 : i32
    return %c0_i32, %c0_i32_0, %c0_i32_1 : i32, i32, i32
  }
  func.func @transform_2(%arg0: i32) -> (i32, i32, i32) {
    %c0_i32 = arith.constant 0 : i32
    %c0_i32_0 = arith.constant 0 : i32
    %c0_i32_1 = arith.constant 0 : i32
    %c0_i32_2 = arith.constant 0 : i32
    return %c0_i32, %c0_i32_0, %c0_i32_1 : i32, i32, i32
  }
  func.func @transform_3(%arg0: i32) -> (i32, i32) {
    %c0_i32 = arith.constant 0 : i32
    %c0_i32_0 = arith.constant 0 : i32
    %c0_i32_1 = arith.constant 0 : i32
    return %c0_i32, %c0_i32_0 : i32, i32
  }
  func.func @transform_4(%arg0: i32) -> (i32, i32, i32) {
    %c0_i32 = arith.constant 0 : i32
    %c0_i32_0 = arith.constant 0 : i32
    %c0_i32_1 = arith.constant 0 : i32
    %c0_i32_2 = arith.constant 0 : i32
    return %c0_i32, %c0_i32_0, %c0_i32_1 : i32, i32, i32
  }
  func.func @transform_5(%arg0: i32) -> (i32, i32, i32) {
    %c0_i32 = arith.constant 0 : i32
    %c0_i32_0 = arith.constant 0 : i32
    %c0_i32_1 = arith.constant 0 : i32
    %c0_i32_2 = arith.constant 0 : i32
    return %c0_i32, %c0_i32_0, %c0_i32_1 : i32, i32, i32
  }
  func.func @transform_6(%arg0: i32) -> (i32, i32) {
    %c0_i32 = arith.constant 0 : i32
    %c0_i32_0 = arith.constant 0 : i32
    %c0_i32_1 = arith.constant 0 : i32
    return %c0_i32, %c0_i32_0 : i32, i32
  }
  func.func @transform_7(%arg0: i32) -> (i32, i32) {
    %c0_i32 = arith.constant 0 : i32
    %c0_i32_0 = arith.constant 0 : i32
    %c0_i32_1 = arith.constant 0 : i32
    return %c0_i32, %c0_i32_0 : i32, i32
  }
  func.func @transform_8(%arg0: i32) -> (i32, i32) {
    %c0_i32 = arith.constant 0 : i32
    %c0_i32_0 = arith.constant 0 : i32
    %c0_i32_1 = arith.constant 0 : i32
    return %c0_i32, %c0_i32_0 : i32, i32
  }
  func.func @transform_9(%arg0: i32) -> (i32, i32) {
    %c0_i32 = arith.constant 0 : i32
    %c0_i32_0 = arith.constant 0 : i32
    %c0_i32_1 = arith.constant 0 : i32
    return %c0_i32, %c0_i32_0 : i32, i32
  }
  func.func @transform_10(%arg0: i32) -> (i32, i32) {
    %c0_i32 = arith.constant 0 : i32
    %c0_i32_0 = arith.constant 0 : i32
    %c0_i32_1 = arith.constant 0 : i32
    return %c0_i32, %c0_i32_0 : i32, i32
  }
  func.func @transform_11(%arg0: i32) -> (i32, i32) {
    %c0_i32 = arith.constant 0 : i32
    %c0_i32_0 = arith.constant 0 : i32
    return %arg0, %c0_i32 : i32, i32
  }
}

</mosaic_0001>

<llo_original>
// kernel: simple_conv_emb_net.1
$region0: #{simple_conv_emb_net.1}
  #allocation0 [shape = 'u32[]', space=smem, size = 0x4, offset = 0x4, fixed_abs, tag = 'smem constant byte address 0x4 - core index']
  #allocation1 [shape = 'u32[144,128]{1,0:T(1,128)}', space=vmem, size = 0x12000, scoped, tag = 'internal scratch']
  %s0 = inlined_call_operand.vmem [shape: bf16[28,16,28], index: 0, kind: input, shape index: {}]
  %s1 = inlined_call_operand.vmem [shape: bf16[5,28,256], index: 1, kind: input, shape index: {}]
  %s2 = inlined_call_operand.vmem [shape: bf16[5,28,256], index: 2, kind: input, shape index: {}]
  %s3 = inlined_call_operand.vmem [shape: f32[1,256], index: 3, kind: input, shape index: {}]
  %s4 = inlined_call_operand.hbm [shape: bf16[5,256,128], index: 4, kind: input, shape index: {}]
  %s5 = inlined_call_operand.hbm [shape: bf16[5,256,128], index: 5, kind: input, shape index: {}]
  %s6 = inlined_call_operand.vmem [shape: f32[1,128], index: 6, kind: input, shape index: {}]
  %s7 = inlined_call_operand.hbm [shape: bf16[512,256], index: 7, kind: input, shape index: {}]
  %s8 = inlined_call_operand.vmem [shape: f32[1,256], index: 8, kind: input, shape index: {}]
  %s9 = inlined_call_operand.hbm [shape: bf16[256,128], index: 9, kind: input, shape index: {}]
  %s10 = inlined_call_operand.vmem [shape: f32[1,128], index: 10, kind: input, shape index: {}]
  %s11 = inlined_call_operand.vmem [shape: f32[16,128], index: 11, kind: output, shape index: {}]
  %s12 = sld [smem:[#allocation0]]
  $region70: #{simple_conv_emb_net.1} parent=0
    _
  %s14 = ssub.s32 1, %s12
  %s15 = scalar_select 0, %s14, %s12
  $region1: #{simple_conv_emb_net.1} parent=0
    #allocation2 [shape = 'u8[327680]{0}', space=vmem, size = 0x50000, scoped, tag = 'input window, operand 4, single buffered']
    #allocation3 [shape = 's32[1]{0}', space=sflag, size = 0x4, scoped, tag = 'scoped memory for simple_conv_emb_net.1']
    #allocation4 [shape = 'u8[327680]{0}', space=vmem, size = 0x50000, scoped, tag = 'input window, operand 5, single buffered']
    #allocation5 [shape = 's32[1]{0}', space=sflag, size = 0x4, scoped, tag = 'scoped memory for simple_conv_emb_net.1']
    #allocation6 [shape = 'u8[262144]{0}', space=vmem, size = 0x40000, scoped, tag = 'input window, operand 7, single buffered']
    #allocation7 [shape = 'u8[65536]{0}', space=vmem, size = 0x10000, scoped, tag = 'input window, operand 9, single buffered']
    #allocation8 [shape = 's32[1]{0}', space=sflag, size = 0x4, scoped, tag = 'scoped memory for simple_conv_emb_net.1']
    %16 = vsyncpa [#allocation3], 0
    %17 = vsyncpa [#allocation5], 0
    %18 = vsyncpa [#allocation8], 0
    // Predicated region
    $region2: #{simple_conv_emb_net.1} parent=1 // pred_check
      _
    $region3: #{simple_conv_emb_net.1} parent=1 // pred_check_branch
      %20 = sbr.rel (0) target = $region5
    $region4: #{simple_conv_emb_net.1} parent=1 // pred_region
      _
    $region5: #{simple_conv_emb_net.1} parent=1 // pred_fallthru
      _
    // Predicated region
    $region6: #{simple_conv_emb_net.1} parent=1 // pred_check
      _
    $region7: #{simple_conv_emb_net.1} parent=1 // pred_check_branch
      %22 = sbr.rel (0) target = $region9
    $region8: #{simple_conv_emb_net.1} parent=1 // pred_region
      _
    $region9: #{simple_conv_emb_net.1} parent=1 // pred_fallthru
      _
    // Predicated region
    $region10: #{simple_conv_emb_net.1} parent=1 // pred_check
      _
    $region11: #{simple_conv_emb_net.1} parent=1 // pred_check_branch
      %24 = sbr.rel (0) target = $region13
    $region12: #{simple_conv_emb_net.1} parent=1 // pred_region
      _
    $region13: #{simple_conv_emb_net.1} parent=1 // pred_fallthru
      _
    // Predicated region
    $region14: #{simple_conv_emb_net.1} parent=1 // pred_check
      _
    $region15: #{simple_conv_emb_net.1} parent=1 // pred_check_branch
      %26 = sbr.rel (0) target = $region17
    $region16: #{simple_conv_emb_net.1} parent=1 // pred_region
      _
    $region17: #{simple_conv_emb_net.1} parent=1 // pred_fallthru
      _
    // Predicated region
    $region18: #{simple_conv_emb_net.1} parent=1 // pred_check
      _
    $region19: #{simple_conv_emb_net.1} parent=1 // pred_check_branch
      %28 = sbr.rel (0) target = $region21
    $region20: #{simple_conv_emb_net.1} parent=1 // pred_region
      %s30 = ssub.s32 10240, 10240
      %31 = vsyncadd [#allocation3], %s30
      %s32 = sshll.u32 [#allocation2], 4
      %s33 = int_to_ptr.vmem [resolvable:$true] %s32
      %38 = dma.hbm_to_vmem [thread:$0]  %s4, 10240, %s33, [#allocation3], 64, 64, 4
    $region21: #{simple_conv_emb_net.1} parent=1 // pred_fallthru
      _
    // Predicated region
    $region22: #{simple_conv_emb_net.1} parent=1 // pred_check
      _
    $region23: #{simple_conv_emb_net.1} parent=1 // pred_check_branch
      %40 = sbr.rel (0) target = $region25
    $region24: #{simple_conv_emb_net.1} parent=1 // pred_region
      %s42 = ssub.s32 10240, 10240
      %43 = vsyncadd [#allocation5], %s42
      %s44 = sshll.u32 [#allocation4], 4
      %s45 = int_to_ptr.vmem [resolvable:$true] %s44
      %50 = dma.hbm_to_vmem [thread:$0]  %s5, 10240, %s45, [#allocation5], 64, 64, 4
    $region25: #{simple_conv_emb_net.1} parent=1 // pred_fallthru
      _
    // Predicated region
    $region26: #{simple_conv_emb_net.1} parent=1 // pred_check
      _
    $region27: #{simple_conv_emb_net.1} parent=1 // pred_check_branch
      %52 = sbr.rel (0) target = $region29
    $region28: #{simple_conv_emb_net.1} parent=1 // pred_region
      _
    $region29: #{simple_conv_emb_net.1} parent=1 // pred_fallthru
      _
    // Predicated region
    $region30: #{simple_conv_emb_net.1} parent=1 // pred_check
      _
    $region31: #{simple_conv_emb_net.1} parent=1 // pred_check_branch
      %54 = sbr.rel (0) target = $region33
    $region32: #{simple_conv_emb_net.1} parent=1 // pred_region
      %s56 = ssub.s32 8192, 8192
      %57 = vsyncadd [#allocation5], %s56
      %s58 = sshll.u32 [#allocation6], 4
      %s59 = int_to_ptr.vmem [resolvable:$true] %s58
      %64 = dma.hbm_to_vmem [thread:$0]  %s7, 8192, %s59, [#allocation5], 128, 128, 8
    $region33: #{simple_conv_emb_net.1} parent=1 // pred_fallthru
      _
    // Predicated region
    $region34: #{simple_conv_emb_net.1} parent=1 // pred_check
      _
    $region35: #{simple_conv_emb_net.1} parent=1 // pred_check_branch
      %66 = sbr.rel (0) target = $region37
    $region36: #{simple_conv_emb_net.1} parent=1 // pred_region
      _
    $region37: #{simple_conv_emb_net.1} parent=1 // pred_fallthru
      _
    // Predicated region
    $region38: #{simple_conv_emb_net.1} parent=1 // pred_check
      _
    $region39: #{simple_conv_emb_net.1} parent=1 // pred_check_branch
      %68 = sbr.rel (0) target = $region41
    $region40: #{simple_conv_emb_net.1} parent=1 // pred_region
      %s70 = ssub.s32 2048, 2048
      %71 = vsyncadd [#allocation8], %s70
      %s72 = sshll.u32 [#allocation7], 4
      %s73 = int_to_ptr.vmem [resolvable:$true] %s72
      %78 = dma.hbm_to_vmem [thread:$0]  %s9, 2048, %s73, [#allocation8], 64, 64, 4
    $region41: #{simple_conv_emb_net.1} parent=1 // pred_fallthru
      _
    // Predicated region
    $region42: #{simple_conv_emb_net.1} parent=1 // pred_check
      _
    $region43: #{simple_conv_emb_net.1} parent=1 // pred_check_branch
      %80 = sbr.rel (0) target = $region45
    $region44: #{simple_conv_emb_net.1} parent=1 // pred_region
      _
    $region45: #{simple_conv_emb_net.1} parent=1 // pred_fallthru
      _
    // Predicated region
    $region46: #{simple_conv_emb_net.1} parent=1 // pred_check
      _
    $region47: #{simple_conv_emb_net.1} parent=1 // pred_check_branch
      %82 = sbr.rel (0) target = $region49
    $region48: #{simple_conv_emb_net.1} parent=1 // pred_region
      %83 = dma.done [#allocation3], 10240
    $region49: #{simple_conv_emb_net.1} parent=1 // pred_fallthru
      _
    // Predicated region
    $region50: #{simple_conv_emb_net.1} parent=1 // pred_check
      _
    $region51: #{simple_conv_emb_net.1} parent=1 // pred_check_branch
      %85 = sbr.rel (0) target = $region53
    $region52: #{simple_conv_emb_net.1} parent=1 // pred_region
      %86 = dma.done [#allocation5], 10240
    $region53: #{simple_conv_emb_net.1} parent=1 // pred_fallthru
      _
    // Predicated region
    $region54: #{simple_conv_emb_net.1} parent=1 // pred_check
      _
    $region55: #{simple_conv_emb_net.1} parent=1 // pred_check_branch
      %88 = sbr.rel (0) target = $region57
    $region56: #{simple_conv_emb_net.1} parent=1 // pred_region
      %89 = dma.done [#allocation5], 8192
    $region57: #{simple_conv_emb_net.1} parent=1 // pred_fallthru
      _
    // Predicated region
    $region58: #{simple_conv_emb_net.1} parent=1 // pred_check
      _
    $region59: #{simple_conv_emb_net.1} parent=1 // pred_check_branch
      %91 = sbr.rel (0) target = $region61
    $region60: #{simple_conv_emb_net.1} parent=1 // pred_region
      %92 = dma.done [#allocation8], 2048
    $region61: #{simple_conv_emb_net.1} parent=1 // pred_fallthru
      _
    %v94 = vld [vmem:[%s0] sm:$0xf]
    %v95 = vld [vmem:[%s0 + $0x4] sm:$0xf]
    %v96 = vld [vmem:[%s0 + $0x8] sm:$0xf]
    %v97 = vld [vmem:[%s0 + $0xc] sm:$0xf]
    %v98 = vld [vmem:[%s0 + $0x10] sm:$0xf]
    %v99 = vld [vmem:[%s0 + $0x14] sm:$0xf]
    %v100 = vld [vmem:[%s0 + $0x18] sm:$0xf]
    %v101 = vld [vmem:[%s0 + $0x1c] sm:$0xf]
    %v102 = vld [vmem:[%s0 + $0x20] sm:$0xf]
    %v103 = vld [vmem:[%s0 + $0x24] sm:$0xf]
    %v104 = vld [vmem:[%s0 + $0x28] sm:$0xf]
    %v105 = vld [vmem:[%s0 + $0x2c] sm:$0xf]
    %v106 = vld [vmem:[%s0 + $0x30] sm:$0xf]
    %v107 = vld [vmem:[%s0 + $0x34] sm:$0xf]
    %v108 = vld [vmem:[%s0 + $0x38] sm:$0xf]
    %v109 = vld [vmem:[%s0 + $0x3c] sm:$0xf]
    %v110 = vld [vmem:[%s0 + $0x40] sm:$0xf]
    %v111 = vld [vmem:[%s0 + $0x44] sm:$0xf]
    %v112 = vld [vmem:[%s0 + $0x48] sm:$0xf]
    %v113 = vld [vmem:[%s0 + $0x4c] sm:$0xf]
    %v114 = vld [vmem:[%s0 + $0x50] sm:$0xf]
    %v115 = vld [vmem:[%s0 + $0x54] sm:$0xf]
    %v116 = vld [vmem:[%s0 + $0x58] sm:$0xf]
    %v117 = vld [vmem:[%s0 + $0x5c] sm:$0xf]
    %v118 = vld [vmem:[%s0 + $0x60] sm:$0xf]
    %v119 = vld [vmem:[%s0 + $0x64] sm:$0xf]
    %v120 = vld [vmem:[%s0 + $0x68] sm:$0xf]
    %v121 = vld [vmem:[%s0 + $0x6c] sm:$0xf]
    %v122 = vld [vmem:[%s0 + $0x70] sm:$0xf]
    %v123 = vld [vmem:[%s0 + $0x74] sm:$0xf]
    %v124 = vld [vmem:[%s0 + $0x78] sm:$0xf]
    %v125 = vld [vmem:[%s0 + $0x7c] sm:$0xf]
    %v126 = vld [vmem:[%s0 + $0x80] sm:$0xf]
    %v127 = vld [vmem:[%s0 + $0x84] sm:$0xf]
    %v128 = vld [vmem:[%s0 + $0x88] sm:$0xf]
    %v129 = vld [vmem:[%s0 + $0x8c] sm:$0xf]
    %v130 = vld [vmem:[%s0 + $0x90] sm:$0xf]
    %v131 = vld [vmem:[%s0 + $0x94] sm:$0xf]
    %v132 = vld [vmem:[%s0 + $0x98] sm:$0xf]
    %v133 = vld [vmem:[%s0 + $0x9c] sm:$0xf]
    %v134 = vld [vmem:[%s0 + $0xa0] sm:$0xf]
    %v135 = vld [vmem:[%s0 + $0xa4] sm:$0xf]
    %v136 = vld [vmem:[%s0 + $0xa8] sm:$0xf]
    %v137 = vld [vmem:[%s0 + $0xac] sm:$0xf]
    %v138 = vld [vmem:[%s0 + $0xb0] sm:$0xf]
    %v139 = vld [vmem:[%s0 + $0xb4] sm:$0xf]
    %v140 = vld [vmem:[%s0 + $0xb8] sm:$0xf]
    %v141 = vld [vmem:[%s0 + $0xbc] sm:$0xf]
    %v142 = vld [vmem:[%s0 + $0xc0] sm:$0xf]
    %v143 = vld [vmem:[%s0 + $0xc4] sm:$0xf]
    %v144 = vld [vmem:[%s0 + $0xc8] sm:$0xf]
    %v145 = vld [vmem:[%s0 + $0xcc] sm:$0xf]
    %v146 = vld [vmem:[%s0 + $0xd0] sm:$0xf]
    %v147 = vld [vmem:[%s0 + $0xd4] sm:$0xf]
    %v148 = vld [vmem:[%s0 + $0xd8] sm:$0xf]
    %v149 = vld [vmem:[%s0 + $0xdc] sm:$0xf]
    %v150 = vld [vmem:[%s3] sm:$0x3]
    %v151 = vld [vmem:[%s1] sm:$0xff]
    %v152 = vld [vmem:[%s1 + $0x8] sm:$0xff]
    %v153 = vld [vmem:[%s1 + $0x10] sm:$0xff]
    %v154 = vld [vmem:[%s1 + $0x18] sm:$0x33]
    %v155 = vld [vmem:[%s2] sm:$0xff]
    %v156 = vld [vmem:[%s2 + $0x8] sm:$0xff]
    %v157 = vld [vmem:[%s2 + $0x10] sm:$0xff]
    %v158 = vld [vmem:[%s2 + $0x18] sm:$0x33]
    %s159 = scalar_lea.vmem %s1, 32
    %v160 = vld [vmem:[%s159] sm:$0xff]
    %v161 = vld [vmem:[%s159 + $0x8] sm:$0xff]
    %v162 = vld [vmem:[%s159 + $0x10] sm:$0xff]
    %v163 = vld [vmem:[%s159 + $0x18] sm:$0x33]
    %v212 = vunpack.c.l.b16 %v96
    %v213 = vunpack.c.l.b16 %v97
    %v214 = vunpack.c.l.b16 %v98
    %v215 = vunpack.c.l.b16 %v99
    %v216 = vunpack.c.l.b16 %v100
    %v217 = vunpack.c.l.b16 %v101
    %v218 = vunpack.c.l.b16 %v102
    %v219 = vunpack.c.l.b16 %v103
    %v220 = vunpack.c.l.b16 %v104
    %v221 = vunpack.c.l.b16 %v105
    %v222 = vunpack.c.l.b16 %v106
    %v223 = vunpack.c.l.b16 %v107
    %v224 = vunpack.c.l.b16 %v108
    %v225 = vunpack.c.l.b16 %v109
    %v226 = vunpack.c.l.b16 %v110
    %v227 = vunpack.c.l.b16 %v111
    %v228 = vunpack.c.l.b16 %v112
    %v229 = vunpack.c.l.b16 %v113
    %v230 = vunpack.c.l.b16 %v114
    %v231 = vunpack.c.l.b16 %v115
    %v232 = vunpack.c.l.b16 %v116
    %v233 = vunpack.c.l.b16 %v117
    %v234 = vunpack.c.l.b16 %v118
    %v235 = vunpack.c.l.b16 %v119
    %v236 = vunpack.c.l.b16 %v120
    %v237 = vunpack.c.l.b16 %v121
    %v238 = vunpack.c.l.b16 %v122
    %v239 = vunpack.c.l.b16 %v123
    %v240 = vunpack.c.l.b16 %v124
    %v241 = vunpack.c.l.b16 %v125
    %v242 = vunpack.c.l.b16 %v126
    %v243 = vunpack.c.l.b16 %v127
    %v244 = vunpack.c.l.b16 %v128
    %v245 = vunpack.c.l.b16 %v129
    %v246 = vunpack.c.l.b16 %v130
    %v247 = vunpack.c.l.b16 %v131
    %v248 = vunpack.c.l.b16 %v132
    %v249 = vunpack.c.l.b16 %v133
    %v250 = vunpack.c.l.b16 %v134
    %v251 = vunpack.c.l.b16 %v135
    %v252 = vunpack.c.l.b16 %v136
    %v253 = vunpack.c.l.b16 %v137
    %v254 = vunpack.c.l.b16 %v138
    %v255 = vunpack.c.l.b16 %v139
    %v256 = vunpack.c.l.b16 %v140
    %v257 = vunpack.c.l.b16 %v141
    %v258 = vunpack.c.l.b16 %v142
    %v259 = vunpack.c.l.b16 %v143
    %v260 = vpack.c.b16 %v213, %v212
    %v261 = vpack.c.b16 %v215, %v214
    %v262 = vpack.c.b16 %v217, %v216
    %v263 = vpack.c.b16 %v219, %v218
    %v264 = vpack.c.b16 %v221, %v220
    %v265 = vpack.c.b16 %v223, %v222
    %v266 = vpack.c.b16 %v225, %v224
    %v267 = vpack.c.b16 %v227, %v226
    %v268 = vpack.c.b16 %v229, %v228
    %v269 = vpack.c.b16 %v231, %v230
    %v270 = vpack.c.b16 %v233, %v232
    %v271 = vpack.c.b16 %v235, %v234
    %v272 = vpack.c.b16 %v237, %v236
    %v273 = vpack.c.b16 %v239, %v238
    %v274 = vpack.c.b16 %v241, %v240
    %v275 = vpack.c.b16 %v243, %v242
    %v276 = vpack.c.b16 %v245, %v244
    %v277 = vpack.c.b16 %v247, %v246
    %v278 = vpack.c.b16 %v249, %v248
    %v279 = vpack.c.b16 %v251, %v250
    %v280 = vpack.c.b16 %v253, %v252
    %v281 = vpack.c.b16 %v255, %v254
    %v282 = vpack.c.b16 %v257, %v256
    %v283 = vpack.c.b16 %v259, %v258
    %v288 = vunpack.c.l.b16 %v160
    %v289 = vunpack.c.h.b16 %v160
    %v290 = vunpack.c.l.b16 %v161
    %v291 = vunpack.c.h.b16 %v161
    %v292 = vunpack.c.l.b16 %v162
    %v293 = vunpack.c.h.b16 %v162
    %v294 = vunpack.c.l.b16 %v163
    %v295 = vunpack.c.h.b16 %v163
    %v296 = vpack.c.b16 %v290, %v288
    %v297 = vpack.c.b16 %v291, %v289
    %v298 = vpack.c.b16 %v294, %v292
    %v299 = vpack.c.b16 %v295, %v293
    %vm302 = vcmask 228352
    %v304 = vsel %vm302, %v260, 0
    %v307 = vsel %vm302, %v261, 0
    %v310 = vsel %vm302, %v262, 0
    %v313 = vsel %vm302, %v263, 0
    %v316 = vsel %vm302, %v264, 0
    %v319 = vsel %vm302, %v265, 0
    %v322 = vsel %vm302, %v266, 0
    %v325 = vsel %vm302, %v267, 0
    %v328 = vsel %vm302, %v268, 0
    %v331 = vsel %vm302, %v269, 0
    %v334 = vsel %vm302, %v270, 0
    %v337 = vsel %vm302, %v271, 0
    %v340 = vsel %vm302, %v272, 0
    %v343 = vsel %vm302, %v273, 0
    %v346 = vsel %vm302, %v274, 0
    %v349 = vsel %vm302, %v275, 0
    %v352 = vsel %vm302, %v276, 0
    %v355 = vsel %vm302, %v277, 0
    %v358 = vsel %vm302, %v278, 0
    %v361 = vsel %vm302, %v279, 0
    %v364 = vsel %vm302, %v280, 0
    %v367 = vsel %vm302, %v281, 0
    %v370 = vsel %vm302, %v282, 0
    %v373 = vsel %vm302, %v283, 0
    %vm375 = vcmask 1045504
    %v377 = vsel %vm375, %v298, 0
    %v380 = vsel %vm375, %v299, 0
    %382 = vmatprep.subr.bf16.mxu0 0
    %383 = vmatpush1.bf16.msra.mxu0 0
    %384 = vmatprep.subr.bf16.mxu0 0
    %385 = vmatpush1.bf16.msra.mxu0 0
    %386 = vmatprep.subr.bf16.mxu0 0
    %387 = vmatpush1.bf16.msra.mxu0 0
    %388 = vmatprep.subr.bf16.mxu0 0
    %389 = vmatpush1.bf16.msra.mxu0 0
    %390 = vmatprep.subr.bf16.mxu0 0
    %391 = vmatpush1.bf16.msra.mxu0 0
    %392 = vmatprep.subr.bf16.mxu0 0
    %393 = vmatpush1.bf16.msra.mxu0 0
    %394 = vmatprep.subr.bf16.mxu0 %v380
    %395 = vmatpush1.bf16.msra.mxu0 %v377
    %396 = vmatprep.subr.bf16.mxu0 %v297
    %397 = vmatpush1.bf16.msra.mxu0 %v296
    %398 = vmatprep.subr.bf16.mxu0 0
    %399 = vmatpush2.bf16.msra.mxu0 0
    %400 = vmatprep.subr.bf16.mxu0 0
    %401 = vmatpush2.bf16.msra.mxu0 0
    %402 = vmatprep.subr.bf16.mxu0 0
    %403 = vmatpush2.bf16.msra.mxu0 0
    %404 = vmatprep.subr.bf16.mxu0 0
    %405 = vmatpush2.bf16.msra.mxu0 0
    %406 = vmatprep.subr.bf16.mxu0 0
    %407 = vmatpush2.bf16.msra.mxu0 0
    %408 = vmatprep.subr.bf16.mxu0 0
    %409 = vmatpush2.bf16.msra.mxu0 0
    %410 = vmatprep.subr.bf16.mxu0 0
    %411 = vmatpush2.bf16.msra.mxu0 0
    %412 = vmatprep.subr.bf16.mxu0 0
    %413 = vmatpush2.bf16.msra.mxu0 0
    %414 = vmatprep.mubr.bf16.mxu0 0
    %415 = vmatmul.mubr.bf16.gmra.mxu0 %v304
    %v416 = vpop.f32.mrf.mxu0
    %v417 = vadd.f32 0.0, %v416
    %v418 = vpop.f32.mrf.mxu0
    %v419 = vadd.f32 0.0, %v418
    %v420 = vpop.f32.mrf.mxu0
    %v421 = vadd.f32 0.0, %v420
    %v422 = vpop.f32.mrf.mxu0
    %v423 = vadd.f32 0.0, %v422
    %424 = vmatprep.mubr.bf16.mxu0 0
    %425 = vmatmul.mubr.bf16.gmra.mxu0 %v307
    %v426 = vpop.f32.mrf.mxu0
    %v427 = vadd.f32 0.0, %v426
    %v428 = vpop.f32.mrf.mxu0
    %v429 = vadd.f32 0.0, %v428
    %v430 = vpop.f32.mrf.mxu0
    %v431 = vadd.f32 0.0, %v430
    %v432 = vpop.f32.mrf.mxu0
    %v433 = vadd.f32 0.0, %v432
    %434 = vmatprep.mubr.bf16.mxu0 0
    %435 = vmatmul.mubr.bf16.gmra.mxu0 %v310
    %v436 = vpop.f32.mrf.mxu0
    %v437 = vadd.f32 0.0, %v436
    %v438 = vpop.f32.mrf.mxu0
    %v439 = vadd.f32 0.0, %v438
    %v440 = vpop.f32.mrf.mxu0
    %v441 = vadd.f32 0.0, %v440
    %v442 = vpop.f32.mrf.mxu0
    %v443 = vadd.f32 0.0, %v442
    %444 = vmatprep.mubr.bf16.mxu0 0
    %445 = vmatmul.mubr.bf16.gmra.mxu0 %v313
    %v446 = vpop.f32.mrf.mxu0
    %v447 = vadd.f32 0.0, %v446
    %v448 = vpop.f32.mrf.mxu0
    %v449 = vadd.f32 0.0, %v448
    %v450 = vpop.f32.mrf.mxu0
    %v451 = vadd.f32 0.0, %v450
    %v452 = vpop.f32.mrf.mxu0
    %v453 = vadd.f32 0.0, %v452
    %454 = vmatprep.mubr.bf16.mxu0 0
    %455 = vmatmul.mubr.bf16.gmra.mxu0 %v316
    %v456 = vpop.f32.mrf.mxu0
    %v457 = vadd.f32 0.0, %v456
    %v458 = vpop.f32.mrf.mxu0
    %v459 = vadd.f32 0.0, %v458
    %v460 = vpop.f32.mrf.mxu0
    %v461 = vadd.f32 0.0, %v460
    %v462 = vpop.f32.mrf.mxu0
    %v463 = vadd.f32 0.0, %v462
    %464 = vmatprep.mubr.bf16.mxu0 0
    %465 = vmatmul.mubr.bf16.gmra.mxu0 %v319
    %v466 = vpop.f32.mrf.mxu0
    %v467 = vadd.f32 0.0, %v466
    %v468 = vpop.f32.mrf.mxu0
    %v469 = vadd.f32 0.0, %v468
    %v470 = vpop.f32.mrf.mxu0
    %v471 = vadd.f32 0.0, %v470
    %v472 = vpop.f32.mrf.mxu0
    %v473 = vadd.f32 0.0, %v472
    %474 = vmatprep.mubr.bf16.mxu0 0
    %475 = vmatmul.mubr.bf16.gmra.mxu0 %v322
    %v476 = vpop.f32.mrf.mxu0
    %v477 = vadd.f32 0.0, %v476
    %v478 = vpop.f32.mrf.mxu0
    %v479 = vadd.f32 0.0, %v478
    %v480 = vpop.f32.mrf.mxu0
    %v481 = vadd.f32 0.0, %v480
    %v482 = vpop.f32.mrf.mxu0
    %v483 = vadd.f32 0.0, %v482
    %484 = vmatprep.mubr.bf16.mxu0 0
    %485 = vmatmul.mubr.bf16.gmra.mxu0 %v325
    %v486 = vpop.f32.mrf.mxu0
    %v487 = vadd.f32 0.0, %v486
    %v488 = vpop.f32.mrf.mxu0
    %v489 = vadd.f32 0.0, %v488
    %v490 = vpop.f32.mrf.mxu0
    %v491 = vadd.f32 0.0, %v490
    %v492 = vpop.f32.mrf.mxu0
    %v493 = vadd.f32 0.0, %v492
    %494 = vmatprep.mubr.bf16.mxu0 0
    %495 = vmatmul.mubr.bf16.gmra.mxu0 %v328
    %v496 = vpop.f32.mrf.mxu0
    %v497 = vadd.f32 0.0, %v496
    %v498 = vpop.f32.mrf.mxu0
    %v499 = vadd.f32 0.0, %v498
    %v500 = vpop.f32.mrf.mxu0
    %v501 = vadd.f32 0.0, %v500
    %v502 = vpop.f32.mrf.mxu0
    %v503 = vadd.f32 0.0, %v502
    %504 = vmatprep.mubr.bf16.mxu0 0
    %505 = vmatmul.mubr.bf16.gmra.mxu0 %v331
    %v506 = vpop.f32.mrf.mxu0
    %v507 = vadd.f32 0.0, %v506
    %v508 = vpop.f32.mrf.mxu0
    %v509 = vadd.f32 0.0, %v508
    %v510 = vpop.f32.mrf.mxu0
    %v511 = vadd.f32 0.0, %v510
    %v512 = vpop.f32.mrf.mxu0
    %v513 = vadd.f32 0.0, %v512
    %514 = vmatprep.mubr.bf16.mxu0 0
    %515 = vmatmul.mubr.bf16.gmra.mxu0 %v334
    %v516 = vpop.f32.mrf.mxu0
    %v517 = vadd.f32 0.0, %v516
    %v518 = vpop.f32.mrf.mxu0
    %v519 = vadd.f32 0.0, %v518
    %v520 = vpop.f32.mrf.mxu0
    %v521 = vadd.f32 0.0, %v520
    %v522 = vpop.f32.mrf.mxu0
    %v523 = vadd.f32 0.0, %v522
    %524 = vmatprep.mubr.bf16.mxu0 0
    %525 = vmatmul.mubr.bf16.gmra.mxu0 %v337
    %v526 = vpop.f32.mrf.mxu0
    %v527 = vadd.f32 0.0, %v526
    %v528 = vpop.f32.mrf.mxu0
    %v529 = vadd.f32 0.0, %v528
    %v530 = vpop.f32.mrf.mxu0
    %v531 = vadd.f32 0.0, %v530
    %v532 = vpop.f32.mrf.mxu0
    %v533 = vadd.f32 0.0, %v532
    %534 = vmatprep.mubr.bf16.mxu0 0
    %535 = vmatmul.mubr.bf16.gmra.mxu0 %v340
    %v536 = vpop.f32.mrf.mxu0
    %v537 = vadd.f32 0.0, %v536
    %v538 = vpop.f32.mrf.mxu0
    %v539 = vadd.f32 0.0, %v538
    %v540 = vpop.f32.mrf.mxu0
    %v541 = vadd.f32 0.0, %v540
    %v542 = vpop.f32.mrf.mxu0
    %v543 = vadd.f32 0.0, %v542
    %544 = vmatprep.mubr.bf16.mxu0 0
    %545 = vmatmul.mubr.bf16.gmra.mxu0 %v343
    %v546 = vpop.f32.mrf.mxu0
    %v547 = vadd.f32 0.0, %v546
    %v548 = vpop.f32.mrf.mxu0
    %v549 = vadd.f32 0.0, %v548
    %v550 = vpop.f32.mrf.mxu0
    %v551 = vadd.f32 0.0, %v550
    %v552 = vpop.f32.mrf.mxu0
    %v553 = vadd.f32 0.0, %v552
    %554 = vmatprep.mubr.bf16.mxu0 0
    %555 = vmatmul.mubr.bf16.gmra.mxu0 %v346
    %v556 = vpop.f32.mrf.mxu0
    %v557 = vadd.f32 0.0, %v556
    %v558 = vpop.f32.mrf.mxu0
    %v559 = vadd.f32 0.0, %v558
    %v560 = vpop.f32.mrf.mxu0
    %v561 = vadd.f32 0.0, %v560
    %v562 = vpop.f32.mrf.mxu0
    %v563 = vadd.f32 0.0, %v562
    %564 = vmatprep.mubr.bf16.mxu0 0
    %565 = vmatmul.mubr.bf16.gmra.mxu0 %v349
    %v566 = vpop.f32.mrf.mxu0
    %v567 = vadd.f32 0.0, %v566
    %v568 = vpop.f32.mrf.mxu0
    %v569 = vadd.f32 0.0, %v568
    %v570 = vpop.f32.mrf.mxu0
    %v571 = vadd.f32 0.0, %v570
    %v572 = vpop.f32.mrf.mxu0
    %v573 = vadd.f32 0.0, %v572
    %574 = vmatprep.mubr.bf16.mxu0 0
    %575 = vmatmul.mubr.bf16.gmra.mxu0 %v352
    %v576 = vpop.f32.mrf.mxu0
    %v577 = vadd.f32 0.0, %v576
    %v578 = vpop.f32.mrf.mxu0
    %v579 = vadd.f32 0.0, %v578
    %v580 = vpop.f32.mrf.mxu0
    %v581 = vadd.f32 0.0, %v580
    %v582 = vpop.f32.mrf.mxu0
    %v583 = vadd.f32 0.0, %v582
    %584 = vmatprep.mubr.bf16.mxu0 0
    %585 = vmatmul.mubr.bf16.gmra.mxu0 %v355
    %v586 = vpop.f32.mrf.mxu0
    %v587 = vadd.f32 0.0, %v586
    %v588 = vpop.f32.mrf.mxu0
    %v589 = vadd.f32 0.0, %v588
    %v590 = vpop.f32.mrf.mxu0
    %v591 = vadd.f32 0.0, %v590
    %v592 = vpop.f32.mrf.mxu0
    %v593 = vadd.f32 0.0, %v592
    %594 = vmatprep.mubr.bf16.mxu0 0
    %595 = vmatmul.mubr.bf16.gmra.mxu0 %v358
    %v596 = vpop.f32.mrf.mxu0
    %v597 = vadd.f32 0.0, %v596
    %v598 = vpop.f32.mrf.mxu0
    %v599 = vadd.f32 0.0, %v598
    %v600 = vpop.f32.mrf.mxu0
    %v601 = vadd.f32 0.0, %v600
    %v602 = vpop.f32.mrf.mxu0
    %v603 = vadd.f32 0.0, %v602
    %604 = vmatprep.mubr.bf16.mxu0 0
    %605 = vmatmul.mubr.bf16.gmra.mxu0 %v361
    %v606 = vpop.f32.mrf.mxu0
    %v607 = vadd.f32 0.0, %v606
    %v608 = vpop.f32.mrf.mxu0
    %v609 = vadd.f32 0.0, %v608
    %v610 = vpop.f32.mrf.mxu0
    %v611 = vadd.f32 0.0, %v610
    %v612 = vpop.f32.mrf.mxu0
    %v613 = vadd.f32 0.0, %v612
    %614 = vmatprep.mubr.bf16.mxu0 0
    %615 = vmatmul.mubr.bf16.gmra.mxu0 %v364
    %v616 = vpop.f32.mrf.mxu0
    %v617 = vadd.f32 0.0, %v616
    %v618 = vpop.f32.mrf.mxu0
    %v619 = vadd.f32 0.0, %v618
    %v620 = vpop.f32.mrf.mxu0
    %v621 = vadd.f32 0.0, %v620
    %v622 = vpop.f32.mrf.mxu0
    %v623 = vadd.f32 0.0, %v622
    %624 = vmatprep.mubr.bf16.mxu0 0
    %625 = vmatmul.mubr.bf16.gmra.mxu0 %v367
    %v626 = vpop.f32.mrf.mxu0
    %v627 = vadd.f32 0.0, %v626
    %v628 = vpop.f32.mrf.mxu0
    %v629 = vadd.f32 0.0, %v628
    %v630 = vpop.f32.mrf.mxu0
    %v631 = vadd.f32 0.0, %v630
    %v632 = vpop.f32.mrf.mxu0
    %v633 = vadd.f32 0.0, %v632
    %634 = vmatprep.mubr.bf16.mxu0 0
    %635 = vmatmul.mubr.bf16.gmra.mxu0 %v370
    %v636 = vpop.f32.mrf.mxu0
    %v637 = vadd.f32 0.0, %v636
    %v638 = vpop.f32.mrf.mxu0
    %v639 = vadd.f32 0.0, %v638
    %v640 = vpop.f32.mrf.mxu0
    %v641 = vadd.f32 0.0, %v640
    %v642 = vpop.f32.mrf.mxu0
    %v643 = vadd.f32 0.0, %v642
    %644 = vmatprep.mubr.bf16.mxu0 0
    %645 = vmatmul.mubr.bf16.gmra.mxu0 %v373
    %v646 = vpop.f32.mrf.mxu0
    %v647 = vadd.f32 0.0, %v646
    %v648 = vpop.f32.mrf.mxu0
    %v649 = vadd.f32 0.0, %v648
    %v650 = vpop.f32.mrf.mxu0
    %v651 = vadd.f32 0.0, %v650
    %v652 = vpop.f32.mrf.mxu0
    %v653 = vadd.f32 0.0, %v652
    %654 = vdwg.mxu0
    %s655 = scalar_lea.vmem %s2, 32
    %v656 = vld [vmem:[%s655] sm:$0xff]
    %v657 = vld [vmem:[%s655 + $0x8] sm:$0xff]
    %v658 = vld [vmem:[%s655 + $0x10] sm:$0xff]
    %v659 = vld [vmem:[%s655 + $0x18] sm:$0x33]
    %v664 = vunpack.c.l.b16 %v656
    %v665 = vunpack.c.h.b16 %v656
    %v666 = vunpack.c.l.b16 %v657
    %v667 = vunpack.c.h.b16 %v657
    %v668 = vunpack.c.l.b16 %v658
    %v669 = vunpack.c.h.b16 %v658
    %v670 = vunpack.c.l.b16 %v659
    %v671 = vunpack.c.h.b16 %v659
    %v672 = vpack.c.b16 %v666, %v664
    %v673 = vpack.c.b16 %v667, %v665
    %v674 = vpack.c.b16 %v670, %v668
    %v675 = vpack.c.b16 %v671, %v669
    %v679 = vsel %vm375, %v674, 0
    %v682 = vsel %vm375, %v675, 0
    %684 = vmatprep.subr.bf16.mxu0 0
    %685 = vmatpush1.bf16.msra.mxu0 0
    %686 = vmatprep.subr.bf16.mxu0 0
    %687 = vmatpush1.bf16.msra.mxu0 0
    %688 = vmatprep.subr.bf16.mxu0 0
    %689 = vmatpush1.bf16.msra.mxu0 0
    %690 = vmatprep.subr.bf16.mxu0 0
    %691 = vmatpush1.bf16.msra.mxu0 0
    %692 = vmatprep.subr.bf16.mxu0 0
    %693 = vmatpush1.bf16.msra.mxu0 0
    %694 = vmatprep.subr.bf16.mxu0 0
    %695 = vmatpush1.bf16.msra.mxu0 0
    %696 = vmatprep.subr.bf16.mxu0 %v682
    %697 = vmatpush1.bf16.msra.mxu0 %v679
    %698 = vmatprep.subr.bf16.mxu0 %v673
    %699 = vmatpush1.bf16.msra.mxu0 %v672
    %700 = vmatprep.subr.bf16.mxu0 0
    %701 = vmatpush2.bf16.msra.mxu0 0
    %702 = vmatprep.subr.bf16.mxu0 0
    %703 = vmatpush2.bf16.msra.mxu0 0
    %704 = vmatprep.subr.bf16.mxu0 0
    %705 = vmatpush2.bf16.msra.mxu0 0
    %706 = vmatprep.subr.bf16.mxu0 0
    %707 = vmatpush2.bf16.msra.mxu0 0
    %708 = vmatprep.subr.bf16.mxu0 0
    %709 = vmatpush2.bf16.msra.mxu0 0
    %710 = vmatprep.subr.bf16.mxu0 0
    %711 = vmatpush2.bf16.msra.mxu0 0
    %712 = vmatprep.subr.bf16.mxu0 0
    %713 = vmatpush2.bf16.msra.mxu0 0
    %714 = vmatprep.subr.bf16.mxu0 0
    %715 = vmatpush2.bf16.msra.mxu0 0
    %716 = vmatprep.mubr.bf16.mxu0 0
    %717 = vmatmul.mubr.bf16.gmra.mxu0 %v304
    %v718 = vpop.f32.mrf.mxu0
    %v719 = vadd.f32 0.0, %v718
    %v720 = vpop.f32.mrf.mxu0
    %v721 = vadd.f32 0.0, %v720
    %v722 = vpop.f32.mrf.mxu0
    %v723 = vadd.f32 0.0, %v722
    %v724 = vpop.f32.mrf.mxu0
    %v725 = vadd.f32 0.0, %v724
    %726 = vmatprep.mubr.bf16.mxu0 0
    %727 = vmatmul.mubr.bf16.gmra.mxu0 %v307
    %v728 = vpop.f32.mrf.mxu0
    %v729 = vadd.f32 0.0, %v728
    %v730 = vpop.f32.mrf.mxu0
    %v731 = vadd.f32 0.0, %v730
    %v732 = vpop.f32.mrf.mxu0
    %v733 = vadd.f32 0.0, %v732
    %v734 = vpop.f32.mrf.mxu0
    %v735 = vadd.f32 0.0, %v734
    %736 = vmatprep.mubr.bf16.mxu0 0
    %737 = vmatmul.mubr.bf16.gmra.mxu0 %v310
    %v738 = vpop.f32.mrf.mxu0
    %v739 = vadd.f32 0.0, %v738
    %v740 = vpop.f32.mrf.mxu0
    %v741 = vadd.f32 0.0, %v740
    %v742 = vpop.f32.mrf.mxu0
    %v743 = vadd.f32 0.0, %v742
    %v744 = vpop.f32.mrf.mxu0
    %v745 = vadd.f32 0.0, %v744
    %746 = vmatprep.mubr.bf16.mxu0 0
    %747 = vmatmul.mubr.bf16.gmra.mxu0 %v313
    %v748 = vpop.f32.mrf.mxu0
    %v749 = vadd.f32 0.0, %v748
    %v750 = vpop.f32.mrf.mxu0
    %v751 = vadd.f32 0.0, %v750
    %v752 = vpop.f32.mrf.mxu0
    %v753 = vadd.f32 0.0, %v752
    %v754 = vpop.f32.mrf.mxu0
    %v755 = vadd.f32 0.0, %v754
    %756 = vmatprep.mubr.bf16.mxu0 0
    %757 = vmatmul.mubr.bf16.gmra.mxu0 %v316
    %v758 = vpop.f32.mrf.mxu0
    %v759 = vadd.f32 0.0, %v758
    %v760 = vpop.f32.mrf.mxu0
    %v761 = vadd.f32 0.0, %v760
    %v762 = vpop.f32.mrf.mxu0
    %v763 = vadd.f32 0.0, %v762
    %v764 = vpop.f32.mrf.mxu0
    %v765 = vadd.f32 0.0, %v764
    %766 = vmatprep.mubr.bf16.mxu0 0
    %767 = vmatmul.mubr.bf16.gmra.mxu0 %v319
    %v768 = vpop.f32.mrf.mxu0
    %v769 = vadd.f32 0.0, %v768
    %v770 = vpop.f32.mrf.mxu0
    %v771 = vadd.f32 0.0, %v770
    %v772 = vpop.f32.mrf.mxu0
    %v773 = vadd.f32 0.0, %v772
    %v774 = vpop.f32.mrf.mxu0
    %v775 = vadd.f32 0.0, %v774
    %776 = vmatprep.mubr.bf16.mxu0 0
    %777 = vmatmul.mubr.bf16.gmra.mxu0 %v322
    %v778 = vpop.f32.mrf.mxu0
    %v779 = vadd.f32 0.0, %v778
    %v780 = vpop.f32.mrf.mxu0
    %v781 = vadd.f32 0.0, %v780
    %v782 = vpop.f32.mrf.mxu0
    %v783 = vadd.f32 0.0, %v782
    %v784 = vpop.f32.mrf.mxu0
    %v785 = vadd.f32 0.0, %v784
    %786 = vmatprep.mubr.bf16.mxu0 0
    %787 = vmatmul.mubr.bf16.gmra.mxu0 %v325
    %v788 = vpop.f32.mrf.mxu0
    %v789 = vadd.f32 0.0, %v788
    %v790 = vpop.f32.mrf.mxu0
    %v791 = vadd.f32 0.0, %v790
    %v792 = vpop.f32.mrf.mxu0
    %v793 = vadd.f32 0.0, %v792
    %v794 = vpop.f32.mrf.mxu0
    %v795 = vadd.f32 0.0, %v794
    %796 = vmatprep.mubr.bf16.mxu0 0
    %797 = vmatmul.mubr.bf16.gmra.mxu0 %v328
    %v798 = vpop.f32.mrf.mxu0
    %v799 = vadd.f32 0.0, %v798
    %v800 = vpop.f32.mrf.mxu0
    %v801 = vadd.f32 0.0, %v800
    %v802 = vpop.f32.mrf.mxu0
    %v803 = vadd.f32 0.0, %v802
    %v804 = vpop.f32.mrf.mxu0
    %v805 = vadd.f32 0.0, %v804
    %806 = vmatprep.mubr.bf16.mxu0 0
    %807 = vmatmul.mubr.bf16.gmra.mxu0 %v331
    %v808 = vpop.f32.mrf.mxu0
    %v809 = vadd.f32 0.0, %v808
    %v810 = vpop.f32.mrf.mxu0
    %v811 = vadd.f32 0.0, %v810
    %v812 = vpop.f32.mrf.mxu0
    %v813 = vadd.f32 0.0, %v812
    %v814 = vpop.f32.mrf.mxu0
    %v815 = vadd.f32 0.0, %v814
    %816 = vmatprep.mubr.bf16.mxu0 0
    %817 = vmatmul.mubr.bf16.gmra.mxu0 %v334
    %v818 = vpop.f32.mrf.mxu0
    %v819 = vadd.f32 0.0, %v818
    %v820 = vpop.f32.mrf.mxu0
    %v821 = vadd.f32 0.0, %v820
    %v822 = vpop.f32.mrf.mxu0
    %v823 = vadd.f32 0.0, %v822
    %v824 = vpop.f32.mrf.mxu0
    %v825 = vadd.f32 0.0, %v824
    %826 = vmatprep.mubr.bf16.mxu0 0
    %827 = vmatmul.mubr.bf16.gmra.mxu0 %v337
    %v828 = vpop.f32.mrf.mxu0
    %v829 = vadd.f32 0.0, %v828
    %v830 = vpop.f32.mrf.mxu0
    %v831 = vadd.f32 0.0, %v830
    %v832 = vpop.f32.mrf.mxu0
    %v833 = vadd.f32 0.0, %v832
    %v834 = vpop.f32.mrf.mxu0
    %v835 = vadd.f32 0.0, %v834
    %836 = vmatprep.mubr.bf16.mxu0 0
    %837 = vmatmul.mubr.bf16.gmra.mxu0 %v340
    %v838 = vpop.f32.mrf.mxu0
    %v839 = vadd.f32 0.0, %v838
    %v840 = vpop.f32.mrf.mxu0
    %v841 = vadd.f32 0.0, %v840
    %v842 = vpop.f32.mrf.mxu0
    %v843 = vadd.f32 0.0, %v842
    %v844 = vpop.f32.mrf.mxu0
    %v845 = vadd.f32 0.0, %v844
    %846 = vmatprep.mubr.bf16.mxu0 0
    %847 = vmatmul.mubr.bf16.gmra.mxu0 %v343
    %v848 = vpop.f32.mrf.mxu0
    %v849 = vadd.f32 0.0, %v848
    %v850 = vpop.f32.mrf.mxu0
    %v851 = vadd.f32 0.0, %v850
    %v852 = vpop.f32.mrf.mxu0
    %v853 = vadd.f32 0.0, %v852
    %v854 = vpop.f32.mrf.mxu0
    %v855 = vadd.f32 0.0, %v854
    %856 = vmatprep.mubr.bf16.mxu0 0
    %857 = vmatmul.mubr.bf16.gmra.mxu0 %v346
    %v858 = vpop.f32.mrf.mxu0
    %v859 = vadd.f32 0.0, %v858
    %v860 = vpop.f32.mrf.mxu0
    %v861 = vadd.f32 0.0, %v860
    %v862 = vpop.f32.mrf.mxu0
    %v863 = vadd.f32 0.0, %v862
    %v864 = vpop.f32.mrf.mxu0
    %v865 = vadd.f32 0.0, %v864
    %866 = vmatprep.mubr.bf16.mxu0 0
    %867 = vmatmul.mubr.bf16.gmra.mxu0 %v349
    %v868 = vpop.f32.mrf.mxu0
    %v869 = vadd.f32 0.0, %v868
    %v870 = vpop.f32.mrf.mxu0
    %v871 = vadd.f32 0.0, %v870
    %v872 = vpop.f32.mrf.mxu0
    %v873 = vadd.f32 0.0, %v872
    %v874 = vpop.f32.mrf.mxu0
    %v875 = vadd.f32 0.0, %v874
    %876 = vmatprep.mubr.bf16.mxu0 0
    %877 = vmatmul.mubr.bf16.gmra.mxu0 %v352
    %v878 = vpop.f32.mrf.mxu0
    %v879 = vadd.f32 0.0, %v878
    %v880 = vpop.f32.mrf.mxu0
    %v881 = vadd.f32 0.0, %v880
    %v882 = vpop.f32.mrf.mxu0
    %v883 = vadd.f32 0.0, %v882
    %v884 = vpop.f32.mrf.mxu0
    %v885 = vadd.f32 0.0, %v884
    %886 = vmatprep.mubr.bf16.mxu0 0
    %887 = vmatmul.mubr.bf16.gmra.mxu0 %v355
    %v888 = vpop.f32.mrf.mxu0
    %v889 = vadd.f32 0.0, %v888
    %v890 = vpop.f32.mrf.mxu0
    %v891 = vadd.f32 0.0, %v890
    %v892 = vpop.f32.mrf.mxu0
    %v893 = vadd.f32 0.0, %v892
    %v894 = vpop.f32.mrf.mxu0
    %v895 = vadd.f32 0.0, %v894
    %896 = vmatprep.mubr.bf16.mxu0 0
    %897 = vmatmul.mubr.bf16.gmra.mxu0 %v358
    %v898 = vpop.f32.mrf.mxu0
    %v899 = vadd.f32 0.0, %v898
    %v900 = vpop.f32.mrf.mxu0
    %v901 = vadd.f32 0.0, %v900
    %v902 = vpop.f32.mrf.mxu0
    %v903 = vadd.f32 0.0, %v902
    %v904 = vpop.f32.mrf.mxu0
    %v905 = vadd.f32 0.0, %v904
    %906 = vmatprep.mubr.bf16.mxu0 0
    %907 = vmatmul.mubr.bf16.gmra.mxu0 %v361
    %v908 = vpop.f32.mrf.mxu0
    %v909 = vadd.f32 0.0, %v908
    %v910 = vpop.f32.mrf.mxu0
    %v911 = vadd.f32 0.0, %v910
    %v912 = vpop.f32.mrf.mxu0
    %v913 = vadd.f32 0.0, %v912
    %v914 = vpop.f32.mrf.mxu0
    %v915 = vadd.f32 0.0, %v914
    %916 = vmatprep.mubr.bf16.mxu0 0
    %917 = vmatmul.mubr.bf16.gmra.mxu0 %v364
    %v918 = vpop.f32.mrf.mxu0
    %v919 = vadd.f32 0.0, %v918
    %v920 = vpop.f32.mrf.mxu0
    %v921 = vadd.f32 0.0, %v920
    %v922 = vpop.f32.mrf.mxu0
    %v923 = vadd.f32 0.0, %v922
    %v924 = vpop.f32.mrf.mxu0
    %v925 = vadd.f32 0.0, %v924
    %926 = vmatprep.mubr.bf16.mxu0 0
    %927 = vmatmul.mubr.bf16.gmra.mxu0 %v367
    %v928 = vpop.f32.mrf.mxu0
    %v929 = vadd.f32 0.0, %v928
    %v930 = vpop.f32.mrf.mxu0
    %v931 = vadd.f32 0.0, %v930
    %v932 = vpop.f32.mrf.mxu0
    %v933 = vadd.f32 0.0, %v932
    %v934 = vpop.f32.mrf.mxu0
    %v935 = vadd.f32 0.0, %v934
    %936 = vmatprep.mubr.bf16.mxu0 0
    %937 = vmatmul.mubr.bf16.gmra.mxu0 %v370
    %v938 = vpop.f32.mrf.mxu0
    %v939 = vadd.f32 0.0, %v938
    %v940 = vpop.f32.mrf.mxu0
    %v941 = vadd.f32 0.0, %v940
    %v942 = vpop.f32.mrf.mxu0
    %v943 = vadd.f32 0.0, %v942
    %v944 = vpop.f32.mrf.mxu0
    %v945 = vadd.f32 0.0, %v944
    %946 = vmatprep.mubr.bf16.mxu0 0
    %947 = vmatmul.mubr.bf16.gmra.mxu0 %v373
    %v948 = vpop.f32.mrf.mxu0
    %v949 = vadd.f32 0.0, %v948
    %v950 = vpop.f32.mrf.mxu0
    %v951 = vadd.f32 0.0, %v950
    %v952 = vpop.f32.mrf.mxu0
    %v953 = vadd.f32 0.0, %v952
    %v954 = vpop.f32.mrf.mxu0
    %v955 = vadd.f32 0.0, %v954
    %956 = vdwg.mxu0
    %v959 = vunpack.c.l.b16 %v94
    %v960 = vunpack.c.l.b16 %v95
    %v961 = vpack.c.b16 %v960, %v959
    %v966 = vunpack.c.l.b16 %v151
    %v967 = vunpack.c.h.b16 %v151
    %v968 = vunpack.c.l.b16 %v152
    %v969 = vunpack.c.h.b16 %v152
    %v970 = vunpack.c.l.b16 %v153
    %v971 = vunpack.c.h.b16 %v153
    %v972 = vunpack.c.l.b16 %v154
    %v973 = vunpack.c.h.b16 %v154
    %v974 = vpack.c.b16 %v968, %v966
    %v975 = vpack.c.b16 %v969, %v967
    %v976 = vpack.c.b16 %v972, %v970
    %v977 = vpack.c.b16 %v973, %v971
    %v981 = vsel %vm302, %v961, 0
    %v984 = vsel %vm375, %v976, 0
    %v987 = vsel %vm375, %v977, 0
    %989 = vmatprep.subr.bf16.mxu0 0
    %990 = vmatpush1.bf16.msra.mxu0 0
    %991 = vmatprep.subr.bf16.mxu0 0
    %992 = vmatpush1.bf16.msra.mxu0 0
    %993 = vmatprep.subr.bf16.mxu0 0
    %994 = vmatpush1.bf16.msra.mxu0 0
    %995 = vmatprep.subr.bf16.mxu0 0
    %996 = vmatpush1.bf16.msra.mxu0 0
    %997 = vmatprep.subr.bf16.mxu0 0
    %998 = vmatpush1.bf16.msra.mxu0 0
    %999 = vmatprep.subr.bf16.mxu0 0
    %1000 = vmatpush1.bf16.msra.mxu0 0
    %1001 = vmatprep.subr.bf16.mxu0 %v987
    %1002 = vmatpush1.bf16.msra.mxu0 %v984
    %1003 = vmatprep.subr.bf16.mxu0 %v975
    %1004 = vmatpush1.bf16.msra.mxu0 %v974
    %1005 = vmatprep.subr.bf16.mxu0 0
    %1006 = vmatpush2.bf16.msra.mxu0 0
    %1007 = vmatprep.subr.bf16.mxu0 0
    %1008 = vmatpush2.bf16.msra.mxu0 0
    %1009 = vmatprep.subr.bf16.mxu0 0
    %1010 = vmatpush2.bf16.msra.mxu0 0
    %1011 = vmatprep.subr.bf16.mxu0 0
    %1012 = vmatpush2.bf16.msra.mxu0 0
    %1013 = vmatprep.subr.bf16.mxu0 0
    %1014 = vmatpush2.bf16.msra.mxu0 0
    %1015 = vmatprep.subr.bf16.mxu0 0
    %1016 = vmatpush2.bf16.msra.mxu0 0
    %1017 = vmatprep.subr.bf16.mxu0 0
    %1018 = vmatpush2.bf16.msra.mxu0 0
    %1019 = vmatprep.subr.bf16.mxu0 0
    %1020 = vmatpush2.bf16.msra.mxu0 0
    %1021 = vmatprep.mubr.bf16.mxu0 0
    %1022 = vmatmul.mubr.bf16.gmra.mxu0 %v981
    %v1023 = vpop.f32.mrf.mxu0
    %v1024 = vadd.f32 %v417, %v1023
    %v1025 = vpop.f32.mrf.mxu0
    %v1026 = vadd.f32 %v419, %v1025
    %v1027 = vpop.f32.mrf.mxu0
    %v1028 = vadd.f32 %v421, %v1027
    %v1029 = vpop.f32.mrf.mxu0
    %v1030 = vadd.f32 %v423, %v1029
    %1031 = vmatprep.mubr.bf16.mxu0 0
    %1032 = vmatmul.mubr.bf16.gmra.mxu0 %v304
    %v1033 = vpop.f32.mrf.mxu0
    %v1034 = vadd.f32 %v427, %v1033
    %v1035 = vpop.f32.mrf.mxu0
    %v1036 = vadd.f32 %v429, %v1035
    %v1037 = vpop.f32.mrf.mxu0
    %v1038 = vadd.f32 %v431, %v1037
    %v1039 = vpop.f32.mrf.mxu0
    %v1040 = vadd.f32 %v433, %v1039
    %1041 = vmatprep.mubr.bf16.mxu0 0
    %1042 = vmatmul.mubr.bf16.gmra.mxu0 %v307
    %v1043 = vpop.f32.mrf.mxu0
    %v1044 = vadd.f32 %v437, %v1043
    %v1045 = vpop.f32.mrf.mxu0
    %v1046 = vadd.f32 %v439, %v1045
    %v1047 = vpop.f32.mrf.mxu0
    %v1048 = vadd.f32 %v441, %v1047
    %v1049 = vpop.f32.mrf.mxu0
    %v1050 = vadd.f32 %v443, %v1049
    %1051 = vmatprep.mubr.bf16.mxu0 0
    %1052 = vmatmul.mubr.bf16.gmra.mxu0 %v310
    %v1053 = vpop.f32.mrf.mxu0
    %v1054 = vadd.f32 %v447, %v1053
    %v1055 = vpop.f32.mrf.mxu0
    %v1056 = vadd.f32 %v449, %v1055
    %v1057 = vpop.f32.mrf.mxu0
    %v1058 = vadd.f32 %v451, %v1057
    %v1059 = vpop.f32.mrf.mxu0
    %v1060 = vadd.f32 %v453, %v1059
    %1061 = vmatprep.mubr.bf16.mxu0 0
    %1062 = vmatmul.mubr.bf16.gmra.mxu0 %v313
    %v1063 = vpop.f32.mrf.mxu0
    %v1064 = vadd.f32 %v457, %v1063
    %v1065 = vpop.f32.mrf.mxu0
    %v1066 = vadd.f32 %v459, %v1065
    %v1067 = vpop.f32.mrf.mxu0
    %v1068 = vadd.f32 %v461, %v1067
    %v1069 = vpop.f32.mrf.mxu0
    %v1070 = vadd.f32 %v463, %v1069
    %1071 = vmatprep.mubr.bf16.mxu0 0
    %1072 = vmatmul.mubr.bf16.gmra.mxu0 %v316
    %v1073 = vpop.f32.mrf.mxu0
    %v1074 = vadd.f32 %v467, %v1073
    %v1075 = vpop.f32.mrf.mxu0
    %v1076 = vadd.f32 %v469, %v1075
    %v1077 = vpop.f32.mrf.mxu0
    %v1078 = vadd.f32 %v471, %v1077
    %v1079 = vpop.f32.mrf.mxu0
    %v1080 = vadd.f32 %v473, %v1079
    %1081 = vmatprep.mubr.bf16.mxu0 0
    %1082 = vmatmul.mubr.bf16.gmra.mxu0 %v319
    %v1083 = vpop.f32.mrf.mxu0
    %v1084 = vadd.f32 %v477, %v1083
    %v1085 = vpop.f32.mrf.mxu0
    %v1086 = vadd.f32 %v479, %v1085
    %v1087 = vpop.f32.mrf.mxu0
    %v1088 = vadd.f32 %v481, %v1087
    %v1089 = vpop.f32.mrf.mxu0
    %v1090 = vadd.f32 %v483, %v1089
    %1091 = vmatprep.mubr.bf16.mxu0 0
    %1092 = vmatmul.mubr.bf16.gmra.mxu0 %v322
    %v1093 = vpop.f32.mrf.mxu0
    %v1094 = vadd.f32 %v487, %v1093
    %v1095 = vpop.f32.mrf.mxu0
    %v1096 = vadd.f32 %v489, %v1095
    %v1097 = vpop.f32.mrf.mxu0
    %v1098 = vadd.f32 %v491, %v1097
    %v1099 = vpop.f32.mrf.mxu0
    %v1100 = vadd.f32 %v493, %v1099
    %1101 = vmatprep.mubr.bf16.mxu0 0
    %1102 = vmatmul.mubr.bf16.gmra.mxu0 %v325
    %v1103 = vpop.f32.mrf.mxu0
    %v1104 = vadd.f32 %v497, %v1103
    %v1105 = vpop.f32.mrf.mxu0
    %v1106 = vadd.f32 %v499, %v1105
    %v1107 = vpop.f32.mrf.mxu0
    %v1108 = vadd.f32 %v501, %v1107
    %v1109 = vpop.f32.mrf.mxu0
    %v1110 = vadd.f32 %v503, %v1109
    %1111 = vmatprep.mubr.bf16.mxu0 0
    %1112 = vmatmul.mubr.bf16.gmra.mxu0 %v328
    %v1113 = vpop.f32.mrf.mxu0
    %v1114 = vadd.f32 %v507, %v1113
    %v1115 = vpop.f32.mrf.mxu0
    %v1116 = vadd.f32 %v509, %v1115
    %v1117 = vpop.f32.mrf.mxu0
    %v1118 = vadd.f32 %v511, %v1117
    %v1119 = vpop.f32.mrf.mxu0
    %v1120 = vadd.f32 %v513, %v1119
    %1121 = vmatprep.mubr.bf16.mxu0 0
    %1122 = vmatmul.mubr.bf16.gmra.mxu0 %v331
    %v1123 = vpop.f32.mrf.mxu0
    %v1124 = vadd.f32 %v517, %v1123
    %v1125 = vpop.f32.mrf.mxu0
    %v1126 = vadd.f32 %v519, %v1125
    %v1127 = vpop.f32.mrf.mxu0
    %v1128 = vadd.f32 %v521, %v1127
    %v1129 = vpop.f32.mrf.mxu0
    %v1130 = vadd.f32 %v523, %v1129
    %1131 = vmatprep.mubr.bf16.mxu0 0
    %1132 = vmatmul.mubr.bf16.gmra.mxu0 %v334
    %v1133 = vpop.f32.mrf.mxu0
    %v1134 = vadd.f32 %v527, %v1133
    %v1135 = vpop.f32.mrf.mxu0
    %v1136 = vadd.f32 %v529, %v1135
    %v1137 = vpop.f32.mrf.mxu0
    %v1138 = vadd.f32 %v531, %v1137
    %v1139 = vpop.f32.mrf.mxu0
    %v1140 = vadd.f32 %v533, %v1139
    %1141 = vmatprep.mubr.bf16.mxu0 0
    %1142 = vmatmul.mubr.bf16.gmra.mxu0 %v337
    %v1143 = vpop.f32.mrf.mxu0
    %v1144 = vadd.f32 %v537, %v1143
    %v1145 = vpop.f32.mrf.mxu0
    %v1146 = vadd.f32 %v539, %v1145
    %v1147 = vpop.f32.mrf.mxu0
    %v1148 = vadd.f32 %v541, %v1147
    %v1149 = vpop.f32.mrf.mxu0
    %v1150 = vadd.f32 %v543, %v1149
    %1151 = vmatprep.mubr.bf16.mxu0 0
    %1152 = vmatmul.mubr.bf16.gmra.mxu0 %v340
    %v1153 = vpop.f32.mrf.mxu0
    %v1154 = vadd.f32 %v547, %v1153
    %v1155 = vpop.f32.mrf.mxu0
    %v1156 = vadd.f32 %v549, %v1155
    %v1157 = vpop.f32.mrf.mxu0
    %v1158 = vadd.f32 %v551, %v1157
    %v1159 = vpop.f32.mrf.mxu0
    %v1160 = vadd.f32 %v553, %v1159
    %1161 = vmatprep.mubr.bf16.mxu0 0
    %1162 = vmatmul.mubr.bf16.gmra.mxu0 %v343
    %v1163 = vpop.f32.mrf.mxu0
    %v1164 = vadd.f32 %v557, %v1163
    %v1165 = vpop.f32.mrf.mxu0
    %v1166 = vadd.f32 %v559, %v1165
    %v1167 = vpop.f32.mrf.mxu0
    %v1168 = vadd.f32 %v561, %v1167
    %v1169 = vpop.f32.mrf.mxu0
    %v1170 = vadd.f32 %v563, %v1169
    %1171 = vmatprep.mubr.bf16.mxu0 0
    %1172 = vmatmul.mubr.bf16.gmra.mxu0 %v346
    %v1173 = vpop.f32.mrf.mxu0
    %v1174 = vadd.f32 %v567, %v1173
    %v1175 = vpop.f32.mrf.mxu0
    %v1176 = vadd.f32 %v569, %v1175
    %v1177 = vpop.f32.mrf.mxu0
    %v1178 = vadd.f32 %v571, %v1177
    %v1179 = vpop.f32.mrf.mxu0
    %v1180 = vadd.f32 %v573, %v1179
    %1181 = vmatprep.mubr.bf16.mxu0 0
    %1182 = vmatmul.mubr.bf16.gmra.mxu0 %v349
    %v1183 = vpop.f32.mrf.mxu0
    %v1184 = vadd.f32 %v577, %v1183
    %v1185 = vpop.f32.mrf.mxu0
    %v1186 = vadd.f32 %v579, %v1185
    %v1187 = vpop.f32.mrf.mxu0
    %v1188 = vadd.f32 %v581, %v1187
    %v1189 = vpop.f32.mrf.mxu0
    %v1190 = vadd.f32 %v583, %v1189
    %1191 = vmatprep.mubr.bf16.mxu0 0
    %1192 = vmatmul.mubr.bf16.gmra.mxu0 %v352
    %v1193 = vpop.f32.mrf.mxu0
    %v1194 = vadd.f32 %v587, %v1193
    %v1195 = vpop.f32.mrf.mxu0
    %v1196 = vadd.f32 %v589, %v1195
    %v1197 = vpop.f32.mrf.mxu0
    %v1198 = vadd.f32 %v591, %v1197
    %v1199 = vpop.f32.mrf.mxu0
    %v1200 = vadd.f32 %v593, %v1199
    %1201 = vmatprep.mubr.bf16.mxu0 0
    %1202 = vmatmul.mubr.bf16.gmra.mxu0 %v355
    %v1203 = vpop.f32.mrf.mxu0
    %v1204 = vadd.f32 %v597, %v1203
    %v1205 = vpop.f32.mrf.mxu0
    %v1206 = vadd.f32 %v599, %v1205
    %v1207 = vpop.f32.mrf.mxu0
    %v1208 = vadd.f32 %v601, %v1207
    %v1209 = vpop.f32.mrf.mxu0
    %v1210 = vadd.f32 %v603, %v1209
    %1211 = vmatprep.mubr.bf16.mxu0 0
    %1212 = vmatmul.mubr.bf16.gmra.mxu0 %v358
    %v1213 = vpop.f32.mrf.mxu0
    %v1214 = vadd.f32 %v607, %v1213
    %v1215 = vpop.f32.mrf.mxu0
    %v1216 = vadd.f32 %v609, %v1215
    %v1217 = vpop.f32.mrf.mxu0
    %v1218 = vadd.f32 %v611, %v1217
    %v1219 = vpop.f32.mrf.mxu0
    %v1220 = vadd.f32 %v613, %v1219
    %1221 = vmatprep.mubr.bf16.mxu0 0
    %1222 = vmatmul.mubr.bf16.gmra.mxu0 %v361
    %v1223 = vpop.f32.mrf.mxu0
    %v1224 = vadd.f32 %v617, %v1223
    %v1225 = vpop.f32.mrf.mxu0
    %v1226 = vadd.f32 %v619, %v1225
    %v1227 = vpop.f32.mrf.mxu0
    %v1228 = vadd.f32 %v621, %v1227
    %v1229 = vpop.f32.mrf.mxu0
    %v1230 = vadd.f32 %v623, %v1229
    %1231 = vmatprep.mubr.bf16.mxu0 0
    %1232 = vmatmul.mubr.bf16.gmra.mxu0 %v364
    %v1233 = vpop.f32.mrf.mxu0
    %v1234 = vadd.f32 %v627, %v1233
    %v1235 = vpop.f32.mrf.mxu0
    %v1236 = vadd.f32 %v629, %v1235
    %v1237 = vpop.f32.mrf.mxu0
    %v1238 = vadd.f32 %v631, %v1237
    %v1239 = vpop.f32.mrf.mxu0
    %v1240 = vadd.f32 %v633, %v1239
    %1241 = vmatprep.mubr.bf16.mxu0 0
    %1242 = vmatmul.mubr.bf16.gmra.mxu0 %v367
    %v1243 = vpop.f32.mrf.mxu0
    %v1244 = vadd.f32 %v637, %v1243
    %v1245 = vpop.f32.mrf.mxu0
    %v1246 = vadd.f32 %v639, %v1245
    %v1247 = vpop.f32.mrf.mxu0
    %v1248 = vadd.f32 %v641, %v1247
    %v1249 = vpop.f32.mrf.mxu0
    %v1250 = vadd.f32 %v643, %v1249
    %1251 = vmatprep.mubr.bf16.mxu0 0
    %1252 = vmatmul.mubr.bf16.gmra.mxu0 %v370
    %v1253 = vpop.f32.mrf.mxu0
    %v1254 = vadd.f32 %v647, %v1253
    %v1255 = vpop.f32.mrf.mxu0
    %v1256 = vadd.f32 %v649, %v1255
    %v1257 = vpop.f32.mrf.mxu0
    %v1258 = vadd.f32 %v651, %v1257
    %v1259 = vpop.f32.mrf.mxu0
    %v1260 = vadd.f32 %v653, %v1259
    %1261 = vdwg.mxu0
    %v1266 = vunpack.c.l.b16 %v155
    %v1267 = vunpack.c.h.b16 %v155
    %v1268 = vunpack.c.l.b16 %v156
    %v1269 = vunpack.c.h.b16 %v156
    %v1270 = vunpack.c.l.b16 %v157
    %v1271 = vunpack.c.h.b16 %v157
    %v1272 = vunpack.c.l.b16 %v158
    %v1273 = vunpack.c.h.b16 %v158
    %v1274 = vpack.c.b16 %v1268, %v1266
    %v1275 = vpack.c.b16 %v1269, %v1267
    %v1276 = vpack.c.b16 %v1272, %v1270
    %v1277 = vpack.c.b16 %v1273, %v1271
    %v1281 = vsel %vm375, %v1276, 0
    %v1284 = vsel %vm375, %v1277, 0
    %1286 = vmatprep.subr.bf16.mxu0 0
    %1287 = vmatpush1.bf16.msra.mxu0 0
    %1288 = vmatprep.subr.bf16.mxu0 0
    %1289 = vmatpush1.bf16.msra.mxu0 0
    %1290 = vmatprep.subr.bf16.mxu0 0
    %1291 = vmatpush1.bf16.msra.mxu0 0
    %1292 = vmatprep.subr.bf16.mxu0 0
    %1293 = vmatpush1.bf16.msra.mxu0 0
    %1294 = vmatprep.subr.bf16.mxu0 0
    %1295 = vmatpush1.bf16.msra.mxu0 0
    %1296 = vmatprep.subr.bf16.mxu0 0
    %1297 = vmatpush1.bf16.msra.mxu0 0
    %1298 = vmatprep.subr.bf16.mxu0 %v1284
    %1299 = vmatpush1.bf16.msra.mxu0 %v1281
    %1300 = vmatprep.subr.bf16.mxu0 %v1275
    %1301 = vmatpush1.bf16.msra.mxu0 %v1274
    %1302 = vmatprep.subr.bf16.mxu0 0
    %1303 = vmatpush2.bf16.msra.mxu0 0
    %1304 = vmatprep.subr.bf16.mxu0 0
    %1305 = vmatpush2.bf16.msra.mxu0 0
    %1306 = vmatprep.subr.bf16.mxu0 0
    %1307 = vmatpush2.bf16.msra.mxu0 0
    %1308 = vmatprep.subr.bf16.mxu0 0
    %1309 = vmatpush2.bf16.msra.mxu0 0
    %1310 = vmatprep.subr.bf16.mxu0 0
    %1311 = vmatpush2.bf16.msra.mxu0 0
    %1312 = vmatprep.subr.bf16.mxu0 0
    %1313 = vmatpush2.bf16.msra.mxu0 0
    %1314 = vmatprep.subr.bf16.mxu0 0
    %1315 = vmatpush2.bf16.msra.mxu0 0
    %1316 = vmatprep.subr.bf16.mxu0 0
    %1317 = vmatpush2.bf16.msra.mxu0 0
    %1318 = vmatprep.mubr.bf16.mxu0 0
    %1319 = vmatmul.mubr.bf16.gmra.mxu0 %v981
    %v1320 = vpop.f32.mrf.mxu0
    %v1321 = vadd.f32 %v719, %v1320
    %v1322 = vpop.f32.mrf.mxu0
    %v1323 = vadd.f32 %v721, %v1322
    %v1324 = vpop.f32.mrf.mxu0
    %v1325 = vadd.f32 %v723, %v1324
    %v1326 = vpop.f32.mrf.mxu0
    %v1327 = vadd.f32 %v725, %v1326
    %1328 = vmatprep.mubr.bf16.mxu0 0
    %1329 = vmatmul.mubr.bf16.gmra.mxu0 %v304
    %v1330 = vpop.f32.mrf.mxu0
    %v1331 = vadd.f32 %v729, %v1330
    %v1332 = vpop.f32.mrf.mxu0
    %v1333 = vadd.f32 %v731, %v1332
    %v1334 = vpop.f32.mrf.mxu0
    %v1335 = vadd.f32 %v733, %v1334
    %v1336 = vpop.f32.mrf.mxu0
    %v1337 = vadd.f32 %v735, %v1336
    %1338 = vmatprep.mubr.bf16.mxu0 0
    %1339 = vmatmul.mubr.bf16.gmra.mxu0 %v307
    %v1340 = vpop.f32.mrf.mxu0
    %v1341 = vadd.f32 %v739, %v1340
    %v1342 = vpop.f32.mrf.mxu0
    %v1343 = vadd.f32 %v741, %v1342
    %v1344 = vpop.f32.mrf.mxu0
    %v1345 = vadd.f32 %v743, %v1344
    %v1346 = vpop.f32.mrf.mxu0
    %v1347 = vadd.f32 %v745, %v1346
    %1348 = vmatprep.mubr.bf16.mxu0 0
    %1349 = vmatmul.mubr.bf16.gmra.mxu0 %v310
    %v1350 = vpop.f32.mrf.mxu0
    %v1351 = vadd.f32 %v749, %v1350
    %v1352 = vpop.f32.mrf.mxu0
    %v1353 = vadd.f32 %v751, %v1352
    %v1354 = vpop.f32.mrf.mxu0
    %v1355 = vadd.f32 %v753, %v1354
    %v1356 = vpop.f32.mrf.mxu0
    %v1357 = vadd.f32 %v755, %v1356
    %1358 = vmatprep.mubr.bf16.mxu0 0
    %1359 = vmatmul.mubr.bf16.gmra.mxu0 %v313
    %v1360 = vpop.f32.mrf.mxu0
    %v1361 = vadd.f32 %v759, %v1360
    %v1362 = vpop.f32.mrf.mxu0
    %v1363 = vadd.f32 %v761, %v1362
    %v1364 = vpop.f32.mrf.mxu0
    %v1365 = vadd.f32 %v763, %v1364
    %v1366 = vpop.f32.mrf.mxu0
    %v1367 = vadd.f32 %v765, %v1366
    %1368 = vmatprep.mubr.bf16.mxu0 0
    %1369 = vmatmul.mubr.bf16.gmra.mxu0 %v316
    %v1370 = vpop.f32.mrf.mxu0
    %v1371 = vadd.f32 %v769, %v1370
    %v1372 = vpop.f32.mrf.mxu0
    %v1373 = vadd.f32 %v771, %v1372
    %v1374 = vpop.f32.mrf.mxu0
    %v1375 = vadd.f32 %v773, %v1374
    %v1376 = vpop.f32.mrf.mxu0
    %v1377 = vadd.f32 %v775, %v1376
    %1378 = vmatprep.mubr.bf16.mxu0 0
    %1379 = vmatmul.mubr.bf16.gmra.mxu0 %v319
    %v1380 = vpop.f32.mrf.mxu0
    %v1381 = vadd.f32 %v779, %v1380
    %v1382 = vpop.f32.mrf.mxu0
    %v1383 = vadd.f32 %v781, %v1382
    %v1384 = vpop.f32.mrf.mxu0
    %v1385 = vadd.f32 %v783, %v1384
    %v1386 = vpop.f32.mrf.mxu0
    %v1387 = vadd.f32 %v785, %v1386
    %1388 = vmatprep.mubr.bf16.mxu0 0
    %1389 = vmatmul.mubr.bf16.gmra.mxu0 %v322
    %v1390 = vpop.f32.mrf.mxu0
    %v1391 = vadd.f32 %v789, %v1390
    %v1392 = vpop.f32.mrf.mxu0
    %v1393 = vadd.f32 %v791, %v1392
    %v1394 = vpop.f32.mrf.mxu0
    %v1395 = vadd.f32 %v793, %v1394
    %v1396 = vpop.f32.mrf.mxu0
    %v1397 = vadd.f32 %v795, %v1396
    %1398 = vmatprep.mubr.bf16.mxu0 0
    %1399 = vmatmul.mubr.bf16.gmra.mxu0 %v325
    %v1400 = vpop.f32.mrf.mxu0
    %v1401 = vadd.f32 %v799, %v1400
    %v1402 = vpop.f32.mrf.mxu0
    %v1403 = vadd.f32 %v801, %v1402
    %v1404 = vpop.f32.mrf.mxu0
    %v1405 = vadd.f32 %v803, %v1404
    %v1406 = vpop.f32.mrf.mxu0
    %v1407 = vadd.f32 %v805, %v1406
    %1408 = vmatprep.mubr.bf16.mxu0 0
    %1409 = vmatmul.mubr.bf16.gmra.mxu0 %v328
    %v1410 = vpop.f32.mrf.mxu0
    %v1411 = vadd.f32 %v809, %v1410
    %v1412 = vpop.f32.mrf.mxu0
    %v1413 = vadd.f32 %v811, %v1412
    %v1414 = vpop.f32.mrf.mxu0
    %v1415 = vadd.f32 %v813, %v1414
    %v1416 = vpop.f32.mrf.mxu0
    %v1417 = vadd.f32 %v815, %v1416
    %1418 = vmatprep.mubr.bf16.mxu0 0
    %1419 = vmatmul.mubr.bf16.gmra.mxu0 %v331
    %v1420 = vpop.f32.mrf.mxu0
    %v1421 = vadd.f32 %v819, %v1420
    %v1422 = vpop.f32.mrf.mxu0
    %v1423 = vadd.f32 %v821, %v1422
    %v1424 = vpop.f32.mrf.mxu0
    %v1425 = vadd.f32 %v823, %v1424
    %v1426 = vpop.f32.mrf.mxu0
    %v1427 = vadd.f32 %v825, %v1426
    %1428 = vmatprep.mubr.bf16.mxu0 0
    %1429 = vmatmul.mubr.bf16.gmra.mxu0 %v334
    %v1430 = vpop.f32.mrf.mxu0
    %v1431 = vadd.f32 %v829, %v1430
    %v1432 = vpop.f32.mrf.mxu0
    %v1433 = vadd.f32 %v831, %v1432
    %v1434 = vpop.f32.mrf.mxu0
    %v1435 = vadd.f32 %v833, %v1434
    %v1436 = vpop.f32.mrf.mxu0
    %v1437 = vadd.f32 %v835, %v1436
    %1438 = vmatprep.mubr.bf16.mxu0 0
    %1439 = vmatmul.mubr.bf16.gmra.mxu0 %v337
    %v1440 = vpop.f32.mrf.mxu0
    %v1441 = vadd.f32 %v839, %v1440
    %v1442 = vpop.f32.mrf.mxu0
    %v1443 = vadd.f32 %v841, %v1442
    %v1444 = vpop.f32.mrf.mxu0
    %v1445 = vadd.f32 %v843, %v1444
    %v1446 = vpop.f32.mrf.mxu0
    %v1447 = vadd.f32 %v845, %v1446
    %1448 = vmatprep.mubr.bf16.mxu0 0
    %1449 = vmatmul.mubr.bf16.gmra.mxu0 %v340
    %v1450 = vpop.f32.mrf.mxu0
    %v1451 = vadd.f32 %v849, %v1450
    %v1452 = vpop.f32.mrf.mxu0
    %v1453 = vadd.f32 %v851, %v1452
    %v1454 = vpop.f32.mrf.mxu0
    %v1455 = vadd.f32 %v853, %v1454
    %v1456 = vpop.f32.mrf.mxu0
    %v1457 = vadd.f32 %v855, %v1456
    %1458 = vmatprep.mubr.bf16.mxu0 0
    %1459 = vmatmul.mubr.bf16.gmra.mxu0 %v343
    %v1460 = vpop.f32.mrf.mxu0
    %v1461 = vadd.f32 %v859, %v1460
    %v1462 = vpop.f32.mrf.mxu0
    %v1463 = vadd.f32 %v861, %v1462
    %v1464 = vpop.f32.mrf.mxu0
    %v1465 = vadd.f32 %v863, %v1464
    %v1466 = vpop.f32.mrf.mxu0
    %v1467 = vadd.f32 %v865, %v1466
    %1468 = vmatprep.mubr.bf16.mxu0 0
    %1469 = vmatmul.mubr.bf16.gmra.mxu0 %v346
    %v1470 = vpop.f32.mrf.mxu0
    %v1471 = vadd.f32 %v869, %v1470
    %v1472 = vpop.f32.mrf.mxu0
    %v1473 = vadd.f32 %v871, %v1472
    %v1474 = vpop.f32.mrf.mxu0
    %v1475 = vadd.f32 %v873, %v1474
    %v1476 = vpop.f32.mrf.mxu0
    %v1477 = vadd.f32 %v875, %v1476
    %1478 = vmatprep.mubr.bf16.mxu0 0
    %1479 = vmatmul.mubr.bf16.gmra.mxu0 %v349
    %v1480 = vpop.f32.mrf.mxu0
    %v1481 = vadd.f32 %v879, %v1480
    %v1482 = vpop.f32.mrf.mxu0
    %v1483 = vadd.f32 %v881, %v1482
    %v1484 = vpop.f32.mrf.mxu0
    %v1485 = vadd.f32 %v883, %v1484
    %v1486 = vpop.f32.mrf.mxu0
    %v1487 = vadd.f32 %v885, %v1486
    %1488 = vmatprep.mubr.bf16.mxu0 0
    %1489 = vmatmul.mubr.bf16.gmra.mxu0 %v352
    %v1490 = vpop.f32.mrf.mxu0
    %v1491 = vadd.f32 %v889, %v1490
    %v1492 = vpop.f32.mrf.mxu0
    %v1493 = vadd.f32 %v891, %v1492
    %v1494 = vpop.f32.mrf.mxu0
    %v1495 = vadd.f32 %v893, %v1494
    %v1496 = vpop.f32.mrf.mxu0
    %v1497 = vadd.f32 %v895, %v1496
    %1498 = vmatprep.mubr.bf16.mxu0 0
    %1499 = vmatmul.mubr.bf16.gmra.mxu0 %v355
    %v1500 = vpop.f32.mrf.mxu0
    %v1501 = vadd.f32 %v899, %v1500
    %v1502 = vpop.f32.mrf.mxu0
    %v1503 = vadd.f32 %v901, %v1502
    %v1504 = vpop.f32.mrf.mxu0
    %v1505 = vadd.f32 %v903, %v1504
    %v1506 = vpop.f32.mrf.mxu0
    %v1507 = vadd.f32 %v905, %v1506
    %1508 = vmatprep.mubr.bf16.mxu0 0
    %1509 = vmatmul.mubr.bf16.gmra.mxu0 %v358
    %v1510 = vpop.f32.mrf.mxu0
    %v1511 = vadd.f32 %v909, %v1510
    %v1512 = vpop.f32.mrf.mxu0
    %v1513 = vadd.f32 %v911, %v1512
    %v1514 = vpop.f32.mrf.mxu0
    %v1515 = vadd.f32 %v913, %v1514
    %v1516 = vpop.f32.mrf.mxu0
    %v1517 = vadd.f32 %v915, %v1516
    %1518 = vmatprep.mubr.bf16.mxu0 0
    %1519 = vmatmul.mubr.bf16.gmra.mxu0 %v361
    %v1520 = vpop.f32.mrf.mxu0
    %v1521 = vadd.f32 %v919, %v1520
    %v1522 = vpop.f32.mrf.mxu0
    %v1523 = vadd.f32 %v921, %v1522
    %v1524 = vpop.f32.mrf.mxu0
    %v1525 = vadd.f32 %v923, %v1524
    %v1526 = vpop.f32.mrf.mxu0
    %v1527 = vadd.f32 %v925, %v1526
    %1528 = vmatprep.mubr.bf16.mxu0 0
    %1529 = vmatmul.mubr.bf16.gmra.mxu0 %v364
    %v1530 = vpop.f32.mrf.mxu0
    %v1531 = vadd.f32 %v929, %v1530
    %v1532 = vpop.f32.mrf.mxu0
    %v1533 = vadd.f32 %v931, %v1532
    %v1534 = vpop.f32.mrf.mxu0
    %v1535 = vadd.f32 %v933, %v1534
    %v1536 = vpop.f32.mrf.mxu0
    %v1537 = vadd.f32 %v935, %v1536
    %1538 = vmatprep.mubr.bf16.mxu0 0
    %1539 = vmatmul.mubr.bf16.gmra.mxu0 %v367
    %v1540 = vpop.f32.mrf.mxu0
    %v1541 = vadd.f32 %v939, %v1540
    %v1542 = vpop.f32.mrf.mxu0
    %v1543 = vadd.f32 %v941, %v1542
    %v1544 = vpop.f32.mrf.mxu0
    %v1545 = vadd.f32 %v943, %v1544
    %v1546 = vpop.f32.mrf.mxu0
    %v1547 = vadd.f32 %v945, %v1546
    %1548 = vmatprep.mubr.bf16.mxu0 0
    %1549 = vmatmul.mubr.bf16.gmra.mxu0 %v370
    %v1550 = vpop.f32.mrf.mxu0
    %v1551 = vadd.f32 %v949, %v1550
    %v1552 = vpop.f32.mrf.mxu0
    %v1553 = vadd.f32 %v951, %v1552
    %v1554 = vpop.f32.mrf.mxu0
    %v1555 = vadd.f32 %v953, %v1554
    %v1556 = vpop.f32.mrf.mxu0
    %v1557 = vadd.f32 %v955, %v1556
    %1558 = vdwg.mxu0
    %s1559 = scalar_lea.vmem %s1, 64
    %v1560 = vld [vmem:[%s1559] sm:$0xff]
    %v1561 = vld [vmem:[%s1559 + $0x8] sm:$0xff]
    %v1562 = vld [vmem:[%s1559 + $0x10] sm:$0xff]
    %v1563 = vld [vmem:[%s1559 + $0x18] sm:$0x33]
    %v1566 = vunpack.c.l.b16 %v144
    %v1567 = vunpack.c.l.b16 %v145
    %v1568 = vpack.c.b16 %v1567, %v1566
    %v1573 = vunpack.c.l.b16 %v1560
    %v1574 = vunpack.c.h.b16 %v1560
    %v1575 = vunpack.c.l.b16 %v1561
    %v1576 = vunpack.c.h.b16 %v1561
    %v1577 = vunpack.c.l.b16 %v1562
    %v1578 = vunpack.c.h.b16 %v1562
    %v1579 = vunpack.c.l.b16 %v1563
    %v1580 = vunpack.c.h.b16 %v1563
    %v1581 = vpack.c.b16 %v1575, %v1573
    %v1582 = vpack.c.b16 %v1576, %v1574
    %v1583 = vpack.c.b16 %v1579, %v1577
    %v1584 = vpack.c.b16 %v1580, %v1578
    %v1588 = vsel %vm302, %v1568, 0
    %v1591 = vsel %vm375, %v1583, 0
    %v1594 = vsel %vm375, %v1584, 0
    %1596 = vmatprep.subr.bf16.mxu0 0
    %1597 = vmatpush1.bf16.msra.mxu0 0
    %1598 = vmatprep.subr.bf16.mxu0 0
    %1599 = vmatpush1.bf16.msra.mxu0 0
    %1600 = vmatprep.subr.bf16.mxu0 0
    %1601 = vmatpush1.bf16.msra.mxu0 0
    %1602 = vmatprep.subr.bf16.mxu0 0
    %1603 = vmatpush1.bf16.msra.mxu0 0
    %1604 = vmatprep.subr.bf16.mxu0 0
    %1605 = vmatpush1.bf16.msra.mxu0 0
    %1606 = vmatprep.subr.bf16.mxu0 0
    %1607 = vmatpush1.bf16.msra.mxu0 0
    %1608 = vmatprep.subr.bf16.mxu0 %v1594
    %1609 = vmatpush1.bf16.msra.mxu0 %v1591
    %1610 = vmatprep.subr.bf16.mxu0 %v1582
    %1611 = vmatpush1.bf16.msra.mxu0 %v1581
    %1612 = vmatprep.subr.bf16.mxu0 0
    %1613 = vmatpush2.bf16.msra.mxu0 0
    %1614 = vmatprep.subr.bf16.mxu0 0
    %1615 = vmatpush2.bf16.msra.mxu0 0
    %1616 = vmatprep.subr.bf16.mxu0 0
    %1617 = vmatpush2.bf16.msra.mxu0 0
    %1618 = vmatprep.subr.bf16.mxu0 0
    %1619 = vmatpush2.bf16.msra.mxu0 0
    %1620 = vmatprep.subr.bf16.mxu0 0
    %1621 = vmatpush2.bf16.msra.mxu0 0
    %1622 = vmatprep.subr.bf16.mxu0 0
    %1623 = vmatpush2.bf16.msra.mxu0 0
    %1624 = vmatprep.subr.bf16.mxu0 0
    %1625 = vmatpush2.bf16.msra.mxu0 0
    %1626 = vmatprep.subr.bf16.mxu0 0
    %1627 = vmatpush2.bf16.msra.mxu0 0
    %1628 = vmatprep.mubr.bf16.mxu0 0
    %1629 = vmatmul.mubr.bf16.gmra.mxu0 %v307
    %v1630 = vpop.f32.mrf.mxu0
    %v1631 = vadd.f32 0.0, %v1630
    %v1632 = vpop.f32.mrf.mxu0
    %v1633 = vadd.f32 0.0, %v1632
    %v1634 = vpop.f32.mrf.mxu0
    %v1635 = vadd.f32 0.0, %v1634
    %v1636 = vpop.f32.mrf.mxu0
    %v1637 = vadd.f32 0.0, %v1636
    %1638 = vmatprep.mubr.bf16.mxu0 0
    %1639 = vmatmul.mubr.bf16.gmra.mxu0 %v310
    %v1640 = vpop.f32.mrf.mxu0
    %v1641 = vadd.f32 0.0, %v1640
    %v1642 = vpop.f32.mrf.mxu0
    %v1643 = vadd.f32 0.0, %v1642
    %v1644 = vpop.f32.mrf.mxu0
    %v1645 = vadd.f32 0.0, %v1644
    %v1646 = vpop.f32.mrf.mxu0
    %v1647 = vadd.f32 0.0, %v1646
    %1648 = vmatprep.mubr.bf16.mxu0 0
    %1649 = vmatmul.mubr.bf16.gmra.mxu0 %v313
    %v1650 = vpop.f32.mrf.mxu0
    %v1651 = vadd.f32 0.0, %v1650
    %v1652 = vpop.f32.mrf.mxu0
    %v1653 = vadd.f32 0.0, %v1652
    %v1654 = vpop.f32.mrf.mxu0
    %v1655 = vadd.f32 0.0, %v1654
    %v1656 = vpop.f32.mrf.mxu0
    %v1657 = vadd.f32 0.0, %v1656
    %1658 = vmatprep.mubr.bf16.mxu0 0
    %1659 = vmatmul.mubr.bf16.gmra.mxu0 %v316
    %v1660 = vpop.f32.mrf.mxu0
    %v1661 = vadd.f32 0.0, %v1660
    %v1662 = vpop.f32.mrf.mxu0
    %v1663 = vadd.f32 0.0, %v1662
    %v1664 = vpop.f32.mrf.mxu0
    %v1665 = vadd.f32 0.0, %v1664
    %v1666 = vpop.f32.mrf.mxu0
    %v1667 = vadd.f32 0.0, %v1666
    %1668 = vmatprep.mubr.bf16.mxu0 0
    %1669 = vmatmul.mubr.bf16.gmra.mxu0 %v319
    %v1670 = vpop.f32.mrf.mxu0
    %v1671 = vadd.f32 0.0, %v1670
    %v1672 = vpop.f32.mrf.mxu0
    %v1673 = vadd.f32 0.0, %v1672
    %v1674 = vpop.f32.mrf.mxu0
    %v1675 = vadd.f32 0.0, %v1674
    %v1676 = vpop.f32.mrf.mxu0
    %v1677 = vadd.f32 0.0, %v1676
    %1678 = vmatprep.mubr.bf16.mxu0 0
    %1679 = vmatmul.mubr.bf16.gmra.mxu0 %v322
    %v1680 = vpop.f32.mrf.mxu0
    %v1681 = vadd.f32 0.0, %v1680
    %v1682 = vpop.f32.mrf.mxu0
    %v1683 = vadd.f32 0.0, %v1682
    %v1684 = vpop.f32.mrf.mxu0
    %v1685 = vadd.f32 0.0, %v1684
    %v1686 = vpop.f32.mrf.mxu0
    %v1687 = vadd.f32 0.0, %v1686
    %1688 = vmatprep.mubr.bf16.mxu0 0
    %1689 = vmatmul.mubr.bf16.gmra.mxu0 %v325
    %v1690 = vpop.f32.mrf.mxu0
    %v1691 = vadd.f32 0.0, %v1690
    %v1692 = vpop.f32.mrf.mxu0
    %v1693 = vadd.f32 0.0, %v1692
    %v1694 = vpop.f32.mrf.mxu0
    %v1695 = vadd.f32 0.0, %v1694
    %v1696 = vpop.f32.mrf.mxu0
    %v1697 = vadd.f32 0.0, %v1696
    %1698 = vmatprep.mubr.bf16.mxu0 0
    %1699 = vmatmul.mubr.bf16.gmra.mxu0 %v328
    %v1700 = vpop.f32.mrf.mxu0
    %v1701 = vadd.f32 0.0, %v1700
    %v1702 = vpop.f32.mrf.mxu0
    %v1703 = vadd.f32 0.0, %v1702
    %v1704 = vpop.f32.mrf.mxu0
    %v1705 = vadd.f32 0.0, %v1704
    %v1706 = vpop.f32.mrf.mxu0
    %v1707 = vadd.f32 0.0, %v1706
    %1708 = vmatprep.mubr.bf16.mxu0 0
    %1709 = vmatmul.mubr.bf16.gmra.mxu0 %v331
    %v1710 = vpop.f32.mrf.mxu0
    %v1711 = vadd.f32 0.0, %v1710
    %v1712 = vpop.f32.mrf.mxu0
    %v1713 = vadd.f32 0.0, %v1712
    %v1714 = vpop.f32.mrf.mxu0
    %v1715 = vadd.f32 0.0, %v1714
    %v1716 = vpop.f32.mrf.mxu0
    %v1717 = vadd.f32 0.0, %v1716
    %1718 = vmatprep.mubr.bf16.mxu0 0
    %1719 = vmatmul.mubr.bf16.gmra.mxu0 %v334
    %v1720 = vpop.f32.mrf.mxu0
    %v1721 = vadd.f32 0.0, %v1720
    %v1722 = vpop.f32.mrf.mxu0
    %v1723 = vadd.f32 0.0, %v1722
    %v1724 = vpop.f32.mrf.mxu0
    %v1725 = vadd.f32 0.0, %v1724
    %v1726 = vpop.f32.mrf.mxu0
    %v1727 = vadd.f32 0.0, %v1726
    %1728 = vmatprep.mubr.bf16.mxu0 0
    %1729 = vmatmul.mubr.bf16.gmra.mxu0 %v337
    %v1730 = vpop.f32.mrf.mxu0
    %v1731 = vadd.f32 0.0, %v1730
    %v1732 = vpop.f32.mrf.mxu0
    %v1733 = vadd.f32 0.0, %v1732
    %v1734 = vpop.f32.mrf.mxu0
    %v1735 = vadd.f32 0.0, %v1734
    %v1736 = vpop.f32.mrf.mxu0
    %v1737 = vadd.f32 0.0, %v1736
    %1738 = vmatprep.mubr.bf16.mxu0 0
    %1739 = vmatmul.mubr.bf16.gmra.mxu0 %v340
    %v1740 = vpop.f32.mrf.mxu0
    %v1741 = vadd.f32 0.0, %v1740
    %v1742 = vpop.f32.mrf.mxu0
    %v1743 = vadd.f32 0.0, %v1742
    %v1744 = vpop.f32.mrf.mxu0
    %v1745 = vadd.f32 0.0, %v1744
    %v1746 = vpop.f32.mrf.mxu0
    %v1747 = vadd.f32 0.0, %v1746
    %1748 = vmatprep.mubr.bf16.mxu0 0
    %1749 = vmatmul.mubr.bf16.gmra.mxu0 %v343
    %v1750 = vpop.f32.mrf.mxu0
    %v1751 = vadd.f32 0.0, %v1750
    %v1752 = vpop.f32.mrf.mxu0
    %v1753 = vadd.f32 0.0, %v1752
    %v1754 = vpop.f32.mrf.mxu0
    %v1755 = vadd.f32 0.0, %v1754
    %v1756 = vpop.f32.mrf.mxu0
    %v1757 = vadd.f32 0.0, %v1756
    %1758 = vmatprep.mubr.bf16.mxu0 0
    %1759 = vmatmul.mubr.bf16.gmra.mxu0 %v346
    %v1760 = vpop.f32.mrf.mxu0
    %v1761 = vadd.f32 0.0, %v1760
    %v1762 = vpop.f32.mrf.mxu0
    %v1763 = vadd.f32 0.0, %v1762
    %v1764 = vpop.f32.mrf.mxu0
    %v1765 = vadd.f32 0.0, %v1764
    %v1766 = vpop.f32.mrf.mxu0
    %v1767 = vadd.f32 0.0, %v1766
    %1768 = vmatprep.mubr.bf16.mxu0 0
    %1769 = vmatmul.mubr.bf16.gmra.mxu0 %v349
    %v1770 = vpop.f32.mrf.mxu0
    %v1771 = vadd.f32 0.0, %v1770
    %v1772 = vpop.f32.mrf.mxu0
    %v1773 = vadd.f32 0.0, %v1772
    %v1774 = vpop.f32.mrf.mxu0
    %v1775 = vadd.f32 0.0, %v1774
    %v1776 = vpop.f32.mrf.mxu0
    %v1777 = vadd.f32 0.0, %v1776
    %1778 = vmatprep.mubr.bf16.mxu0 0
    %1779 = vmatmul.mubr.bf16.gmra.mxu0 %v352
    %v1780 = vpop.f32.mrf.mxu0
    %v1781 = vadd.f32 0.0, %v1780
    %v1782 = vpop.f32.mrf.mxu0
    %v1783 = vadd.f32 0.0, %v1782
    %v1784 = vpop.f32.mrf.mxu0
    %v1785 = vadd.f32 0.0, %v1784
    %v1786 = vpop.f32.mrf.mxu0
    %v1787 = vadd.f32 0.0, %v1786
    %1788 = vmatprep.mubr.bf16.mxu0 0
    %1789 = vmatmul.mubr.bf16.gmra.mxu0 %v355
    %v1790 = vpop.f32.mrf.mxu0
    %v1791 = vadd.f32 0.0, %v1790
    %v1792 = vpop.f32.mrf.mxu0
    %v1793 = vadd.f32 0.0, %v1792
    %v1794 = vpop.f32.mrf.mxu0
    %v1795 = vadd.f32 0.0, %v1794
    %v1796 = vpop.f32.mrf.mxu0
    %v1797 = vadd.f32 0.0, %v1796
    %1798 = vmatprep.mubr.bf16.mxu0 0
    %1799 = vmatmul.mubr.bf16.gmra.mxu0 %v358
    %v1800 = vpop.f32.mrf.mxu0
    %v1801 = vadd.f32 0.0, %v1800
    %v1802 = vpop.f32.mrf.mxu0
    %v1803 = vadd.f32 0.0, %v1802
    %v1804 = vpop.f32.mrf.mxu0
    %v1805 = vadd.f32 0.0, %v1804
    %v1806 = vpop.f32.mrf.mxu0
    %v1807 = vadd.f32 0.0, %v1806
    %1808 = vmatprep.mubr.bf16.mxu0 0
    %1809 = vmatmul.mubr.bf16.gmra.mxu0 %v361
    %v1810 = vpop.f32.mrf.mxu0
    %v1811 = vadd.f32 0.0, %v1810
    %v1812 = vpop.f32.mrf.mxu0
    %v1813 = vadd.f32 0.0, %v1812
    %v1814 = vpop.f32.mrf.mxu0
    %v1815 = vadd.f32 0.0, %v1814
    %v1816 = vpop.f32.mrf.mxu0
    %v1817 = vadd.f32 0.0, %v1816
    %1818 = vmatprep.mubr.bf16.mxu0 0
    %1819 = vmatmul.mubr.bf16.gmra.mxu0 %v364
    %v1820 = vpop.f32.mrf.mxu0
    %v1821 = vadd.f32 0.0, %v1820
    %v1822 = vpop.f32.mrf.mxu0
    %v1823 = vadd.f32 0.0, %v1822
    %v1824 = vpop.f32.mrf.mxu0
    %v1825 = vadd.f32 0.0, %v1824
    %v1826 = vpop.f32.mrf.mxu0
    %v1827 = vadd.f32 0.0, %v1826
    %1828 = vmatprep.mubr.bf16.mxu0 0
    %1829 = vmatmul.mubr.bf16.gmra.mxu0 %v367
    %v1830 = vpop.f32.mrf.mxu0
    %v1831 = vadd.f32 0.0, %v1830
    %v1832 = vpop.f32.mrf.mxu0
    %v1833 = vadd.f32 0.0, %v1832
    %v1834 = vpop.f32.mrf.mxu0
    %v1835 = vadd.f32 0.0, %v1834
    %v1836 = vpop.f32.mrf.mxu0
    %v1837 = vadd.f32 0.0, %v1836
    %1838 = vmatprep.mubr.bf16.mxu0 0
    %1839 = vmatmul.mubr.bf16.gmra.mxu0 %v370
    %v1840 = vpop.f32.mrf.mxu0
    %v1841 = vadd.f32 0.0, %v1840
    %v1842 = vpop.f32.mrf.mxu0
    %v1843 = vadd.f32 0.0, %v1842
    %v1844 = vpop.f32.mrf.mxu0
    %v1845 = vadd.f32 0.0, %v1844
    %v1846 = vpop.f32.mrf.mxu0
    %v1847 = vadd.f32 0.0, %v1846
    %1848 = vmatprep.mubr.bf16.mxu0 0
    %1849 = vmatmul.mubr.bf16.gmra.mxu0 %v373
    %v1850 = vpop.f32.mrf.mxu0
    %v1851 = vadd.f32 0.0, %v1850
    %v1852 = vpop.f32.mrf.mxu0
    %v1853 = vadd.f32 0.0, %v1852
    %v1854 = vpop.f32.mrf.mxu0
    %v1855 = vadd.f32 0.0, %v1854
    %v1856 = vpop.f32.mrf.mxu0
    %v1857 = vadd.f32 0.0, %v1856
    %1858 = vmatprep.mubr.bf16.mxu0 0
    %1859 = vmatmul.mubr.bf16.gmra.mxu0 %v1588
    %v1860 = vpop.f32.mrf.mxu0
    %v1861 = vadd.f32 0.0, %v1860
    %v1862 = vpop.f32.mrf.mxu0
    %v1863 = vadd.f32 0.0, %v1862
    %v1864 = vpop.f32.mrf.mxu0
    %v1865 = vadd.f32 0.0, %v1864
    %v1866 = vpop.f32.mrf.mxu0
    %v1867 = vadd.f32 0.0, %v1866
    %1868 = vdwg.mxu0
    %s1869 = scalar_lea.vmem %s2, 64
    %v1870 = vld [vmem:[%s1869] sm:$0xff]
    %v1871 = vld [vmem:[%s1869 + $0x8] sm:$0xff]
    %v1872 = vld [vmem:[%s1869 + $0x10] sm:$0xff]
    %v1873 = vld [vmem:[%s1869 + $0x18] sm:$0x33]
    %v1878 = vunpack.c.l.b16 %v1870
    %v1879 = vunpack.c.h.b16 %v1870
    %v1880 = vunpack.c.l.b16 %v1871
    %v1881 = vunpack.c.h.b16 %v1871
    %v1882 = vunpack.c.l.b16 %v1872
    %v1883 = vunpack.c.h.b16 %v1872
    %v1884 = vunpack.c.l.b16 %v1873
    %v1885 = vunpack.c.h.b16 %v1873
    %v1886 = vpack.c.b16 %v1880, %v1878
    %v1887 = vpack.c.b16 %v1881, %v1879
    %v1888 = vpack.c.b16 %v1884, %v1882
    %v1889 = vpack.c.b16 %v1885, %v1883
    %v1893 = vsel %vm375, %v1888, 0
    %v1896 = vsel %vm375, %v1889, 0
    %1898 = vmatprep.subr.bf16.mxu0 0
    %1899 = vmatpush1.bf16.msra.mxu0 0
    %1900 = vmatprep.subr.bf16.mxu0 0
    %1901 = vmatpush1.bf16.msra.mxu0 0
    %1902 = vmatprep.subr.bf16.mxu0 0
    %1903 = vmatpush1.bf16.msra.mxu0 0
    %1904 = vmatprep.subr.bf16.mxu0 0
    %1905 = vmatpush1.bf16.msra.mxu0 0
    %1906 = vmatprep.subr.bf16.mxu0 0
    %1907 = vmatpush1.bf16.msra.mxu0 0
    %1908 = vmatprep.subr.bf16.mxu0 0
    %1909 = vmatpush1.bf16.msra.mxu0 0
    %1910 = vmatprep.subr.bf16.mxu0 %v1896
    %1911 = vmatpush1.bf16.msra.mxu0 %v1893
    %1912 = vmatprep.subr.bf16.mxu0 %v1887
    %1913 = vmatpush1.bf16.msra.mxu0 %v1886
    %1914 = vmatprep.subr.bf16.mxu0 0
    %1915 = vmatpush2.bf16.msra.mxu0 0
    %1916 = vmatprep.subr.bf16.mxu0 0
    %1917 = vmatpush2.bf16.msra.mxu0 0
    %1918 = vmatprep.subr.bf16.mxu0 0
    %1919 = vmatpush2.bf16.msra.mxu0 0
    %1920 = vmatprep.subr.bf16.mxu0 0
    %1921 = vmatpush2.bf16.msra.mxu0 0
    %1922 = vmatprep.subr.bf16.mxu0 0
    %1923 = vmatpush2.bf16.msra.mxu0 0
    %1924 = vmatprep.subr.bf16.mxu0 0
    %1925 = vmatpush2.bf16.msra.mxu0 0
    %1926 = vmatprep.subr.bf16.mxu0 0
    %1927 = vmatpush2.bf16.msra.mxu0 0
    %1928 = vmatprep.subr.bf16.mxu0 0
    %1929 = vmatpush2.bf16.msra.mxu0 0
    %1930 = vmatprep.mubr.bf16.mxu0 0
    %1931 = vmatmul.mubr.bf16.gmra.mxu0 %v307
    %v1932 = vpop.f32.mrf.mxu0
    %v1933 = vadd.f32 0.0, %v1932
    %v1934 = vpop.f32.mrf.mxu0
    %v1935 = vadd.f32 0.0, %v1934
    %v1936 = vpop.f32.mrf.mxu0
    %v1937 = vadd.f32 0.0, %v1936
    %v1938 = vpop.f32.mrf.mxu0
    %v1939 = vadd.f32 0.0, %v1938
    %1940 = vmatprep.mubr.bf16.mxu0 0
    %1941 = vmatmul.mubr.bf16.gmra.mxu0 %v310
    %v1942 = vpop.f32.mrf.mxu0
    %v1943 = vadd.f32 0.0, %v1942
    %v1944 = vpop.f32.mrf.mxu0
    %v1945 = vadd.f32 0.0, %v1944
    %v1946 = vpop.f32.mrf.mxu0
    %v1947 = vadd.f32 0.0, %v1946
    %v1948 = vpop.f32.mrf.mxu0
    %v1949 = vadd.f32 0.0, %v1948
    %1950 = vmatprep.mubr.bf16.mxu0 0
    %1951 = vmatmul.mubr.bf16.gmra.mxu0 %v313
    %v1952 = vpop.f32.mrf.mxu0
    %v1953 = vadd.f32 0.0, %v1952
    %v1954 = vpop.f32.mrf.mxu0
    %v1955 = vadd.f32 0.0, %v1954
    %v1956 = vpop.f32.mrf.mxu0
    %v1957 = vadd.f32 0.0, %v1956
    %v1958 = vpop.f32.mrf.mxu0
    %v1959 = vadd.f32 0.0, %v1958
    %1960 = vmatprep.mubr.bf16.mxu0 0
    %1961 = vmatmul.mubr.bf16.gmra.mxu0 %v316
    %v1962 = vpop.f32.mrf.mxu0
    %v1963 = vadd.f32 0.0, %v1962
    %v1964 = vpop.f32.mrf.mxu0
    %v1965 = vadd.f32 0.0, %v1964
    %v1966 = vpop.f32.mrf.mxu0
    %v1967 = vadd.f32 0.0, %v1966
    %v1968 = vpop.f32.mrf.mxu0
    %v1969 = vadd.f32 0.0, %v1968
    %1970 = vmatprep.mubr.bf16.mxu0 0
    %1971 = vmatmul.mubr.bf16.gmra.mxu0 %v319
    %v1972 = vpop.f32.mrf.mxu0
    %v1973 = vadd.f32 0.0, %v1972
    %v1974 = vpop.f32.mrf.mxu0
    %v1975 = vadd.f32 0.0, %v1974
    %v1976 = vpop.f32.mrf.mxu0
    %v1977 = vadd.f32 0.0, %v1976
    %v1978 = vpop.f32.mrf.mxu0
    %v1979 = vadd.f32 0.0, %v1978
    %1980 = vmatprep.mubr.bf16.mxu0 0
    %1981 = vmatmul.mubr.bf16.gmra.mxu0 %v322
    %v1982 = vpop.f32.mrf.mxu0
    %v1983 = vadd.f32 0.0, %v1982
    %v1984 = vpop.f32.mrf.mxu0
    %v1985 = vadd.f32 0.0, %v1984
    %v1986 = vpop.f32.mrf.mxu0
    %v1987 = vadd.f32 0.0, %v1986
    %v1988 = vpop.f32.mrf.mxu0
    %v1989 = vadd.f32 0.0, %v1988
    %1990 = vmatprep.mubr.bf16.mxu0 0
    %1991 = vmatmul.mubr.bf16.gmra.mxu0 %v325
    %v1992 = vpop.f32.mrf.mxu0
    %v1993 = vadd.f32 0.0, %v1992
    %v1994 = vpop.f32.mrf.mxu0
    %v1995 = vadd.f32 0.0, %v1994
    %v1996 = vpop.f32.mrf.mxu0
    %v1997 = vadd.f32 0.0, %v1996
    %v1998 = vpop.f32.mrf.mxu0
    %v1999 = vadd.f32 0.0, %v1998
    %2000 = vmatprep.mubr.bf16.mxu0 0
    %2001 = vmatmul.mubr.bf16.gmra.mxu0 %v328
    %v2002 = vpop.f32.mrf.mxu0
    %v2003 = vadd.f32 0.0, %v2002
    %v2004 = vpop.f32.mrf.mxu0
    %v2005 = vadd.f32 0.0, %v2004
    %v2006 = vpop.f32.mrf.mxu0
    %v2007 = vadd.f32 0.0, %v2006
    %v2008 = vpop.f32.mrf.mxu0
    %v2009 = vadd.f32 0.0, %v2008
    %2010 = vmatprep.mubr.bf16.mxu0 0
    %2011 = vmatmul.mubr.bf16.gmra.mxu0 %v331
    %v2012 = vpop.f32.mrf.mxu0
    %v2013 = vadd.f32 0.0, %v2012
    %v2014 = vpop.f32.mrf.mxu0
    %v2015 = vadd.f32 0.0, %v2014
    %v2016 = vpop.f32.mrf.mxu0
    %v2017 = vadd.f32 0.0, %v2016
    %v2018 = vpop.f32.mrf.mxu0
    %v2019 = vadd.f32 0.0, %v2018
    %2020 = vmatprep.mubr.bf16.mxu0 0
    %2021 = vmatmul.mubr.bf16.gmra.mxu0 %v334
    %v2022 = vpop.f32.mrf.mxu0
    %v2023 = vadd.f32 0.0, %v2022
    %v2024 = vpop.f32.mrf.mxu0
    %v2025 = vadd.f32 0.0, %v2024
    %v2026 = vpop.f32.mrf.mxu0
    %v2027 = vadd.f32 0.0, %v2026
    %v2028 = vpop.f32.mrf.mxu0
    %v2029 = vadd.f32 0.0, %v2028
    %2030 = vmatprep.mubr.bf16.mxu0 0
    %2031 = vmatmul.mubr.bf16.gmra.mxu0 %v337
    %v2032 = vpop.f32.mrf.mxu0
    %v2033 = vadd.f32 0.0, %v2032
    %v2034 = vpop.f32.mrf.mxu0
    %v2035 = vadd.f32 0.0, %v2034
    %v2036 = vpop.f32.mrf.mxu0
    %v2037 = vadd.f32 0.0, %v2036
    %v2038 = vpop.f32.mrf.mxu0
    %v2039 = vadd.f32 0.0, %v2038
    %2040 = vmatprep.mubr.bf16.mxu0 0
    %2041 = vmatmul.mubr.bf16.gmra.mxu0 %v340
    %v2042 = vpop.f32.mrf.mxu0
    %v2043 = vadd.f32 0.0, %v2042
    %v2044 = vpop.f32.mrf.mxu0
    %v2045 = vadd.f32 0.0, %v2044
    %v2046 = vpop.f32.mrf.mxu0
    %v2047 = vadd.f32 0.0, %v2046
    %v2048 = vpop.f32.mrf.mxu0
    %v2049 = vadd.f32 0.0, %v2048
    %2050 = vmatprep.mubr.bf16.mxu0 0
    %2051 = vmatmul.mubr.bf16.gmra.mxu0 %v343
    %v2052 = vpop.f32.mrf.mxu0
    %v2053 = vadd.f32 0.0, %v2052
    %v2054 = vpop.f32.mrf.mxu0
    %v2055 = vadd.f32 0.0, %v2054
    %v2056 = vpop.f32.mrf.mxu0
    %v2057 = vadd.f32 0.0, %v2056
    %v2058 = vpop.f32.mrf.mxu0
    %v2059 = vadd.f32 0.0, %v2058
    %2060 = vmatprep.mubr.bf16.mxu0 0
    %2061 = vmatmul.mubr.bf16.gmra.mxu0 %v346
    %v2062 = vpop.f32.mrf.mxu0
    %v2063 = vadd.f32 0.0, %v2062
    %v2064 = vpop.f32.mrf.mxu0
    %v2065 = vadd.f32 0.0, %v2064
    %v2066 = vpop.f32.mrf.mxu0
    %v2067 = vadd.f32 0.0, %v2066
    %v2068 = vpop.f32.mrf.mxu0
    %v2069 = vadd.f32 0.0, %v2068
    %2070 = vmatprep.mubr.bf16.mxu0 0
    %2071 = vmatmul.mubr.bf16.gmra.mxu0 %v349
    %v2072 = vpop.f32.mrf.mxu0
    %v2073 = vadd.f32 0.0, %v2072
    %v2074 = vpop.f32.mrf.mxu0
    %v2075 = vadd.f32 0.0, %v2074
    %v2076 = vpop.f32.mrf.mxu0
    %v2077 = vadd.f32 0.0, %v2076
    %v2078 = vpop.f32.mrf.mxu0
    %v2079 = vadd.f32 0.0, %v2078
    %2080 = vmatprep.mubr.bf16.mxu0 0
    %2081 = vmatmul.mubr.bf16.gmra.mxu0 %v352
    %v2082 = vpop.f32.mrf.mxu0
    %v2083 = vadd.f32 0.0, %v2082
    %v2084 = vpop.f32.mrf.mxu0
    %v2085 = vadd.f32 0.0, %v2084
    %v2086 = vpop.f32.mrf.mxu0
    %v2087 = vadd.f32 0.0, %v2086
    %v2088 = vpop.f32.mrf.mxu0
    %v2089 = vadd.f32 0.0, %v2088
    %2090 = vmatprep.mubr.bf16.mxu0 0
    %2091 = vmatmul.mubr.bf16.gmra.mxu0 %v355
    %v2092 = vpop.f32.mrf.mxu0
    %v2093 = vadd.f32 0.0, %v2092
    %v2094 = vpop.f32.mrf.mxu0
    %v2095 = vadd.f32 0.0, %v2094
    %v2096 = vpop.f32.mrf.mxu0
    %v2097 = vadd.f32 0.0, %v2096
    %v2098 = vpop.f32.mrf.mxu0
    %v2099 = vadd.f32 0.0, %v2098
    %2100 = vmatprep.mubr.bf16.mxu0 0
    %2101 = vmatmul.mubr.bf16.gmra.mxu0 %v358
    %v2102 = vpop.f32.mrf.mxu0
    %v2103 = vadd.f32 0.0, %v2102
    %v2104 = vpop.f32.mrf.mxu0
    %v2105 = vadd.f32 0.0, %v2104
    %v2106 = vpop.f32.mrf.mxu0
    %v2107 = vadd.f32 0.0, %v2106
    %v2108 = vpop.f32.mrf.mxu0
    %v2109 = vadd.f32 0.0, %v2108
    %2110 = vmatprep.mubr.bf16.mxu0 0
    %2111 = vmatmul.mubr.bf16.gmra.mxu0 %v361
    %v2112 = vpop.f32.mrf.mxu0
    %v2113 = vadd.f32 0.0, %v2112
    %v2114 = vpop.f32.mrf.mxu0
    %v2115 = vadd.f32 0.0, %v2114
    %v2116 = vpop.f32.mrf.mxu0
    %v2117 = vadd.f32 0.0, %v2116
    %v2118 = vpop.f32.mrf.mxu0
    %v2119 = vadd.f32 0.0, %v2118
    %2120 = vmatprep.mubr.bf16.mxu0 0
    %2121 = vmatmul.mubr.bf16.gmra.mxu0 %v364
    %v2122 = vpop.f32.mrf.mxu0
    %v2123 = vadd.f32 0.0, %v2122
    %v2124 = vpop.f32.mrf.mxu0
    %v2125 = vadd.f32 0.0, %v2124
    %v2126 = vpop.f32.mrf.mxu0
    %v2127 = vadd.f32 0.0, %v2126
    %v2128 = vpop.f32.mrf.mxu0
    %v2129 = vadd.f32 0.0, %v2128
    %2130 = vmatprep.mubr.bf16.mxu0 0
    %2131 = vmatmul.mubr.bf16.gmra.mxu0 %v367
    %v2132 = vpop.f32.mrf.mxu0
    %v2133 = vadd.f32 0.0, %v2132
    %v2134 = vpop.f32.mrf.mxu0
    %v2135 = vadd.f32 0.0, %v2134
    %v2136 = vpop.f32.mrf.mxu0
    %v2137 = vadd.f32 0.0, %v2136
    %v2138 = vpop.f32.mrf.mxu0
    %v2139 = vadd.f32 0.0, %v2138
    %2140 = vmatprep.mubr.bf16.mxu0 0
    %2141 = vmatmul.mubr.bf16.gmra.mxu0 %v370
    %v2142 = vpop.f32.mrf.mxu0
    %v2143 = vadd.f32 0.0, %v2142
    %v2144 = vpop.f32.mrf.mxu0
    %v2145 = vadd.f32 0.0, %v2144
    %v2146 = vpop.f32.mrf.mxu0
    %v2147 = vadd.f32 0.0, %v2146
    %v2148 = vpop.f32.mrf.mxu0
    %v2149 = vadd.f32 0.0, %v2148
    %2150 = vmatprep.mubr.bf16.mxu0 0
    %2151 = vmatmul.mubr.bf16.gmra.mxu0 %v373
    %v2152 = vpop.f32.mrf.mxu0
    %v2153 = vadd.f32 0.0, %v2152
    %v2154 = vpop.f32.mrf.mxu0
    %v2155 = vadd.f32 0.0, %v2154
    %v2156 = vpop.f32.mrf.mxu0
    %v2157 = vadd.f32 0.0, %v2156
    %v2158 = vpop.f32.mrf.mxu0
    %v2159 = vadd.f32 0.0, %v2158
    %2160 = vmatprep.mubr.bf16.mxu0 0
    %2161 = vmatmul.mubr.bf16.gmra.mxu0 %v1588
    %v2162 = vpop.f32.mrf.mxu0
    %v2163 = vadd.f32 0.0, %v2162
    %v2164 = vpop.f32.mrf.mxu0
    %v2165 = vadd.f32 0.0, %v2164
    %v2166 = vpop.f32.mrf.mxu0
    %v2167 = vadd.f32 0.0, %v2166
    %v2168 = vpop.f32.mrf.mxu0
    %v2169 = vadd.f32 0.0, %v2168
    %2170 = vdwg.mxu0
    %v2171 = vadd.f32 %v1024, %v1631
    %v2172 = vadd.f32 %v1026, %v1633
    %v2173 = vadd.f32 %v1028, %v1635
    %v2174 = vadd.f32 %v1030, %v1637
    %v2175 = vadd.f32 %v1034, %v1641
    %v2176 = vadd.f32 %v1036, %v1643
    %v2177 = vadd.f32 %v1038, %v1645
    %v2178 = vadd.f32 %v1040, %v1647
    %v2179 = vadd.f32 %v1044, %v1651
    %v2180 = vadd.f32 %v1046, %v1653
    %v2181 = vadd.f32 %v1048, %v1655
    %v2182 = vadd.f32 %v1050, %v1657
    %v2183 = vadd.f32 %v1054, %v1661
    %v2184 = vadd.f32 %v1056, %v1663
    %v2185 = vadd.f32 %v1058, %v1665
    %v2186 = vadd.f32 %v1060, %v1667
    %v2187 = vadd.f32 %v1064, %v1671
    %v2188 = vadd.f32 %v1066, %v1673
    %v2189 = vadd.f32 %v1068, %v1675
    %v2190 = vadd.f32 %v1070, %v1677
    %v2191 = vadd.f32 %v1074, %v1681
    %v2192 = vadd.f32 %v1076, %v1683
    %v2193 = vadd.f32 %v1078, %v1685
    %v2194 = vadd.f32 %v1080, %v1687
    %v2195 = vadd.f32 %v1084, %v1691
    %v2196 = vadd.f32 %v1086, %v1693
    %v2197 = vadd.f32 %v1088, %v1695
    %v2198 = vadd.f32 %v1090, %v1697
    %v2199 = vadd.f32 %v1094, %v1701
    %v2200 = vadd.f32 %v1096, %v1703
    %v2201 = vadd.f32 %v1098, %v1705
    %v2202 = vadd.f32 %v1100, %v1707
    %v2203 = vadd.f32 %v1104, %v1711
    %v2204 = vadd.f32 %v1106, %v1713
    %v2205 = vadd.f32 %v1108, %v1715
    %v2206 = vadd.f32 %v1110, %v1717
    %v2207 = vadd.f32 %v1114, %v1721
    %v2208 = vadd.f32 %v1116, %v1723
    %v2209 = vadd.f32 %v1118, %v1725
    %v2210 = vadd.f32 %v1120, %v1727
    %v2211 = vadd.f32 %v1124, %v1731
    %v2212 = vadd.f32 %v1126, %v1733
    %v2213 = vadd.f32 %v1128, %v1735
    %v2214 = vadd.f32 %v1130, %v1737
    %v2215 = vadd.f32 %v1134, %v1741
    %v2216 = vadd.f32 %v1136, %v1743
    %v2217 = vadd.f32 %v1138, %v1745
    %v2218 = vadd.f32 %v1140, %v1747
    %v2219 = vadd.f32 %v1144, %v1751
    %v2220 = vadd.f32 %v1146, %v1753
    %v2221 = vadd.f32 %v1148, %v1755
    %v2222 = vadd.f32 %v1150, %v1757
    %v2223 = vadd.f32 %v1154, %v1761
    %v2224 = vadd.f32 %v1156, %v1763
    %v2225 = vadd.f32 %v1158, %v1765
    %v2226 = vadd.f32 %v1160, %v1767
    %v2227 = vadd.f32 %v1164, %v1771
    %v2228 = vadd.f32 %v1166, %v1773
    %v2229 = vadd.f32 %v1168, %v1775
    %v2230 = vadd.f32 %v1170, %v1777
    %v2231 = vadd.f32 %v1174, %v1781
    %v2232 = vadd.f32 %v1176, %v1783
    %v2233 = vadd.f32 %v1178, %v1785
    %v2234 = vadd.f32 %v1180, %v1787
    %v2235 = vadd.f32 %v1184, %v1791
    %v2236 = vadd.f32 %v1186, %v1793
    %v2237 = vadd.f32 %v1188, %v1795
    %v2238 = vadd.f32 %v1190, %v1797
    %v2239 = vadd.f32 %v1194, %v1801
    %v2240 = vadd.f32 %v1196, %v1803
    %v2241 = vadd.f32 %v1198, %v1805
    %v2242 = vadd.f32 %v1200, %v1807
    %v2243 = vadd.f32 %v1204, %v1811
    %v2244 = vadd.f32 %v1206, %v1813
    %v2245 = vadd.f32 %v1208, %v1815
    %v2246 = vadd.f32 %v1210, %v1817
    %v2247 = vadd.f32 %v1214, %v1821
    %v2248 = vadd.f32 %v1216, %v1823
    %v2249 = vadd.f32 %v1218, %v1825
    %v2250 = vadd.f32 %v1220, %v1827
    %v2251 = vadd.f32 %v1224, %v1831
    %v2252 = vadd.f32 %v1226, %v1833
    %v2253 = vadd.f32 %v1228, %v1835
    %v2254 = vadd.f32 %v1230, %v1837
    %v2255 = vadd.f32 %v1234, %v1841
    %v2256 = vadd.f32 %v1236, %v1843
    %v2257 = vadd.f32 %v1238, %v1845
    %v2258 = vadd.f32 %v1240, %v1847
    %v2259 = vadd.f32 %v1244, %v1851
    %v2260 = vadd.f32 %v1246, %v1853
    %v2261 = vadd.f32 %v1248, %v1855
    %v2262 = vadd.f32 %v1250, %v1857
    %v2263 = vadd.f32 %v1254, %v1861
    %v2264 = vadd.f32 %v1256, %v1863
    %v2265 = vadd.f32 %v1258, %v1865
    %v2266 = vadd.f32 %v1260, %v1867
    %v2267 = vadd.f32 %v1321, %v1933
    %v2268 = vadd.f32 %v1323, %v1935
    %v2269 = vadd.f32 %v1325, %v1937
    %v2270 = vadd.f32 %v1327, %v1939
    %v2271 = vadd.f32 %v1331, %v1943
    %v2272 = vadd.f32 %v1333, %v1945
    %v2273 = vadd.f32 %v1335, %v1947
    %v2274 = vadd.f32 %v1337, %v1949
    %v2275 = vadd.f32 %v1341, %v1953
    %v2276 = vadd.f32 %v1343, %v1955
    %v2277 = vadd.f32 %v1345, %v1957
    %v2278 = vadd.f32 %v1347, %v1959
    %v2279 = vadd.f32 %v1351, %v1963
    %v2280 = vadd.f32 %v1353, %v1965
    %v2281 = vadd.f32 %v1355, %v1967
    %v2282 = vadd.f32 %v1357, %v1969
    %v2283 = vadd.f32 %v1361, %v1973
    %v2284 = vadd.f32 %v1363, %v1975
    %v2285 = vadd.f32 %v1365, %v1977
    %v2286 = vadd.f32 %v1367, %v1979
    %v2287 = vadd.f32 %v1371, %v1983
    %v2288 = vadd.f32 %v1373, %v1985
    %v2289 = vadd.f32 %v1375, %v1987
    %v2290 = vadd.f32 %v1377, %v1989
    %v2291 = vadd.f32 %v1381, %v1993
    %v2292 = vadd.f32 %v1383, %v1995
    %v2293 = vadd.f32 %v1385, %v1997
    %v2294 = vadd.f32 %v1387, %v1999
    %v2295 = vadd.f32 %v1391, %v2003
    %v2296 = vadd.f32 %v1393, %v2005
    %v2297 = vadd.f32 %v1395, %v2007
    %v2298 = vadd.f32 %v1397, %v2009
    %v2299 = vadd.f32 %v1401, %v2013
    %v2300 = vadd.f32 %v1403, %v2015
    %v2301 = vadd.f32 %v1405, %v2017
    %v2302 = vadd.f32 %v1407, %v2019
    %v2303 = vadd.f32 %v1411, %v2023
    %v2304 = vadd.f32 %v1413, %v2025
    %v2305 = vadd.f32 %v1415, %v2027
    %v2306 = vadd.f32 %v1417, %v2029
    %v2307 = vadd.f32 %v1421, %v2033
    %v2308 = vadd.f32 %v1423, %v2035
    %v2309 = vadd.f32 %v1425, %v2037
    %v2310 = vadd.f32 %v1427, %v2039
    %v2311 = vadd.f32 %v1431, %v2043
    %v2312 = vadd.f32 %v1433, %v2045
    %v2313 = vadd.f32 %v1435, %v2047
    %v2314 = vadd.f32 %v1437, %v2049
    %v2315 = vadd.f32 %v1441, %v2053
    %v2316 = vadd.f32 %v1443, %v2055
    %v2317 = vadd.f32 %v1445, %v2057
    %v2318 = vadd.f32 %v1447, %v2059
    %v2319 = vadd.f32 %v1451, %v2063
    %v2320 = vadd.f32 %v1453, %v2065
    %v2321 = vadd.f32 %v1455, %v2067
    %v2322 = vadd.f32 %v1457, %v2069
    %v2323 = vadd.f32 %v1461, %v2073
    %v2324 = vadd.f32 %v1463, %v2075
    %v2325 = vadd.f32 %v1465, %v2077
    %v2326 = vadd.f32 %v1467, %v2079
    %v2327 = vadd.f32 %v1471, %v2083
    %v2328 = vadd.f32 %v1473, %v2085
    %v2329 = vadd.f32 %v1475, %v2087
    %v2330 = vadd.f32 %v1477, %v2089
    %v2331 = vadd.f32 %v1481, %v2093
    %v2332 = vadd.f32 %v1483, %v2095
    %v2333 = vadd.f32 %v1485, %v2097
    %v2334 = vadd.f32 %v1487, %v2099
    %v2335 = vadd.f32 %v1491, %v2103
    %v2336 = vadd.f32 %v1493, %v2105
    %v2337 = vadd.f32 %v1495, %v2107
    %v2338 = vadd.f32 %v1497, %v2109
    %v2339 = vadd.f32 %v1501, %v2113
    %v2340 = vadd.f32 %v1503, %v2115
    %v2341 = vadd.f32 %v1505, %v2117
    %v2342 = vadd.f32 %v1507, %v2119
    %v2343 = vadd.f32 %v1511, %v2123
    %v2344 = vadd.f32 %v1513, %v2125
    %v2345 = vadd.f32 %v1515, %v2127
    %v2346 = vadd.f32 %v1517, %v2129
    %v2347 = vadd.f32 %v1521, %v2133
    %v2348 = vadd.f32 %v1523, %v2135
    %v2349 = vadd.f32 %v1525, %v2137
    %v2350 = vadd.f32 %v1527, %v2139
    %v2351 = vadd.f32 %v1531, %v2143
    %v2352 = vadd.f32 %v1533, %v2145
    %v2353 = vadd.f32 %v1535, %v2147
    %v2354 = vadd.f32 %v1537, %v2149
    %v2355 = vadd.f32 %v1541, %v2153
    %v2356 = vadd.f32 %v1543, %v2155
    %v2357 = vadd.f32 %v1545, %v2157
    %v2358 = vadd.f32 %v1547, %v2159
    %v2359 = vadd.f32 %v1551, %v2163
    %v2360 = vadd.f32 %v1553, %v2165
    %v2361 = vadd.f32 %v1555, %v2167
    %v2362 = vadd.f32 %v1557, %v2169
    %s2363 = scalar_lea.vmem %s1, 96
    %v2364 = vld [vmem:[%s2363] sm:$0xff]
    %v2365 = vld [vmem:[%s2363 + $0x8] sm:$0xff]
    %v2366 = vld [vmem:[%s2363 + $0x10] sm:$0xff]
    %v2367 = vld [vmem:[%s2363 + $0x18] sm:$0x33]
    %v2370 = vunpack.c.l.b16 %v146
    %v2371 = vunpack.c.l.b16 %v147
    %v2372 = vpack.c.b16 %v2371, %v2370
    %v2377 = vunpack.c.l.b16 %v2364
    %v2378 = vunpack.c.h.b16 %v2364
    %v2379 = vunpack.c.l.b16 %v2365
    %v2380 = vunpack.c.h.b16 %v2365
    %v2381 = vunpack.c.l.b16 %v2366
    %v2382 = vunpack.c.h.b16 %v2366
    %v2383 = vunpack.c.l.b16 %v2367
    %v2384 = vunpack.c.h.b16 %v2367
    %v2385 = vpack.c.b16 %v2379, %v2377
    %v2386 = vpack.c.b16 %v2380, %v2378
    %v2387 = vpack.c.b16 %v2383, %v2381
    %v2388 = vpack.c.b16 %v2384, %v2382
    %v2392 = vsel %vm302, %v2372, 0
    %v2395 = vsel %vm375, %v2387, 0
    %v2398 = vsel %vm375, %v2388, 0
    %2400 = vmatprep.subr.bf16.mxu0 0
    %2401 = vmatpush1.bf16.msra.mxu0 0
    %2402 = vmatprep.subr.bf16.mxu0 0
    %2403 = vmatpush1.bf16.msra.mxu0 0
    %2404 = vmatprep.subr.bf16.mxu0 0
    %2405 = vmatpush1.bf16.msra.mxu0 0
    %2406 = vmatprep.subr.bf16.mxu0 0
    %2407 = vmatpush1.bf16.msra.mxu0 0
    %2408 = vmatprep.subr.bf16.mxu0 0
    %2409 = vmatpush1.bf16.msra.mxu0 0
    %2410 = vmatprep.subr.bf16.mxu0 0
    %2411 = vmatpush1.bf16.msra.mxu0 0
    %2412 = vmatprep.subr.bf16.mxu0 %v2398
    %2413 = vmatpush1.bf16.msra.mxu0 %v2395
    %2414 = vmatprep.subr.bf16.mxu0 %v2386
    %2415 = vmatpush1.bf16.msra.mxu0 %v2385
    %2416 = vmatprep.subr.bf16.mxu0 0
    %2417 = vmatpush2.bf16.msra.mxu0 0
    %2418 = vmatprep.subr.bf16.mxu0 0
    %2419 = vmatpush2.bf16.msra.mxu0 0
    %2420 = vmatprep.subr.bf16.mxu0 0
    %2421 = vmatpush2.bf16.msra.mxu0 0
    %2422 = vmatprep.subr.bf16.mxu0 0
    %2423 = vmatpush2.bf16.msra.mxu0 0
    %2424 = vmatprep.subr.bf16.mxu0 0
    %2425 = vmatpush2.bf16.msra.mxu0 0
    %2426 = vmatprep.subr.bf16.mxu0 0
    %2427 = vmatpush2.bf16.msra.mxu0 0
    %2428 = vmatprep.subr.bf16.mxu0 0
    %2429 = vmatpush2.bf16.msra.mxu0 0
    %2430 = vmatprep.subr.bf16.mxu0 0
    %2431 = vmatpush2.bf16.msra.mxu0 0
    %2432 = vmatprep.mubr.bf16.mxu0 0
    %2433 = vmatmul.mubr.bf16.gmra.mxu0 %v310
    %v2434 = vpop.f32.mrf.mxu0
    %v2435 = vadd.f32 0.0, %v2434
    %v2436 = vpop.f32.mrf.mxu0
    %v2437 = vadd.f32 0.0, %v2436
    %v2438 = vpop.f32.mrf.mxu0
    %v2439 = vadd.f32 0.0, %v2438
    %v2440 = vpop.f32.mrf.mxu0
    %v2441 = vadd.f32 0.0, %v2440
    %2442 = vmatprep.mubr.bf16.mxu0 0
    %2443 = vmatmul.mubr.bf16.gmra.mxu0 %v313
    %v2444 = vpop.f32.mrf.mxu0
    %v2445 = vadd.f32 0.0, %v2444
    %v2446 = vpop.f32.mrf.mxu0
    %v2447 = vadd.f32 0.0, %v2446
    %v2448 = vpop.f32.mrf.mxu0
    %v2449 = vadd.f32 0.0, %v2448
    %v2450 = vpop.f32.mrf.mxu0
    %v2451 = vadd.f32 0.0, %v2450
    %2452 = vmatprep.mubr.bf16.mxu0 0
    %2453 = vmatmul.mubr.bf16.gmra.mxu0 %v316
    %v2454 = vpop.f32.mrf.mxu0
    %v2455 = vadd.f32 0.0, %v2454
    %v2456 = vpop.f32.mrf.mxu0
    %v2457 = vadd.f32 0.0, %v2456
    %v2458 = vpop.f32.mrf.mxu0
    %v2459 = vadd.f32 0.0, %v2458
    %v2460 = vpop.f32.mrf.mxu0
    %v2461 = vadd.f32 0.0, %v2460
    %2462 = vmatprep.mubr.bf16.mxu0 0
    %2463 = vmatmul.mubr.bf16.gmra.mxu0 %v319
    %v2464 = vpop.f32.mrf.mxu0
    %v2465 = vadd.f32 0.0, %v2464
    %v2466 = vpop.f32.mrf.mxu0
    %v2467 = vadd.f32 0.0, %v2466
    %v2468 = vpop.f32.mrf.mxu0
    %v2469 = vadd.f32 0.0, %v2468
    %v2470 = vpop.f32.mrf.mxu0
    %v2471 = vadd.f32 0.0, %v2470
    %2472 = vmatprep.mubr.bf16.mxu0 0
    %2473 = vmatmul.mubr.bf16.gmra.mxu0 %v322
    %v2474 = vpop.f32.mrf.mxu0
    %v2475 = vadd.f32 0.0, %v2474
    %v2476 = vpop.f32.mrf.mxu0
    %v2477 = vadd.f32 0.0, %v2476
    %v2478 = vpop.f32.mrf.mxu0
    %v2479 = vadd.f32 0.0, %v2478
    %v2480 = vpop.f32.mrf.mxu0
    %v2481 = vadd.f32 0.0, %v2480
    %2482 = vmatprep.mubr.bf16.mxu0 0
    %2483 = vmatmul.mubr.bf16.gmra.mxu0 %v325
    %v2484 = vpop.f32.mrf.mxu0
    %v2485 = vadd.f32 0.0, %v2484
    %v2486 = vpop.f32.mrf.mxu0
    %v2487 = vadd.f32 0.0, %v2486
    %v2488 = vpop.f32.mrf.mxu0
    %v2489 = vadd.f32 0.0, %v2488
    %v2490 = vpop.f32.mrf.mxu0
    %v2491 = vadd.f32 0.0, %v2490
    %2492 = vmatprep.mubr.bf16.mxu0 0
    %2493 = vmatmul.mubr.bf16.gmra.mxu0 %v328
    %v2494 = vpop.f32.mrf.mxu0
    %v2495 = vadd.f32 0.0, %v2494
    %v2496 = vpop.f32.mrf.mxu0
    %v2497 = vadd.f32 0.0, %v2496
    %v2498 = vpop.f32.mrf.mxu0
    %v2499 = vadd.f32 0.0, %v2498
    %v2500 = vpop.f32.mrf.mxu0
    %v2501 = vadd.f32 0.0, %v2500
    %2502 = vmatprep.mubr.bf16.mxu0 0
    %2503 = vmatmul.mubr.bf16.gmra.mxu0 %v331
    %v2504 = vpop.f32.mrf.mxu0
    %v2505 = vadd.f32 0.0, %v2504
    %v2506 = vpop.f32.mrf.mxu0
    %v2507 = vadd.f32 0.0, %v2506
    %v2508 = vpop.f32.mrf.mxu0
    %v2509 = vadd.f32 0.0, %v2508
    %v2510 = vpop.f32.mrf.mxu0
    %v2511 = vadd.f32 0.0, %v2510
    %2512 = vmatprep.mubr.bf16.mxu0 0
    %2513 = vmatmul.mubr.bf16.gmra.mxu0 %v334
    %v2514 = vpop.f32.mrf.mxu0
    %v2515 = vadd.f32 0.0, %v2514
    %v2516 = vpop.f32.mrf.mxu0
    %v2517 = vadd.f32 0.0, %v2516
    %v2518 = vpop.f32.mrf.mxu0
    %v2519 = vadd.f32 0.0, %v2518
    %v2520 = vpop.f32.mrf.mxu0
    %v2521 = vadd.f32 0.0, %v2520
    %2522 = vmatprep.mubr.bf16.mxu0 0
    %2523 = vmatmul.mubr.bf16.gmra.mxu0 %v337
    %v2524 = vpop.f32.mrf.mxu0
    %v2525 = vadd.f32 0.0, %v2524
    %v2526 = vpop.f32.mrf.mxu0
    %v2527 = vadd.f32 0.0, %v2526
    %v2528 = vpop.f32.mrf.mxu0
    %v2529 = vadd.f32 0.0, %v2528
    %v2530 = vpop.f32.mrf.mxu0
    %v2531 = vadd.f32 0.0, %v2530
    %2532 = vmatprep.mubr.bf16.mxu0 0
    %2533 = vmatmul.mubr.bf16.gmra.mxu0 %v340
    %v2534 = vpop.f32.mrf.mxu0
    %v2535 = vadd.f32 0.0, %v2534
    %v2536 = vpop.f32.mrf.mxu0
    %v2537 = vadd.f32 0.0, %v2536
    %v2538 = vpop.f32.mrf.mxu0
    %v2539 = vadd.f32 0.0, %v2538
    %v2540 = vpop.f32.mrf.mxu0
    %v2541 = vadd.f32 0.0, %v2540
    %2542 = vmatprep.mubr.bf16.mxu0 0
    %2543 = vmatmul.mubr.bf16.gmra.mxu0 %v343
    %v2544 = vpop.f32.mrf.mxu0
    %v2545 = vadd.f32 0.0, %v2544
    %v2546 = vpop.f32.mrf.mxu0
    %v2547 = vadd.f32 0.0, %v2546
    %v2548 = vpop.f32.mrf.mxu0
    %v2549 = vadd.f32 0.0, %v2548
    %v2550 = vpop.f32.mrf.mxu0
    %v2551 = vadd.f32 0.0, %v2550
    %2552 = vmatprep.mubr.bf16.mxu0 0
    %2553 = vmatmul.mubr.bf16.gmra.mxu0 %v346
    %v2554 = vpop.f32.mrf.mxu0
    %v2555 = vadd.f32 0.0, %v2554
    %v2556 = vpop.f32.mrf.mxu0
    %v2557 = vadd.f32 0.0, %v2556
    %v2558 = vpop.f32.mrf.mxu0
    %v2559 = vadd.f32 0.0, %v2558
    %v2560 = vpop.f32.mrf.mxu0
    %v2561 = vadd.f32 0.0, %v2560
    %2562 = vmatprep.mubr.bf16.mxu0 0
    %2563 = vmatmul.mubr.bf16.gmra.mxu0 %v349
    %v2564 = vpop.f32.mrf.mxu0
    %v2565 = vadd.f32 0.0, %v2564
    %v2566 = vpop.f32.mrf.mxu0
    %v2567 = vadd.f32 0.0, %v2566
    %v2568 = vpop.f32.mrf.mxu0
    %v2569 = vadd.f32 0.0, %v2568
    %v2570 = vpop.f32.mrf.mxu0
    %v2571 = vadd.f32 0.0, %v2570
    %2572 = vmatprep.mubr.bf16.mxu0 0
    %2573 = vmatmul.mubr.bf16.gmra.mxu0 %v352
    %v2574 = vpop.f32.mrf.mxu0
    %v2575 = vadd.f32 0.0, %v2574
    %v2576 = vpop.f32.mrf.mxu0
    %v2577 = vadd.f32 0.0, %v2576
    %v2578 = vpop.f32.mrf.mxu0
    %v2579 = vadd.f32 0.0, %v2578
    %v2580 = vpop.f32.mrf.mxu0
    %v2581 = vadd.f32 0.0, %v2580
    %2582 = vmatprep.mubr.bf16.mxu0 0
    %2583 = vmatmul.mubr.bf16.gmra.mxu0 %v355
    %v2584 = vpop.f32.mrf.mxu0
    %v2585 = vadd.f32 0.0, %v2584
    %v2586 = vpop.f32.mrf.mxu0
    %v2587 = vadd.f32 0.0, %v2586
    %v2588 = vpop.f32.mrf.mxu0
    %v2589 = vadd.f32 0.0, %v2588
    %v2590 = vpop.f32.mrf.mxu0
    %v2591 = vadd.f32 0.0, %v2590
    %2592 = vmatprep.mubr.bf16.mxu0 0
    %2593 = vmatmul.mubr.bf16.gmra.mxu0 %v358
    %v2594 = vpop.f32.mrf.mxu0
    %v2595 = vadd.f32 0.0, %v2594
    %v2596 = vpop.f32.mrf.mxu0
    %v2597 = vadd.f32 0.0, %v2596
    %v2598 = vpop.f32.mrf.mxu0
    %v2599 = vadd.f32 0.0, %v2598
    %v2600 = vpop.f32.mrf.mxu0
    %v2601 = vadd.f32 0.0, %v2600
    %2602 = vmatprep.mubr.bf16.mxu0 0
    %2603 = vmatmul.mubr.bf16.gmra.mxu0 %v361
    %v2604 = vpop.f32.mrf.mxu0
    %v2605 = vadd.f32 0.0, %v2604
    %v2606 = vpop.f32.mrf.mxu0
    %v2607 = vadd.f32 0.0, %v2606
    %v2608 = vpop.f32.mrf.mxu0
    %v2609 = vadd.f32 0.0, %v2608
    %v2610 = vpop.f32.mrf.mxu0
    %v2611 = vadd.f32 0.0, %v2610
    %2612 = vmatprep.mubr.bf16.mxu0 0
    %2613 = vmatmul.mubr.bf16.gmra.mxu0 %v364
    %v2614 = vpop.f32.mrf.mxu0
    %v2615 = vadd.f32 0.0, %v2614
    %v2616 = vpop.f32.mrf.mxu0
    %v2617 = vadd.f32 0.0, %v2616
    %v2618 = vpop.f32.mrf.mxu0
    %v2619 = vadd.f32 0.0, %v2618
    %v2620 = vpop.f32.mrf.mxu0
    %v2621 = vadd.f32 0.0, %v2620
    %2622 = vmatprep.mubr.bf16.mxu0 0
    %2623 = vmatmul.mubr.bf16.gmra.mxu0 %v367
    %v2624 = vpop.f32.mrf.mxu0
    %v2625 = vadd.f32 0.0, %v2624
    %v2626 = vpop.f32.mrf.mxu0
    %v2627 = vadd.f32 0.0, %v2626
    %v2628 = vpop.f32.mrf.mxu0
    %v2629 = vadd.f32 0.0, %v2628
    %v2630 = vpop.f32.mrf.mxu0
    %v2631 = vadd.f32 0.0, %v2630
    %2632 = vmatprep.mubr.bf16.mxu0 0
    %2633 = vmatmul.mubr.bf16.gmra.mxu0 %v370
    %v2634 = vpop.f32.mrf.mxu0
    %v2635 = vadd.f32 0.0, %v2634
    %v2636 = vpop.f32.mrf.mxu0
    %v2637 = vadd.f32 0.0, %v2636
    %v2638 = vpop.f32.mrf.mxu0
    %v2639 = vadd.f32 0.0, %v2638
    %v2640 = vpop.f32.mrf.mxu0
    %v2641 = vadd.f32 0.0, %v2640
    %2642 = vmatprep.mubr.bf16.mxu0 0
    %2643 = vmatmul.mubr.bf16.gmra.mxu0 %v373
    %v2644 = vpop.f32.mrf.mxu0
    %v2645 = vadd.f32 0.0, %v2644
    %v2646 = vpop.f32.mrf.mxu0
    %v2647 = vadd.f32 0.0, %v2646
    %v2648 = vpop.f32.mrf.mxu0
    %v2649 = vadd.f32 0.0, %v2648
    %v2650 = vpop.f32.mrf.mxu0
    %v2651 = vadd.f32 0.0, %v2650
    %2652 = vmatprep.mubr.bf16.mxu0 0
    %2653 = vmatmul.mubr.bf16.gmra.mxu0 %v1588
    %v2654 = vpop.f32.mrf.mxu0
    %v2655 = vadd.f32 0.0, %v2654
    %v2656 = vpop.f32.mrf.mxu0
    %v2657 = vadd.f32 0.0, %v2656
    %v2658 = vpop.f32.mrf.mxu0
    %v2659 = vadd.f32 0.0, %v2658
    %v2660 = vpop.f32.mrf.mxu0
    %v2661 = vadd.f32 0.0, %v2660
    %2662 = vmatprep.mubr.bf16.mxu0 0
    %2663 = vmatmul.mubr.bf16.gmra.mxu0 %v2392
    %v2664 = vpop.f32.mrf.mxu0
    %v2665 = vadd.f32 0.0, %v2664
    %v2666 = vpop.f32.mrf.mxu0
    %v2667 = vadd.f32 0.0, %v2666
    %v2668 = vpop.f32.mrf.mxu0
    %v2669 = vadd.f32 0.0, %v2668
    %v2670 = vpop.f32.mrf.mxu0
    %v2671 = vadd.f32 0.0, %v2670
    %2672 = vdwg.mxu0
    %s2673 = scalar_lea.vmem %s2, 96
    %v2674 = vld [vmem:[%s2673] sm:$0xff]
    %v2675 = vld [vmem:[%s2673 + $0x8] sm:$0xff]
    %v2676 = vld [vmem:[%s2673 + $0x10] sm:$0xff]
    %v2677 = vld [vmem:[%s2673 + $0x18] sm:$0x33]
    %v2682 = vunpack.c.l.b16 %v2674
    %v2683 = vunpack.c.h.b16 %v2674
    %v2684 = vunpack.c.l.b16 %v2675
    %v2685 = vunpack.c.h.b16 %v2675
    %v2686 = vunpack.c.l.b16 %v2676
    %v2687 = vunpack.c.h.b16 %v2676
    %v2688 = vunpack.c.l.b16 %v2677
    %v2689 = vunpack.c.h.b16 %v2677
    %v2690 = vpack.c.b16 %v2684, %v2682
    %v2691 = vpack.c.b16 %v2685, %v2683
    %v2692 = vpack.c.b16 %v2688, %v2686
    %v2693 = vpack.c.b16 %v2689, %v2687
    %v2697 = vsel %vm375, %v2692, 0
    %v2700 = vsel %vm375, %v2693, 0
    %2702 = vmatprep.subr.bf16.mxu0 0
    %2703 = vmatpush1.bf16.msra.mxu0 0
    %2704 = vmatprep.subr.bf16.mxu0 0
    %2705 = vmatpush1.bf16.msra.mxu0 0
    %2706 = vmatprep.subr.bf16.mxu0 0
    %2707 = vmatpush1.bf16.msra.mxu0 0
    %2708 = vmatprep.subr.bf16.mxu0 0
    %2709 = vmatpush1.bf16.msra.mxu0 0
    %2710 = vmatprep.subr.bf16.mxu0 0
    %2711 = vmatpush1.bf16.msra.mxu0 0
    %2712 = vmatprep.subr.bf16.mxu0 0
    %2713 = vmatpush1.bf16.msra.mxu0 0
    %2714 = vmatprep.subr.bf16.mxu0 %v2700
    %2715 = vmatpush1.bf16.msra.mxu0 %v2697
    %2716 = vmatprep.subr.bf16.mxu0 %v2691
    %2717 = vmatpush1.bf16.msra.mxu0 %v2690
    %2718 = vmatprep.subr.bf16.mxu0 0
    %2719 = vmatpush2.bf16.msra.mxu0 0
    %2720 = vmatprep.subr.bf16.mxu0 0
    %2721 = vmatpush2.bf16.msra.mxu0 0
    %2722 = vmatprep.subr.bf16.mxu0 0
    %2723 = vmatpush2.bf16.msra.mxu0 0
    %2724 = vmatprep.subr.bf16.mxu0 0
    %2725 = vmatpush2.bf16.msra.mxu0 0
    %2726 = vmatprep.subr.bf16.mxu0 0
    %2727 = vmatpush2.bf16.msra.mxu0 0
    %2728 = vmatprep.subr.bf16.mxu0 0
    %2729 = vmatpush2.bf16.msra.mxu0 0
    %2730 = vmatprep.subr.bf16.mxu0 0
    %2731 = vmatpush2.bf16.msra.mxu0 0
    %2732 = vmatprep.subr.bf16.mxu0 0
    %2733 = vmatpush2.bf16.msra.mxu0 0
    %2734 = vmatprep.mubr.bf16.mxu0 0
    %2735 = vmatmul.mubr.bf16.gmra.mxu0 %v310
    %v2736 = vpop.f32.mrf.mxu0
    %v2737 = vadd.f32 0.0, %v2736
    %v2738 = vpop.f32.mrf.mxu0
    %v2739 = vadd.f32 0.0, %v2738
    %v2740 = vpop.f32.mrf.mxu0
    %v2741 = vadd.f32 0.0, %v2740
    %v2742 = vpop.f32.mrf.mxu0
    %v2743 = vadd.f32 0.0, %v2742
    %2744 = vmatprep.mubr.bf16.mxu0 0
    %2745 = vmatmul.mubr.bf16.gmra.mxu0 %v313
    %v2746 = vpop.f32.mrf.mxu0
    %v2747 = vadd.f32 0.0, %v2746
    %v2748 = vpop.f32.mrf.mxu0
    %v2749 = vadd.f32 0.0, %v2748
    %v2750 = vpop.f32.mrf.mxu0
    %v2751 = vadd.f32 0.0, %v2750
    %v2752 = vpop.f32.mrf.mxu0
    %v2753 = vadd.f32 0.0, %v2752
    %2754 = vmatprep.mubr.bf16.mxu0 0
    %2755 = vmatmul.mubr.bf16.gmra.mxu0 %v316
    %v2756 = vpop.f32.mrf.mxu0
    %v2757 = vadd.f32 0.0, %v2756
    %v2758 = vpop.f32.mrf.mxu0
    %v2759 = vadd.f32 0.0, %v2758
    %v2760 = vpop.f32.mrf.mxu0
    %v2761 = vadd.f32 0.0, %v2760
    %v2762 = vpop.f32.mrf.mxu0
    %v2763 = vadd.f32 0.0, %v2762
    %2764 = vmatprep.mubr.bf16.mxu0 0
    %2765 = vmatmul.mubr.bf16.gmra.mxu0 %v319
    %v2766 = vpop.f32.mrf.mxu0
    %v2767 = vadd.f32 0.0, %v2766
    %v2768 = vpop.f32.mrf.mxu0
    %v2769 = vadd.f32 0.0, %v2768
    %v2770 = vpop.f32.mrf.mxu0
    %v2771 = vadd.f32 0.0, %v2770
    %v2772 = vpop.f32.mrf.mxu0
    %v2773 = vadd.f32 0.0, %v2772
    %2774 = vmatprep.mubr.bf16.mxu0 0
    %2775 = vmatmul.mubr.bf16.gmra.mxu0 %v322
    %v2776 = vpop.f32.mrf.mxu0
    %v2777 = vadd.f32 0.0, %v2776
    %v2778 = vpop.f32.mrf.mxu0
    %v2779 = vadd.f32 0.0, %v2778
    %v2780 = vpop.f32.mrf.mxu0
    %v2781 = vadd.f32 0.0, %v2780
    %v2782 = vpop.f32.mrf.mxu0
    %v2783 = vadd.f32 0.0, %v2782
    %2784 = vmatprep.mubr.bf16.mxu0 0
    %2785 = vmatmul.mubr.bf16.gmra.mxu0 %v325
    %v2786 = vpop.f32.mrf.mxu0
    %v2787 = vadd.f32 0.0, %v2786
    %v2788 = vpop.f32.mrf.mxu0
    %v2789 = vadd.f32 0.0, %v2788
    %v2790 = vpop.f32.mrf.mxu0
    %v2791 = vadd.f32 0.0, %v2790
    %v2792 = vpop.f32.mrf.mxu0
    %v2793 = vadd.f32 0.0, %v2792
    %2794 = vmatprep.mubr.bf16.mxu0 0
    %2795 = vmatmul.mubr.bf16.gmra.mxu0 %v328
    %v2796 = vpop.f32.mrf.mxu0
    %v2797 = vadd.f32 0.0, %v2796
    %v2798 = vpop.f32.mrf.mxu0
    %v2799 = vadd.f32 0.0, %v2798
    %v2800 = vpop.f32.mrf.mxu0
    %v2801 = vadd.f32 0.0, %v2800
    %v2802 = vpop.f32.mrf.mxu0
    %v2803 = vadd.f32 0.0, %v2802
    %2804 = vmatprep.mubr.bf16.mxu0 0
    %2805 = vmatmul.mubr.bf16.gmra.mxu0 %v331
    %v2806 = vpop.f32.mrf.mxu0
    %v2807 = vadd.f32 0.0, %v2806
    %v2808 = vpop.f32.mrf.mxu0
    %v2809 = vadd.f32 0.0, %v2808
    %v2810 = vpop.f32.mrf.mxu0
    %v2811 = vadd.f32 0.0, %v2810
    %v2812 = vpop.f32.mrf.mxu0
    %v2813 = vadd.f32 0.0, %v2812
    %2814 = vmatprep.mubr.bf16.mxu0 0
    %2815 = vmatmul.mubr.bf16.gmra.mxu0 %v334
    %v2816 = vpop.f32.mrf.mxu0
    %v2817 = vadd.f32 0.0, %v2816
    %v2818 = vpop.f32.mrf.mxu0
    %v2819 = vadd.f32 0.0, %v2818
    %v2820 = vpop.f32.mrf.mxu0
    %v2821 = vadd.f32 0.0, %v2820
    %v2822 = vpop.f32.mrf.mxu0
    %v2823 = vadd.f32 0.0, %v2822
    %2824 = vmatprep.mubr.bf16.mxu0 0
    %2825 = vmatmul.mubr.bf16.gmra.mxu0 %v337
    %v2826 = vpop.f32.mrf.mxu0
    %v2827 = vadd.f32 0.0, %v2826
    %v2828 = vpop.f32.mrf.mxu0
    %v2829 = vadd.f32 0.0, %v2828
    %v2830 = vpop.f32.mrf.mxu0
    %v2831 = vadd.f32 0.0, %v2830
    %v2832 = vpop.f32.mrf.mxu0
    %v2833 = vadd.f32 0.0, %v2832
    %2834 = vmatprep.mubr.bf16.mxu0 0
    %2835 = vmatmul.mubr.bf16.gmra.mxu0 %v340
    %v2836 = vpop.f32.mrf.mxu0
    %v2837 = vadd.f32 0.0, %v2836
    %v2838 = vpop.f32.mrf.mxu0
    %v2839 = vadd.f32 0.0, %v2838
    %v2840 = vpop.f32.mrf.mxu0
    %v2841 = vadd.f32 0.0, %v2840
    %v2842 = vpop.f32.mrf.mxu0
    %v2843 = vadd.f32 0.0, %v2842
    %2844 = vmatprep.mubr.bf16.mxu0 0
    %2845 = vmatmul.mubr.bf16.gmra.mxu0 %v343
    %v2846 = vpop.f32.mrf.mxu0
    %v2847 = vadd.f32 0.0, %v2846
    %v2848 = vpop.f32.mrf.mxu0
    %v2849 = vadd.f32 0.0, %v2848
    %v2850 = vpop.f32.mrf.mxu0
    %v2851 = vadd.f32 0.0, %v2850
    %v2852 = vpop.f32.mrf.mxu0
    %v2853 = vadd.f32 0.0, %v2852
    %2854 = vmatprep.mubr.bf16.mxu0 0
    %2855 = vmatmul.mubr.bf16.gmra.mxu0 %v346
    %v2856 = vpop.f32.mrf.mxu0
    %v2857 = vadd.f32 0.0, %v2856
    %v2858 = vpop.f32.mrf.mxu0
    %v2859 = vadd.f32 0.0, %v2858
    %v2860 = vpop.f32.mrf.mxu0
    %v2861 = vadd.f32 0.0, %v2860
    %v2862 = vpop.f32.mrf.mxu0
    %v2863 = vadd.f32 0.0, %v2862
    %2864 = vmatprep.mubr.bf16.mxu0 0
    %2865 = vmatmul.mubr.bf16.gmra.mxu0 %v349
    %v2866 = vpop.f32.mrf.mxu0
    %v2867 = vadd.f32 0.0, %v2866
    %v2868 = vpop.f32.mrf.mxu0
    %v2869 = vadd.f32 0.0, %v2868
    %v2870 = vpop.f32.mrf.mxu0
    %v2871 = vadd.f32 0.0, %v2870
    %v2872 = vpop.f32.mrf.mxu0
    %v2873 = vadd.f32 0.0, %v2872
    %2874 = vmatprep.mubr.bf16.mxu0 0
    %2875 = vmatmul.mubr.bf16.gmra.mxu0 %v352
    %v2876 = vpop.f32.mrf.mxu0
    %v2877 = vadd.f32 0.0, %v2876
    %v2878 = vpop.f32.mrf.mxu0
    %v2879 = vadd.f32 0.0, %v2878
    %v2880 = vpop.f32.mrf.mxu0
    %v2881 = vadd.f32 0.0, %v2880
    %v2882 = vpop.f32.mrf.mxu0
    %v2883 = vadd.f32 0.0, %v2882
    %2884 = vmatprep.mubr.bf16.mxu0 0
    %2885 = vmatmul.mubr.bf16.gmra.mxu0 %v355
    %v2886 = vpop.f32.mrf.mxu0
    %v2887 = vadd.f32 0.0, %v2886
    %v2888 = vpop.f32.mrf.mxu0
    %v2889 = vadd.f32 0.0, %v2888
    %v2890 = vpop.f32.mrf.mxu0
    %v2891 = vadd.f32 0.0, %v2890
    %v2892 = vpop.f32.mrf.mxu0
    %v2893 = vadd.f32 0.0, %v2892
    %2894 = vmatprep.mubr.bf16.mxu0 0
    %2895 = vmatmul.mubr.bf16.gmra.mxu0 %v358
    %v2896 = vpop.f32.mrf.mxu0
    %v2897 = vadd.f32 0.0, %v2896
    %v2898 = vpop.f32.mrf.mxu0
    %v2899 = vadd.f32 0.0, %v2898
    %v2900 = vpop.f32.mrf.mxu0
    %v2901 = vadd.f32 0.0, %v2900
    %v2902 = vpop.f32.mrf.mxu0
    %v2903 = vadd.f32 0.0, %v2902
    %2904 = vmatprep.mubr.bf16.mxu0 0
    %2905 = vmatmul.mubr.bf16.gmra.mxu0 %v361
    %v2906 = vpop.f32.mrf.mxu0
    %v2907 = vadd.f32 0.0, %v2906
    %v2908 = vpop.f32.mrf.mxu0
    %v2909 = vadd.f32 0.0, %v2908
    %v2910 = vpop.f32.mrf.mxu0
    %v2911 = vadd.f32 0.0, %v2910
    %v2912 = vpop.f32.mrf.mxu0
    %v2913 = vadd.f32 0.0, %v2912
    %2914 = vmatprep.mubr.bf16.mxu0 0
    %2915 = vmatmul.mubr.bf16.gmra.mxu0 %v364
    %v2916 = vpop.f32.mrf.mxu0
    %v2917 = vadd.f32 0.0, %v2916
    %v2918 = vpop.f32.mrf.mxu0
    %v2919 = vadd.f32 0.0, %v2918
    %v2920 = vpop.f32.mrf.mxu0
    %v2921 = vadd.f32 0.0, %v2920
    %v2922 = vpop.f32.mrf.mxu0
    %v2923 = vadd.f32 0.0, %v2922
    %2924 = vmatprep.mubr.bf16.mxu0 0
    %2925 = vmatmul.mubr.bf16.gmra.mxu0 %v367
    %v2926 = vpop.f32.mrf.mxu0
    %v2927 = vadd.f32 0.0, %v2926
    %v2928 = vpop.f32.mrf.mxu0
    %v2929 = vadd.f32 0.0, %v2928
    %v2930 = vpop.f32.mrf.mxu0
    %v2931 = vadd.f32 0.0, %v2930
    %v2932 = vpop.f32.mrf.mxu0
    %v2933 = vadd.f32 0.0, %v2932
    %2934 = vmatprep.mubr.bf16.mxu0 0
    %2935 = vmatmul.mubr.bf16.gmra.mxu0 %v370
    %v2936 = vpop.f32.mrf.mxu0
    %v2937 = vadd.f32 0.0, %v2936
    %v2938 = vpop.f32.mrf.mxu0
    %v2939 = vadd.f32 0.0, %v2938
    %v2940 = vpop.f32.mrf.mxu0
    %v2941 = vadd.f32 0.0, %v2940
    %v2942 = vpop.f32.mrf.mxu0
    %v2943 = vadd.f32 0.0, %v2942
    %2944 = vmatprep.mubr.bf16.mxu0 0
    %2945 = vmatmul.mubr.bf16.gmra.mxu0 %v373
    %v2946 = vpop.f32.mrf.mxu0
    %v2947 = vadd.f32 0.0, %v2946
    %v2948 = vpop.f32.mrf.mxu0
    %v2949 = vadd.f32 0.0, %v2948
    %v2950 = vpop.f32.mrf.mxu0
    %v2951 = vadd.f32 0.0, %v2950
    %v2952 = vpop.f32.mrf.mxu0
    %v2953 = vadd.f32 0.0, %v2952
    %2954 = vmatprep.mubr.bf16.mxu0 0
    %2955 = vmatmul.mubr.bf16.gmra.mxu0 %v1588
    %v2956 = vpop.f32.mrf.mxu0
    %v2957 = vadd.f32 0.0, %v2956
    %v2958 = vpop.f32.mrf.mxu0
    %v2959 = vadd.f32 0.0, %v2958
    %v2960 = vpop.f32.mrf.mxu0
    %v2961 = vadd.f32 0.0, %v2960
    %v2962 = vpop.f32.mrf.mxu0
    %v2963 = vadd.f32 0.0, %v2962
    %2964 = vmatprep.mubr.bf16.mxu0 0
    %2965 = vmatmul.mubr.bf16.gmra.mxu0 %v2392
    %v2966 = vpop.f32.mrf.mxu0
    %v2967 = vadd.f32 0.0, %v2966
    %v2968 = vpop.f32.mrf.mxu0
    %v2969 = vadd.f32 0.0, %v2968
    %v2970 = vpop.f32.mrf.mxu0
    %v2971 = vadd.f32 0.0, %v2970
    %v2972 = vpop.f32.mrf.mxu0
    %v2973 = vadd.f32 0.0, %v2972
    %2974 = vdwg.mxu0
    %v2975 = vadd.f32 %v2171, %v2435
    %v2976 = vadd.f32 %v2172, %v2437
    %v2977 = vadd.f32 %v2173, %v2439
    %v2978 = vadd.f32 %v2174, %v2441
    %v2979 = vadd.f32 %v2175, %v2445
    %v2980 = vadd.f32 %v2176, %v2447
    %v2981 = vadd.f32 %v2177, %v2449
    %v2982 = vadd.f32 %v2178, %v2451
    %v2983 = vadd.f32 %v2179, %v2455
    %v2984 = vadd.f32 %v2180, %v2457
    %v2985 = vadd.f32 %v2181, %v2459
    %v2986 = vadd.f32 %v2182, %v2461
    %v2987 = vadd.f32 %v2183, %v2465
    %v2988 = vadd.f32 %v2184, %v2467
    %v2989 = vadd.f32 %v2185, %v2469
    %v2990 = vadd.f32 %v2186, %v2471
    %v2991 = vadd.f32 %v2187, %v2475
    %v2992 = vadd.f32 %v2188, %v2477
    %v2993 = vadd.f32 %v2189, %v2479
    %v2994 = vadd.f32 %v2190, %v2481
    %v2995 = vadd.f32 %v2191, %v2485
    %v2996 = vadd.f32 %v2192, %v2487
    %v2997 = vadd.f32 %v2193, %v2489
    %v2998 = vadd.f32 %v2194, %v2491
    %v2999 = vadd.f32 %v2195, %v2495
    %v3000 = vadd.f32 %v2196, %v2497
    %v3001 = vadd.f32 %v2197, %v2499
    %v3002 = vadd.f32 %v2198, %v2501
    %v3003 = vadd.f32 %v2199, %v2505
    %v3004 = vadd.f32 %v2200, %v2507
    %v3005 = vadd.f32 %v2201, %v2509
    %v3006 = vadd.f32 %v2202, %v2511
    %v3007 = vadd.f32 %v2203, %v2515
    %v3008 = vadd.f32 %v2204, %v2517
    %v3009 = vadd.f32 %v2205, %v2519
    %v3010 = vadd.f32 %v2206, %v2521
    %v3011 = vadd.f32 %v2207, %v2525
    %v3012 = vadd.f32 %v2208, %v2527
    %v3013 = vadd.f32 %v2209, %v2529
    %v3014 = vadd.f32 %v2210, %v2531
    %v3015 = vadd.f32 %v2211, %v2535
    %v3016 = vadd.f32 %v2212, %v2537
    %v3017 = vadd.f32 %v2213, %v2539
    %v3018 = vadd.f32 %v2214, %v2541
    %v3019 = vadd.f32 %v2215, %v2545
    %v3020 = vadd.f32 %v2216, %v2547
    %v3021 = vadd.f32 %v2217, %v2549
    %v3022 = vadd.f32 %v2218, %v2551
    %v3023 = vadd.f32 %v2219, %v2555
    %v3024 = vadd.f32 %v2220, %v2557
    %v3025 = vadd.f32 %v2221, %v2559
    %v3026 = vadd.f32 %v2222, %v2561
    %v3027 = vadd.f32 %v2223, %v2565
    %v3028 = vadd.f32 %v2224, %v2567
    %v3029 = vadd.f32 %v2225, %v2569
    %v3030 = vadd.f32 %v2226, %v2571
    %v3031 = vadd.f32 %v2227, %v2575
    %v3032 = vadd.f32 %v2228, %v2577
    %v3033 = vadd.f32 %v2229, %v2579
    %v3034 = vadd.f32 %v2230, %v2581
    %v3035 = vadd.f32 %v2231, %v2585
    %v3036 = vadd.f32 %v2232, %v2587
    %v3037 = vadd.f32 %v2233, %v2589
    %v3038 = vadd.f32 %v2234, %v2591
    %v3039 = vadd.f32 %v2235, %v2595
    %v3040 = vadd.f32 %v2236, %v2597
    %v3041 = vadd.f32 %v2237, %v2599
    %v3042 = vadd.f32 %v2238, %v2601
    %v3043 = vadd.f32 %v2239, %v2605
    %v3044 = vadd.f32 %v2240, %v2607
    %v3045 = vadd.f32 %v2241, %v2609
    %v3046 = vadd.f32 %v2242, %v2611
    %v3047 = vadd.f32 %v2243, %v2615
    %v3048 = vadd.f32 %v2244, %v2617
    %v3049 = vadd.f32 %v2245, %v2619
    %v3050 = vadd.f32 %v2246, %v2621
    %v3051 = vadd.f32 %v2247, %v2625
    %v3052 = vadd.f32 %v2248, %v2627
    %v3053 = vadd.f32 %v2249, %v2629
    %v3054 = vadd.f32 %v2250, %v2631
    %v3055 = vadd.f32 %v2251, %v2635
    %v3056 = vadd.f32 %v2252, %v2637
    %v3057 = vadd.f32 %v2253, %v2639
    %v3058 = vadd.f32 %v2254, %v2641
    %v3059 = vadd.f32 %v2255, %v2645
    %v3060 = vadd.f32 %v2256, %v2647
    %v3061 = vadd.f32 %v2257, %v2649
    %v3062 = vadd.f32 %v2258, %v2651
    %v3063 = vadd.f32 %v2259, %v2655
    %v3064 = vadd.f32 %v2260, %v2657
    %v3065 = vadd.f32 %v2261, %v2659
    %v3066 = vadd.f32 %v2262, %v2661
    %v3067 = vadd.f32 %v2263, %v2665
    %v3068 = vadd.f32 %v2264, %v2667
    %v3069 = vadd.f32 %v2265, %v2669
    %v3070 = vadd.f32 %v2266, %v2671
    %v3071 = vadd.f32 %v2267, %v2737
    %v3072 = vadd.f32 %v2268, %v2739
    %v3073 = vadd.f32 %v2269, %v2741
    %v3074 = vadd.f32 %v2270, %v2743
    %v3075 = vadd.f32 %v2271, %v2747
    %v3076 = vadd.f32 %v2272, %v2749
    %v3077 = vadd.f32 %v2273, %v2751
    %v3078 = vadd.f32 %v2274, %v2753
    %v3079 = vadd.f32 %v2275, %v2757
    %v3080 = vadd.f32 %v2276, %v2759
    %v3081 = vadd.f32 %v2277, %v2761
    %v3082 = vadd.f32 %v2278, %v2763
    %v3083 = vadd.f32 %v2279, %v2767
    %v3084 = vadd.f32 %v2280, %v2769
    %v3085 = vadd.f32 %v2281, %v2771
    %v3086 = vadd.f32 %v2282, %v2773
    %v3087 = vadd.f32 %v2283, %v2777
    %v3088 = vadd.f32 %v2284, %v2779
    %v3089 = vadd.f32 %v2285, %v2781
    %v3090 = vadd.f32 %v2286, %v2783
    %v3091 = vadd.f32 %v2287, %v2787
    %v3092 = vadd.f32 %v2288, %v2789
    %v3093 = vadd.f32 %v2289, %v2791
    %v3094 = vadd.f32 %v2290, %v2793
    %v3095 = vadd.f32 %v2291, %v2797
    %v3096 = vadd.f32 %v2292, %v2799
    %v3097 = vadd.f32 %v2293, %v2801
    %v3098 = vadd.f32 %v2294, %v2803
    %v3099 = vadd.f32 %v2295, %v2807
    %v3100 = vadd.f32 %v2296, %v2809
    %v3101 = vadd.f32 %v2297, %v2811
    %v3102 = vadd.f32 %v2298, %v2813
    %v3103 = vadd.f32 %v2299, %v2817
    %v3104 = vadd.f32 %v2300, %v2819
    %v3105 = vadd.f32 %v2301, %v2821
    %v3106 = vadd.f32 %v2302, %v2823
    %v3107 = vadd.f32 %v2303, %v2827
    %v3108 = vadd.f32 %v2304, %v2829
    %v3109 = vadd.f32 %v2305, %v2831
    %v3110 = vadd.f32 %v2306, %v2833
    %v3111 = vadd.f32 %v2307, %v2837
    %v3112 = vadd.f32 %v2308, %v2839
    %v3113 = vadd.f32 %v2309, %v2841
    %v3114 = vadd.f32 %v2310, %v2843
    %v3115 = vadd.f32 %v2311, %v2847
    %v3116 = vadd.f32 %v2312, %v2849
    %v3117 = vadd.f32 %v2313, %v2851
    %v3118 = vadd.f32 %v2314, %v2853
    %v3119 = vadd.f32 %v2315, %v2857
    %v3120 = vadd.f32 %v2316, %v2859
    %v3121 = vadd.f32 %v2317, %v2861
    %v3122 = vadd.f32 %v2318, %v2863
    %v3123 = vadd.f32 %v2319, %v2867
    %v3124 = vadd.f32 %v2320, %v2869
    %v3125 = vadd.f32 %v2321, %v2871
    %v3126 = vadd.f32 %v2322, %v2873
    %v3127 = vadd.f32 %v2323, %v2877
    %v3128 = vadd.f32 %v2324, %v2879
    %v3129 = vadd.f32 %v2325, %v2881
    %v3130 = vadd.f32 %v2326, %v2883
    %v3131 = vadd.f32 %v2327, %v2887
    %v3132 = vadd.f32 %v2328, %v2889
    %v3133 = vadd.f32 %v2329, %v2891
    %v3134 = vadd.f32 %v2330, %v2893
    %v3135 = vadd.f32 %v2331, %v2897
    %v3136 = vadd.f32 %v2332, %v2899
    %v3137 = vadd.f32 %v2333, %v2901
    %v3138 = vadd.f32 %v2334, %v2903
    %v3139 = vadd.f32 %v2335, %v2907
    %v3140 = vadd.f32 %v2336, %v2909
    %v3141 = vadd.f32 %v2337, %v2911
    %v3142 = vadd.f32 %v2338, %v2913
    %v3143 = vadd.f32 %v2339, %v2917
    %v3144 = vadd.f32 %v2340, %v2919
    %v3145 = vadd.f32 %v2341, %v2921
    %v3146 = vadd.f32 %v2342, %v2923
    %v3147 = vadd.f32 %v2343, %v2927
    %v3148 = vadd.f32 %v2344, %v2929
    %v3149 = vadd.f32 %v2345, %v2931
    %v3150 = vadd.f32 %v2346, %v2933
    %v3151 = vadd.f32 %v2347, %v2937
    %v3152 = vadd.f32 %v2348, %v2939
    %v3153 = vadd.f32 %v2349, %v2941
    %v3154 = vadd.f32 %v2350, %v2943
    %v3155 = vadd.f32 %v2351, %v2947
    %v3156 = vadd.f32 %v2352, %v2949
    %v3157 = vadd.f32 %v2353, %v2951
    %v3158 = vadd.f32 %v2354, %v2953
    %v3159 = vadd.f32 %v2355, %v2957
    %v3160 = vadd.f32 %v2356, %v2959
    %v3161 = vadd.f32 %v2357, %v2961
    %v3162 = vadd.f32 %v2358, %v2963
    %v3163 = vadd.f32 %v2359, %v2967
    %v3164 = vadd.f32 %v2360, %v2969
    %v3165 = vadd.f32 %v2361, %v2971
    %v3166 = vadd.f32 %v2362, %v2973
    %s3167 = scalar_lea.vmem %s1, 128
    %v3168 = vld [vmem:[%s3167] sm:$0xff]
    %v3169 = vld [vmem:[%s3167 + $0x8] sm:$0xff]
    %v3170 = vld [vmem:[%s3167 + $0x10] sm:$0xff]
    %v3171 = vld [vmem:[%s3167 + $0x18] sm:$0x33]
    %v3174 = vunpack.c.l.b16 %v148
    %v3175 = vunpack.c.l.b16 %v149
    %v3176 = vpack.c.b16 %v3175, %v3174
    %v3181 = vunpack.c.l.b16 %v3168
    %v3182 = vunpack.c.h.b16 %v3168
    %v3183 = vunpack.c.l.b16 %v3169
    %v3184 = vunpack.c.h.b16 %v3169
    %v3185 = vunpack.c.l.b16 %v3170
    %v3186 = vunpack.c.h.b16 %v3170
    %v3187 = vunpack.c.l.b16 %v3171
    %v3188 = vunpack.c.h.b16 %v3171
    %v3189 = vpack.c.b16 %v3183, %v3181
    %v3190 = vpack.c.b16 %v3184, %v3182
    %v3191 = vpack.c.b16 %v3187, %v3185
    %v3192 = vpack.c.b16 %v3188, %v3186
    %v3196 = vsel %vm302, %v3176, 0
    %v3199 = vsel %vm375, %v3191, 0
    %v3202 = vsel %vm375, %v3192, 0
    %3204 = vmatprep.subr.bf16.mxu0 0
    %3205 = vmatpush1.bf16.msra.mxu0 0
    %3206 = vmatprep.subr.bf16.mxu0 0
    %3207 = vmatpush1.bf16.msra.mxu0 0
    %3208 = vmatprep.subr.bf16.mxu0 0
    %3209 = vmatpush1.bf16.msra.mxu0 0
    %3210 = vmatprep.subr.bf16.mxu0 0
    %3211 = vmatpush1.bf16.msra.mxu0 0
    %3212 = vmatprep.subr.bf16.mxu0 0
    %3213 = vmatpush1.bf16.msra.mxu0 0
    %3214 = vmatprep.subr.bf16.mxu0 0
    %3215 = vmatpush1.bf16.msra.mxu0 0
    %3216 = vmatprep.subr.bf16.mxu0 %v3202
    %3217 = vmatpush1.bf16.msra.mxu0 %v3199
    %3218 = vmatprep.subr.bf16.mxu0 %v3190
    %3219 = vmatpush1.bf16.msra.mxu0 %v3189
    %3220 = vmatprep.subr.bf16.mxu0 0
    %3221 = vmatpush2.bf16.msra.mxu0 0
    %3222 = vmatprep.subr.bf16.mxu0 0
    %3223 = vmatpush2.bf16.msra.mxu0 0
    %3224 = vmatprep.subr.bf16.mxu0 0
    %3225 = vmatpush2.bf16.msra.mxu0 0
    %3226 = vmatprep.subr.bf16.mxu0 0
    %3227 = vmatpush2.bf16.msra.mxu0 0
    %3228 = vmatprep.subr.bf16.mxu0 0
    %3229 = vmatpush2.bf16.msra.mxu0 0
    %3230 = vmatprep.subr.bf16.mxu0 0
    %3231 = vmatpush2.bf16.msra.mxu0 0
    %3232 = vmatprep.subr.bf16.mxu0 0
    %3233 = vmatpush2.bf16.msra.mxu0 0
    %3234 = vmatprep.subr.bf16.mxu0 0
    %3235 = vmatpush2.bf16.msra.mxu0 0
    %3236 = vmatprep.mubr.bf16.mxu0 0
    %3237 = vmatmul.mubr.bf16.gmra.mxu0 %v313
    %v3238 = vpop.f32.mrf.mxu0
    %v3239 = vadd.f32 0.0, %v3238
    %v3240 = vpop.f32.mrf.mxu0
    %v3241 = vadd.f32 0.0, %v3240
    %v3242 = vpop.f32.mrf.mxu0
    %v3243 = vadd.f32 0.0, %v3242
    %v3244 = vpop.f32.mrf.mxu0
    %v3245 = vadd.f32 0.0, %v3244
    %3246 = vmatprep.mubr.bf16.mxu0 0
    %3247 = vmatmul.mubr.bf16.gmra.mxu0 %v316
    %v3248 = vpop.f32.mrf.mxu0
    %v3249 = vadd.f32 0.0, %v3248
    %v3250 = vpop.f32.mrf.mxu0
    %v3251 = vadd.f32 0.0, %v3250
    %v3252 = vpop.f32.mrf.mxu0
    %v3253 = vadd.f32 0.0, %v3252
    %v3254 = vpop.f32.mrf.mxu0
    %v3255 = vadd.f32 0.0, %v3254
    %3256 = vmatprep.mubr.bf16.mxu0 0
    %3257 = vmatmul.mubr.bf16.gmra.mxu0 %v319
    %v3258 = vpop.f32.mrf.mxu0
    %v3259 = vadd.f32 0.0, %v3258
    %v3260 = vpop.f32.mrf.mxu0
    %v3261 = vadd.f32 0.0, %v3260
    %v3262 = vpop.f32.mrf.mxu0
    %v3263 = vadd.f32 0.0, %v3262
    %v3264 = vpop.f32.mrf.mxu0
    %v3265 = vadd.f32 0.0, %v3264
    %3266 = vmatprep.mubr.bf16.mxu0 0
    %3267 = vmatmul.mubr.bf16.gmra.mxu0 %v322
    %v3268 = vpop.f32.mrf.mxu0
    %v3269 = vadd.f32 0.0, %v3268
    %v3270 = vpop.f32.mrf.mxu0
    %v3271 = vadd.f32 0.0, %v3270
    %v3272 = vpop.f32.mrf.mxu0
    %v3273 = vadd.f32 0.0, %v3272
    %v3274 = vpop.f32.mrf.mxu0
    %v3275 = vadd.f32 0.0, %v3274
    %3276 = vmatprep.mubr.bf16.mxu0 0
    %3277 = vmatmul.mubr.bf16.gmra.mxu0 %v325
    %v3278 = vpop.f32.mrf.mxu0
    %v3279 = vadd.f32 0.0, %v3278
    %v3280 = vpop.f32.mrf.mxu0
    %v3281 = vadd.f32 0.0, %v3280
    %v3282 = vpop.f32.mrf.mxu0
    %v3283 = vadd.f32 0.0, %v3282
    %v3284 = vpop.f32.mrf.mxu0
    %v3285 = vadd.f32 0.0, %v3284
    %3286 = vmatprep.mubr.bf16.mxu0 0
    %3287 = vmatmul.mubr.bf16.gmra.mxu0 %v328
    %v3288 = vpop.f32.mrf.mxu0
    %v3289 = vadd.f32 0.0, %v3288
    %v3290 = vpop.f32.mrf.mxu0
    %v3291 = vadd.f32 0.0, %v3290
    %v3292 = vpop.f32.mrf.mxu0
    %v3293 = vadd.f32 0.0, %v3292
    %v3294 = vpop.f32.mrf.mxu0
    %v3295 = vadd.f32 0.0, %v3294
    %3296 = vmatprep.mubr.bf16.mxu0 0
    %3297 = vmatmul.mubr.bf16.gmra.mxu0 %v331
    %v3298 = vpop.f32.mrf.mxu0
    %v3299 = vadd.f32 0.0, %v3298
    %v3300 = vpop.f32.mrf.mxu0
    %v3301 = vadd.f32 0.0, %v3300
    %v3302 = vpop.f32.mrf.mxu0
    %v3303 = vadd.f32 0.0, %v3302
    %v3304 = vpop.f32.mrf.mxu0
    %v3305 = vadd.f32 0.0, %v3304
    %3306 = vmatprep.mubr.bf16.mxu0 0
    %3307 = vmatmul.mubr.bf16.gmra.mxu0 %v334
    %v3308 = vpop.f32.mrf.mxu0
    %v3309 = vadd.f32 0.0, %v3308
    %v3310 = vpop.f32.mrf.mxu0
    %v3311 = vadd.f32 0.0, %v3310
    %v3312 = vpop.f32.mrf.mxu0
    %v3313 = vadd.f32 0.0, %v3312
    %v3314 = vpop.f32.mrf.mxu0
    %v3315 = vadd.f32 0.0, %v3314
    %3316 = vmatprep.mubr.bf16.mxu0 0
    %3317 = vmatmul.mubr.bf16.gmra.mxu0 %v337
    %v3318 = vpop.f32.mrf.mxu0
    %v3319 = vadd.f32 0.0, %v3318
    %v3320 = vpop.f32.mrf.mxu0
    %v3321 = vadd.f32 0.0, %v3320
    %v3322 = vpop.f32.mrf.mxu0
    %v3323 = vadd.f32 0.0, %v3322
    %v3324 = vpop.f32.mrf.mxu0
    %v3325 = vadd.f32 0.0, %v3324
    %3326 = vmatprep.mubr.bf16.mxu0 0
    %3327 = vmatmul.mubr.bf16.gmra.mxu0 %v340
    %v3328 = vpop.f32.mrf.mxu0
    %v3329 = vadd.f32 0.0, %v3328
    %v3330 = vpop.f32.mrf.mxu0
    %v3331 = vadd.f32 0.0, %v3330
    %v3332 = vpop.f32.mrf.mxu0
    %v3333 = vadd.f32 0.0, %v3332
    %v3334 = vpop.f32.mrf.mxu0
    %v3335 = vadd.f32 0.0, %v3334
    %3336 = vmatprep.mubr.bf16.mxu0 0
    %3337 = vmatmul.mubr.bf16.gmra.mxu0 %v343
    %v3338 = vpop.f32.mrf.mxu0
    %v3339 = vadd.f32 0.0, %v3338
    %v3340 = vpop.f32.mrf.mxu0
    %v3341 = vadd.f32 0.0, %v3340
    %v3342 = vpop.f32.mrf.mxu0
    %v3343 = vadd.f32 0.0, %v3342
    %v3344 = vpop.f32.mrf.mxu0
    %v3345 = vadd.f32 0.0, %v3344
    %3346 = vmatprep.mubr.bf16.mxu0 0
    %3347 = vmatmul.mubr.bf16.gmra.mxu0 %v346
    %v3348 = vpop.f32.mrf.mxu0
    %v3349 = vadd.f32 0.0, %v3348
    %v3350 = vpop.f32.mrf.mxu0
    %v3351 = vadd.f32 0.0, %v3350
    %v3352 = vpop.f32.mrf.mxu0
    %v3353 = vadd.f32 0.0, %v3352
    %v3354 = vpop.f32.mrf.mxu0
    %v3355 = vadd.f32 0.0, %v3354
    %3356 = vmatprep.mubr.bf16.mxu0 0
    %3357 = vmatmul.mubr.bf16.gmra.mxu0 %v349
    %v3358 = vpop.f32.mrf.mxu0
    %v3359 = vadd.f32 0.0, %v3358
    %v3360 = vpop.f32.mrf.mxu0
    %v3361 = vadd.f32 0.0, %v3360
    %v3362 = vpop.f32.mrf.mxu0
    %v3363 = vadd.f32 0.0, %v3362
    %v3364 = vpop.f32.mrf.mxu0
    %v3365 = vadd.f32 0.0, %v3364
    %3366 = vmatprep.mubr.bf16.mxu0 0
    %3367 = vmatmul.mubr.bf16.gmra.mxu0 %v352
    %v3368 = vpop.f32.mrf.mxu0
    %v3369 = vadd.f32 0.0, %v3368
    %v3370 = vpop.f32.mrf.mxu0
    %v3371 = vadd.f32 0.0, %v3370
    %v3372 = vpop.f32.mrf.mxu0
    %v3373 = vadd.f32 0.0, %v3372
    %v3374 = vpop.f32.mrf.mxu0
    %v3375 = vadd.f32 0.0, %v3374
    %3376 = vmatprep.mubr.bf16.mxu0 0
    %3377 = vmatmul.mubr.bf16.gmra.mxu0 %v355
    %v3378 = vpop.f32.mrf.mxu0
    %v3379 = vadd.f32 0.0, %v3378
    %v3380 = vpop.f32.mrf.mxu0
    %v3381 = vadd.f32 0.0, %v3380
    %v3382 = vpop.f32.mrf.mxu0
    %v3383 = vadd.f32 0.0, %v3382
    %v3384 = vpop.f32.mrf.mxu0
    %v3385 = vadd.f32 0.0, %v3384
    %3386 = vmatprep.mubr.bf16.mxu0 0
    %3387 = vmatmul.mubr.bf16.gmra.mxu0 %v358
    %v3388 = vpop.f32.mrf.mxu0
    %v3389 = vadd.f32 0.0, %v3388
    %v3390 = vpop.f32.mrf.mxu0
    %v3391 = vadd.f32 0.0, %v3390
    %v3392 = vpop.f32.mrf.mxu0
    %v3393 = vadd.f32 0.0, %v3392
    %v3394 = vpop.f32.mrf.mxu0
    %v3395 = vadd.f32 0.0, %v3394
    %3396 = vmatprep.mubr.bf16.mxu0 0
    %3397 = vmatmul.mubr.bf16.gmra.mxu0 %v361
    %v3398 = vpop.f32.mrf.mxu0
    %v3399 = vadd.f32 0.0, %v3398
    %v3400 = vpop.f32.mrf.mxu0
    %v3401 = vadd.f32 0.0, %v3400
    %v3402 = vpop.f32.mrf.mxu0
    %v3403 = vadd.f32 0.0, %v3402
    %v3404 = vpop.f32.mrf.mxu0
    %v3405 = vadd.f32 0.0, %v3404
    %3406 = vmatprep.mubr.bf16.mxu0 0
    %3407 = vmatmul.mubr.bf16.gmra.mxu0 %v364
    %v3408 = vpop.f32.mrf.mxu0
    %v3409 = vadd.f32 0.0, %v3408
    %v3410 = vpop.f32.mrf.mxu0
    %v3411 = vadd.f32 0.0, %v3410
    %v3412 = vpop.f32.mrf.mxu0
    %v3413 = vadd.f32 0.0, %v3412
    %v3414 = vpop.f32.mrf.mxu0
    %v3415 = vadd.f32 0.0, %v3414
    %3416 = vmatprep.mubr.bf16.mxu0 0
    %3417 = vmatmul.mubr.bf16.gmra.mxu0 %v367
    %v3418 = vpop.f32.mrf.mxu0
    %v3419 = vadd.f32 0.0, %v3418
    %v3420 = vpop.f32.mrf.mxu0
    %v3421 = vadd.f32 0.0, %v3420
    %v3422 = vpop.f32.mrf.mxu0
    %v3423 = vadd.f32 0.0, %v3422
    %v3424 = vpop.f32.mrf.mxu0
    %v3425 = vadd.f32 0.0, %v3424
    %3426 = vmatprep.mubr.bf16.mxu0 0
    %3427 = vmatmul.mubr.bf16.gmra.mxu0 %v370
    %v3428 = vpop.f32.mrf.mxu0
    %v3429 = vadd.f32 0.0, %v3428
    %v3430 = vpop.f32.mrf.mxu0
    %v3431 = vadd.f32 0.0, %v3430
    %v3432 = vpop.f32.mrf.mxu0
    %v3433 = vadd.f32 0.0, %v3432
    %v3434 = vpop.f32.mrf.mxu0
    %v3435 = vadd.f32 0.0, %v3434
    %3436 = vmatprep.mubr.bf16.mxu0 0
    %3437 = vmatmul.mubr.bf16.gmra.mxu0 %v373
    %v3438 = vpop.f32.mrf.mxu0
    %v3439 = vadd.f32 0.0, %v3438
    %v3440 = vpop.f32.mrf.mxu0
    %v3441 = vadd.f32 0.0, %v3440
    %v3442 = vpop.f32.mrf.mxu0
    %v3443 = vadd.f32 0.0, %v3442
    %v3444 = vpop.f32.mrf.mxu0
    %v3445 = vadd.f32 0.0, %v3444
    %3446 = vmatprep.mubr.bf16.mxu0 0
    %3447 = vmatmul.mubr.bf16.gmra.mxu0 %v1588
    %v3448 = vpop.f32.mrf.mxu0
    %v3449 = vadd.f32 0.0, %v3448
    %v3450 = vpop.f32.mrf.mxu0
    %v3451 = vadd.f32 0.0, %v3450
    %v3452 = vpop.f32.mrf.mxu0
    %v3453 = vadd.f32 0.0, %v3452
    %v3454 = vpop.f32.mrf.mxu0
    %v3455 = vadd.f32 0.0, %v3454
    %3456 = vmatprep.mubr.bf16.mxu0 0
    %3457 = vmatmul.mubr.bf16.gmra.mxu0 %v2392
    %v3458 = vpop.f32.mrf.mxu0
    %v3459 = vadd.f32 0.0, %v3458
    %v3460 = vpop.f32.mrf.mxu0
    %v3461 = vadd.f32 0.0, %v3460
    %v3462 = vpop.f32.mrf.mxu0
    %v3463 = vadd.f32 0.0, %v3462
    %v3464 = vpop.f32.mrf.mxu0
    %v3465 = vadd.f32 0.0, %v3464
    %3466 = vmatprep.mubr.bf16.mxu0 0
    %3467 = vmatmul.mubr.bf16.gmra.mxu0 %v3196
    %v3468 = vpop.f32.mrf.mxu0
    %v3469 = vadd.f32 0.0, %v3468
    %v3470 = vpop.f32.mrf.mxu0
    %v3471 = vadd.f32 0.0, %v3470
    %v3472 = vpop.f32.mrf.mxu0
    %v3473 = vadd.f32 0.0, %v3472
    %v3474 = vpop.f32.mrf.mxu0
    %v3475 = vadd.f32 0.0, %v3474
    %3476 = vdwg.mxu0
    %s3477 = scalar_lea.vmem %s2, 128
    %v3478 = vld [vmem:[%s3477] sm:$0xff]
    %v3479 = vld [vmem:[%s3477 + $0x8] sm:$0xff]
    %v3480 = vld [vmem:[%s3477 + $0x10] sm:$0xff]
    %v3481 = vld [vmem:[%s3477 + $0x18] sm:$0x33]
    %v3486 = vunpack.c.l.b16 %v3478
    %v3487 = vunpack.c.h.b16 %v3478
    %v3488 = vunpack.c.l.b16 %v3479
    %v3489 = vunpack.c.h.b16 %v3479
    %v3490 = vunpack.c.l.b16 %v3480
    %v3491 = vunpack.c.h.b16 %v3480
    %v3492 = vunpack.c.l.b16 %v3481
    %v3493 = vunpack.c.h.b16 %v3481
    %v3494 = vpack.c.b16 %v3488, %v3486
    %v3495 = vpack.c.b16 %v3489, %v3487
    %v3496 = vpack.c.b16 %v3492, %v3490
    %v3497 = vpack.c.b16 %v3493, %v3491
    %v3501 = vsel %vm375, %v3496, 0
    %v3504 = vsel %vm375, %v3497, 0
    %3506 = vmatprep.subr.bf16.mxu0 0
    %3507 = vmatpush1.bf16.msra.mxu0 0
    %3508 = vmatprep.subr.bf16.mxu0 0
    %3509 = vmatpush1.bf16.msra.mxu0 0
    %3510 = vmatprep.subr.bf16.mxu0 0
    %3511 = vmatpush1.bf16.msra.mxu0 0
    %3512 = vmatprep.subr.bf16.mxu0 0
    %3513 = vmatpush1.bf16.msra.mxu0 0
    %3514 = vmatprep.subr.bf16.mxu0 0
    %3515 = vmatpush1.bf16.msra.mxu0 0
    %3516 = vmatprep.subr.bf16.mxu0 0
    %3517 = vmatpush1.bf16.msra.mxu0 0
    %3518 = vmatprep.subr.bf16.mxu0 %v3504
    %3519 = vmatpush1.bf16.msra.mxu0 %v3501
    %3520 = vmatprep.subr.bf16.mxu0 %v3495
    %3521 = vmatpush1.bf16.msra.mxu0 %v3494
    %3522 = vmatprep.subr.bf16.mxu0 0
    %3523 = vmatpush2.bf16.msra.mxu0 0
    %3524 = vmatprep.subr.bf16.mxu0 0
    %3525 = vmatpush2.bf16.msra.mxu0 0
    %3526 = vmatprep.subr.bf16.mxu0 0
    %3527 = vmatpush2.bf16.msra.mxu0 0
    %3528 = vmatprep.subr.bf16.mxu0 0
    %3529 = vmatpush2.bf16.msra.mxu0 0
    %3530 = vmatprep.subr.bf16.mxu0 0
    %3531 = vmatpush2.bf16.msra.mxu0 0
    %3532 = vmatprep.subr.bf16.mxu0 0
    %3533 = vmatpush2.bf16.msra.mxu0 0
    %3534 = vmatprep.subr.bf16.mxu0 0
    %3535 = vmatpush2.bf16.msra.mxu0 0
    %3536 = vmatprep.subr.bf16.mxu0 0
    %3537 = vmatpush2.bf16.msra.mxu0 0
    %3538 = vmatprep.mubr.bf16.mxu0 0
    %3539 = vmatmul.mubr.bf16.gmra.mxu0 %v313
    %v3540 = vpop.f32.mrf.mxu0
    %v3541 = vadd.f32 0.0, %v3540
    %v3542 = vpop.f32.mrf.mxu0
    %v3543 = vadd.f32 0.0, %v3542
    %v3544 = vpop.f32.mrf.mxu0
    %v3545 = vadd.f32 0.0, %v3544
    %v3546 = vpop.f32.mrf.mxu0
    %v3547 = vadd.f32 0.0, %v3546
    %3548 = vmatprep.mubr.bf16.mxu0 0
    %3549 = vmatmul.mubr.bf16.gmra.mxu0 %v316
    %v3550 = vpop.f32.mrf.mxu0
    %v3551 = vadd.f32 0.0, %v3550
    %v3552 = vpop.f32.mrf.mxu0
    %v3553 = vadd.f32 0.0, %v3552
    %v3554 = vpop.f32.mrf.mxu0
    %v3555 = vadd.f32 0.0, %v3554
    %v3556 = vpop.f32.mrf.mxu0
    %v3557 = vadd.f32 0.0, %v3556
    %3558 = vmatprep.mubr.bf16.mxu0 0
    %3559 = vmatmul.mubr.bf16.gmra.mxu0 %v319
    %v3560 = vpop.f32.mrf.mxu0
    %v3561 = vadd.f32 0.0, %v3560
    %v3562 = vpop.f32.mrf.mxu0
    %v3563 = vadd.f32 0.0, %v3562
    %v3564 = vpop.f32.mrf.mxu0
    %v3565 = vadd.f32 0.0, %v3564
    %v3566 = vpop.f32.mrf.mxu0
    %v3567 = vadd.f32 0.0, %v3566
    %3568 = vmatprep.mubr.bf16.mxu0 0
    %3569 = vmatmul.mubr.bf16.gmra.mxu0 %v322
    %v3570 = vpop.f32.mrf.mxu0
    %v3571 = vadd.f32 0.0, %v3570
    %v3572 = vpop.f32.mrf.mxu0
    %v3573 = vadd.f32 0.0, %v3572
    %v3574 = vpop.f32.mrf.mxu0
    %v3575 = vadd.f32 0.0, %v3574
    %v3576 = vpop.f32.mrf.mxu0
    %v3577 = vadd.f32 0.0, %v3576
    %3578 = vmatprep.mubr.bf16.mxu0 0
    %3579 = vmatmul.mubr.bf16.gmra.mxu0 %v325
    %v3580 = vpop.f32.mrf.mxu0
    %v3581 = vadd.f32 0.0, %v3580
    %v3582 = vpop.f32.mrf.mxu0
    %v3583 = vadd.f32 0.0, %v3582
    %v3584 = vpop.f32.mrf.mxu0
    %v3585 = vadd.f32 0.0, %v3584
    %v3586 = vpop.f32.mrf.mxu0
    %v3587 = vadd.f32 0.0, %v3586
    %3588 = vmatprep.mubr.bf16.mxu0 0
    %3589 = vmatmul.mubr.bf16.gmra.mxu0 %v328
    %v3590 = vpop.f32.mrf.mxu0
    %v3591 = vadd.f32 0.0, %v3590
    %v3592 = vpop.f32.mrf.mxu0
    %v3593 = vadd.f32 0.0, %v3592
    %v3594 = vpop.f32.mrf.mxu0
    %v3595 = vadd.f32 0.0, %v3594
    %v3596 = vpop.f32.mrf.mxu0
    %v3597 = vadd.f32 0.0, %v3596
    %3598 = vmatprep.mubr.bf16.mxu0 0
    %3599 = vmatmul.mubr.bf16.gmra.mxu0 %v331
    %v3600 = vpop.f32.mrf.mxu0
    %v3601 = vadd.f32 0.0, %v3600
    %v3602 = vpop.f32.mrf.mxu0
    %v3603 = vadd.f32 0.0, %v3602
    %v3604 = vpop.f32.mrf.mxu0
    %v3605 = vadd.f32 0.0, %v3604
    %v3606 = vpop.f32.mrf.mxu0
    %v3607 = vadd.f32 0.0, %v3606
    %3608 = vmatprep.mubr.bf16.mxu0 0
    %3609 = vmatmul.mubr.bf16.gmra.mxu0 %v334
    %v3610 = vpop.f32.mrf.mxu0
    %v3611 = vadd.f32 0.0, %v3610
    %v3612 = vpop.f32.mrf.mxu0
    %v3613 = vadd.f32 0.0, %v3612
    %v3614 = vpop.f32.mrf.mxu0
    %v3615 = vadd.f32 0.0, %v3614
    %v3616 = vpop.f32.mrf.mxu0
    %v3617 = vadd.f32 0.0, %v3616
    %3618 = vmatprep.mubr.bf16.mxu0 0
    %3619 = vmatmul.mubr.bf16.gmra.mxu0 %v337
    %v3620 = vpop.f32.mrf.mxu0
    %v3621 = vadd.f32 0.0, %v3620
    %v3622 = vpop.f32.mrf.mxu0
    %v3623 = vadd.f32 0.0, %v3622
    %v3624 = vpop.f32.mrf.mxu0
    %v3625 = vadd.f32 0.0, %v3624
    %v3626 = vpop.f32.mrf.mxu0
    %v3627 = vadd.f32 0.0, %v3626
    %3628 = vmatprep.mubr.bf16.mxu0 0
    %3629 = vmatmul.mubr.bf16.gmra.mxu0 %v340
    %v3630 = vpop.f32.mrf.mxu0
    %v3631 = vadd.f32 0.0, %v3630
    %v3632 = vpop.f32.mrf.mxu0
    %v3633 = vadd.f32 0.0, %v3632
    %v3634 = vpop.f32.mrf.mxu0
    %v3635 = vadd.f32 0.0, %v3634
    %v3636 = vpop.f32.mrf.mxu0
    %v3637 = vadd.f32 0.0, %v3636
    %3638 = vmatprep.mubr.bf16.mxu0 0
    %3639 = vmatmul.mubr.bf16.gmra.mxu0 %v343
    %v3640 = vpop.f32.mrf.mxu0
    %v3641 = vadd.f32 0.0, %v3640
    %v3642 = vpop.f32.mrf.mxu0
    %v3643 = vadd.f32 0.0, %v3642
    %v3644 = vpop.f32.mrf.mxu0
    %v3645 = vadd.f32 0.0, %v3644
    %v3646 = vpop.f32.mrf.mxu0
    %v3647 = vadd.f32 0.0, %v3646
    %3648 = vmatprep.mubr.bf16.mxu0 0
    %3649 = vmatmul.mubr.bf16.gmra.mxu0 %v346
    %v3650 = vpop.f32.mrf.mxu0
    %v3651 = vadd.f32 0.0, %v3650
    %v3652 = vpop.f32.mrf.mxu0
    %v3653 = vadd.f32 0.0, %v3652
    %v3654 = vpop.f32.mrf.mxu0
    %v3655 = vadd.f32 0.0, %v3654
    %v3656 = vpop.f32.mrf.mxu0
    %v3657 = vadd.f32 0.0, %v3656
    %3658 = vmatprep.mubr.bf16.mxu0 0
    %3659 = vmatmul.mubr.bf16.gmra.mxu0 %v349
    %v3660 = vpop.f32.mrf.mxu0
    %v3661 = vadd.f32 0.0, %v3660
    %v3662 = vpop.f32.mrf.mxu0
    %v3663 = vadd.f32 0.0, %v3662
    %v3664 = vpop.f32.mrf.mxu0
    %v3665 = vadd.f32 0.0, %v3664
    %v3666 = vpop.f32.mrf.mxu0
    %v3667 = vadd.f32 0.0, %v3666
    %3668 = vmatprep.mubr.bf16.mxu0 0
    %3669 = vmatmul.mubr.bf16.gmra.mxu0 %v352
    %v3670 = vpop.f32.mrf.mxu0
    %v3671 = vadd.f32 0.0, %v3670
    %v3672 = vpop.f32.mrf.mxu0
    %v3673 = vadd.f32 0.0, %v3672
    %v3674 = vpop.f32.mrf.mxu0
    %v3675 = vadd.f32 0.0, %v3674
    %v3676 = vpop.f32.mrf.mxu0
    %v3677 = vadd.f32 0.0, %v3676
    %3678 = vmatprep.mubr.bf16.mxu0 0
    %3679 = vmatmul.mubr.bf16.gmra.mxu0 %v355
    %v3680 = vpop.f32.mrf.mxu0
    %v3681 = vadd.f32 0.0, %v3680
    %v3682 = vpop.f32.mrf.mxu0
    %v3683 = vadd.f32 0.0, %v3682
    %v3684 = vpop.f32.mrf.mxu0
    %v3685 = vadd.f32 0.0, %v3684
    %v3686 = vpop.f32.mrf.mxu0
    %v3687 = vadd.f32 0.0, %v3686
    %3688 = vmatprep.mubr.bf16.mxu0 0
    %3689 = vmatmul.mubr.bf16.gmra.mxu0 %v358
    %v3690 = vpop.f32.mrf.mxu0
    %v3691 = vadd.f32 0.0, %v3690
    %v3692 = vpop.f32.mrf.mxu0
    %v3693 = vadd.f32 0.0, %v3692
    %v3694 = vpop.f32.mrf.mxu0
    %v3695 = vadd.f32 0.0, %v3694
    %v3696 = vpop.f32.mrf.mxu0
    %v3697 = vadd.f32 0.0, %v3696
    %3698 = vmatprep.mubr.bf16.mxu0 0
    %3699 = vmatmul.mubr.bf16.gmra.mxu0 %v361
    %v3700 = vpop.f32.mrf.mxu0
    %v3701 = vadd.f32 0.0, %v3700
    %v3702 = vpop.f32.mrf.mxu0
    %v3703 = vadd.f32 0.0, %v3702
    %v3704 = vpop.f32.mrf.mxu0
    %v3705 = vadd.f32 0.0, %v3704
    %v3706 = vpop.f32.mrf.mxu0
    %v3707 = vadd.f32 0.0, %v3706
    %3708 = vmatprep.mubr.bf16.mxu0 0
    %3709 = vmatmul.mubr.bf16.gmra.mxu0 %v364
    %v3710 = vpop.f32.mrf.mxu0
    %v3711 = vadd.f32 0.0, %v3710
    %v3712 = vpop.f32.mrf.mxu0
    %v3713 = vadd.f32 0.0, %v3712
    %v3714 = vpop.f32.mrf.mxu0
    %v3715 = vadd.f32 0.0, %v3714
    %v3716 = vpop.f32.mrf.mxu0
    %v3717 = vadd.f32 0.0, %v3716
    %3718 = vmatprep.mubr.bf16.mxu0 0
    %3719 = vmatmul.mubr.bf16.gmra.mxu0 %v367
    %v3720 = vpop.f32.mrf.mxu0
    %v3721 = vadd.f32 0.0, %v3720
    %v3722 = vpop.f32.mrf.mxu0
    %v3723 = vadd.f32 0.0, %v3722
    %v3724 = vpop.f32.mrf.mxu0
    %v3725 = vadd.f32 0.0, %v3724
    %v3726 = vpop.f32.mrf.mxu0
    %v3727 = vadd.f32 0.0, %v3726
    %3728 = vmatprep.mubr.bf16.mxu0 0
    %3729 = vmatmul.mubr.bf16.gmra.mxu0 %v370
    %v3730 = vpop.f32.mrf.mxu0
    %v3731 = vadd.f32 0.0, %v3730
    %v3732 = vpop.f32.mrf.mxu0
    %v3733 = vadd.f32 0.0, %v3732
    %v3734 = vpop.f32.mrf.mxu0
    %v3735 = vadd.f32 0.0, %v3734
    %v3736 = vpop.f32.mrf.mxu0
    %v3737 = vadd.f32 0.0, %v3736
    %3738 = vmatprep.mubr.bf16.mxu0 0
    %3739 = vmatmul.mubr.bf16.gmra.mxu0 %v373
    %v3740 = vpop.f32.mrf.mxu0
    %v3741 = vadd.f32 0.0, %v3740
    %v3742 = vpop.f32.mrf.mxu0
    %v3743 = vadd.f32 0.0, %v3742
    %v3744 = vpop.f32.mrf.mxu0
    %v3745 = vadd.f32 0.0, %v3744
    %v3746 = vpop.f32.mrf.mxu0
    %v3747 = vadd.f32 0.0, %v3746
    %3748 = vmatprep.mubr.bf16.mxu0 0
    %3749 = vmatmul.mubr.bf16.gmra.mxu0 %v1588
    %v3750 = vpop.f32.mrf.mxu0
    %v3751 = vadd.f32 0.0, %v3750
    %v3752 = vpop.f32.mrf.mxu0
    %v3753 = vadd.f32 0.0, %v3752
    %v3754 = vpop.f32.mrf.mxu0
    %v3755 = vadd.f32 0.0, %v3754
    %v3756 = vpop.f32.mrf.mxu0
    %v3757 = vadd.f32 0.0, %v3756
    %3758 = vmatprep.mubr.bf16.mxu0 0
    %3759 = vmatmul.mubr.bf16.gmra.mxu0 %v2392
    %v3760 = vpop.f32.mrf.mxu0
    %v3761 = vadd.f32 0.0, %v3760
    %v3762 = vpop.f32.mrf.mxu0
    %v3763 = vadd.f32 0.0, %v3762
    %v3764 = vpop.f32.mrf.mxu0
    %v3765 = vadd.f32 0.0, %v3764
    %v3766 = vpop.f32.mrf.mxu0
    %v3767 = vadd.f32 0.0, %v3766
    %3768 = vmatprep.mubr.bf16.mxu0 0
    %3769 = vmatmul.mubr.bf16.gmra.mxu0 %v3196
    %v3770 = vpop.f32.mrf.mxu0
    %v3771 = vadd.f32 0.0, %v3770
    %v3772 = vpop.f32.mrf.mxu0
    %v3773 = vadd.f32 0.0, %v3772
    %v3774 = vpop.f32.mrf.mxu0
    %v3775 = vadd.f32 0.0, %v3774
    %v3776 = vpop.f32.mrf.mxu0
    %v3777 = vadd.f32 0.0, %v3776
    %3778 = vdwg.mxu0
    %v3779 = vadd.f32 %v2975, %v3239
    %v3780 = vadd.f32 %v2976, %v3241
    %v3781 = vadd.f32 %v2977, %v3243
    %v3782 = vadd.f32 %v2978, %v3245
    %v3783 = vadd.f32 %v2979, %v3249
    %v3784 = vadd.f32 %v2980, %v3251
    %v3785 = vadd.f32 %v2981, %v3253
    %v3786 = vadd.f32 %v2982, %v3255
    %v3787 = vadd.f32 %v2983, %v3259
    %v3788 = vadd.f32 %v2984, %v3261
    %v3789 = vadd.f32 %v2985, %v3263
    %v3790 = vadd.f32 %v2986, %v3265
    %v3791 = vadd.f32 %v2987, %v3269
    %v3792 = vadd.f32 %v2988, %v3271
    %v3793 = vadd.f32 %v2989, %v3273
    %v3794 = vadd.f32 %v2990, %v3275
    %v3795 = vadd.f32 %v2991, %v3279
    %v3796 = vadd.f32 %v2992, %v3281
    %v3797 = vadd.f32 %v2993, %v3283
    %v3798 = vadd.f32 %v2994, %v3285
    %v3799 = vadd.f32 %v2995, %v3289
    %v3800 = vadd.f32 %v2996, %v3291
    %v3801 = vadd.f32 %v2997, %v3293
    %v3802 = vadd.f32 %v2998, %v3295
    %v3803 = vadd.f32 %v2999, %v3299
    %v3804 = vadd.f32 %v3000, %v3301
    %v3805 = vadd.f32 %v3001, %v3303
    %v3806 = vadd.f32 %v3002, %v3305
    %v3807 = vadd.f32 %v3003, %v3309
    %v3808 = vadd.f32 %v3004, %v3311
    %v3809 = vadd.f32 %v3005, %v3313
    %v3810 = vadd.f32 %v3006, %v3315
    %v3811 = vadd.f32 %v3007, %v3319
    %v3812 = vadd.f32 %v3008, %v3321
    %v3813 = vadd.f32 %v3009, %v3323
    %v3814 = vadd.f32 %v3010, %v3325
    %v3815 = vadd.f32 %v3011, %v3329
    %v3816 = vadd.f32 %v3012, %v3331
    %v3817 = vadd.f32 %v3013, %v3333
    %v3818 = vadd.f32 %v3014, %v3335
    %v3819 = vadd.f32 %v3015, %v3339
    %v3820 = vadd.f32 %v3016, %v3341
    %v3821 = vadd.f32 %v3017, %v3343
    %v3822 = vadd.f32 %v3018, %v3345
    %v3823 = vadd.f32 %v3019, %v3349
    %v3824 = vadd.f32 %v3020, %v3351
    %v3825 = vadd.f32 %v3021, %v3353
    %v3826 = vadd.f32 %v3022, %v3355
    %v3827 = vadd.f32 %v3023, %v3359
    %v3828 = vadd.f32 %v3024, %v3361
    %v3829 = vadd.f32 %v3025, %v3363
    %v3830 = vadd.f32 %v3026, %v3365
    %v3831 = vadd.f32 %v3027, %v3369
    %v3832 = vadd.f32 %v3028, %v3371
    %v3833 = vadd.f32 %v3029, %v3373
    %v3834 = vadd.f32 %v3030, %v3375
    %v3835 = vadd.f32 %v3031, %v3379
    %v3836 = vadd.f32 %v3032, %v3381
    %v3837 = vadd.f32 %v3033, %v3383
    %v3838 = vadd.f32 %v3034, %v3385
    %v3839 = vadd.f32 %v3035, %v3389
    %v3840 = vadd.f32 %v3036, %v3391
    %v3841 = vadd.f32 %v3037, %v3393
    %v3842 = vadd.f32 %v3038, %v3395
    %v3843 = vadd.f32 %v3039, %v3399
    %v3844 = vadd.f32 %v3040, %v3401
    %v3845 = vadd.f32 %v3041, %v3403
    %v3846 = vadd.f32 %v3042, %v3405
    %v3847 = vadd.f32 %v3043, %v3409
    %v3848 = vadd.f32 %v3044, %v3411
    %v3849 = vadd.f32 %v3045, %v3413
    %v3850 = vadd.f32 %v3046, %v3415
    %v3851 = vadd.f32 %v3047, %v3419
    %v3852 = vadd.f32 %v3048, %v3421
    %v3853 = vadd.f32 %v3049, %v3423
    %v3854 = vadd.f32 %v3050, %v3425
    %v3855 = vadd.f32 %v3051, %v3429
    %v3856 = vadd.f32 %v3052, %v3431
    %v3857 = vadd.f32 %v3053, %v3433
    %v3858 = vadd.f32 %v3054, %v3435
    %v3859 = vadd.f32 %v3055, %v3439
    %v3860 = vadd.f32 %v3056, %v3441
    %v3861 = vadd.f32 %v3057, %v3443
    %v3862 = vadd.f32 %v3058, %v3445
    %v3863 = vadd.f32 %v3059, %v3449
    %v3864 = vadd.f32 %v3060, %v3451
    %v3865 = vadd.f32 %v3061, %v3453
    %v3866 = vadd.f32 %v3062, %v3455
    %v3867 = vadd.f32 %v3063, %v3459
    %v3868 = vadd.f32 %v3064, %v3461
    %v3869 = vadd.f32 %v3065, %v3463
    %v3870 = vadd.f32 %v3066, %v3465
    %v3871 = vadd.f32 %v3067, %v3469
    %v3872 = vadd.f32 %v3068, %v3471
    %v3873 = vadd.f32 %v3069, %v3473
    %v3874 = vadd.f32 %v3070, %v3475
    %v3875 = vadd.f32 %v3071, %v3541
    %v3876 = vadd.f32 %v3072, %v3543
    %v3877 = vadd.f32 %v3073, %v3545
    %v3878 = vadd.f32 %v3074, %v3547
    %v3879 = vadd.f32 %v3075, %v3551
    %v3880 = vadd.f32 %v3076, %v3553
    %v3881 = vadd.f32 %v3077, %v3555
    %v3882 = vadd.f32 %v3078, %v3557
    %v3883 = vadd.f32 %v3079, %v3561
    %v3884 = vadd.f32 %v3080, %v3563
    %v3885 = vadd.f32 %v3081, %v3565
    %v3886 = vadd.f32 %v3082, %v3567
    %v3887 = vadd.f32 %v3083, %v3571
    %v3888 = vadd.f32 %v3084, %v3573
    %v3889 = vadd.f32 %v3085, %v3575
    %v3890 = vadd.f32 %v3086, %v3577
    %v3891 = vadd.f32 %v3087, %v3581
    %v3892 = vadd.f32 %v3088, %v3583
    %v3893 = vadd.f32 %v3089, %v3585
    %v3894 = vadd.f32 %v3090, %v3587
    %v3895 = vadd.f32 %v3091, %v3591
    %v3896 = vadd.f32 %v3092, %v3593
    %v3897 = vadd.f32 %v3093, %v3595
    %v3898 = vadd.f32 %v3094, %v3597
    %v3899 = vadd.f32 %v3095, %v3601
    %v3900 = vadd.f32 %v3096, %v3603
    %v3901 = vadd.f32 %v3097, %v3605
    %v3902 = vadd.f32 %v3098, %v3607
    %v3903 = vadd.f32 %v3099, %v3611
    %v3904 = vadd.f32 %v3100, %v3613
    %v3905 = vadd.f32 %v3101, %v3615
    %v3906 = vadd.f32 %v3102, %v3617
    %v3907 = vadd.f32 %v3103, %v3621
    %v3908 = vadd.f32 %v3104, %v3623
    %v3909 = vadd.f32 %v3105, %v3625
    %v3910 = vadd.f32 %v3106, %v3627
    %v3911 = vadd.f32 %v3107, %v3631
    %v3912 = vadd.f32 %v3108, %v3633
    %v3913 = vadd.f32 %v3109, %v3635
    %v3914 = vadd.f32 %v3110, %v3637
    %v3915 = vadd.f32 %v3111, %v3641
    %v3916 = vadd.f32 %v3112, %v3643
    %v3917 = vadd.f32 %v3113, %v3645
    %v3918 = vadd.f32 %v3114, %v3647
    %v3919 = vadd.f32 %v3115, %v3651
    %v3920 = vadd.f32 %v3116, %v3653
    %v3921 = vadd.f32 %v3117, %v3655
    %v3922 = vadd.f32 %v3118, %v3657
    %v3923 = vadd.f32 %v3119, %v3661
    %v3924 = vadd.f32 %v3120, %v3663
    %v3925 = vadd.f32 %v3121, %v3665
    %v3926 = vadd.f32 %v3122, %v3667
    %v3927 = vadd.f32 %v3123, %v3671
    %v3928 = vadd.f32 %v3124, %v3673
    %v3929 = vadd.f32 %v3125, %v3675
    %v3930 = vadd.f32 %v3126, %v3677
    %v3931 = vadd.f32 %v3127, %v3681
    %v3932 = vadd.f32 %v3128, %v3683
    %v3933 = vadd.f32 %v3129, %v3685
    %v3934 = vadd.f32 %v3130, %v3687
    %v3935 = vadd.f32 %v3131, %v3691
    %v3936 = vadd.f32 %v3132, %v3693
    %v3937 = vadd.f32 %v3133, %v3695
    %v3938 = vadd.f32 %v3134, %v3697
    %v3939 = vadd.f32 %v3135, %v3701
    %v3940 = vadd.f32 %v3136, %v3703
    %v3941 = vadd.f32 %v3137, %v3705
    %v3942 = vadd.f32 %v3138, %v3707
    %v3943 = vadd.f32 %v3139, %v3711
    %v3944 = vadd.f32 %v3140, %v3713
    %v3945 = vadd.f32 %v3141, %v3715
    %v3946 = vadd.f32 %v3142, %v3717
    %v3947 = vadd.f32 %v3143, %v3721
    %v3948 = vadd.f32 %v3144, %v3723
    %v3949 = vadd.f32 %v3145, %v3725
    %v3950 = vadd.f32 %v3146, %v3727
    %v3951 = vadd.f32 %v3147, %v3731
    %v3952 = vadd.f32 %v3148, %v3733
    %v3953 = vadd.f32 %v3149, %v3735
    %v3954 = vadd.f32 %v3150, %v3737
    %v3955 = vadd.f32 %v3151, %v3741
    %v3956 = vadd.f32 %v3152, %v3743
    %v3957 = vadd.f32 %v3153, %v3745
    %v3958 = vadd.f32 %v3154, %v3747
    %v3959 = vadd.f32 %v3155, %v3751
    %v3960 = vadd.f32 %v3156, %v3753
    %v3961 = vadd.f32 %v3157, %v3755
    %v3962 = vadd.f32 %v3158, %v3757
    %v3963 = vadd.f32 %v3159, %v3761
    %v3964 = vadd.f32 %v3160, %v3763
    %v3965 = vadd.f32 %v3161, %v3765
    %v3966 = vadd.f32 %v3162, %v3767
    %v3967 = vadd.f32 %v3163, %v3771
    %v3968 = vadd.f32 %v3164, %v3773
    %v3969 = vadd.f32 %v3165, %v3775
    %v3970 = vadd.f32 %v3166, %v3777
    %v3971 = vmax.f32 %v3779, %v3875
    %v3972 = vmax.f32 %v3780, %v3876
    %v3973 = vmax.f32 %v3781, %v3877
    %v3974 = vmax.f32 %v3782, %v3878
    %v3975 = vmax.f32 %v3783, %v3879
    %v3976 = vmax.f32 %v3784, %v3880
    %v3977 = vmax.f32 %v3785, %v3881
    %v3978 = vmax.f32 %v3786, %v3882
    %v3979 = vmax.f32 %v3787, %v3883
    %v3980 = vmax.f32 %v3788, %v3884
    %v3981 = vmax.f32 %v3789, %v3885
    %v3982 = vmax.f32 %v3790, %v3886
    %v3983 = vmax.f32 %v3791, %v3887
    %v3984 = vmax.f32 %v3792, %v3888
    %v3985 = vmax.f32 %v3793, %v3889
    %v3986 = vmax.f32 %v3794, %v3890
    %v3987 = vmax.f32 %v3795, %v3891
    %v3988 = vmax.f32 %v3796, %v3892
    %v3989 = vmax.f32 %v3797, %v3893
    %v3990 = vmax.f32 %v3798, %v3894
    %v3991 = vmax.f32 %v3799, %v3895
    %v3992 = vmax.f32 %v3800, %v3896
    %v3993 = vmax.f32 %v3801, %v3897
    %v3994 = vmax.f32 %v3802, %v3898
    %v3995 = vmax.f32 %v3803, %v3899
    %v3996 = vmax.f32 %v3804, %v3900
    %v3997 = vmax.f32 %v3805, %v3901
    %v3998 = vmax.f32 %v3806, %v3902
    %v3999 = vmax.f32 %v3807, %v3903
    %v4000 = vmax.f32 %v3808, %v3904
    %v4001 = vmax.f32 %v3809, %v3905
    %v4002 = vmax.f32 %v3810, %v3906
    %v4003 = vmax.f32 %v3811, %v3907
    %v4004 = vmax.f32 %v3812, %v3908
    %v4005 = vmax.f32 %v3813, %v3909
    %v4006 = vmax.f32 %v3814, %v3910
    %v4007 = vmax.f32 %v3815, %v3911
    %v4008 = vmax.f32 %v3816, %v3912
    %v4009 = vmax.f32 %v3817, %v3913
    %v4010 = vmax.f32 %v3818, %v3914
    %v4011 = vmax.f32 %v3819, %v3915
    %v4012 = vmax.f32 %v3820, %v3916
    %v4013 = vmax.f32 %v3821, %v3917
    %v4014 = vmax.f32 %v3822, %v3918
    %v4015 = vmax.f32 %v3823, %v3919
    %v4016 = vmax.f32 %v3824, %v3920
    %v4017 = vmax.f32 %v3825, %v3921
    %v4018 = vmax.f32 %v3826, %v3922
    %v4019 = vmax.f32 %v3827, %v3923
    %v4020 = vmax.f32 %v3828, %v3924
    %v4021 = vmax.f32 %v3829, %v3925
    %v4022 = vmax.f32 %v3830, %v3926
    %v4023 = vmax.f32 %v3831, %v3927
    %v4024 = vmax.f32 %v3832, %v3928
    %v4025 = vmax.f32 %v3833, %v3929
    %v4026 = vmax.f32 %v3834, %v3930
    %v4027 = vmax.f32 %v3835, %v3931
    %v4028 = vmax.f32 %v3836, %v3932
    %v4029 = vmax.f32 %v3837, %v3933
    %v4030 = vmax.f32 %v3838, %v3934
    %v4031 = vmax.f32 %v3839, %v3935
    %v4032 = vmax.f32 %v3840, %v3936
    %v4033 = vmax.f32 %v3841, %v3937
    %v4034 = vmax.f32 %v3842, %v3938
    %v4035 = vmax.f32 %v3843, %v3939
    %v4036 = vmax.f32 %v3844, %v3940
    %v4037 = vmax.f32 %v3845, %v3941
    %v4038 = vmax.f32 %v3846, %v3942
    %v4039 = vmax.f32 %v3847, %v3943
    %v4040 = vmax.f32 %v3848, %v3944
    %v4041 = vmax.f32 %v3849, %v3945
    %v4042 = vmax.f32 %v3850, %v3946
    %v4043 = vmax.f32 %v3851, %v3947
    %v4044 = vmax.f32 %v3852, %v3948
    %v4045 = vmax.f32 %v3853, %v3949
    %v4046 = vmax.f32 %v3854, %v3950
    %v4047 = vmax.f32 %v3855, %v3951
    %v4048 = vmax.f32 %v3856, %v3952
    %v4049 = vmax.f32 %v3857, %v3953
    %v4050 = vmax.f32 %v3858, %v3954
    %v4051 = vmax.f32 %v3859, %v3955
    %v4052 = vmax.f32 %v3860, %v3956
    %v4053 = vmax.f32 %v3861, %v3957
    %v4054 = vmax.f32 %v3862, %v3958
    %v4055 = vmax.f32 %v3863, %v3959
    %v4056 = vmax.f32 %v3864, %v3960
    %v4057 = vmax.f32 %v3865, %v3961
    %v4058 = vmax.f32 %v3866, %v3962
    %v4059 = vmax.f32 %v3867, %v3963
    %v4060 = vmax.f32 %v3868, %v3964
    %v4061 = vmax.f32 %v3869, %v3965
    %v4062 = vmax.f32 %v3870, %v3966
    %v4063 = vmax.f32 %v3871, %v3967
    %v4064 = vmax.f32 %v3872, %v3968
    %v4065 = vmax.f32 %v3873, %v3969
    %v4066 = vmax.f32 %v3874, %v3970
    %v4067 = vmax.f32 %v3971, %v3975
    %v4068 = vmax.f32 %v3972, %v3976
    %v4069 = vmax.f32 %v3973, %v3977
    %v4070 = vmax.f32 %v3974, %v3978
    %v4071 = vmax.f32 %v3979, %v3983
    %v4072 = vmax.f32 %v3980, %v3984
    %v4073 = vmax.f32 %v3981, %v3985
    %v4074 = vmax.f32 %v3982, %v3986
    %v4075 = vmax.f32 %v3987, %v3991
    %v4076 = vmax.f32 %v3988, %v3992
    %v4077 = vmax.f32 %v3989, %v3993
    %v4078 = vmax.f32 %v3990, %v3994
    %v4079 = vmax.f32 %v3995, %v3999
    %v4080 = vmax.f32 %v3996, %v4000
    %v4081 = vmax.f32 %v3997, %v4001
    %v4082 = vmax.f32 %v3998, %v4002
    %v4083 = vmax.f32 %v4003, %v4007
    %v4084 = vmax.f32 %v4004, %v4008
    %v4085 = vmax.f32 %v4005, %v4009
    %v4086 = vmax.f32 %v4006, %v4010
    %v4087 = vmax.f32 %v4011, %v4015
    %v4088 = vmax.f32 %v4012, %v4016
    %v4089 = vmax.f32 %v4013, %v4017
    %v4090 = vmax.f32 %v4014, %v4018
    %v4091 = vmax.f32 %v4019, %v4023
    %v4092 = vmax.f32 %v4020, %v4024
    %v4093 = vmax.f32 %v4021, %v4025
    %v4094 = vmax.f32 %v4022, %v4026
    %v4095 = vmax.f32 %v4027, %v4031
    %v4096 = vmax.f32 %v4028, %v4032
    %v4097 = vmax.f32 %v4029, %v4033
    %v4098 = vmax.f32 %v4030, %v4034
    %v4099 = vmax.f32 %v4035, %v4039
    %v4100 = vmax.f32 %v4036, %v4040
    %v4101 = vmax.f32 %v4037, %v4041
    %v4102 = vmax.f32 %v4038, %v4042
    %v4103 = vmax.f32 %v4043, %v4047
    %v4104 = vmax.f32 %v4044, %v4048
    %v4105 = vmax.f32 %v4045, %v4049
    %v4106 = vmax.f32 %v4046, %v4050
    %v4107 = vmax.f32 %v4051, %v4055
    %v4108 = vmax.f32 %v4052, %v4056
    %v4109 = vmax.f32 %v4053, %v4057
    %v4110 = vmax.f32 %v4054, %v4058
    %v4111 = vmax.f32 %v4059, %v4063
    %v4112 = vmax.f32 %v4060, %v4064
    %v4113 = vmax.f32 %v4061, %v4065
    %v4114 = vmax.f32 %v4062, %v4066
    %v4116 = vlaneseq
    %v4117 = vshrl.u32 %v4116, 7
    %v4118 = vsub.s32 0, %v4117
    %v4119 = vrot.slane %v150, %v4118
    %v4120 = vlaneseq
    %v4121 = vshrl.u32 %v4120, 7
    %v4122 = vsub.s32 1, %v4121
    %v4123 = vrot.slane %v150, %v4122
    %v4126 = vadd.f32 %v4067, %v4119
    %v4127 = vadd.f32 %v4068, %v4123
    %v4128 = vadd.f32 %v4069, %v4119
    %v4129 = vadd.f32 %v4070, %v4123
    %v4130 = vadd.f32 %v4071, %v4119
    %v4131 = vadd.f32 %v4072, %v4123
    %v4132 = vadd.f32 %v4073, %v4119
    %v4133 = vadd.f32 %v4074, %v4123
    %v4134 = vadd.f32 %v4075, %v4119
    %v4135 = vadd.f32 %v4076, %v4123
    %v4136 = vadd.f32 %v4077, %v4119
    %v4137 = vadd.f32 %v4078, %v4123
    %v4138 = vadd.f32 %v4079, %v4119
    %v4139 = vadd.f32 %v4080, %v4123
    %v4140 = vadd.f32 %v4081, %v4119
    %v4141 = vadd.f32 %v4082, %v4123
    %v4142 = vadd.f32 %v4083, %v4119
    %v4143 = vadd.f32 %v4084, %v4123
    %v4144 = vadd.f32 %v4085, %v4119
    %v4145 = vadd.f32 %v4086, %v4123
    %v4146 = vadd.f32 %v4087, %v4119
    %v4147 = vadd.f32 %v4088, %v4123
    %v4148 = vadd.f32 %v4089, %v4119
    %v4149 = vadd.f32 %v4090, %v4123
    %v4150 = vadd.f32 %v4091, %v4119
    %v4151 = vadd.f32 %v4092, %v4123
    %v4152 = vadd.f32 %v4093, %v4119
    %v4153 = vadd.f32 %v4094, %v4123
    %v4154 = vadd.f32 %v4095, %v4119
    %v4155 = vadd.f32 %v4096, %v4123
    %v4156 = vadd.f32 %v4097, %v4119
    %v4157 = vadd.f32 %v4098, %v4123
    %v4158 = vadd.f32 %v4099, %v4119
    %v4159 = vadd.f32 %v4100, %v4123
    %v4160 = vadd.f32 %v4101, %v4119
    %v4161 = vadd.f32 %v4102, %v4123
    %v4162 = vadd.f32 %v4103, %v4119
    %v4163 = vadd.f32 %v4104, %v4123
    %v4164 = vadd.f32 %v4105, %v4119
    %v4165 = vadd.f32 %v4106, %v4123
    %v4166 = vadd.f32 %v4107, %v4119
    %v4167 = vadd.f32 %v4108, %v4123
    %v4168 = vadd.f32 %v4109, %v4119
    %v4169 = vadd.f32 %v4110, %v4123
    %v4170 = vadd.f32 %v4111, %v4119
    %v4171 = vadd.f32 %v4112, %v4123
    %v4172 = vadd.f32 %v4113, %v4119
    %v4173 = vadd.f32 %v4114, %v4123
    %v4174 = vmax.f32 %v4126, 0.0
    %v4175 = vmax.f32 %v4127, 0.0
    %v4176 = vmax.f32 %v4128, 0.0
    %v4177 = vmax.f32 %v4129, 0.0
    %v4178 = vmax.f32 %v4130, 0.0
    %v4179 = vmax.f32 %v4131, 0.0
    %v4180 = vmax.f32 %v4132, 0.0
    %v4181 = vmax.f32 %v4133, 0.0
    %v4182 = vmax.f32 %v4134, 0.0
    %v4183 = vmax.f32 %v4135, 0.0
    %v4184 = vmax.f32 %v4136, 0.0
    %v4185 = vmax.f32 %v4137, 0.0
    %v4186 = vmax.f32 %v4138, 0.0
    %v4187 = vmax.f32 %v4139, 0.0
    %v4188 = vmax.f32 %v4140, 0.0
    %v4189 = vmax.f32 %v4141, 0.0
    %v4190 = vmax.f32 %v4142, 0.0
    %v4191 = vmax.f32 %v4143, 0.0
    %v4192 = vmax.f32 %v4144, 0.0
    %v4193 = vmax.f32 %v4145, 0.0
    %v4194 = vmax.f32 %v4146, 0.0
    %v4195 = vmax.f32 %v4147, 0.0
    %v4196 = vmax.f32 %v4148, 0.0
    %v4197 = vmax.f32 %v4149, 0.0
    %v4198 = vmax.f32 %v4150, 0.0
    %v4199 = vmax.f32 %v4151, 0.0
    %v4200 = vmax.f32 %v4152, 0.0
    %v4201 = vmax.f32 %v4153, 0.0
    %v4202 = vmax.f32 %v4154, 0.0
    %v4203 = vmax.f32 %v4155, 0.0
    %v4204 = vmax.f32 %v4156, 0.0
    %v4205 = vmax.f32 %v4157, 0.0
    %v4206 = vmax.f32 %v4158, 0.0
    %v4207 = vmax.f32 %v4159, 0.0
    %v4208 = vmax.f32 %v4160, 0.0
    %v4209 = vmax.f32 %v4161, 0.0
    %v4210 = vmax.f32 %v4162, 0.0
    %v4211 = vmax.f32 %v4163, 0.0
    %v4212 = vmax.f32 %v4164, 0.0
    %v4213 = vmax.f32 %v4165, 0.0
    %v4214 = vmax.f32 %v4166, 0.0
    %v4215 = vmax.f32 %v4167, 0.0
    %v4216 = vmax.f32 %v4168, 0.0
    %v4217 = vmax.f32 %v4169, 0.0
    %v4218 = vmax.f32 %v4170, 0.0
    %v4219 = vmax.f32 %v4171, 0.0
    %v4220 = vmax.f32 %v4172, 0.0
    %v4221 = vmax.f32 %v4173, 0.0
    %v4222 = vpack.c.bf16 %v4176, %v4174
    %v4223 = vpack.c.bf16 %v4177, %v4175
    %v4224 = vpack.c.bf16 %v4180, %v4178
    %v4225 = vpack.c.bf16 %v4181, %v4179
    %v4226 = vpack.c.bf16 %v4184, %v4182
    %v4227 = vpack.c.bf16 %v4185, %v4183
    %v4228 = vpack.c.bf16 %v4188, %v4186
    %v4229 = vpack.c.bf16 %v4189, %v4187
    %v4230 = vpack.c.bf16 %v4192, %v4190
    %v4231 = vpack.c.bf16 %v4193, %v4191
    %v4232 = vpack.c.bf16 %v4196, %v4194
    %v4233 = vpack.c.bf16 %v4197, %v4195
    %v4234 = vpack.c.bf16 %v4200, %v4198
    %v4235 = vpack.c.bf16 %v4201, %v4199
    %v4236 = vpack.c.bf16 %v4204, %v4202
    %v4237 = vpack.c.bf16 %v4205, %v4203
    %v4238 = vpack.c.bf16 %v4208, %v4206
    %v4239 = vpack.c.bf16 %v4209, %v4207
    %v4240 = vpack.c.bf16 %v4212, %v4210
    %v4241 = vpack.c.bf16 %v4213, %v4211
    %v4242 = vpack.c.bf16 %v4216, %v4214
    %v4243 = vpack.c.bf16 %v4217, %v4215
    %v4244 = vpack.c.bf16 %v4220, %v4218
    %v4245 = vpack.c.bf16 %v4221, %v4219
    %v4246 = vld [vmem:[%s6] sm:$0x1]
    %v4247 = vld [vmem:[#allocation2] sm:$0xf]
    %v4248 = vld [vmem:[#allocation2 + $0x4] sm:$0xf]
    %v4249 = vld [vmem:[#allocation2 + $0x8] sm:$0xf]
    %v4250 = vld [vmem:[#allocation2 + $0xc] sm:$0xf]
    %v4251 = vld [vmem:[#allocation2 + $0x10] sm:$0xf]
    %v4252 = vld [vmem:[#allocation2 + $0x14] sm:$0xf]
    %v4253 = vld [vmem:[#allocation2 + $0x18] sm:$0xf]
    %v4254 = vld [vmem:[#allocation2 + $0x1c] sm:$0xf]
    %v4255 = vld [vmem:[#allocation2 + $0x20] sm:$0xf]
    %v4256 = vld [vmem:[#allocation2 + $0x24] sm:$0xf]
    %v4257 = vld [vmem:[#allocation2 + $0x28] sm:$0xf]
    %v4258 = vld [vmem:[#allocation2 + $0x2c] sm:$0xf]
    %v4259 = vld [vmem:[#allocation2 + $0x30] sm:$0xf]
    %v4260 = vld [vmem:[#allocation2 + $0x34] sm:$0xf]
    %v4261 = vld [vmem:[#allocation2 + $0x38] sm:$0xf]
    %v4262 = vld [vmem:[#allocation2 + $0x3c] sm:$0xf]
    %v4263 = vld [vmem:[#allocation2 + $0x40] sm:$0xf]
    %v4264 = vld [vmem:[#allocation2 + $0x44] sm:$0xf]
    %v4265 = vld [vmem:[#allocation2 + $0x48] sm:$0xf]
    %v4266 = vld [vmem:[#allocation2 + $0x4c] sm:$0xf]
    %v4267 = vld [vmem:[#allocation2 + $0x50] sm:$0xf]
    %v4268 = vld [vmem:[#allocation2 + $0x54] sm:$0xf]
    %v4269 = vld [vmem:[#allocation2 + $0x58] sm:$0xf]
    %v4270 = vld [vmem:[#allocation2 + $0x5c] sm:$0xf]
    %v4271 = vld [vmem:[#allocation2 + $0x60] sm:$0xf]
    %v4272 = vld [vmem:[#allocation2 + $0x64] sm:$0xf]
    %v4273 = vld [vmem:[#allocation2 + $0x68] sm:$0xf]
    %v4274 = vld [vmem:[#allocation2 + $0x6c] sm:$0xf]
    %v4275 = vld [vmem:[#allocation2 + $0x70] sm:$0xf]
    %v4276 = vld [vmem:[#allocation2 + $0x74] sm:$0xf]
    %v4277 = vld [vmem:[#allocation2 + $0x78] sm:$0xf]
    %v4278 = vld [vmem:[#allocation2 + $0x7c] sm:$0xf]
    %v4279 = vld [vmem:[#allocation4] sm:$0xf]
    %v4280 = vld [vmem:[#allocation4 + $0x4] sm:$0xf]
    %v4281 = vld [vmem:[#allocation4 + $0x8] sm:$0xf]
    %v4282 = vld [vmem:[#allocation4 + $0xc] sm:$0xf]
    %v4283 = vld [vmem:[#allocation4 + $0x10] sm:$0xf]
    %v4284 = vld [vmem:[#allocation4 + $0x14] sm:$0xf]
    %v4285 = vld [vmem:[#allocation4 + $0x18] sm:$0xf]
    %v4286 = vld [vmem:[#allocation4 + $0x1c] sm:$0xf]
    %v4287 = vld [vmem:[#allocation4 + $0x20] sm:$0xf]
    %v4288 = vld [vmem:[#allocation4 + $0x24] sm:$0xf]
    %v4289 = vld [vmem:[#allocation4 + $0x28] sm:$0xf]
    %v4290 = vld [vmem:[#allocation4 + $0x2c] sm:$0xf]
    %v4291 = vld [vmem:[#allocation4 + $0x30] sm:$0xf]
    %v4292 = vld [vmem:[#allocation4 + $0x34] sm:$0xf]
    %v4293 = vld [vmem:[#allocation4 + $0x38] sm:$0xf]
    %v4294 = vld [vmem:[#allocation4 + $0x3c] sm:$0xf]
    %v4295 = vld [vmem:[#allocation4 + $0x40] sm:$0xf]
    %v4296 = vld [vmem:[#allocation4 + $0x44] sm:$0xf]
    %v4297 = vld [vmem:[#allocation4 + $0x48] sm:$0xf]
    %v4298 = vld [vmem:[#allocation4 + $0x4c] sm:$0xf]
    %v4299 = vld [vmem:[#allocation4 + $0x50] sm:$0xf]
    %v4300 = vld [vmem:[#allocation4 + $0x54] sm:$0xf]
    %v4301 = vld [vmem:[#allocation4 + $0x58] sm:$0xf]
    %v4302 = vld [vmem:[#allocation4 + $0x5c] sm:$0xf]
    %v4303 = vld [vmem:[#allocation4 + $0x60] sm:$0xf]
    %v4304 = vld [vmem:[#allocation4 + $0x64] sm:$0xf]
    %v4305 = vld [vmem:[#allocation4 + $0x68] sm:$0xf]
    %v4306 = vld [vmem:[#allocation4 + $0x6c] sm:$0xf]
    %v4307 = vld [vmem:[#allocation4 + $0x70] sm:$0xf]
    %v4308 = vld [vmem:[#allocation4 + $0x74] sm:$0xf]
    %v4309 = vld [vmem:[#allocation4 + $0x78] sm:$0xf]
    %v4310 = vld [vmem:[#allocation4 + $0x7c] sm:$0xf]
    %s4311 = scalar_lea.vmem [#allocation2], 128
    %v4312 = vld [vmem:[%s4311] sm:$0xf]
    %v4313 = vld [vmem:[%s4311 + $0x4] sm:$0xf]
    %v4314 = vld [vmem:[%s4311 + $0x8] sm:$0xf]
    %v4315 = vld [vmem:[%s4311 + $0xc] sm:$0xf]
    %v4316 = vld [vmem:[%s4311 + $0x10] sm:$0xf]
    %v4317 = vld [vmem:[%s4311 + $0x14] sm:$0xf]
    %v4318 = vld [vmem:[%s4311 + $0x18] sm:$0xf]
    %v4319 = vld [vmem:[%s4311 + $0x1c] sm:$0xf]
    %v4320 = vld [vmem:[%s4311 + $0x20] sm:$0xf]
    %v4321 = vld [vmem:[%s4311 + $0x24] sm:$0xf]
    %v4322 = vld [vmem:[%s4311 + $0x28] sm:$0xf]
    %v4323 = vld [vmem:[%s4311 + $0x2c] sm:$0xf]
    %v4324 = vld [vmem:[%s4311 + $0x30] sm:$0xf]
    %v4325 = vld [vmem:[%s4311 + $0x34] sm:$0xf]
    %v4326 = vld [vmem:[%s4311 + $0x38] sm:$0xf]
    %v4327 = vld [vmem:[%s4311 + $0x3c] sm:$0xf]
    %v4328 = vld [vmem:[%s4311 + $0x40] sm:$0xf]
    %v4329 = vld [vmem:[%s4311 + $0x44] sm:$0xf]
    %v4330 = vld [vmem:[%s4311 + $0x48] sm:$0xf]
    %v4331 = vld [vmem:[%s4311 + $0x4c] sm:$0xf]
    %v4332 = vld [vmem:[%s4311 + $0x50] sm:$0xf]
    %v4333 = vld [vmem:[%s4311 + $0x54] sm:$0xf]
    %v4334 = vld [vmem:[%s4311 + $0x58] sm:$0xf]
    %v4335 = vld [vmem:[%s4311 + $0x5c] sm:$0xf]
    %v4336 = vld [vmem:[%s4311 + $0x60] sm:$0xf]
    %v4337 = vld [vmem:[%s4311 + $0x64] sm:$0xf]
    %v4338 = vld [vmem:[%s4311 + $0x68] sm:$0xf]
    %v4339 = vld [vmem:[%s4311 + $0x6c] sm:$0xf]
    %v4340 = vld [vmem:[%s4311 + $0x70] sm:$0xf]
    %v4341 = vld [vmem:[%s4311 + $0x74] sm:$0xf]
    %v4342 = vld [vmem:[%s4311 + $0x78] sm:$0xf]
    %v4343 = vld [vmem:[%s4311 + $0x7c] sm:$0xf]
    %v4376 = vunpack.c.l.b16 %v4312
    %v4377 = vunpack.c.l.b16 %v4313
    %v4378 = vunpack.c.l.b16 %v4314
    %v4379 = vunpack.c.l.b16 %v4315
    %v4380 = vunpack.c.l.b16 %v4316
    %v4381 = vunpack.c.l.b16 %v4317
    %v4382 = vunpack.c.l.b16 %v4318
    %v4383 = vunpack.c.l.b16 %v4319
    %v4384 = vunpack.c.l.b16 %v4320
    %v4385 = vunpack.c.l.b16 %v4321
    %v4386 = vunpack.c.l.b16 %v4322
    %v4387 = vunpack.c.l.b16 %v4323
    %v4388 = vunpack.c.l.b16 %v4324
    %v4389 = vunpack.c.l.b16 %v4325
    %v4390 = vunpack.c.l.b16 %v4326
    %v4391 = vunpack.c.l.b16 %v4327
    %v4392 = vunpack.c.l.b16 %v4328
    %v4393 = vunpack.c.l.b16 %v4329
    %v4394 = vunpack.c.l.b16 %v4330
    %v4395 = vunpack.c.l.b16 %v4331
    %v4396 = vunpack.c.l.b16 %v4332
    %v4397 = vunpack.c.l.b16 %v4333
    %v4398 = vunpack.c.l.b16 %v4334
    %v4399 = vunpack.c.l.b16 %v4335
    %v4400 = vunpack.c.l.b16 %v4336
    %v4401 = vunpack.c.l.b16 %v4337
    %v4402 = vunpack.c.l.b16 %v4338
    %v4403 = vunpack.c.l.b16 %v4339
    %v4404 = vunpack.c.l.b16 %v4340
    %v4405 = vunpack.c.l.b16 %v4341
    %v4406 = vunpack.c.l.b16 %v4342
    %v4407 = vunpack.c.l.b16 %v4343
    %v4408 = vpack.c.b16 %v4377, %v4376
    %v4409 = vpack.c.b16 %v4379, %v4378
    %v4410 = vpack.c.b16 %v4381, %v4380
    %v4411 = vpack.c.b16 %v4383, %v4382
    %v4412 = vpack.c.b16 %v4385, %v4384
    %v4413 = vpack.c.b16 %v4387, %v4386
    %v4414 = vpack.c.b16 %v4389, %v4388
    %v4415 = vpack.c.b16 %v4391, %v4390
    %v4416 = vpack.c.b16 %v4393, %v4392
    %v4417 = vpack.c.b16 %v4395, %v4394
    %v4418 = vpack.c.b16 %v4397, %v4396
    %v4419 = vpack.c.b16 %v4399, %v4398
    %v4420 = vpack.c.b16 %v4401, %v4400
    %v4421 = vpack.c.b16 %v4403, %v4402
    %v4422 = vpack.c.b16 %v4405, %v4404
    %v4423 = vpack.c.b16 %v4407, %v4406
    %4440 = vmatprep.subr.bf16.mxu0 0
    %4441 = vmatpush1.bf16.msra.mxu0 %v4415
    %4442 = vmatprep.subr.bf16.mxu0 0
    %4443 = vmatpush1.bf16.msra.mxu0 %v4414
    %4444 = vmatprep.subr.bf16.mxu0 0
    %4445 = vmatpush1.bf16.msra.mxu0 %v4413
    %4446 = vmatprep.subr.bf16.mxu0 0
    %4447 = vmatpush1.bf16.msra.mxu0 %v4412
    %4448 = vmatprep.subr.bf16.mxu0 0
    %4449 = vmatpush1.bf16.msra.mxu0 %v4411
    %4450 = vmatprep.subr.bf16.mxu0 0
    %4451 = vmatpush1.bf16.msra.mxu0 %v4410
    %4452 = vmatprep.subr.bf16.mxu0 0
    %4453 = vmatpush1.bf16.msra.mxu0 %v4409
    %4454 = vmatprep.subr.bf16.mxu0 0
    %4455 = vmatpush1.bf16.msra.mxu0 %v4408
    %4456 = vmatprep.subr.bf16.mxu0 0
    %4457 = vmatpush2.bf16.msra.mxu0 %v4423
    %4458 = vmatprep.subr.bf16.mxu0 0
    %4459 = vmatpush2.bf16.msra.mxu0 %v4422
    %4460 = vmatprep.subr.bf16.mxu0 0
    %4461 = vmatpush2.bf16.msra.mxu0 %v4421
    %4462 = vmatprep.subr.bf16.mxu0 0
    %4463 = vmatpush2.bf16.msra.mxu0 %v4420
    %4464 = vmatprep.subr.bf16.mxu0 0
    %4465 = vmatpush2.bf16.msra.mxu0 %v4419
    %4466 = vmatprep.subr.bf16.mxu0 0
    %4467 = vmatpush2.bf16.msra.mxu0 %v4418
    %4468 = vmatprep.subr.bf16.mxu0 0
    %4469 = vmatpush2.bf16.msra.mxu0 %v4417
    %4470 = vmatprep.subr.bf16.mxu0 0
    %4471 = vmatpush2.bf16.msra.mxu0 %v4416
    %4472 = vmatprep.mubr.bf16.mxu0 %v4225
    %4473 = vmatmul.mubr.bf16.gmra.mxu0 %v4224
    %v4474 = vpop.f32.mrf.mxu0
    %v4475 = vadd.f32 0.0, %v4474
    %v4476 = vpop.f32.mrf.mxu0
    %v4477 = vpop.f32.mrf.mxu0
    %v4478 = vadd.f32 0.0, %v4477
    %v4479 = vpop.f32.mrf.mxu0
    %4480 = vmatprep.mubr.bf16.mxu0 %v4227
    %4481 = vmatmul.mubr.bf16.gmra.mxu0 %v4226
    %v4482 = vpop.f32.mrf.mxu0
    %v4483 = vadd.f32 0.0, %v4482
    %v4484 = vpop.f32.mrf.mxu0
    %v4485 = vpop.f32.mrf.mxu0
    %v4486 = vadd.f32 0.0, %v4485
    %v4487 = vpop.f32.mrf.mxu0
    %4488 = vmatprep.mubr.bf16.mxu0 %v4229
    %4489 = vmatmul.mubr.bf16.gmra.mxu0 %v4228
    %v4490 = vpop.f32.mrf.mxu0
    %v4491 = vadd.f32 0.0, %v4490
    %v4492 = vpop.f32.mrf.mxu0
    %v4493 = vpop.f32.mrf.mxu0
    %v4494 = vadd.f32 0.0, %v4493
    %v4495 = vpop.f32.mrf.mxu0
    %4496 = vmatprep.mubr.bf16.mxu0 %v4231
    %4497 = vmatmul.mubr.bf16.gmra.mxu0 %v4230
    %v4498 = vpop.f32.mrf.mxu0
    %v4499 = vadd.f32 0.0, %v4498
    %v4500 = vpop.f32.mrf.mxu0
    %v4501 = vpop.f32.mrf.mxu0
    %v4502 = vadd.f32 0.0, %v4501
    %v4503 = vpop.f32.mrf.mxu0
    %4504 = vmatprep.mubr.bf16.mxu0 %v4233
    %4505 = vmatmul.mubr.bf16.gmra.mxu0 %v4232
    %v4506 = vpop.f32.mrf.mxu0
    %v4507 = vadd.f32 0.0, %v4506
    %v4508 = vpop.f32.mrf.mxu0
    %v4509 = vpop.f32.mrf.mxu0
    %v4510 = vadd.f32 0.0, %v4509
    %v4511 = vpop.f32.mrf.mxu0
    %4512 = vmatprep.mubr.bf16.mxu0 %v4235
    %4513 = vmatmul.mubr.bf16.gmra.mxu0 %v4234
    %v4514 = vpop.f32.mrf.mxu0
    %v4515 = vadd.f32 0.0, %v4514
    %v4516 = vpop.f32.mrf.mxu0
    %v4517 = vpop.f32.mrf.mxu0
    %v4518 = vadd.f32 0.0, %v4517
    %v4519 = vpop.f32.mrf.mxu0
    %4520 = vmatprep.mubr.bf16.mxu0 %v4237
    %4521 = vmatmul.mubr.bf16.gmra.mxu0 %v4236
    %v4522 = vpop.f32.mrf.mxu0
    %v4523 = vadd.f32 0.0, %v4522
    %v4524 = vpop.f32.mrf.mxu0
    %v4525 = vpop.f32.mrf.mxu0
    %v4526 = vadd.f32 0.0, %v4525
    %v4527 = vpop.f32.mrf.mxu0
    %4528 = vmatprep.mubr.bf16.mxu0 %v4239
    %4529 = vmatmul.mubr.bf16.gmra.mxu0 %v4238
    %v4530 = vpop.f32.mrf.mxu0
    %v4531 = vadd.f32 0.0, %v4530
    %v4532 = vpop.f32.mrf.mxu0
    %v4533 = vpop.f32.mrf.mxu0
    %v4534 = vadd.f32 0.0, %v4533
    %v4535 = vpop.f32.mrf.mxu0
    %4536 = vdwg.mxu0
    %s4537 = scalar_lea.vmem [#allocation4], 128
    %v4538 = vld [vmem:[%s4537] sm:$0xf]
    %v4539 = vld [vmem:[%s4537 + $0x4] sm:$0xf]
    %v4540 = vld [vmem:[%s4537 + $0x8] sm:$0xf]
    %v4541 = vld [vmem:[%s4537 + $0xc] sm:$0xf]
    %v4542 = vld [vmem:[%s4537 + $0x10] sm:$0xf]
    %v4543 = vld [vmem:[%s4537 + $0x14] sm:$0xf]
    %v4544 = vld [vmem:[%s4537 + $0x18] sm:$0xf]
    %v4545 = vld [vmem:[%s4537 + $0x1c] sm:$0xf]
    %v4546 = vld [vmem:[%s4537 + $0x20] sm:$0xf]
    %v4547 = vld [vmem:[%s4537 + $0x24] sm:$0xf]
    %v4548 = vld [vmem:[%s4537 + $0x28] sm:$0xf]
    %v4549 = vld [vmem:[%s4537 + $0x2c] sm:$0xf]
    %v4550 = vld [vmem:[%s4537 + $0x30] sm:$0xf]
    %v4551 = vld [vmem:[%s4537 + $0x34] sm:$0xf]
    %v4552 = vld [vmem:[%s4537 + $0x38] sm:$0xf]
    %v4553 = vld [vmem:[%s4537 + $0x3c] sm:$0xf]
    %v4554 = vld [vmem:[%s4537 + $0x40] sm:$0xf]
    %v4555 = vld [vmem:[%s4537 + $0x44] sm:$0xf]
    %v4556 = vld [vmem:[%s4537 + $0x48] sm:$0xf]
    %v4557 = vld [vmem:[%s4537 + $0x4c] sm:$0xf]
    %v4558 = vld [vmem:[%s4537 + $0x50] sm:$0xf]
    %v4559 = vld [vmem:[%s4537 + $0x54] sm:$0xf]
    %v4560 = vld [vmem:[%s4537 + $0x58] sm:$0xf]
    %v4561 = vld [vmem:[%s4537 + $0x5c] sm:$0xf]
    %v4562 = vld [vmem:[%s4537 + $0x60] sm:$0xf]
    %v4563 = vld [vmem:[%s4537 + $0x64] sm:$0xf]
    %v4564 = vld [vmem:[%s4537 + $0x68] sm:$0xf]
    %v4565 = vld [vmem:[%s4537 + $0x6c] sm:$0xf]
    %v4566 = vld [vmem:[%s4537 + $0x70] sm:$0xf]
    %v4567 = vld [vmem:[%s4537 + $0x74] sm:$0xf]
    %v4568 = vld [vmem:[%s4537 + $0x78] sm:$0xf]
    %v4569 = vld [vmem:[%s4537 + $0x7c] sm:$0xf]
    %v4602 = vunpack.c.l.b16 %v4538
    %v4603 = vunpack.c.l.b16 %v4539
    %v4604 = vunpack.c.l.b16 %v4540
    %v4605 = vunpack.c.l.b16 %v4541
    %v4606 = vunpack.c.l.b16 %v4542
    %v4607 = vunpack.c.l.b16 %v4543
    %v4608 = vunpack.c.l.b16 %v4544
    %v4609 = vunpack.c.l.b16 %v4545
    %v4610 = vunpack.c.l.b16 %v4546
    %v4611 = vunpack.c.l.b16 %v4547
    %v4612 = vunpack.c.l.b16 %v4548
    %v4613 = vunpack.c.l.b16 %v4549
    %v4614 = vunpack.c.l.b16 %v4550
    %v4615 = vunpack.c.l.b16 %v4551
    %v4616 = vunpack.c.l.b16 %v4552
    %v4617 = vunpack.c.l.b16 %v4553
    %v4618 = vunpack.c.l.b16 %v4554
    %v4619 = vunpack.c.l.b16 %v4555
    %v4620 = vunpack.c.l.b16 %v4556
    %v4621 = vunpack.c.l.b16 %v4557
    %v4622 = vunpack.c.l.b16 %v4558
    %v4623 = vunpack.c.l.b16 %v4559
    %v4624 = vunpack.c.l.b16 %v4560
    %v4625 = vunpack.c.l.b16 %v4561
    %v4626 = vunpack.c.l.b16 %v4562
    %v4627 = vunpack.c.l.b16 %v4563
    %v4628 = vunpack.c.l.b16 %v4564
    %v4629 = vunpack.c.l.b16 %v4565
    %v4630 = vunpack.c.l.b16 %v4566
    %v4631 = vunpack.c.l.b16 %v4567
    %v4632 = vunpack.c.l.b16 %v4568
    %v4633 = vunpack.c.l.b16 %v4569
    %v4634 = vpack.c.b16 %v4603, %v4602
    %v4635 = vpack.c.b16 %v4605, %v4604
    %v4636 = vpack.c.b16 %v4607, %v4606
    %v4637 = vpack.c.b16 %v4609, %v4608
    %v4638 = vpack.c.b16 %v4611, %v4610
    %v4639 = vpack.c.b16 %v4613, %v4612
    %v4640 = vpack.c.b16 %v4615, %v4614
    %v4641 = vpack.c.b16 %v4617, %v4616
    %v4642 = vpack.c.b16 %v4619, %v4618
    %v4643 = vpack.c.b16 %v4621, %v4620
    %v4644 = vpack.c.b16 %v4623, %v4622
    %v4645 = vpack.c.b16 %v4625, %v4624
    %v4646 = vpack.c.b16 %v4627, %v4626
    %v4647 = vpack.c.b16 %v4629, %v4628
    %v4648 = vpack.c.b16 %v4631, %v4630
    %v4649 = vpack.c.b16 %v4633, %v4632
    %4666 = vmatprep.subr.bf16.mxu0 0
    %4667 = vmatpush1.bf16.msra.mxu0 %v4641
    %4668 = vmatprep.subr.bf16.mxu0 0
    %4669 = vmatpush1.bf16.msra.mxu0 %v4640
    %4670 = vmatprep.subr.bf16.mxu0 0
    %4671 = vmatpush1.bf16.msra.mxu0 %v4639
    %4672 = vmatprep.subr.bf16.mxu0 0
    %4673 = vmatpush1.bf16.msra.mxu0 %v4638
    %4674 = vmatprep.subr.bf16.mxu0 0
    %4675 = vmatpush1.bf16.msra.mxu0 %v4637
    %4676 = vmatprep.subr.bf16.mxu0 0
    %4677 = vmatpush1.bf16.msra.mxu0 %v4636
    %4678 = vmatprep.subr.bf16.mxu0 0
    %4679 = vmatpush1.bf16.msra.mxu0 %v4635
    %4680 = vmatprep.subr.bf16.mxu0 0
    %4681 = vmatpush1.bf16.msra.mxu0 %v4634
    %4682 = vmatprep.subr.bf16.mxu0 0
    %4683 = vmatpush2.bf16.msra.mxu0 %v4649
    %4684 = vmatprep.subr.bf16.mxu0 0
    %4685 = vmatpush2.bf16.msra.mxu0 %v4648
    %4686 = vmatprep.subr.bf16.mxu0 0
    %4687 = vmatpush2.bf16.msra.mxu0 %v4647
    %4688 = vmatprep.subr.bf16.mxu0 0
    %4689 = vmatpush2.bf16.msra.mxu0 %v4646
    %4690 = vmatprep.subr.bf16.mxu0 0
    %4691 = vmatpush2.bf16.msra.mxu0 %v4645
    %4692 = vmatprep.subr.bf16.mxu0 0
    %4693 = vmatpush2.bf16.msra.mxu0 %v4644
    %4694 = vmatprep.subr.bf16.mxu0 0
    %4695 = vmatpush2.bf16.msra.mxu0 %v4643
    %4696 = vmatprep.subr.bf16.mxu0 0
    %4697 = vmatpush2.bf16.msra.mxu0 %v4642
    %4698 = vmatprep.mubr.bf16.mxu0 %v4225
    %4699 = vmatmul.mubr.bf16.gmra.mxu0 %v4224
    %v4700 = vpop.f32.mrf.mxu0
    %v4701 = vadd.f32 0.0, %v4700
    %v4702 = vpop.f32.mrf.mxu0
    %v4703 = vpop.f32.mrf.mxu0
    %v4704 = vadd.f32 0.0, %v4703
    %v4705 = vpop.f32.mrf.mxu0
    %4706 = vmatprep.mubr.bf16.mxu0 %v4227
    %4707 = vmatmul.mubr.bf16.gmra.mxu0 %v4226
    %v4708 = vpop.f32.mrf.mxu0
    %v4709 = vadd.f32 0.0, %v4708
    %v4710 = vpop.f32.mrf.mxu0
    %v4711 = vpop.f32.mrf.mxu0
    %v4712 = vadd.f32 0.0, %v4711
    %v4713 = vpop.f32.mrf.mxu0
    %4714 = vmatprep.mubr.bf16.mxu0 %v4229
    %4715 = vmatmul.mubr.bf16.gmra.mxu0 %v4228
    %v4716 = vpop.f32.mrf.mxu0
    %v4717 = vadd.f32 0.0, %v4716
    %v4718 = vpop.f32.mrf.mxu0
    %v4719 = vpop.f32.mrf.mxu0
    %v4720 = vadd.f32 0.0, %v4719
    %v4721 = vpop.f32.mrf.mxu0
    %4722 = vmatprep.mubr.bf16.mxu0 %v4231
    %4723 = vmatmul.mubr.bf16.gmra.mxu0 %v4230
    %v4724 = vpop.f32.mrf.mxu0
    %v4725 = vadd.f32 0.0, %v4724
    %v4726 = vpop.f32.mrf.mxu0
    %v4727 = vpop.f32.mrf.mxu0
    %v4728 = vadd.f32 0.0, %v4727
    %v4729 = vpop.f32.mrf.mxu0
    %4730 = vmatprep.mubr.bf16.mxu0 %v4233
    %4731 = vmatmul.mubr.bf16.gmra.mxu0 %v4232
    %v4732 = vpop.f32.mrf.mxu0
    %v4733 = vadd.f32 0.0, %v4732
    %v4734 = vpop.f32.mrf.mxu0
    %v4735 = vpop.f32.mrf.mxu0
    %v4736 = vadd.f32 0.0, %v4735
    %v4737 = vpop.f32.mrf.mxu0
    %4738 = vmatprep.mubr.bf16.mxu0 %v4235
    %4739 = vmatmul.mubr.bf16.gmra.mxu0 %v4234
    %v4740 = vpop.f32.mrf.mxu0
    %v4741 = vadd.f32 0.0, %v4740
    %v4742 = vpop.f32.mrf.mxu0
    %v4743 = vpop.f32.mrf.mxu0
    %v4744 = vadd.f32 0.0, %v4743
    %v4745 = vpop.f32.mrf.mxu0
    %4746 = vmatprep.mubr.bf16.mxu0 %v4237
    %4747 = vmatmul.mubr.bf16.gmra.mxu0 %v4236
    %v4748 = vpop.f32.mrf.mxu0
    %v4749 = vadd.f32 0.0, %v4748
    %v4750 = vpop.f32.mrf.mxu0
    %v4751 = vpop.f32.mrf.mxu0
    %v4752 = vadd.f32 0.0, %v4751
    %v4753 = vpop.f32.mrf.mxu0
    %4754 = vmatprep.mubr.bf16.mxu0 %v4239
    %4755 = vmatmul.mubr.bf16.gmra.mxu0 %v4238
    %v4756 = vpop.f32.mrf.mxu0
    %v4757 = vadd.f32 0.0, %v4756
    %v4758 = vpop.f32.mrf.mxu0
    %v4759 = vpop.f32.mrf.mxu0
    %v4760 = vadd.f32 0.0, %v4759
    %v4761 = vpop.f32.mrf.mxu0
    %4762 = vdwg.mxu0
    %v4795 = vunpack.c.l.b16 %v4247
    %v4796 = vunpack.c.l.b16 %v4248
    %v4797 = vunpack.c.l.b16 %v4249
    %v4798 = vunpack.c.l.b16 %v4250
    %v4799 = vunpack.c.l.b16 %v4251
    %v4800 = vunpack.c.l.b16 %v4252
    %v4801 = vunpack.c.l.b16 %v4253
    %v4802 = vunpack.c.l.b16 %v4254
    %v4803 = vunpack.c.l.b16 %v4255
    %v4804 = vunpack.c.l.b16 %v4256
    %v4805 = vunpack.c.l.b16 %v4257
    %v4806 = vunpack.c.l.b16 %v4258
    %v4807 = vunpack.c.l.b16 %v4259
    %v4808 = vunpack.c.l.b16 %v4260
    %v4809 = vunpack.c.l.b16 %v4261
    %v4810 = vunpack.c.l.b16 %v4262
    %v4811 = vunpack.c.l.b16 %v4263
    %v4812 = vunpack.c.l.b16 %v4264
    %v4813 = vunpack.c.l.b16 %v4265
    %v4814 = vunpack.c.l.b16 %v4266
    %v4815 = vunpack.c.l.b16 %v4267
    %v4816 = vunpack.c.l.b16 %v4268
    %v4817 = vunpack.c.l.b16 %v4269
    %v4818 = vunpack.c.l.b16 %v4270
    %v4819 = vunpack.c.l.b16 %v4271
    %v4820 = vunpack.c.l.b16 %v4272
    %v4821 = vunpack.c.l.b16 %v4273
    %v4822 = vunpack.c.l.b16 %v4274
    %v4823 = vunpack.c.l.b16 %v4275
    %v4824 = vunpack.c.l.b16 %v4276
    %v4825 = vunpack.c.l.b16 %v4277
    %v4826 = vunpack.c.l.b16 %v4278
    %v4827 = vpack.c.b16 %v4796, %v4795
    %v4828 = vpack.c.b16 %v4798, %v4797
    %v4829 = vpack.c.b16 %v4800, %v4799
    %v4830 = vpack.c.b16 %v4802, %v4801
    %v4831 = vpack.c.b16 %v4804, %v4803
    %v4832 = vpack.c.b16 %v4806, %v4805
    %v4833 = vpack.c.b16 %v4808, %v4807
    %v4834 = vpack.c.b16 %v4810, %v4809
    %v4835 = vpack.c.b16 %v4812, %v4811
    %v4836 = vpack.c.b16 %v4814, %v4813
    %v4837 = vpack.c.b16 %v4816, %v4815
    %v4838 = vpack.c.b16 %v4818, %v4817
    %v4839 = vpack.c.b16 %v4820, %v4819
    %v4840 = vpack.c.b16 %v4822, %v4821
    %v4841 = vpack.c.b16 %v4824, %v4823
    %v4842 = vpack.c.b16 %v4826, %v4825
    %4859 = vmatprep.subr.bf16.mxu0 0
    %4860 = vmatpush1.bf16.msra.mxu0 %v4834
    %4861 = vmatprep.subr.bf16.mxu0 0
    %4862 = vmatpush1.bf16.msra.mxu0 %v4833
    %4863 = vmatprep.subr.bf16.mxu0 0
    %4864 = vmatpush1.bf16.msra.mxu0 %v4832
    %4865 = vmatprep.subr.bf16.mxu0 0
    %4866 = vmatpush1.bf16.msra.mxu0 %v4831
    %4867 = vmatprep.subr.bf16.mxu0 0
    %4868 = vmatpush1.bf16.msra.mxu0 %v4830
    %4869 = vmatprep.subr.bf16.mxu0 0
    %4870 = vmatpush1.bf16.msra.mxu0 %v4829
    %4871 = vmatprep.subr.bf16.mxu0 0
    %4872 = vmatpush1.bf16.msra.mxu0 %v4828
    %4873 = vmatprep.subr.bf16.mxu0 0
    %4874 = vmatpush1.bf16.msra.mxu0 %v4827
    %4875 = vmatprep.subr.bf16.mxu0 0
    %4876 = vmatpush2.bf16.msra.mxu0 %v4842
    %4877 = vmatprep.subr.bf16.mxu0 0
    %4878 = vmatpush2.bf16.msra.mxu0 %v4841
    %4879 = vmatprep.subr.bf16.mxu0 0
    %4880 = vmatpush2.bf16.msra.mxu0 %v4840
    %4881 = vmatprep.subr.bf16.mxu0 0
    %4882 = vmatpush2.bf16.msra.mxu0 %v4839
    %4883 = vmatprep.subr.bf16.mxu0 0
    %4884 = vmatpush2.bf16.msra.mxu0 %v4838
    %4885 = vmatprep.subr.bf16.mxu0 0
    %4886 = vmatpush2.bf16.msra.mxu0 %v4837
    %4887 = vmatprep.subr.bf16.mxu0 0
    %4888 = vmatpush2.bf16.msra.mxu0 %v4836
    %4889 = vmatprep.subr.bf16.mxu0 0
    %4890 = vmatpush2.bf16.msra.mxu0 %v4835
    %4891 = vmatprep.mubr.bf16.mxu0 %v4223
    %4892 = vmatmul.mubr.bf16.gmra.mxu0 %v4222
    %v4893 = vpop.f32.mrf.mxu0
    %v4894 = vadd.f32 %v4475, %v4893
    %v4895 = vpop.f32.mrf.mxu0
    %v4896 = vpop.f32.mrf.mxu0
    %v4897 = vadd.f32 %v4478, %v4896
    %v4898 = vpop.f32.mrf.mxu0
    %4899 = vmatprep.mubr.bf16.mxu0 %v4225
    %4900 = vmatmul.mubr.bf16.gmra.mxu0 %v4224
    %v4901 = vpop.f32.mrf.mxu0
    %v4902 = vadd.f32 %v4483, %v4901
    %v4903 = vpop.f32.mrf.mxu0
    %v4904 = vpop.f32.mrf.mxu0
    %v4905 = vadd.f32 %v4486, %v4904
    %v4906 = vpop.f32.mrf.mxu0
    %4907 = vmatprep.mubr.bf16.mxu0 %v4227
    %4908 = vmatmul.mubr.bf16.gmra.mxu0 %v4226
    %v4909 = vpop.f32.mrf.mxu0
    %v4910 = vadd.f32 %v4491, %v4909
    %v4911 = vpop.f32.mrf.mxu0
    %v4912 = vpop.f32.mrf.mxu0
    %v4913 = vadd.f32 %v4494, %v4912
    %v4914 = vpop.f32.mrf.mxu0
    %4915 = vmatprep.mubr.bf16.mxu0 %v4229
    %4916 = vmatmul.mubr.bf16.gmra.mxu0 %v4228
    %v4917 = vpop.f32.mrf.mxu0
    %v4918 = vadd.f32 %v4499, %v4917
    %v4919 = vpop.f32.mrf.mxu0
    %v4920 = vpop.f32.mrf.mxu0
    %v4921 = vadd.f32 %v4502, %v4920
    %v4922 = vpop.f32.mrf.mxu0
    %4923 = vmatprep.mubr.bf16.mxu0 %v4231
    %4924 = vmatmul.mubr.bf16.gmra.mxu0 %v4230
    %v4925 = vpop.f32.mrf.mxu0
    %v4926 = vadd.f32 %v4507, %v4925
    %v4927 = vpop.f32.mrf.mxu0
    %v4928 = vpop.f32.mrf.mxu0
    %v4929 = vadd.f32 %v4510, %v4928
    %v4930 = vpop.f32.mrf.mxu0
    %4931 = vmatprep.mubr.bf16.mxu0 %v4233
    %4932 = vmatmul.mubr.bf16.gmra.mxu0 %v4232
    %v4933 = vpop.f32.mrf.mxu0
    %v4934 = vadd.f32 %v4515, %v4933
    %v4935 = vpop.f32.mrf.mxu0
    %v4936 = vpop.f32.mrf.mxu0
    %v4937 = vadd.f32 %v4518, %v4936
    %v4938 = vpop.f32.mrf.mxu0
    %4939 = vmatprep.mubr.bf16.mxu0 %v4235
    %4940 = vmatmul.mubr.bf16.gmra.mxu0 %v4234
    %v4941 = vpop.f32.mrf.mxu0
    %v4942 = vadd.f32 %v4523, %v4941
    %v4943 = vpop.f32.mrf.mxu0
    %v4944 = vpop.f32.mrf.mxu0
    %v4945 = vadd.f32 %v4526, %v4944
    %v4946 = vpop.f32.mrf.mxu0
    %4947 = vmatprep.mubr.bf16.mxu0 %v4237
    %4948 = vmatmul.mubr.bf16.gmra.mxu0 %v4236
    %v4949 = vpop.f32.mrf.mxu0
    %v4950 = vadd.f32 %v4531, %v4949
    %v4951 = vpop.f32.mrf.mxu0
    %v4952 = vpop.f32.mrf.mxu0
    %v4953 = vadd.f32 %v4534, %v4952
    %v4954 = vpop.f32.mrf.mxu0
    %4955 = vdwg.mxu0
    %v4988 = vunpack.c.l.b16 %v4279
    %v4989 = vunpack.c.l.b16 %v4280
    %v4990 = vunpack.c.l.b16 %v4281
    %v4991 = vunpack.c.l.b16 %v4282
    %v4992 = vunpack.c.l.b16 %v4283
    %v4993 = vunpack.c.l.b16 %v4284
    %v4994 = vunpack.c.l.b16 %v4285
    %v4995 = vunpack.c.l.b16 %v4286
    %v4996 = vunpack.c.l.b16 %v4287
    %v4997 = vunpack.c.l.b16 %v4288
    %v4998 = vunpack.c.l.b16 %v4289
    %v4999 = vunpack.c.l.b16 %v4290
    %v5000 = vunpack.c.l.b16 %v4291
    %v5001 = vunpack.c.l.b16 %v4292
    %v5002 = vunpack.c.l.b16 %v4293
    %v5003 = vunpack.c.l.b16 %v4294
    %v5004 = vunpack.c.l.b16 %v4295
    %v5005 = vunpack.c.l.b16 %v4296
    %v5006 = vunpack.c.l.b16 %v4297
    %v5007 = vunpack.c.l.b16 %v4298
    %v5008 = vunpack.c.l.b16 %v4299
    %v5009 = vunpack.c.l.b16 %v4300
    %v5010 = vunpack.c.l.b16 %v4301
    %v5011 = vunpack.c.l.b16 %v4302
    %v5012 = vunpack.c.l.b16 %v4303
    %v5013 = vunpack.c.l.b16 %v4304
    %v5014 = vunpack.c.l.b16 %v4305
    %v5015 = vunpack.c.l.b16 %v4306
    %v5016 = vunpack.c.l.b16 %v4307
    %v5017 = vunpack.c.l.b16 %v4308
    %v5018 = vunpack.c.l.b16 %v4309
    %v5019 = vunpack.c.l.b16 %v4310
    %v5020 = vpack.c.b16 %v4989, %v4988
    %v5021 = vpack.c.b16 %v4991, %v4990
    %v5022 = vpack.c.b16 %v4993, %v4992
    %v5023 = vpack.c.b16 %v4995, %v4994
    %v5024 = vpack.c.b16 %v4997, %v4996
    %v5025 = vpack.c.b16 %v4999, %v4998
    %v5026 = vpack.c.b16 %v5001, %v5000
    %v5027 = vpack.c.b16 %v5003, %v5002
    %v5028 = vpack.c.b16 %v5005, %v5004
    %v5029 = vpack.c.b16 %v5007, %v5006
    %v5030 = vpack.c.b16 %v5009, %v5008
    %v5031 = vpack.c.b16 %v5011, %v5010
    %v5032 = vpack.c.b16 %v5013, %v5012
    %v5033 = vpack.c.b16 %v5015, %v5014
    %v5034 = vpack.c.b16 %v5017, %v5016
    %v5035 = vpack.c.b16 %v5019, %v5018
    %5052 = vmatprep.subr.bf16.mxu0 0
    %5053 = vmatpush1.bf16.msra.mxu0 %v5027
    %5054 = vmatprep.subr.bf16.mxu0 0
    %5055 = vmatpush1.bf16.msra.mxu0 %v5026
    %5056 = vmatprep.subr.bf16.mxu0 0
    %5057 = vmatpush1.bf16.msra.mxu0 %v5025
    %5058 = vmatprep.subr.bf16.mxu0 0
    %5059 = vmatpush1.bf16.msra.mxu0 %v5024
    %5060 = vmatprep.subr.bf16.mxu0 0
    %5061 = vmatpush1.bf16.msra.mxu0 %v5023
    %5062 = vmatprep.subr.bf16.mxu0 0
    %5063 = vmatpush1.bf16.msra.mxu0 %v5022
    %5064 = vmatprep.subr.bf16.mxu0 0
    %5065 = vmatpush1.bf16.msra.mxu0 %v5021
    %5066 = vmatprep.subr.bf16.mxu0 0
    %5067 = vmatpush1.bf16.msra.mxu0 %v5020
    %5068 = vmatprep.subr.bf16.mxu0 0
    %5069 = vmatpush2.bf16.msra.mxu0 %v5035
    %5070 = vmatprep.subr.bf16.mxu0 0
    %5071 = vmatpush2.bf16.msra.mxu0 %v5034
    %5072 = vmatprep.subr.bf16.mxu0 0
    %5073 = vmatpush2.bf16.msra.mxu0 %v5033
    %5074 = vmatprep.subr.bf16.mxu0 0
    %5075 = vmatpush2.bf16.msra.mxu0 %v5032
    %5076 = vmatprep.subr.bf16.mxu0 0
    %5077 = vmatpush2.bf16.msra.mxu0 %v5031
    %5078 = vmatprep.subr.bf16.mxu0 0
    %5079 = vmatpush2.bf16.msra.mxu0 %v5030
    %5080 = vmatprep.subr.bf16.mxu0 0
    %5081 = vmatpush2.bf16.msra.mxu0 %v5029
    %5082 = vmatprep.subr.bf16.mxu0 0
    %5083 = vmatpush2.bf16.msra.mxu0 %v5028
    %5084 = vmatprep.mubr.bf16.mxu0 %v4223
    %5085 = vmatmul.mubr.bf16.gmra.mxu0 %v4222
    %v5086 = vpop.f32.mrf.mxu0
    %v5087 = vadd.f32 %v4701, %v5086
    %v5088 = vpop.f32.mrf.mxu0
    %v5089 = vpop.f32.mrf.mxu0
    %v5090 = vadd.f32 %v4704, %v5089
    %v5091 = vpop.f32.mrf.mxu0
    %5092 = vmatprep.mubr.bf16.mxu0 %v4225
    %5093 = vmatmul.mubr.bf16.gmra.mxu0 %v4224
    %v5094 = vpop.f32.mrf.mxu0
    %v5095 = vadd.f32 %v4709, %v5094
    %v5096 = vpop.f32.mrf.mxu0
    %v5097 = vpop.f32.mrf.mxu0
    %v5098 = vadd.f32 %v4712, %v5097
    %v5099 = vpop.f32.mrf.mxu0
    %5100 = vmatprep.mubr.bf16.mxu0 %v4227
    %5101 = vmatmul.mubr.bf16.gmra.mxu0 %v4226
    %v5102 = vpop.f32.mrf.mxu0
    %v5103 = vadd.f32 %v4717, %v5102
    %v5104 = vpop.f32.mrf.mxu0
    %v5105 = vpop.f32.mrf.mxu0
    %v5106 = vadd.f32 %v4720, %v5105
    %v5107 = vpop.f32.mrf.mxu0
    %5108 = vmatprep.mubr.bf16.mxu0 %v4229
    %5109 = vmatmul.mubr.bf16.gmra.mxu0 %v4228
    %v5110 = vpop.f32.mrf.mxu0
    %v5111 = vadd.f32 %v4725, %v5110
    %v5112 = vpop.f32.mrf.mxu0
    %v5113 = vpop.f32.mrf.mxu0
    %v5114 = vadd.f32 %v4728, %v5113
    %v5115 = vpop.f32.mrf.mxu0
    %5116 = vmatprep.mubr.bf16.mxu0 %v4231
    %5117 = vmatmul.mubr.bf16.gmra.mxu0 %v4230
    %v5118 = vpop.f32.mrf.mxu0
    %v5119 = vadd.f32 %v4733, %v5118
    %v5120 = vpop.f32.mrf.mxu0
    %v5121 = vpop.f32.mrf.mxu0
    %v5122 = vadd.f32 %v4736, %v5121
    %v5123 = vpop.f32.mrf.mxu0
    %5124 = vmatprep.mubr.bf16.mxu0 %v4233
    %5125 = vmatmul.mubr.bf16.gmra.mxu0 %v4232
    %v5126 = vpop.f32.mrf.mxu0
    %v5127 = vadd.f32 %v4741, %v5126
    %v5128 = vpop.f32.mrf.mxu0
    %v5129 = vpop.f32.mrf.mxu0
    %v5130 = vadd.f32 %v4744, %v5129
    %v5131 = vpop.f32.mrf.mxu0
    %5132 = vmatprep.mubr.bf16.mxu0 %v4235
    %5133 = vmatmul.mubr.bf16.gmra.mxu0 %v4234
    %v5134 = vpop.f32.mrf.mxu0
    %v5135 = vadd.f32 %v4749, %v5134
    %v5136 = vpop.f32.mrf.mxu0
    %v5137 = vpop.f32.mrf.mxu0
    %v5138 = vadd.f32 %v4752, %v5137
    %v5139 = vpop.f32.mrf.mxu0
    %5140 = vmatprep.mubr.bf16.mxu0 %v4237
    %5141 = vmatmul.mubr.bf16.gmra.mxu0 %v4236
    %v5142 = vpop.f32.mrf.mxu0
    %v5143 = vadd.f32 %v4757, %v5142
    %v5144 = vpop.f32.mrf.mxu0
    %v5145 = vpop.f32.mrf.mxu0
    %v5146 = vadd.f32 %v4760, %v5145
    %v5147 = vpop.f32.mrf.mxu0
    %5148 = vdwg.mxu0
    %s5149 = scalar_lea.vmem [#allocation2], 256
    %v5150 = vld [vmem:[%s5149] sm:$0xf]
    %v5151 = vld [vmem:[%s5149 + $0x4] sm:$0xf]
    %v5152 = vld [vmem:[%s5149 + $0x8] sm:$0xf]
    %v5153 = vld [vmem:[%s5149 + $0xc] sm:$0xf]
    %v5154 = vld [vmem:[%s5149 + $0x10] sm:$0xf]
    %v5155 = vld [vmem:[%s5149 + $0x14] sm:$0xf]
    %v5156 = vld [vmem:[%s5149 + $0x18] sm:$0xf]
    %v5157 = vld [vmem:[%s5149 + $0x1c] sm:$0xf]
    %v5158 = vld [vmem:[%s5149 + $0x20] sm:$0xf]
    %v5159 = vld [vmem:[%s5149 + $0x24] sm:$0xf]
    %v5160 = vld [vmem:[%s5149 + $0x28] sm:$0xf]
    %v5161 = vld [vmem:[%s5149 + $0x2c] sm:$0xf]
    %v5162 = vld [vmem:[%s5149 + $0x30] sm:$0xf]
    %v5163 = vld [vmem:[%s5149 + $0x34] sm:$0xf]
    %v5164 = vld [vmem:[%s5149 + $0x38] sm:$0xf]
    %v5165 = vld [vmem:[%s5149 + $0x3c] sm:$0xf]
    %v5166 = vld [vmem:[%s5149 + $0x40] sm:$0xf]
    %v5167 = vld [vmem:[%s5149 + $0x44] sm:$0xf]
    %v5168 = vld [vmem:[%s5149 + $0x48] sm:$0xf]
    %v5169 = vld [vmem:[%s5149 + $0x4c] sm:$0xf]
    %v5170 = vld [vmem:[%s5149 + $0x50] sm:$0xf]
    %v5171 = vld [vmem:[%s5149 + $0x54] sm:$0xf]
    %v5172 = vld [vmem:[%s5149 + $0x58] sm:$0xf]
    %v5173 = vld [vmem:[%s5149 + $0x5c] sm:$0xf]
    %v5174 = vld [vmem:[%s5149 + $0x60] sm:$0xf]
    %v5175 = vld [vmem:[%s5149 + $0x64] sm:$0xf]
    %v5176 = vld [vmem:[%s5149 + $0x68] sm:$0xf]
    %v5177 = vld [vmem:[%s5149 + $0x6c] sm:$0xf]
    %v5178 = vld [vmem:[%s5149 + $0x70] sm:$0xf]
    %v5179 = vld [vmem:[%s5149 + $0x74] sm:$0xf]
    %v5180 = vld [vmem:[%s5149 + $0x78] sm:$0xf]
    %v5181 = vld [vmem:[%s5149 + $0x7c] sm:$0xf]
    %v5214 = vunpack.c.l.b16 %v5150
    %v5215 = vunpack.c.l.b16 %v5151
    %v5216 = vunpack.c.l.b16 %v5152
    %v5217 = vunpack.c.l.b16 %v5153
    %v5218 = vunpack.c.l.b16 %v5154
    %v5219 = vunpack.c.l.b16 %v5155
    %v5220 = vunpack.c.l.b16 %v5156
    %v5221 = vunpack.c.l.b16 %v5157
    %v5222 = vunpack.c.l.b16 %v5158
    %v5223 = vunpack.c.l.b16 %v5159
    %v5224 = vunpack.c.l.b16 %v5160
    %v5225 = vunpack.c.l.b16 %v5161
    %v5226 = vunpack.c.l.b16 %v5162
    %v5227 = vunpack.c.l.b16 %v5163
    %v5228 = vunpack.c.l.b16 %v5164
    %v5229 = vunpack.c.l.b16 %v5165
    %v5230 = vunpack.c.l.b16 %v5166
    %v5231 = vunpack.c.l.b16 %v5167
    %v5232 = vunpack.c.l.b16 %v5168
    %v5233 = vunpack.c.l.b16 %v5169
    %v5234 = vunpack.c.l.b16 %v5170
    %v5235 = vunpack.c.l.b16 %v5171
    %v5236 = vunpack.c.l.b16 %v5172
    %v5237 = vunpack.c.l.b16 %v5173
    %v5238 = vunpack.c.l.b16 %v5174
    %v5239 = vunpack.c.l.b16 %v5175
    %v5240 = vunpack.c.l.b16 %v5176
    %v5241 = vunpack.c.l.b16 %v5177
    %v5242 = vunpack.c.l.b16 %v5178
    %v5243 = vunpack.c.l.b16 %v5179
    %v5244 = vunpack.c.l.b16 %v5180
    %v5245 = vunpack.c.l.b16 %v5181
    %v5246 = vpack.c.b16 %v5215, %v5214
    %v5247 = vpack.c.b16 %v5217, %v5216
    %v5248 = vpack.c.b16 %v5219, %v5218
    %v5249 = vpack.c.b16 %v5221, %v5220
    %v5250 = vpack.c.b16 %v5223, %v5222
    %v5251 = vpack.c.b16 %v5225, %v5224
    %v5252 = vpack.c.b16 %v5227, %v5226
    %v5253 = vpack.c.b16 %v5229, %v5228
    %v5254 = vpack.c.b16 %v5231, %v5230
    %v5255 = vpack.c.b16 %v5233, %v5232
    %v5256 = vpack.c.b16 %v5235, %v5234
    %v5257 = vpack.c.b16 %v5237, %v5236
    %v5258 = vpack.c.b16 %v5239, %v5238
    %v5259 = vpack.c.b16 %v5241, %v5240
    %v5260 = vpack.c.b16 %v5243, %v5242
    %v5261 = vpack.c.b16 %v5245, %v5244
    %5278 = vmatprep.subr.bf16.mxu0 0
    %5279 = vmatpush1.bf16.msra.mxu0 %v5253
    %5280 = vmatprep.subr.bf16.mxu0 0
    %5281 = vmatpush1.bf16.msra.mxu0 %v5252
    %5282 = vmatprep.subr.bf16.mxu0 0
    %5283 = vmatpush1.bf16.msra.mxu0 %v5251
    %5284 = vmatprep.subr.bf16.mxu0 0
    %5285 = vmatpush1.bf16.msra.mxu0 %v5250
    %5286 = vmatprep.subr.bf16.mxu0 0
    %5287 = vmatpush1.bf16.msra.mxu0 %v5249
    %5288 = vmatprep.subr.bf16.mxu0 0
    %5289 = vmatpush1.bf16.msra.mxu0 %v5248
    %5290 = vmatprep.subr.bf16.mxu0 0
    %5291 = vmatpush1.bf16.msra.mxu0 %v5247
    %5292 = vmatprep.subr.bf16.mxu0 0
    %5293 = vmatpush1.bf16.msra.mxu0 %v5246
    %5294 = vmatprep.subr.bf16.mxu0 0
    %5295 = vmatpush2.bf16.msra.mxu0 %v5261
    %5296 = vmatprep.subr.bf16.mxu0 0
    %5297 = vmatpush2.bf16.msra.mxu0 %v5260
    %5298 = vmatprep.subr.bf16.mxu0 0
    %5299 = vmatpush2.bf16.msra.mxu0 %v5259
    %5300 = vmatprep.subr.bf16.mxu0 0
    %5301 = vmatpush2.bf16.msra.mxu0 %v5258
    %5302 = vmatprep.subr.bf16.mxu0 0
    %5303 = vmatpush2.bf16.msra.mxu0 %v5257
    %5304 = vmatprep.subr.bf16.mxu0 0
    %5305 = vmatpush2.bf16.msra.mxu0 %v5256
    %5306 = vmatprep.subr.bf16.mxu0 0
    %5307 = vmatpush2.bf16.msra.mxu0 %v5255
    %5308 = vmatprep.subr.bf16.mxu0 0
    %5309 = vmatpush2.bf16.msra.mxu0 %v5254
    %5310 = vmatprep.mubr.bf16.mxu0 %v4227
    %5311 = vmatmul.mubr.bf16.gmra.mxu0 %v4226
    %v5312 = vpop.f32.mrf.mxu0
    %v5313 = vadd.f32 0.0, %v5312
    %v5314 = vpop.f32.mrf.mxu0
    %v5315 = vpop.f32.mrf.mxu0
    %v5316 = vadd.f32 0.0, %v5315
    %v5317 = vpop.f32.mrf.mxu0
    %5318 = vmatprep.mubr.bf16.mxu0 %v4229
    %5319 = vmatmul.mubr.bf16.gmra.mxu0 %v4228
    %v5320 = vpop.f32.mrf.mxu0
    %v5321 = vadd.f32 0.0, %v5320
    %v5322 = vpop.f32.mrf.mxu0
    %v5323 = vpop.f32.mrf.mxu0
    %v5324 = vadd.f32 0.0, %v5323
    %v5325 = vpop.f32.mrf.mxu0
    %5326 = vmatprep.mubr.bf16.mxu0 %v4231
    %5327 = vmatmul.mubr.bf16.gmra.mxu0 %v4230
    %v5328 = vpop.f32.mrf.mxu0
    %v5329 = vadd.f32 0.0, %v5328
    %v5330 = vpop.f32.mrf.mxu0
    %v5331 = vpop.f32.mrf.mxu0
    %v5332 = vadd.f32 0.0, %v5331
    %v5333 = vpop.f32.mrf.mxu0
    %5334 = vmatprep.mubr.bf16.mxu0 %v4233
    %5335 = vmatmul.mubr.bf16.gmra.mxu0 %v4232
    %v5336 = vpop.f32.mrf.mxu0
    %v5337 = vadd.f32 0.0, %v5336
    %v5338 = vpop.f32.mrf.mxu0
    %v5339 = vpop.f32.mrf.mxu0
    %v5340 = vadd.f32 0.0, %v5339
    %v5341 = vpop.f32.mrf.mxu0
    %5342 = vmatprep.mubr.bf16.mxu0 %v4235
    %5343 = vmatmul.mubr.bf16.gmra.mxu0 %v4234
    %v5344 = vpop.f32.mrf.mxu0
    %v5345 = vadd.f32 0.0, %v5344
    %v5346 = vpop.f32.mrf.mxu0
    %v5347 = vpop.f32.mrf.mxu0
    %v5348 = vadd.f32 0.0, %v5347
    %v5349 = vpop.f32.mrf.mxu0
    %5350 = vmatprep.mubr.bf16.mxu0 %v4237
    %5351 = vmatmul.mubr.bf16.gmra.mxu0 %v4236
    %v5352 = vpop.f32.mrf.mxu0
    %v5353 = vadd.f32 0.0, %v5352
    %v5354 = vpop.f32.mrf.mxu0
    %v5355 = vpop.f32.mrf.mxu0
    %v5356 = vadd.f32 0.0, %v5355
    %v5357 = vpop.f32.mrf.mxu0
    %5358 = vmatprep.mubr.bf16.mxu0 %v4239
    %5359 = vmatmul.mubr.bf16.gmra.mxu0 %v4238
    %v5360 = vpop.f32.mrf.mxu0
    %v5361 = vadd.f32 0.0, %v5360
    %v5362 = vpop.f32.mrf.mxu0
    %v5363 = vpop.f32.mrf.mxu0
    %v5364 = vadd.f32 0.0, %v5363
    %v5365 = vpop.f32.mrf.mxu0
    %5366 = vmatprep.mubr.bf16.mxu0 %v4241
    %5367 = vmatmul.mubr.bf16.gmra.mxu0 %v4240
    %v5368 = vpop.f32.mrf.mxu0
    %v5369 = vadd.f32 0.0, %v5368
    %v5370 = vpop.f32.mrf.mxu0
    %v5371 = vpop.f32.mrf.mxu0
    %v5372 = vadd.f32 0.0, %v5371
    %v5373 = vpop.f32.mrf.mxu0
    %5374 = vdwg.mxu0
    %s5375 = scalar_lea.vmem [#allocation4], 256
    %v5376 = vld [vmem:[%s5375] sm:$0xf]
    %v5377 = vld [vmem:[%s5375 + $0x4] sm:$0xf]
    %v5378 = vld [vmem:[%s5375 + $0x8] sm:$0xf]
    %v5379 = vld [vmem:[%s5375 + $0xc] sm:$0xf]
    %v5380 = vld [vmem:[%s5375 + $0x10] sm:$0xf]
    %v5381 = vld [vmem:[%s5375 + $0x14] sm:$0xf]
    %v5382 = vld [vmem:[%s5375 + $0x18] sm:$0xf]
    %v5383 = vld [vmem:[%s5375 + $0x1c] sm:$0xf]
    %v5384 = vld [vmem:[%s5375 + $0x20] sm:$0xf]
    %v5385 = vld [vmem:[%s5375 + $0x24] sm:$0xf]
    %v5386 = vld [vmem:[%s5375 + $0x28] sm:$0xf]
    %v5387 = vld [vmem:[%s5375 + $0x2c] sm:$0xf]
    %v5388 = vld [vmem:[%s5375 + $0x30] sm:$0xf]
    %v5389 = vld [vmem:[%s5375 + $0x34] sm:$0xf]
    %v5390 = vld [vmem:[%s5375 + $0x38] sm:$0xf]
    %v5391 = vld [vmem:[%s5375 + $0x3c] sm:$0xf]
    %v5392 = vld [vmem:[%s5375 + $0x40] sm:$0xf]
    %v5393 = vld [vmem:[%s5375 + $0x44] sm:$0xf]
    %v5394 = vld [vmem:[%s5375 + $0x48] sm:$0xf]
    %v5395 = vld [vmem:[%s5375 + $0x4c] sm:$0xf]
    %v5396 = vld [vmem:[%s5375 + $0x50] sm:$0xf]
    %v5397 = vld [vmem:[%s5375 + $0x54] sm:$0xf]
    %v5398 = vld [vmem:[%s5375 + $0x58] sm:$0xf]
    %v5399 = vld [vmem:[%s5375 + $0x5c] sm:$0xf]
    %v5400 = vld [vmem:[%s5375 + $0x60] sm:$0xf]
    %v5401 = vld [vmem:[%s5375 + $0x64] sm:$0xf]
    %v5402 = vld [vmem:[%s5375 + $0x68] sm:$0xf]
    %v5403 = vld [vmem:[%s5375 + $0x6c] sm:$0xf]
    %v5404 = vld [vmem:[%s5375 + $0x70] sm:$0xf]
    %v5405 = vld [vmem:[%s5375 + $0x74] sm:$0xf]
    %v5406 = vld [vmem:[%s5375 + $0x78] sm:$0xf]
    %v5407 = vld [vmem:[%s5375 + $0x7c] sm:$0xf]
    %v5440 = vunpack.c.l.b16 %v5376
    %v5441 = vunpack.c.l.b16 %v5377
    %v5442 = vunpack.c.l.b16 %v5378
    %v5443 = vunpack.c.l.b16 %v5379
    %v5444 = vunpack.c.l.b16 %v5380
    %v5445 = vunpack.c.l.b16 %v5381
    %v5446 = vunpack.c.l.b16 %v5382
    %v5447 = vunpack.c.l.b16 %v5383
    %v5448 = vunpack.c.l.b16 %v5384
    %v5449 = vunpack.c.l.b16 %v5385
    %v5450 = vunpack.c.l.b16 %v5386
    %v5451 = vunpack.c.l.b16 %v5387
    %v5452 = vunpack.c.l.b16 %v5388
    %v5453 = vunpack.c.l.b16 %v5389
    %v5454 = vunpack.c.l.b16 %v5390
    %v5455 = vunpack.c.l.b16 %v5391
    %v5456 = vunpack.c.l.b16 %v5392
    %v5457 = vunpack.c.l.b16 %v5393
    %v5458 = vunpack.c.l.b16 %v5394
    %v5459 = vunpack.c.l.b16 %v5395
    %v5460 = vunpack.c.l.b16 %v5396
    %v5461 = vunpack.c.l.b16 %v5397
    %v5462 = vunpack.c.l.b16 %v5398
    %v5463 = vunpack.c.l.b16 %v5399
    %v5464 = vunpack.c.l.b16 %v5400
    %v5465 = vunpack.c.l.b16 %v5401
    %v5466 = vunpack.c.l.b16 %v5402
    %v5467 = vunpack.c.l.b16 %v5403
    %v5468 = vunpack.c.l.b16 %v5404
    %v5469 = vunpack.c.l.b16 %v5405
    %v5470 = vunpack.c.l.b16 %v5406
    %v5471 = vunpack.c.l.b16 %v5407
    %v5472 = vpack.c.b16 %v5441, %v5440
    %v5473 = vpack.c.b16 %v5443, %v5442
    %v5474 = vpack.c.b16 %v5445, %v5444
    %v5475 = vpack.c.b16 %v5447, %v5446
    %v5476 = vpack.c.b16 %v5449, %v5448
    %v5477 = vpack.c.b16 %v5451, %v5450
    %v5478 = vpack.c.b16 %v5453, %v5452
    %v5479 = vpack.c.b16 %v5455, %v5454
    %v5480 = vpack.c.b16 %v5457, %v5456
    %v5481 = vpack.c.b16 %v5459, %v5458
    %v5482 = vpack.c.b16 %v5461, %v5460
    %v5483 = vpack.c.b16 %v5463, %v5462
    %v5484 = vpack.c.b16 %v5465, %v5464
    %v5485 = vpack.c.b16 %v5467, %v5466
    %v5486 = vpack.c.b16 %v5469, %v5468
    %v5487 = vpack.c.b16 %v5471, %v5470
    %5504 = vmatprep.subr.bf16.mxu0 0
    %5505 = vmatpush1.bf16.msra.mxu0 %v5479
    %5506 = vmatprep.subr.bf16.mxu0 0
    %5507 = vmatpush1.bf16.msra.mxu0 %v5478
    %5508 = vmatprep.subr.bf16.mxu0 0
    %5509 = vmatpush1.bf16.msra.mxu0 %v5477
    %5510 = vmatprep.subr.bf16.mxu0 0
    %5511 = vmatpush1.bf16.msra.mxu0 %v5476
    %5512 = vmatprep.subr.bf16.mxu0 0
    %5513 = vmatpush1.bf16.msra.mxu0 %v5475
    %5514 = vmatprep.subr.bf16.mxu0 0
    %5515 = vmatpush1.bf16.msra.mxu0 %v5474
    %5516 = vmatprep.subr.bf16.mxu0 0
    %5517 = vmatpush1.bf16.msra.mxu0 %v5473
    %5518 = vmatprep.subr.bf16.mxu0 0
    %5519 = vmatpush1.bf16.msra.mxu0 %v5472
    %5520 = vmatprep.subr.bf16.mxu0 0
    %5521 = vmatpush2.bf16.msra.mxu0 %v5487
    %5522 = vmatprep.subr.bf16.mxu0 0
    %5523 = vmatpush2.bf16.msra.mxu0 %v5486
    %5524 = vmatprep.subr.bf16.mxu0 0
    %5525 = vmatpush2.bf16.msra.mxu0 %v5485
    %5526 = vmatprep.subr.bf16.mxu0 0
    %5527 = vmatpush2.bf16.msra.mxu0 %v5484
    %5528 = vmatprep.subr.bf16.mxu0 0
    %5529 = vmatpush2.bf16.msra.mxu0 %v5483
    %5530 = vmatprep.subr.bf16.mxu0 0
    %5531 = vmatpush2.bf16.msra.mxu0 %v5482
    %5532 = vmatprep.subr.bf16.mxu0 0
    %5533 = vmatpush2.bf16.msra.mxu0 %v5481
    %5534 = vmatprep.subr.bf16.mxu0 0
    %5535 = vmatpush2.bf16.msra.mxu0 %v5480
    %5536 = vmatprep.mubr.bf16.mxu0 %v4227
    %5537 = vmatmul.mubr.bf16.gmra.mxu0 %v4226
    %v5538 = vpop.f32.mrf.mxu0
    %v5539 = vadd.f32 0.0, %v5538
    %v5540 = vpop.f32.mrf.mxu0
    %v5541 = vpop.f32.mrf.mxu0
    %v5542 = vadd.f32 0.0, %v5541
    %v5543 = vpop.f32.mrf.mxu0
    %5544 = vmatprep.mubr.bf16.mxu0 %v4229
    %5545 = vmatmul.mubr.bf16.gmra.mxu0 %v4228
    %v5546 = vpop.f32.mrf.mxu0
    %v5547 = vadd.f32 0.0, %v5546
    %v5548 = vpop.f32.mrf.mxu0
    %v5549 = vpop.f32.mrf.mxu0
    %v5550 = vadd.f32 0.0, %v5549
    %v5551 = vpop.f32.mrf.mxu0
    %5552 = vmatprep.mubr.bf16.mxu0 %v4231
    %5553 = vmatmul.mubr.bf16.gmra.mxu0 %v4230
    %v5554 = vpop.f32.mrf.mxu0
    %v5555 = vadd.f32 0.0, %v5554
    %v5556 = vpop.f32.mrf.mxu0
    %v5557 = vpop.f32.mrf.mxu0
    %v5558 = vadd.f32 0.0, %v5557
    %v5559 = vpop.f32.mrf.mxu0
    %5560 = vmatprep.mubr.bf16.mxu0 %v4233
    %5561 = vmatmul.mubr.bf16.gmra.mxu0 %v4232
    %v5562 = vpop.f32.mrf.mxu0
    %v5563 = vadd.f32 0.0, %v5562
    %v5564 = vpop.f32.mrf.mxu0
    %v5565 = vpop.f32.mrf.mxu0
    %v5566 = vadd.f32 0.0, %v5565
    %v5567 = vpop.f32.mrf.mxu0
    %5568 = vmatprep.mubr.bf16.mxu0 %v4235
    %5569 = vmatmul.mubr.bf16.gmra.mxu0 %v4234
    %v5570 = vpop.f32.mrf.mxu0
    %v5571 = vadd.f32 0.0, %v5570
    %v5572 = vpop.f32.mrf.mxu0
    %v5573 = vpop.f32.mrf.mxu0
    %v5574 = vadd.f32 0.0, %v5573
    %v5575 = vpop.f32.mrf.mxu0
    %5576 = vmatprep.mubr.bf16.mxu0 %v4237
    %5577 = vmatmul.mubr.bf16.gmra.mxu0 %v4236
    %v5578 = vpop.f32.mrf.mxu0
    %v5579 = vadd.f32 0.0, %v5578
    %v5580 = vpop.f32.mrf.mxu0
    %v5581 = vpop.f32.mrf.mxu0
    %v5582 = vadd.f32 0.0, %v5581
    %v5583 = vpop.f32.mrf.mxu0
    %5584 = vmatprep.mubr.bf16.mxu0 %v4239
    %5585 = vmatmul.mubr.bf16.gmra.mxu0 %v4238
    %v5586 = vpop.f32.mrf.mxu0
    %v5587 = vadd.f32 0.0, %v5586
    %v5588 = vpop.f32.mrf.mxu0
    %v5589 = vpop.f32.mrf.mxu0
    %v5590 = vadd.f32 0.0, %v5589
    %v5591 = vpop.f32.mrf.mxu0
    %5592 = vmatprep.mubr.bf16.mxu0 %v4241
    %5593 = vmatmul.mubr.bf16.gmra.mxu0 %v4240
    %v5594 = vpop.f32.mrf.mxu0
    %v5595 = vadd.f32 0.0, %v5594
    %v5596 = vpop.f32.mrf.mxu0
    %v5597 = vpop.f32.mrf.mxu0
    %v5598 = vadd.f32 0.0, %v5597
    %v5599 = vpop.f32.mrf.mxu0
    %5600 = vdwg.mxu0
    %v5601 = vadd.f32 %v4894, %v5313
    %v5602 = vadd.f32 %v4897, %v5316
    %v5603 = vadd.f32 %v4902, %v5321
    %v5604 = vadd.f32 %v4905, %v5324
    %v5605 = vadd.f32 %v4910, %v5329
    %v5606 = vadd.f32 %v4913, %v5332
    %v5607 = vadd.f32 %v4918, %v5337
    %v5608 = vadd.f32 %v4921, %v5340
    %v5609 = vadd.f32 %v4926, %v5345
    %v5610 = vadd.f32 %v4929, %v5348
    %v5611 = vadd.f32 %v4934, %v5353
    %v5612 = vadd.f32 %v4937, %v5356
    %v5613 = vadd.f32 %v4942, %v5361
    %v5614 = vadd.f32 %v4945, %v5364
    %v5615 = vadd.f32 %v4950, %v5369
    %v5616 = vadd.f32 %v4953, %v5372
    %v5617 = vadd.f32 %v5087, %v5539
    %v5618 = vadd.f32 %v5090, %v5542
    %v5619 = vadd.f32 %v5095, %v5547
    %v5620 = vadd.f32 %v5098, %v5550
    %v5621 = vadd.f32 %v5103, %v5555
    %v5622 = vadd.f32 %v5106, %v5558
    %v5623 = vadd.f32 %v5111, %v5563
    %v5624 = vadd.f32 %v5114, %v5566
    %v5625 = vadd.f32 %v5119, %v5571
    %v5626 = vadd.f32 %v5122, %v5574
    %v5627 = vadd.f32 %v5127, %v5579
    %v5628 = vadd.f32 %v5130, %v5582
    %v5629 = vadd.f32 %v5135, %v5587
    %v5630 = vadd.f32 %v5138, %v5590
    %v5631 = vadd.f32 %v5143, %v5595
    %v5632 = vadd.f32 %v5146, %v5598
    %s5633 = scalar_lea.vmem [#allocation2], 384
    %v5634 = vld [vmem:[%s5633] sm:$0xf]
    %v5635 = vld [vmem:[%s5633 + $0x4] sm:$0xf]
    %v5636 = vld [vmem:[%s5633 + $0x8] sm:$0xf]
    %v5637 = vld [vmem:[%s5633 + $0xc] sm:$0xf]
    %v5638 = vld [vmem:[%s5633 + $0x10] sm:$0xf]
    %v5639 = vld [vmem:[%s5633 + $0x14] sm:$0xf]
    %v5640 = vld [vmem:[%s5633 + $0x18] sm:$0xf]
    %v5641 = vld [vmem:[%s5633 + $0x1c] sm:$0xf]
    %v5642 = vld [vmem:[%s5633 + $0x20] sm:$0xf]
    %v5643 = vld [vmem:[%s5633 + $0x24] sm:$0xf]
    %v5644 = vld [vmem:[%s5633 + $0x28] sm:$0xf]
    %v5645 = vld [vmem:[%s5633 + $0x2c] sm:$0xf]
    %v5646 = vld [vmem:[%s5633 + $0x30] sm:$0xf]
    %v5647 = vld [vmem:[%s5633 + $0x34] sm:$0xf]
    %v5648 = vld [vmem:[%s5633 + $0x38] sm:$0xf]
    %v5649 = vld [vmem:[%s5633 + $0x3c] sm:$0xf]
    %v5650 = vld [vmem:[%s5633 + $0x40] sm:$0xf]
    %v5651 = vld [vmem:[%s5633 + $0x44] sm:$0xf]
    %v5652 = vld [vmem:[%s5633 + $0x48] sm:$0xf]
    %v5653 = vld [vmem:[%s5633 + $0x4c] sm:$0xf]
    %v5654 = vld [vmem:[%s5633 + $0x50] sm:$0xf]
    %v5655 = vld [vmem:[%s5633 + $0x54] sm:$0xf]
    %v5656 = vld [vmem:[%s5633 + $0x58] sm:$0xf]
    %v5657 = vld [vmem:[%s5633 + $0x5c] sm:$0xf]
    %v5658 = vld [vmem:[%s5633 + $0x60] sm:$0xf]
    %v5659 = vld [vmem:[%s5633 + $0x64] sm:$0xf]
    %v5660 = vld [vmem:[%s5633 + $0x68] sm:$0xf]
    %v5661 = vld [vmem:[%s5633 + $0x6c] sm:$0xf]
    %v5662 = vld [vmem:[%s5633 + $0x70] sm:$0xf]
    %v5663 = vld [vmem:[%s5633 + $0x74] sm:$0xf]
    %v5664 = vld [vmem:[%s5633 + $0x78] sm:$0xf]
    %v5665 = vld [vmem:[%s5633 + $0x7c] sm:$0xf]
    %v5698 = vunpack.c.l.b16 %v5634
    %v5699 = vunpack.c.l.b16 %v5635
    %v5700 = vunpack.c.l.b16 %v5636
    %v5701 = vunpack.c.l.b16 %v5637
    %v5702 = vunpack.c.l.b16 %v5638
    %v5703 = vunpack.c.l.b16 %v5639
    %v5704 = vunpack.c.l.b16 %v5640
    %v5705 = vunpack.c.l.b16 %v5641
    %v5706 = vunpack.c.l.b16 %v5642
    %v5707 = vunpack.c.l.b16 %v5643
    %v5708 = vunpack.c.l.b16 %v5644
    %v5709 = vunpack.c.l.b16 %v5645
    %v5710 = vunpack.c.l.b16 %v5646
    %v5711 = vunpack.c.l.b16 %v5647
    %v5712 = vunpack.c.l.b16 %v5648
    %v5713 = vunpack.c.l.b16 %v5649
    %v5714 = vunpack.c.l.b16 %v5650
    %v5715 = vunpack.c.l.b16 %v5651
    %v5716 = vunpack.c.l.b16 %v5652
    %v5717 = vunpack.c.l.b16 %v5653
    %v5718 = vunpack.c.l.b16 %v5654
    %v5719 = vunpack.c.l.b16 %v5655
    %v5720 = vunpack.c.l.b16 %v5656
    %v5721 = vunpack.c.l.b16 %v5657
    %v5722 = vunpack.c.l.b16 %v5658
    %v5723 = vunpack.c.l.b16 %v5659
    %v5724 = vunpack.c.l.b16 %v5660
    %v5725 = vunpack.c.l.b16 %v5661
    %v5726 = vunpack.c.l.b16 %v5662
    %v5727 = vunpack.c.l.b16 %v5663
    %v5728 = vunpack.c.l.b16 %v5664
    %v5729 = vunpack.c.l.b16 %v5665
    %v5730 = vpack.c.b16 %v5699, %v5698
    %v5731 = vpack.c.b16 %v5701, %v5700
    %v5732 = vpack.c.b16 %v5703, %v5702
    %v5733 = vpack.c.b16 %v5705, %v5704
    %v5734 = vpack.c.b16 %v5707, %v5706
    %v5735 = vpack.c.b16 %v5709, %v5708
    %v5736 = vpack.c.b16 %v5711, %v5710
    %v5737 = vpack.c.b16 %v5713, %v5712
    %v5738 = vpack.c.b16 %v5715, %v5714
    %v5739 = vpack.c.b16 %v5717, %v5716
    %v5740 = vpack.c.b16 %v5719, %v5718
    %v5741 = vpack.c.b16 %v5721, %v5720
    %v5742 = vpack.c.b16 %v5723, %v5722
    %v5743 = vpack.c.b16 %v5725, %v5724
    %v5744 = vpack.c.b16 %v5727, %v5726
    %v5745 = vpack.c.b16 %v5729, %v5728
    %5762 = vmatprep.subr.bf16.mxu0 0
    %5763 = vmatpush1.bf16.msra.mxu0 %v5737
    %5764 = vmatprep.subr.bf16.mxu0 0
    %5765 = vmatpush1.bf16.msra.mxu0 %v5736
    %5766 = vmatprep.subr.bf16.mxu0 0
    %5767 = vmatpush1.bf16.msra.mxu0 %v5735
    %5768 = vmatprep.subr.bf16.mxu0 0
    %5769 = vmatpush1.bf16.msra.mxu0 %v5734
    %5770 = vmatprep.subr.bf16.mxu0 0
    %5771 = vmatpush1.bf16.msra.mxu0 %v5733
    %5772 = vmatprep.subr.bf16.mxu0 0
    %5773 = vmatpush1.bf16.msra.mxu0 %v5732
    %5774 = vmatprep.subr.bf16.mxu0 0
    %5775 = vmatpush1.bf16.msra.mxu0 %v5731
    %5776 = vmatprep.subr.bf16.mxu0 0
    %5777 = vmatpush1.bf16.msra.mxu0 %v5730
    %5778 = vmatprep.subr.bf16.mxu0 0
    %5779 = vmatpush2.bf16.msra.mxu0 %v5745
    %5780 = vmatprep.subr.bf16.mxu0 0
    %5781 = vmatpush2.bf16.msra.mxu0 %v5744
    %5782 = vmatprep.subr.bf16.mxu0 0
    %5783 = vmatpush2.bf16.msra.mxu0 %v5743
    %5784 = vmatprep.subr.bf16.mxu0 0
    %5785 = vmatpush2.bf16.msra.mxu0 %v5742
    %5786 = vmatprep.subr.bf16.mxu0 0
    %5787 = vmatpush2.bf16.msra.mxu0 %v5741
    %5788 = vmatprep.subr.bf16.mxu0 0
    %5789 = vmatpush2.bf16.msra.mxu0 %v5740
    %5790 = vmatprep.subr.bf16.mxu0 0
    %5791 = vmatpush2.bf16.msra.mxu0 %v5739
    %5792 = vmatprep.subr.bf16.mxu0 0
    %5793 = vmatpush2.bf16.msra.mxu0 %v5738
    %5794 = vmatprep.mubr.bf16.mxu0 %v4229
    %5795 = vmatmul.mubr.bf16.gmra.mxu0 %v4228
    %v5796 = vpop.f32.mrf.mxu0
    %v5797 = vadd.f32 0.0, %v5796
    %v5798 = vpop.f32.mrf.mxu0
    %v5799 = vpop.f32.mrf.mxu0
    %v5800 = vadd.f32 0.0, %v5799
    %v5801 = vpop.f32.mrf.mxu0
    %5802 = vmatprep.mubr.bf16.mxu0 %v4231
    %5803 = vmatmul.mubr.bf16.gmra.mxu0 %v4230
    %v5804 = vpop.f32.mrf.mxu0
    %v5805 = vadd.f32 0.0, %v5804
    %v5806 = vpop.f32.mrf.mxu0
    %v5807 = vpop.f32.mrf.mxu0
    %v5808 = vadd.f32 0.0, %v5807
    %v5809 = vpop.f32.mrf.mxu0
    %5810 = vmatprep.mubr.bf16.mxu0 %v4233
    %5811 = vmatmul.mubr.bf16.gmra.mxu0 %v4232
    %v5812 = vpop.f32.mrf.mxu0
    %v5813 = vadd.f32 0.0, %v5812
    %v5814 = vpop.f32.mrf.mxu0
    %v5815 = vpop.f32.mrf.mxu0
    %v5816 = vadd.f32 0.0, %v5815
    %v5817 = vpop.f32.mrf.mxu0
    %5818 = vmatprep.mubr.bf16.mxu0 %v4235
    %5819 = vmatmul.mubr.bf16.gmra.mxu0 %v4234
    %v5820 = vpop.f32.mrf.mxu0
    %v5821 = vadd.f32 0.0, %v5820
    %v5822 = vpop.f32.mrf.mxu0
    %v5823 = vpop.f32.mrf.mxu0
    %v5824 = vadd.f32 0.0, %v5823
    %v5825 = vpop.f32.mrf.mxu0
    %5826 = vmatprep.mubr.bf16.mxu0 %v4237
    %5827 = vmatmul.mubr.bf16.gmra.mxu0 %v4236
    %v5828 = vpop.f32.mrf.mxu0
    %v5829 = vadd.f32 0.0, %v5828
    %v5830 = vpop.f32.mrf.mxu0
    %v5831 = vpop.f32.mrf.mxu0
    %v5832 = vadd.f32 0.0, %v5831
    %v5833 = vpop.f32.mrf.mxu0
    %5834 = vmatprep.mubr.bf16.mxu0 %v4239
    %5835 = vmatmul.mubr.bf16.gmra.mxu0 %v4238
    %v5836 = vpop.f32.mrf.mxu0
    %v5837 = vadd.f32 0.0, %v5836
    %v5838 = vpop.f32.mrf.mxu0
    %v5839 = vpop.f32.mrf.mxu0
    %v5840 = vadd.f32 0.0, %v5839
    %v5841 = vpop.f32.mrf.mxu0
    %5842 = vmatprep.mubr.bf16.mxu0 %v4241
    %5843 = vmatmul.mubr.bf16.gmra.mxu0 %v4240
    %v5844 = vpop.f32.mrf.mxu0
    %v5845 = vadd.f32 0.0, %v5844
    %v5846 = vpop.f32.mrf.mxu0
    %v5847 = vpop.f32.mrf.mxu0
    %v5848 = vadd.f32 0.0, %v5847
    %v5849 = vpop.f32.mrf.mxu0
    %5850 = vmatprep.mubr.bf16.mxu0 %v4243
    %5851 = vmatmul.mubr.bf16.gmra.mxu0 %v4242
    %v5852 = vpop.f32.mrf.mxu0
    %v5853 = vadd.f32 0.0, %v5852
    %v5854 = vpop.f32.mrf.mxu0
    %v5855 = vpop.f32.mrf.mxu0
    %v5856 = vadd.f32 0.0, %v5855
    %v5857 = vpop.f32.mrf.mxu0
    %5858 = vdwg.mxu0
    %s5859 = scalar_lea.vmem [#allocation4], 384
    %v5860 = vld [vmem:[%s5859] sm:$0xf]
    %v5861 = vld [vmem:[%s5859 + $0x4] sm:$0xf]
    %v5862 = vld [vmem:[%s5859 + $0x8] sm:$0xf]
    %v5863 = vld [vmem:[%s5859 + $0xc] sm:$0xf]
    %v5864 = vld [vmem:[%s5859 + $0x10] sm:$0xf]
    %v5865 = vld [vmem:[%s5859 + $0x14] sm:$0xf]
    %v5866 = vld [vmem:[%s5859 + $0x18] sm:$0xf]
    %v5867 = vld [vmem:[%s5859 + $0x1c] sm:$0xf]
    %v5868 = vld [vmem:[%s5859 + $0x20] sm:$0xf]
    %v5869 = vld [vmem:[%s5859 + $0x24] sm:$0xf]
    %v5870 = vld [vmem:[%s5859 + $0x28] sm:$0xf]
    %v5871 = vld [vmem:[%s5859 + $0x2c] sm:$0xf]
    %v5872 = vld [vmem:[%s5859 + $0x30] sm:$0xf]
    %v5873 = vld [vmem:[%s5859 + $0x34] sm:$0xf]
    %v5874 = vld [vmem:[%s5859 + $0x38] sm:$0xf]
    %v5875 = vld [vmem:[%s5859 + $0x3c] sm:$0xf]
    %v5876 = vld [vmem:[%s5859 + $0x40] sm:$0xf]
    %v5877 = vld [vmem:[%s5859 + $0x44] sm:$0xf]
    %v5878 = vld [vmem:[%s5859 + $0x48] sm:$0xf]
    %v5879 = vld [vmem:[%s5859 + $0x4c] sm:$0xf]
    %v5880 = vld [vmem:[%s5859 + $0x50] sm:$0xf]
    %v5881 = vld [vmem:[%s5859 + $0x54] sm:$0xf]
    %v5882 = vld [vmem:[%s5859 + $0x58] sm:$0xf]
    %v5883 = vld [vmem:[%s5859 + $0x5c] sm:$0xf]
    %v5884 = vld [vmem:[%s5859 + $0x60] sm:$0xf]
    %v5885 = vld [vmem:[%s5859 + $0x64] sm:$0xf]
    %v5886 = vld [vmem:[%s5859 + $0x68] sm:$0xf]
    %v5887 = vld [vmem:[%s5859 + $0x6c] sm:$0xf]
    %v5888 = vld [vmem:[%s5859 + $0x70] sm:$0xf]
    %v5889 = vld [vmem:[%s5859 + $0x74] sm:$0xf]
    %v5890 = vld [vmem:[%s5859 + $0x78] sm:$0xf]
    %v5891 = vld [vmem:[%s5859 + $0x7c] sm:$0xf]
    %v5924 = vunpack.c.l.b16 %v5860
    %v5925 = vunpack.c.l.b16 %v5861
    %v5926 = vunpack.c.l.b16 %v5862
    %v5927 = vunpack.c.l.b16 %v5863
    %v5928 = vunpack.c.l.b16 %v5864
    %v5929 = vunpack.c.l.b16 %v5865
    %v5930 = vunpack.c.l.b16 %v5866
    %v5931 = vunpack.c.l.b16 %v5867
    %v5932 = vunpack.c.l.b16 %v5868
    %v5933 = vunpack.c.l.b16 %v5869
    %v5934 = vunpack.c.l.b16 %v5870
    %v5935 = vunpack.c.l.b16 %v5871
    %v5936 = vunpack.c.l.b16 %v5872
    %v5937 = vunpack.c.l.b16 %v5873
    %v5938 = vunpack.c.l.b16 %v5874
    %v5939 = vunpack.c.l.b16 %v5875
    %v5940 = vunpack.c.l.b16 %v5876
    %v5941 = vunpack.c.l.b16 %v5877
    %v5942 = vunpack.c.l.b16 %v5878
    %v5943 = vunpack.c.l.b16 %v5879
    %v5944 = vunpack.c.l.b16 %v5880
    %v5945 = vunpack.c.l.b16 %v5881
    %v5946 = vunpack.c.l.b16 %v5882
    %v5947 = vunpack.c.l.b16 %v5883
    %v5948 = vunpack.c.l.b16 %v5884
    %v5949 = vunpack.c.l.b16 %v5885
    %v5950 = vunpack.c.l.b16 %v5886
    %v5951 = vunpack.c.l.b16 %v5887
    %v5952 = vunpack.c.l.b16 %v5888
    %v5953 = vunpack.c.l.b16 %v5889
    %v5954 = vunpack.c.l.b16 %v5890
    %v5955 = vunpack.c.l.b16 %v5891
    %v5956 = vpack.c.b16 %v5925, %v5924
    %v5957 = vpack.c.b16 %v5927, %v5926
    %v5958 = vpack.c.b16 %v5929, %v5928
    %v5959 = vpack.c.b16 %v5931, %v5930
    %v5960 = vpack.c.b16 %v5933, %v5932
    %v5961 = vpack.c.b16 %v5935, %v5934
    %v5962 = vpack.c.b16 %v5937, %v5936
    %v5963 = vpack.c.b16 %v5939, %v5938
    %v5964 = vpack.c.b16 %v5941, %v5940
    %v5965 = vpack.c.b16 %v5943, %v5942
    %v5966 = vpack.c.b16 %v5945, %v5944
    %v5967 = vpack.c.b16 %v5947, %v5946
    %v5968 = vpack.c.b16 %v5949, %v5948
    %v5969 = vpack.c.b16 %v5951, %v5950
    %v5970 = vpack.c.b16 %v5953, %v5952
    %v5971 = vpack.c.b16 %v5955, %v5954
    %5988 = vmatprep.subr.bf16.mxu0 0
    %5989 = vmatpush1.bf16.msra.mxu0 %v5963
    %5990 = vmatprep.subr.bf16.mxu0 0
    %5991 = vmatpush1.bf16.msra.mxu0 %v5962
    %5992 = vmatprep.subr.bf16.mxu0 0
    %5993 = vmatpush1.bf16.msra.mxu0 %v5961
    %5994 = vmatprep.subr.bf16.mxu0 0
    %5995 = vmatpush1.bf16.msra.mxu0 %v5960
    %5996 = vmatprep.subr.bf16.mxu0 0
    %5997 = vmatpush1.bf16.msra.mxu0 %v5959
    %5998 = vmatprep.subr.bf16.mxu0 0
    %5999 = vmatpush1.bf16.msra.mxu0 %v5958
    %6000 = vmatprep.subr.bf16.mxu0 0
    %6001 = vmatpush1.bf16.msra.mxu0 %v5957
    %6002 = vmatprep.subr.bf16.mxu0 0
    %6003 = vmatpush1.bf16.msra.mxu0 %v5956
    %6004 = vmatprep.subr.bf16.mxu0 0
    %6005 = vmatpush2.bf16.msra.mxu0 %v5971
    %6006 = vmatprep.subr.bf16.mxu0 0
    %6007 = vmatpush2.bf16.msra.mxu0 %v5970
    %6008 = vmatprep.subr.bf16.mxu0 0
    %6009 = vmatpush2.bf16.msra.mxu0 %v5969
    %6010 = vmatprep.subr.bf16.mxu0 0
    %6011 = vmatpush2.bf16.msra.mxu0 %v5968
    %6012 = vmatprep.subr.bf16.mxu0 0
    %6013 = vmatpush2.bf16.msra.mxu0 %v5967
    %6014 = vmatprep.subr.bf16.mxu0 0
    %6015 = vmatpush2.bf16.msra.mxu0 %v5966
    %6016 = vmatprep.subr.bf16.mxu0 0
    %6017 = vmatpush2.bf16.msra.mxu0 %v5965
    %6018 = vmatprep.subr.bf16.mxu0 0
    %6019 = vmatpush2.bf16.msra.mxu0 %v5964
    %6020 = vmatprep.mubr.bf16.mxu0 %v4229
    %6021 = vmatmul.mubr.bf16.gmra.mxu0 %v4228
    %v6022 = vpop.f32.mrf.mxu0
    %v6023 = vadd.f32 0.0, %v6022
    %v6024 = vpop.f32.mrf.mxu0
    %v6025 = vpop.f32.mrf.mxu0
    %v6026 = vadd.f32 0.0, %v6025
    %v6027 = vpop.f32.mrf.mxu0
    %6028 = vmatprep.mubr.bf16.mxu0 %v4231
    %6029 = vmatmul.mubr.bf16.gmra.mxu0 %v4230
    %v6030 = vpop.f32.mrf.mxu0
    %v6031 = vadd.f32 0.0, %v6030
    %v6032 = vpop.f32.mrf.mxu0
    %v6033 = vpop.f32.mrf.mxu0
    %v6034 = vadd.f32 0.0, %v6033
    %v6035 = vpop.f32.mrf.mxu0
    %6036 = vmatprep.mubr.bf16.mxu0 %v4233
    %6037 = vmatmul.mubr.bf16.gmra.mxu0 %v4232
    %v6038 = vpop.f32.mrf.mxu0
    %v6039 = vadd.f32 0.0, %v6038
    %v6040 = vpop.f32.mrf.mxu0
    %v6041 = vpop.f32.mrf.mxu0
    %v6042 = vadd.f32 0.0, %v6041
    %v6043 = vpop.f32.mrf.mxu0
    %6044 = vmatprep.mubr.bf16.mxu0 %v4235
    %6045 = vmatmul.mubr.bf16.gmra.mxu0 %v4234
    %v6046 = vpop.f32.mrf.mxu0
    %v6047 = vadd.f32 0.0, %v6046
    %v6048 = vpop.f32.mrf.mxu0
    %v6049 = vpop.f32.mrf.mxu0
    %v6050 = vadd.f32 0.0, %v6049
    %v6051 = vpop.f32.mrf.mxu0
    %6052 = vmatprep.mubr.bf16.mxu0 %v4237
    %6053 = vmatmul.mubr.bf16.gmra.mxu0 %v4236
    %v6054 = vpop.f32.mrf.mxu0
    %v6055 = vadd.f32 0.0, %v6054
    %v6056 = vpop.f32.mrf.mxu0
    %v6057 = vpop.f32.mrf.mxu0
    %v6058 = vadd.f32 0.0, %v6057
    %v6059 = vpop.f32.mrf.mxu0
    %6060 = vmatprep.mubr.bf16.mxu0 %v4239
    %6061 = vmatmul.mubr.bf16.gmra.mxu0 %v4238
    %v6062 = vpop.f32.mrf.mxu0
    %v6063 = vadd.f32 0.0, %v6062
    %v6064 = vpop.f32.mrf.mxu0
    %v6065 = vpop.f32.mrf.mxu0
    %v6066 = vadd.f32 0.0, %v6065
    %v6067 = vpop.f32.mrf.mxu0
    %6068 = vmatprep.mubr.bf16.mxu0 %v4241
    %6069 = vmatmul.mubr.bf16.gmra.mxu0 %v4240
    %v6070 = vpop.f32.mrf.mxu0
    %v6071 = vadd.f32 0.0, %v6070
    %v6072 = vpop.f32.mrf.mxu0
    %v6073 = vpop.f32.mrf.mxu0
    %v6074 = vadd.f32 0.0, %v6073
    %v6075 = vpop.f32.mrf.mxu0
    %6076 = vmatprep.mubr.bf16.mxu0 %v4243
    %6077 = vmatmul.mubr.bf16.gmra.mxu0 %v4242
    %v6078 = vpop.f32.mrf.mxu0
    %v6079 = vadd.f32 0.0, %v6078
    %v6080 = vpop.f32.mrf.mxu0
    %v6081 = vpop.f32.mrf.mxu0
    %v6082 = vadd.f32 0.0, %v6081
    %v6083 = vpop.f32.mrf.mxu0
    %6084 = vdwg.mxu0
    %v6085 = vadd.f32 %v5601, %v5797
    %v6086 = vadd.f32 %v5602, %v5800
    %v6087 = vadd.f32 %v5603, %v5805
    %v6088 = vadd.f32 %v5604, %v5808
    %v6089 = vadd.f32 %v5605, %v5813
    %v6090 = vadd.f32 %v5606, %v5816
    %v6091 = vadd.f32 %v5607, %v5821
    %v6092 = vadd.f32 %v5608, %v5824
    %v6093 = vadd.f32 %v5609, %v5829
    %v6094 = vadd.f32 %v5610, %v5832
    %v6095 = vadd.f32 %v5611, %v5837
    %v6096 = vadd.f32 %v5612, %v5840
    %v6097 = vadd.f32 %v5613, %v5845
    %v6098 = vadd.f32 %v5614, %v5848
    %v6099 = vadd.f32 %v5615, %v5853
    %v6100 = vadd.f32 %v5616, %v5856
    %v6101 = vadd.f32 %v5617, %v6023
    %v6102 = vadd.f32 %v5618, %v6026
    %v6103 = vadd.f32 %v5619, %v6031
    %v6104 = vadd.f32 %v5620, %v6034
    %v6105 = vadd.f32 %v5621, %v6039
    %v6106 = vadd.f32 %v5622, %v6042
    %v6107 = vadd.f32 %v5623, %v6047
    %v6108 = vadd.f32 %v5624, %v6050
    %v6109 = vadd.f32 %v5625, %v6055
    %v6110 = vadd.f32 %v5626, %v6058
    %v6111 = vadd.f32 %v5627, %v6063
    %v6112 = vadd.f32 %v5628, %v6066
    %v6113 = vadd.f32 %v5629, %v6071
    %v6114 = vadd.f32 %v5630, %v6074
    %v6115 = vadd.f32 %v5631, %v6079
    %v6116 = vadd.f32 %v5632, %v6082
    %s6117 = scalar_lea.vmem [#allocation2], 512
    %v6118 = vld [vmem:[%s6117] sm:$0xf]
    %v6119 = vld [vmem:[%s6117 + $0x4] sm:$0xf]
    %v6120 = vld [vmem:[%s6117 + $0x8] sm:$0xf]
    %v6121 = vld [vmem:[%s6117 + $0xc] sm:$0xf]
    %v6122 = vld [vmem:[%s6117 + $0x10] sm:$0xf]
    %v6123 = vld [vmem:[%s6117 + $0x14] sm:$0xf]
    %v6124 = vld [vmem:[%s6117 + $0x18] sm:$0xf]
    %v6125 = vld [vmem:[%s6117 + $0x1c] sm:$0xf]
    %v6126 = vld [vmem:[%s6117 + $0x20] sm:$0xf]
    %v6127 = vld [vmem:[%s6117 + $0x24] sm:$0xf]
    %v6128 = vld [vmem:[%s6117 + $0x28] sm:$0xf]
    %v6129 = vld [vmem:[%s6117 + $0x2c] sm:$0xf]
    %v6130 = vld [vmem:[%s6117 + $0x30] sm:$0xf]
    %v6131 = vld [vmem:[%s6117 + $0x34] sm:$0xf]
    %v6132 = vld [vmem:[%s6117 + $0x38] sm:$0xf]
    %v6133 = vld [vmem:[%s6117 + $0x3c] sm:$0xf]
    %v6134 = vld [vmem:[%s6117 + $0x40] sm:$0xf]
    %v6135 = vld [vmem:[%s6117 + $0x44] sm:$0xf]
    %v6136 = vld [vmem:[%s6117 + $0x48] sm:$0xf]
    %v6137 = vld [vmem:[%s6117 + $0x4c] sm:$0xf]
    %v6138 = vld [vmem:[%s6117 + $0x50] sm:$0xf]
    %v6139 = vld [vmem:[%s6117 + $0x54] sm:$0xf]
    %v6140 = vld [vmem:[%s6117 + $0x58] sm:$0xf]
    %v6141 = vld [vmem:[%s6117 + $0x5c] sm:$0xf]
    %v6142 = vld [vmem:[%s6117 + $0x60] sm:$0xf]
    %v6143 = vld [vmem:[%s6117 + $0x64] sm:$0xf]
    %v6144 = vld [vmem:[%s6117 + $0x68] sm:$0xf]
    %v6145 = vld [vmem:[%s6117 + $0x6c] sm:$0xf]
    %v6146 = vld [vmem:[%s6117 + $0x70] sm:$0xf]
    %v6147 = vld [vmem:[%s6117 + $0x74] sm:$0xf]
    %v6148 = vld [vmem:[%s6117 + $0x78] sm:$0xf]
    %v6149 = vld [vmem:[%s6117 + $0x7c] sm:$0xf]
    %v6182 = vunpack.c.l.b16 %v6118
    %v6183 = vunpack.c.l.b16 %v6119
    %v6184 = vunpack.c.l.b16 %v6120
    %v6185 = vunpack.c.l.b16 %v6121
    %v6186 = vunpack.c.l.b16 %v6122
    %v6187 = vunpack.c.l.b16 %v6123
    %v6188 = vunpack.c.l.b16 %v6124
    %v6189 = vunpack.c.l.b16 %v6125
    %v6190 = vunpack.c.l.b16 %v6126
    %v6191 = vunpack.c.l.b16 %v6127
    %v6192 = vunpack.c.l.b16 %v6128
    %v6193 = vunpack.c.l.b16 %v6129
    %v6194 = vunpack.c.l.b16 %v6130
    %v6195 = vunpack.c.l.b16 %v6131
    %v6196 = vunpack.c.l.b16 %v6132
    %v6197 = vunpack.c.l.b16 %v6133
    %v6198 = vunpack.c.l.b16 %v6134
    %v6199 = vunpack.c.l.b16 %v6135
    %v6200 = vunpack.c.l.b16 %v6136
    %v6201 = vunpack.c.l.b16 %v6137
    %v6202 = vunpack.c.l.b16 %v6138
    %v6203 = vunpack.c.l.b16 %v6139
    %v6204 = vunpack.c.l.b16 %v6140
    %v6205 = vunpack.c.l.b16 %v6141
    %v6206 = vunpack.c.l.b16 %v6142
    %v6207 = vunpack.c.l.b16 %v6143
    %v6208 = vunpack.c.l.b16 %v6144
    %v6209 = vunpack.c.l.b16 %v6145
    %v6210 = vunpack.c.l.b16 %v6146
    %v6211 = vunpack.c.l.b16 %v6147
    %v6212 = vunpack.c.l.b16 %v6148
    %v6213 = vunpack.c.l.b16 %v6149
    %v6214 = vpack.c.b16 %v6183, %v6182
    %v6215 = vpack.c.b16 %v6185, %v6184
    %v6216 = vpack.c.b16 %v6187, %v6186
    %v6217 = vpack.c.b16 %v6189, %v6188
    %v6218 = vpack.c.b16 %v6191, %v6190
    %v6219 = vpack.c.b16 %v6193, %v6192
    %v6220 = vpack.c.b16 %v6195, %v6194
    %v6221 = vpack.c.b16 %v6197, %v6196
    %v6222 = vpack.c.b16 %v6199, %v6198
    %v6223 = vpack.c.b16 %v6201, %v6200
    %v6224 = vpack.c.b16 %v6203, %v6202
    %v6225 = vpack.c.b16 %v6205, %v6204
    %v6226 = vpack.c.b16 %v6207, %v6206
    %v6227 = vpack.c.b16 %v6209, %v6208
    %v6228 = vpack.c.b16 %v6211, %v6210
    %v6229 = vpack.c.b16 %v6213, %v6212
    %6246 = vmatprep.subr.bf16.mxu0 0
    %6247 = vmatpush1.bf16.msra.mxu0 %v6221
    %6248 = vmatprep.subr.bf16.mxu0 0
    %6249 = vmatpush1.bf16.msra.mxu0 %v6220
    %6250 = vmatprep.subr.bf16.mxu0 0
    %6251 = vmatpush1.bf16.msra.mxu0 %v6219
    %6252 = vmatprep.subr.bf16.mxu0 0
    %6253 = vmatpush1.bf16.msra.mxu0 %v6218
    %6254 = vmatprep.subr.bf16.mxu0 0
    %6255 = vmatpush1.bf16.msra.mxu0 %v6217
    %6256 = vmatprep.subr.bf16.mxu0 0
    %6257 = vmatpush1.bf16.msra.mxu0 %v6216
    %6258 = vmatprep.subr.bf16.mxu0 0
    %6259 = vmatpush1.bf16.msra.mxu0 %v6215
    %6260 = vmatprep.subr.bf16.mxu0 0
    %6261 = vmatpush1.bf16.msra.mxu0 %v6214
    %6262 = vmatprep.subr.bf16.mxu0 0
    %6263 = vmatpush2.bf16.msra.mxu0 %v6229
    %6264 = vmatprep.subr.bf16.mxu0 0
    %6265 = vmatpush2.bf16.msra.mxu0 %v6228
    %6266 = vmatprep.subr.bf16.mxu0 0
    %6267 = vmatpush2.bf16.msra.mxu0 %v6227
    %6268 = vmatprep.subr.bf16.mxu0 0
    %6269 = vmatpush2.bf16.msra.mxu0 %v6226
    %6270 = vmatprep.subr.bf16.mxu0 0
    %6271 = vmatpush2.bf16.msra.mxu0 %v6225
    %6272 = vmatprep.subr.bf16.mxu0 0
    %6273 = vmatpush2.bf16.msra.mxu0 %v6224
    %6274 = vmatprep.subr.bf16.mxu0 0
    %6275 = vmatpush2.bf16.msra.mxu0 %v6223
    %6276 = vmatprep.subr.bf16.mxu0 0
    %6277 = vmatpush2.bf16.msra.mxu0 %v6222
    %6278 = vmatprep.mubr.bf16.mxu0 %v4231
    %6279 = vmatmul.mubr.bf16.gmra.mxu0 %v4230
    %v6280 = vpop.f32.mrf.mxu0
    %v6281 = vadd.f32 0.0, %v6280
    %v6282 = vpop.f32.mrf.mxu0
    %v6283 = vpop.f32.mrf.mxu0
    %v6284 = vadd.f32 0.0, %v6283
    %v6285 = vpop.f32.mrf.mxu0
    %6286 = vmatprep.mubr.bf16.mxu0 %v4233
    %6287 = vmatmul.mubr.bf16.gmra.mxu0 %v4232
    %v6288 = vpop.f32.mrf.mxu0
    %v6289 = vadd.f32 0.0, %v6288
    %v6290 = vpop.f32.mrf.mxu0
    %v6291 = vpop.f32.mrf.mxu0
    %v6292 = vadd.f32 0.0, %v6291
    %v6293 = vpop.f32.mrf.mxu0
    %6294 = vmatprep.mubr.bf16.mxu0 %v4235
    %6295 = vmatmul.mubr.bf16.gmra.mxu0 %v4234
    %v6296 = vpop.f32.mrf.mxu0
    %v6297 = vadd.f32 0.0, %v6296
    %v6298 = vpop.f32.mrf.mxu0
    %v6299 = vpop.f32.mrf.mxu0
    %v6300 = vadd.f32 0.0, %v6299
    %v6301 = vpop.f32.mrf.mxu0
    %6302 = vmatprep.mubr.bf16.mxu0 %v4237
    %6303 = vmatmul.mubr.bf16.gmra.mxu0 %v4236
    %v6304 = vpop.f32.mrf.mxu0
    %v6305 = vadd.f32 0.0, %v6304
    %v6306 = vpop.f32.mrf.mxu0
    %v6307 = vpop.f32.mrf.mxu0
    %v6308 = vadd.f32 0.0, %v6307
    %v6309 = vpop.f32.mrf.mxu0
    %6310 = vmatprep.mubr.bf16.mxu0 %v4239
    %6311 = vmatmul.mubr.bf16.gmra.mxu0 %v4238
    %v6312 = vpop.f32.mrf.mxu0
    %v6313 = vadd.f32 0.0, %v6312
    %v6314 = vpop.f32.mrf.mxu0
    %v6315 = vpop.f32.mrf.mxu0
    %v6316 = vadd.f32 0.0, %v6315
    %v6317 = vpop.f32.mrf.mxu0
    %6318 = vmatprep.mubr.bf16.mxu0 %v4241
    %6319 = vmatmul.mubr.bf16.gmra.mxu0 %v4240
    %v6320 = vpop.f32.mrf.mxu0
    %v6321 = vadd.f32 0.0, %v6320
    %v6322 = vpop.f32.mrf.mxu0
    %v6323 = vpop.f32.mrf.mxu0
    %v6324 = vadd.f32 0.0, %v6323
    %v6325 = vpop.f32.mrf.mxu0
    %6326 = vmatprep.mubr.bf16.mxu0 %v4243
    %6327 = vmatmul.mubr.bf16.gmra.mxu0 %v4242
    %v6328 = vpop.f32.mrf.mxu0
    %v6329 = vadd.f32 0.0, %v6328
    %v6330 = vpop.f32.mrf.mxu0
    %v6331 = vpop.f32.mrf.mxu0
    %v6332 = vadd.f32 0.0, %v6331
    %v6333 = vpop.f32.mrf.mxu0
    %6334 = vmatprep.mubr.bf16.mxu0 %v4245
    %6335 = vmatmul.mubr.bf16.gmra.mxu0 %v4244
    %v6336 = vpop.f32.mrf.mxu0
    %v6337 = vadd.f32 0.0, %v6336
    %v6338 = vpop.f32.mrf.mxu0
    %v6339 = vpop.f32.mrf.mxu0
    %v6340 = vadd.f32 0.0, %v6339
    %v6341 = vpop.f32.mrf.mxu0
    %6342 = vdwg.mxu0
    %s6343 = scalar_lea.vmem [#allocation4], 512
    %v6344 = vld [vmem:[%s6343] sm:$0xf]
    %v6345 = vld [vmem:[%s6343 + $0x4] sm:$0xf]
    %v6346 = vld [vmem:[%s6343 + $0x8] sm:$0xf]
    %v6347 = vld [vmem:[%s6343 + $0xc] sm:$0xf]
    %v6348 = vld [vmem:[%s6343 + $0x10] sm:$0xf]
    %v6349 = vld [vmem:[%s6343 + $0x14] sm:$0xf]
    %v6350 = vld [vmem:[%s6343 + $0x18] sm:$0xf]
    %v6351 = vld [vmem:[%s6343 + $0x1c] sm:$0xf]
    %v6352 = vld [vmem:[%s6343 + $0x20] sm:$0xf]
    %v6353 = vld [vmem:[%s6343 + $0x24] sm:$0xf]
    %v6354 = vld [vmem:[%s6343 + $0x28] sm:$0xf]
    %v6355 = vld [vmem:[%s6343 + $0x2c] sm:$0xf]
    %v6356 = vld [vmem:[%s6343 + $0x30] sm:$0xf]
    %v6357 = vld [vmem:[%s6343 + $0x34] sm:$0xf]
    %v6358 = vld [vmem:[%s6343 + $0x38] sm:$0xf]
    %v6359 = vld [vmem:[%s6343 + $0x3c] sm:$0xf]
    %v6360 = vld [vmem:[%s6343 + $0x40] sm:$0xf]
    %v6361 = vld [vmem:[%s6343 + $0x44] sm:$0xf]
    %v6362 = vld [vmem:[%s6343 + $0x48] sm:$0xf]
    %v6363 = vld [vmem:[%s6343 + $0x4c] sm:$0xf]
    %v6364 = vld [vmem:[%s6343 + $0x50] sm:$0xf]
    %v6365 = vld [vmem:[%s6343 + $0x54] sm:$0xf]
    %v6366 = vld [vmem:[%s6343 + $0x58] sm:$0xf]
    %v6367 = vld [vmem:[%s6343 + $0x5c] sm:$0xf]
    %v6368 = vld [vmem:[%s6343 + $0x60] sm:$0xf]
    %v6369 = vld [vmem:[%s6343 + $0x64] sm:$0xf]
    %v6370 = vld [vmem:[%s6343 + $0x68] sm:$0xf]
    %v6371 = vld [vmem:[%s6343 + $0x6c] sm:$0xf]
    %v6372 = vld [vmem:[%s6343 + $0x70] sm:$0xf]
    %v6373 = vld [vmem:[%s6343 + $0x74] sm:$0xf]
    %v6374 = vld [vmem:[%s6343 + $0x78] sm:$0xf]
    %v6375 = vld [vmem:[%s6343 + $0x7c] sm:$0xf]
    %v6408 = vunpack.c.l.b16 %v6344
    %v6409 = vunpack.c.l.b16 %v6345
    %v6410 = vunpack.c.l.b16 %v6346
    %v6411 = vunpack.c.l.b16 %v6347
    %v6412 = vunpack.c.l.b16 %v6348
    %v6413 = vunpack.c.l.b16 %v6349
    %v6414 = vunpack.c.l.b16 %v6350
    %v6415 = vunpack.c.l.b16 %v6351
    %v6416 = vunpack.c.l.b16 %v6352
    %v6417 = vunpack.c.l.b16 %v6353
    %v6418 = vunpack.c.l.b16 %v6354
    %v6419 = vunpack.c.l.b16 %v6355
    %v6420 = vunpack.c.l.b16 %v6356
    %v6421 = vunpack.c.l.b16 %v6357
    %v6422 = vunpack.c.l.b16 %v6358
    %v6423 = vunpack.c.l.b16 %v6359
    %v6424 = vunpack.c.l.b16 %v6360
    %v6425 = vunpack.c.l.b16 %v6361
    %v6426 = vunpack.c.l.b16 %v6362
    %v6427 = vunpack.c.l.b16 %v6363
    %v6428 = vunpack.c.l.b16 %v6364
    %v6429 = vunpack.c.l.b16 %v6365
    %v6430 = vunpack.c.l.b16 %v6366
    %v6431 = vunpack.c.l.b16 %v6367
    %v6432 = vunpack.c.l.b16 %v6368
    %v6433 = vunpack.c.l.b16 %v6369
    %v6434 = vunpack.c.l.b16 %v6370
    %v6435 = vunpack.c.l.b16 %v6371
    %v6436 = vunpack.c.l.b16 %v6372
    %v6437 = vunpack.c.l.b16 %v6373
    %v6438 = vunpack.c.l.b16 %v6374
    %v6439 = vunpack.c.l.b16 %v6375
    %v6440 = vpack.c.b16 %v6409, %v6408
    %v6441 = vpack.c.b16 %v6411, %v6410
    %v6442 = vpack.c.b16 %v6413, %v6412
    %v6443 = vpack.c.b16 %v6415, %v6414
    %v6444 = vpack.c.b16 %v6417, %v6416
    %v6445 = vpack.c.b16 %v6419, %v6418
    %v6446 = vpack.c.b16 %v6421, %v6420
    %v6447 = vpack.c.b16 %v6423, %v6422
    %v6448 = vpack.c.b16 %v6425, %v6424
    %v6449 = vpack.c.b16 %v6427, %v6426
    %v6450 = vpack.c.b16 %v6429, %v6428
    %v6451 = vpack.c.b16 %v6431, %v6430
    %v6452 = vpack.c.b16 %v6433, %v6432
    %v6453 = vpack.c.b16 %v6435, %v6434
    %v6454 = vpack.c.b16 %v6437, %v6436
    %v6455 = vpack.c.b16 %v6439, %v6438
    %6472 = vmatprep.subr.bf16.mxu0 0
    %6473 = vmatpush1.bf16.msra.mxu0 %v6447
    %6474 = vmatprep.subr.bf16.mxu0 0
    %6475 = vmatpush1.bf16.msra.mxu0 %v6446
    %6476 = vmatprep.subr.bf16.mxu0 0
    %6477 = vmatpush1.bf16.msra.mxu0 %v6445
    %6478 = vmatprep.subr.bf16.mxu0 0
    %6479 = vmatpush1.bf16.msra.mxu0 %v6444
    %6480 = vmatprep.subr.bf16.mxu0 0
    %6481 = vmatpush1.bf16.msra.mxu0 %v6443
    %6482 = vmatprep.subr.bf16.mxu0 0
    %6483 = vmatpush1.bf16.msra.mxu0 %v6442
    %6484 = vmatprep.subr.bf16.mxu0 0
    %6485 = vmatpush1.bf16.msra.mxu0 %v6441
    %6486 = vmatprep.subr.bf16.mxu0 0
    %6487 = vmatpush1.bf16.msra.mxu0 %v6440
    %6488 = vmatprep.subr.bf16.mxu0 0
    %6489 = vmatpush2.bf16.msra.mxu0 %v6455
    %6490 = vmatprep.subr.bf16.mxu0 0
    %6491 = vmatpush2.bf16.msra.mxu0 %v6454
    %6492 = vmatprep.subr.bf16.mxu0 0
    %6493 = vmatpush2.bf16.msra.mxu0 %v6453
    %6494 = vmatprep.subr.bf16.mxu0 0
    %6495 = vmatpush2.bf16.msra.mxu0 %v6452
    %6496 = vmatprep.subr.bf16.mxu0 0
    %6497 = vmatpush2.bf16.msra.mxu0 %v6451
    %6498 = vmatprep.subr.bf16.mxu0 0
    %6499 = vmatpush2.bf16.msra.mxu0 %v6450
    %6500 = vmatprep.subr.bf16.mxu0 0
    %6501 = vmatpush2.bf16.msra.mxu0 %v6449
    %6502 = vmatprep.subr.bf16.mxu0 0
    %6503 = vmatpush2.bf16.msra.mxu0 %v6448
    %6504 = vmatprep.mubr.bf16.mxu0 %v4231
    %6505 = vmatmul.mubr.bf16.gmra.mxu0 %v4230
    %v6506 = vpop.f32.mrf.mxu0
    %v6507 = vadd.f32 0.0, %v6506
    %v6508 = vpop.f32.mrf.mxu0
    %v6509 = vpop.f32.mrf.mxu0
    %v6510 = vadd.f32 0.0, %v6509
    %v6511 = vpop.f32.mrf.mxu0
    %6512 = vmatprep.mubr.bf16.mxu0 %v4233
    %6513 = vmatmul.mubr.bf16.gmra.mxu0 %v4232
    %v6514 = vpop.f32.mrf.mxu0
    %v6515 = vadd.f32 0.0, %v6514
    %v6516 = vpop.f32.mrf.mxu0
    %v6517 = vpop.f32.mrf.mxu0
    %v6518 = vadd.f32 0.0, %v6517
    %v6519 = vpop.f32.mrf.mxu0
    %6520 = vmatprep.mubr.bf16.mxu0 %v4235
    %6521 = vmatmul.mubr.bf16.gmra.mxu0 %v4234
    %v6522 = vpop.f32.mrf.mxu0
    %v6523 = vadd.f32 0.0, %v6522
    %v6524 = vpop.f32.mrf.mxu0
    %v6525 = vpop.f32.mrf.mxu0
    %v6526 = vadd.f32 0.0, %v6525
    %v6527 = vpop.f32.mrf.mxu0
    %6528 = vmatprep.mubr.bf16.mxu0 %v4237
    %6529 = vmatmul.mubr.bf16.gmra.mxu0 %v4236
    %v6530 = vpop.f32.mrf.mxu0
    %v6531 = vadd.f32 0.0, %v6530
    %v6532 = vpop.f32.mrf.mxu0
    %v6533 = vpop.f32.mrf.mxu0
    %v6534 = vadd.f32 0.0, %v6533
    %v6535 = vpop.f32.mrf.mxu0
    %6536 = vmatprep.mubr.bf16.mxu0 %v4239
    %6537 = vmatmul.mubr.bf16.gmra.mxu0 %v4238
    %v6538 = vpop.f32.mrf.mxu0
    %v6539 = vadd.f32 0.0, %v6538
    %v6540 = vpop.f32.mrf.mxu0
    %v6541 = vpop.f32.mrf.mxu0
    %v6542 = vadd.f32 0.0, %v6541
    %v6543 = vpop.f32.mrf.mxu0
    %6544 = vmatprep.mubr.bf16.mxu0 %v4241
    %6545 = vmatmul.mubr.bf16.gmra.mxu0 %v4240
    %v6546 = vpop.f32.mrf.mxu0
    %v6547 = vadd.f32 0.0, %v6546
    %v6548 = vpop.f32.mrf.mxu0
    %v6549 = vpop.f32.mrf.mxu0
    %v6550 = vadd.f32 0.0, %v6549
    %v6551 = vpop.f32.mrf.mxu0
    %6552 = vmatprep.mubr.bf16.mxu0 %v4243
    %6553 = vmatmul.mubr.bf16.gmra.mxu0 %v4242
    %v6554 = vpop.f32.mrf.mxu0
    %v6555 = vadd.f32 0.0, %v6554
    %v6556 = vpop.f32.mrf.mxu0
    %v6557 = vpop.f32.mrf.mxu0
    %v6558 = vadd.f32 0.0, %v6557
    %v6559 = vpop.f32.mrf.mxu0
    %6560 = vmatprep.mubr.bf16.mxu0 %v4245
    %6561 = vmatmul.mubr.bf16.gmra.mxu0 %v4244
    %v6562 = vpop.f32.mrf.mxu0
    %v6563 = vadd.f32 0.0, %v6562
    %v6564 = vpop.f32.mrf.mxu0
    %v6565 = vpop.f32.mrf.mxu0
    %v6566 = vadd.f32 0.0, %v6565
    %v6567 = vpop.f32.mrf.mxu0
    %6568 = vdwg.mxu0
    %v6569 = vadd.f32 %v6085, %v6281
    %v6570 = vadd.f32 %v6086, %v6284
    %v6571 = vadd.f32 %v6087, %v6289
    %v6572 = vadd.f32 %v6088, %v6292
    %v6573 = vadd.f32 %v6089, %v6297
    %v6574 = vadd.f32 %v6090, %v6300
    %v6575 = vadd.f32 %v6091, %v6305
    %v6576 = vadd.f32 %v6092, %v6308
    %v6577 = vadd.f32 %v6093, %v6313
    %v6578 = vadd.f32 %v6094, %v6316
    %v6579 = vadd.f32 %v6095, %v6321
    %v6580 = vadd.f32 %v6096, %v6324
    %v6581 = vadd.f32 %v6097, %v6329
    %v6582 = vadd.f32 %v6098, %v6332
    %v6583 = vadd.f32 %v6099, %v6337
    %v6584 = vadd.f32 %v6100, %v6340
    %v6585 = vadd.f32 %v6101, %v6507
    %v6586 = vadd.f32 %v6102, %v6510
    %v6587 = vadd.f32 %v6103, %v6515
    %v6588 = vadd.f32 %v6104, %v6518
    %v6589 = vadd.f32 %v6105, %v6523
    %v6590 = vadd.f32 %v6106, %v6526
    %v6591 = vadd.f32 %v6107, %v6531
    %v6592 = vadd.f32 %v6108, %v6534
    %v6593 = vadd.f32 %v6109, %v6539
    %v6594 = vadd.f32 %v6110, %v6542
    %v6595 = vadd.f32 %v6111, %v6547
    %v6596 = vadd.f32 %v6112, %v6550
    %v6597 = vadd.f32 %v6113, %v6555
    %v6598 = vadd.f32 %v6114, %v6558
    %v6599 = vadd.f32 %v6115, %v6563
    %v6600 = vadd.f32 %v6116, %v6566
    %v6601 = vmax.f32 %v6569, %v6585
    %v6602 = vmax.f32 %v6570, %v6586
    %v6603 = vmax.f32 %v6571, %v6587
    %v6604 = vmax.f32 %v6572, %v6588
    %v6605 = vmax.f32 %v6573, %v6589
    %v6606 = vmax.f32 %v6574, %v6590
    %v6607 = vmax.f32 %v6575, %v6591
    %v6608 = vmax.f32 %v6576, %v6592
    %v6609 = vmax.f32 %v6577, %v6593
    %v6610 = vmax.f32 %v6578, %v6594
    %v6611 = vmax.f32 %v6579, %v6595
    %v6612 = vmax.f32 %v6580, %v6596
    %v6613 = vmax.f32 %v6581, %v6597
    %v6614 = vmax.f32 %v6582, %v6598
    %v6615 = vmax.f32 %v6583, %v6599
    %v6616 = vmax.f32 %v6584, %v6600
    %v6617 = vmax.f32 %v6601, %v6603
    %v6618 = vmax.f32 %v6602, %v6604
    %v6619 = vmax.f32 %v6605, %v6607
    %v6620 = vmax.f32 %v6606, %v6608
    %v6621 = vmax.f32 %v6609, %v6611
    %v6622 = vmax.f32 %v6610, %v6612
    %v6623 = vmax.f32 %v6613, %v6615
    %v6624 = vmax.f32 %v6614, %v6616
    %v6626 = vlaneseq
    %v6627 = vshrl.u32 %v6626, 7
    %v6628 = vsub.s32 0, %v6627
    %v6629 = vrot.slane %v4246, %v6628
    %v6631 = vadd.f32 %v6617, %v6629
    %v6632 = vadd.f32 %v6618, %v6629
    %v6633 = vadd.f32 %v6619, %v6629
    %v6634 = vadd.f32 %v6620, %v6629
    %v6635 = vadd.f32 %v6621, %v6629
    %v6636 = vadd.f32 %v6622, %v6629
    %v6637 = vadd.f32 %v6623, %v6629
    %v6638 = vadd.f32 %v6624, %v6629
    %v6639 = vmax.f32 %v6631, 0.0
    %v6640 = vmax.f32 %v6632, 0.0
    %v6641 = vmax.f32 %v6633, 0.0
    %v6642 = vmax.f32 %v6634, 0.0
    %v6643 = vmax.f32 %v6635, 0.0
    %v6644 = vmax.f32 %v6636, 0.0
    %v6645 = vmax.f32 %v6637, 0.0
    %v6646 = vmax.f32 %v6638, 0.0
    %v6647 = vpack.c.bf16 %v6640, %v6639
    %v6648 = vpack.c.bf16 %v6642, %v6641
    %v6649 = vpack.c.bf16 %v6644, %v6643
    %v6650 = vpack.c.bf16 %v6646, %v6645
    %v6651 = vld [vmem:[#allocation6] sm:$0xff]
    %v6652 = vld [vmem:[#allocation6 + $0x8] sm:$0xff]
    %v6653 = vld [vmem:[#allocation6 + $0x10] sm:$0xff]
    %v6654 = vld [vmem:[#allocation6 + $0x18] sm:$0xff]
    %v6655 = vld [vmem:[#allocation6 + $0x20] sm:$0xff]
    %v6656 = vld [vmem:[#allocation6 + $0x28] sm:$0xff]
    %v6657 = vld [vmem:[#allocation6 + $0x30] sm:$0xff]
    %v6658 = vld [vmem:[#allocation6 + $0x38] sm:$0xff]
    %v6659 = vld [vmem:[#allocation6 + $0x40] sm:$0xff]
    %v6660 = vld [vmem:[#allocation6 + $0x48] sm:$0xff]
    %v6661 = vld [vmem:[#allocation6 + $0x50] sm:$0xff]
    %v6662 = vld [vmem:[#allocation6 + $0x58] sm:$0xff]
    %v6663 = vld [vmem:[#allocation6 + $0x60] sm:$0xff]
    %v6664 = vld [vmem:[#allocation6 + $0x68] sm:$0xff]
    %v6665 = vld [vmem:[#allocation6 + $0x70] sm:$0xff]
    %v6666 = vld [vmem:[#allocation6 + $0x78] sm:$0xff]
    %v6667 = vld [vmem:[#allocation6 + $0x80] sm:$0xff]
    %v6668 = vld [vmem:[#allocation6 + $0x88] sm:$0xff]
    %v6669 = vld [vmem:[#allocation6 + $0x90] sm:$0xff]
    %v6670 = vld [vmem:[#allocation6 + $0x98] sm:$0xff]
    %v6671 = vld [vmem:[#allocation6 + $0xa0] sm:$0xff]
    %v6672 = vld [vmem:[#allocation6 + $0xa8] sm:$0xff]
    %v6673 = vld [vmem:[#allocation6 + $0xb0] sm:$0xff]
    %v6674 = vld [vmem:[#allocation6 + $0xb8] sm:$0xff]
    %v6675 = vld [vmem:[#allocation6 + $0xc0] sm:$0xff]
    %v6676 = vld [vmem:[#allocation6 + $0xc8] sm:$0xff]
    %v6677 = vld [vmem:[#allocation6 + $0xd0] sm:$0xff]
    %v6678 = vld [vmem:[#allocation6 + $0xd8] sm:$0xff]
    %v6679 = vld [vmem:[#allocation6 + $0xe0] sm:$0xff]
    %v6680 = vld [vmem:[#allocation6 + $0xe8] sm:$0xff]
    %v6681 = vld [vmem:[#allocation6 + $0xf0] sm:$0xff]
    %v6682 = vld [vmem:[#allocation6 + $0xf8] sm:$0xff]
    %v6683 = vld [vmem:[#allocation6 + $0x100] sm:$0xff]
    %v6684 = vld [vmem:[#allocation6 + $0x108] sm:$0xff]
    %v6685 = vld [vmem:[#allocation6 + $0x110] sm:$0xff]
    %v6686 = vld [vmem:[#allocation6 + $0x118] sm:$0xff]
    %v6687 = vld [vmem:[#allocation6 + $0x120] sm:$0xff]
    %v6688 = vld [vmem:[#allocation6 + $0x128] sm:$0xff]
    %v6689 = vld [vmem:[#allocation6 + $0x130] sm:$0xff]
    %v6690 = vld [vmem:[#allocation6 + $0x138] sm:$0xff]
    %v6691 = vld [vmem:[#allocation6 + $0x140] sm:$0xff]
    %v6692 = vld [vmem:[#allocation6 + $0x148] sm:$0xff]
    %v6693 = vld [vmem:[#allocation6 + $0x150] sm:$0xff]
    %v6694 = vld [vmem:[#allocation6 + $0x158] sm:$0xff]
    %v6695 = vld [vmem:[#allocation6 + $0x160] sm:$0xff]
    %v6696 = vld [vmem:[#allocation6 + $0x168] sm:$0xff]
    %v6697 = vld [vmem:[#allocation6 + $0x170] sm:$0xff]
    %v6698 = vld [vmem:[#allocation6 + $0x178] sm:$0xff]
    %v6699 = vld [vmem:[#allocation6 + $0x180] sm:$0xff]
    %v6700 = vld [vmem:[#allocation6 + $0x188] sm:$0xff]
    %v6701 = vld [vmem:[#allocation6 + $0x190] sm:$0xff]
    %v6702 = vld [vmem:[#allocation6 + $0x198] sm:$0xff]
    %v6703 = vld [vmem:[#allocation6 + $0x1a0] sm:$0xff]
    %v6704 = vld [vmem:[#allocation6 + $0x1a8] sm:$0xff]
    %v6705 = vld [vmem:[#allocation6 + $0x1b0] sm:$0xff]
    %v6706 = vld [vmem:[#allocation6 + $0x1b8] sm:$0xff]
    %v6707 = vld [vmem:[#allocation6 + $0x1c0] sm:$0xff]
    %v6708 = vld [vmem:[#allocation6 + $0x1c8] sm:$0xff]
    %v6709 = vld [vmem:[#allocation6 + $0x1d0] sm:$0xff]
    %v6710 = vld [vmem:[#allocation6 + $0x1d8] sm:$0xff]
    %v6711 = vld [vmem:[#allocation6 + $0x1e0] sm:$0xff]
    %v6712 = vld [vmem:[#allocation6 + $0x1e8] sm:$0xff]
    %v6713 = vld [vmem:[#allocation6 + $0x1f0] sm:$0xff]
    %v6714 = vld [vmem:[#allocation6 + $0x1f8] sm:$0xff]
    %v6715 = vld [vmem:[%s8] sm:$0x3]
    %v6717 = vlaneseq
    %v6718 = vshrl.u32 %v6717, 7
    %v6719 = vsub.s32 0, %v6718
    %v6720 = vrot.slane %v6715, %v6719
    %v6721 = vlaneseq
    %v6722 = vshrl.u32 %v6721, 7
    %v6723 = vsub.s32 1, %v6722
    %v6724 = vrot.slane %v6715, %v6723
    %v6791 = vunpack.c.l.b16 %v6651
    %v6792 = vunpack.c.h.b16 %v6651
    %v6793 = vunpack.c.l.b16 %v6652
    %v6794 = vunpack.c.h.b16 %v6652
    %v6795 = vunpack.c.l.b16 %v6653
    %v6796 = vunpack.c.h.b16 %v6653
    %v6797 = vunpack.c.l.b16 %v6654
    %v6798 = vunpack.c.h.b16 %v6654
    %v6799 = vunpack.c.l.b16 %v6655
    %v6800 = vunpack.c.h.b16 %v6655
    %v6801 = vunpack.c.l.b16 %v6656
    %v6802 = vunpack.c.h.b16 %v6656
    %v6803 = vunpack.c.l.b16 %v6657
    %v6804 = vunpack.c.h.b16 %v6657
    %v6805 = vunpack.c.l.b16 %v6658
    %v6806 = vunpack.c.h.b16 %v6658
    %v6807 = vunpack.c.l.b16 %v6659
    %v6808 = vunpack.c.h.b16 %v6659
    %v6809 = vunpack.c.l.b16 %v6660
    %v6810 = vunpack.c.h.b16 %v6660
    %v6811 = vunpack.c.l.b16 %v6661
    %v6812 = vunpack.c.h.b16 %v6661
    %v6813 = vunpack.c.l.b16 %v6662
    %v6814 = vunpack.c.h.b16 %v6662
    %v6815 = vunpack.c.l.b16 %v6663
    %v6816 = vunpack.c.h.b16 %v6663
    %v6817 = vunpack.c.l.b16 %v6664
    %v6818 = vunpack.c.h.b16 %v6664
    %v6819 = vunpack.c.l.b16 %v6665
    %v6820 = vunpack.c.h.b16 %v6665
    %v6821 = vunpack.c.l.b16 %v6666
    %v6822 = vunpack.c.h.b16 %v6666
    %v6823 = vunpack.c.l.b16 %v6667
    %v6824 = vunpack.c.h.b16 %v6667
    %v6825 = vunpack.c.l.b16 %v6668
    %v6826 = vunpack.c.h.b16 %v6668
    %v6827 = vunpack.c.l.b16 %v6669
    %v6828 = vunpack.c.h.b16 %v6669
    %v6829 = vunpack.c.l.b16 %v6670
    %v6830 = vunpack.c.h.b16 %v6670
    %v6831 = vunpack.c.l.b16 %v6671
    %v6832 = vunpack.c.h.b16 %v6671
    %v6833 = vunpack.c.l.b16 %v6672
    %v6834 = vunpack.c.h.b16 %v6672
    %v6835 = vunpack.c.l.b16 %v6673
    %v6836 = vunpack.c.h.b16 %v6673
    %v6837 = vunpack.c.l.b16 %v6674
    %v6838 = vunpack.c.h.b16 %v6674
    %v6839 = vunpack.c.l.b16 %v6675
    %v6840 = vunpack.c.h.b16 %v6675
    %v6841 = vunpack.c.l.b16 %v6676
    %v6842 = vunpack.c.h.b16 %v6676
    %v6843 = vunpack.c.l.b16 %v6677
    %v6844 = vunpack.c.h.b16 %v6677
    %v6845 = vunpack.c.l.b16 %v6678
    %v6846 = vunpack.c.h.b16 %v6678
    %v6847 = vunpack.c.l.b16 %v6679
    %v6848 = vunpack.c.h.b16 %v6679
    %v6849 = vunpack.c.l.b16 %v6680
    %v6850 = vunpack.c.h.b16 %v6680
    %v6851 = vunpack.c.l.b16 %v6681
    %v6852 = vunpack.c.h.b16 %v6681
    %v6853 = vunpack.c.l.b16 %v6682
    %v6854 = vunpack.c.h.b16 %v6682
    %v6855 = vunpack.c.l.b16 %v6683
    %v6856 = vunpack.c.h.b16 %v6683
    %v6857 = vunpack.c.l.b16 %v6684
    %v6858 = vunpack.c.h.b16 %v6684
    %v6859 = vunpack.c.l.b16 %v6685
    %v6860 = vunpack.c.h.b16 %v6685
    %v6861 = vunpack.c.l.b16 %v6686
    %v6862 = vunpack.c.h.b16 %v6686
    %v6863 = vunpack.c.l.b16 %v6687
    %v6864 = vunpack.c.h.b16 %v6687
    %v6865 = vunpack.c.l.b16 %v6688
    %v6866 = vunpack.c.h.b16 %v6688
    %v6867 = vunpack.c.l.b16 %v6689
    %v6868 = vunpack.c.h.b16 %v6689
    %v6869 = vunpack.c.l.b16 %v6690
    %v6870 = vunpack.c.h.b16 %v6690
    %v6871 = vunpack.c.l.b16 %v6691
    %v6872 = vunpack.c.h.b16 %v6691
    %v6873 = vunpack.c.l.b16 %v6692
    %v6874 = vunpack.c.h.b16 %v6692
    %v6875 = vunpack.c.l.b16 %v6693
    %v6876 = vunpack.c.h.b16 %v6693
    %v6877 = vunpack.c.l.b16 %v6694
    %v6878 = vunpack.c.h.b16 %v6694
    %v6879 = vunpack.c.l.b16 %v6695
    %v6880 = vunpack.c.h.b16 %v6695
    %v6881 = vunpack.c.l.b16 %v6696
    %v6882 = vunpack.c.h.b16 %v6696
    %v6883 = vunpack.c.l.b16 %v6697
    %v6884 = vunpack.c.h.b16 %v6697
    %v6885 = vunpack.c.l.b16 %v6698
    %v6886 = vunpack.c.h.b16 %v6698
    %v6887 = vunpack.c.l.b16 %v6699
    %v6888 = vunpack.c.h.b16 %v6699
    %v6889 = vunpack.c.l.b16 %v6700
    %v6890 = vunpack.c.h.b16 %v6700
    %v6891 = vunpack.c.l.b16 %v6701
    %v6892 = vunpack.c.h.b16 %v6701
    %v6893 = vunpack.c.l.b16 %v6702
    %v6894 = vunpack.c.h.b16 %v6702
    %v6895 = vunpack.c.l.b16 %v6703
    %v6896 = vunpack.c.h.b16 %v6703
    %v6897 = vunpack.c.l.b16 %v6704
    %v6898 = vunpack.c.h.b16 %v6704
    %v6899 = vunpack.c.l.b16 %v6705
    %v6900 = vunpack.c.h.b16 %v6705
    %v6901 = vunpack.c.l.b16 %v6706
    %v6902 = vunpack.c.h.b16 %v6706
    %v6903 = vunpack.c.l.b16 %v6707
    %v6904 = vunpack.c.h.b16 %v6707
    %v6905 = vunpack.c.l.b16 %v6708
    %v6906 = vunpack.c.h.b16 %v6708
    %v6907 = vunpack.c.l.b16 %v6709
    %v6908 = vunpack.c.h.b16 %v6709
    %v6909 = vunpack.c.l.b16 %v6710
    %v6910 = vunpack.c.h.b16 %v6710
    %v6911 = vunpack.c.l.b16 %v6711
    %v6912 = vunpack.c.h.b16 %v6711
    %v6913 = vunpack.c.l.b16 %v6712
    %v6914 = vunpack.c.h.b16 %v6712
    %v6915 = vunpack.c.l.b16 %v6713
    %v6916 = vunpack.c.h.b16 %v6713
    %v6917 = vunpack.c.l.b16 %v6714
    %v6918 = vunpack.c.h.b16 %v6714
    %v6919 = vpack.c.b16 %v6793, %v6791
    %v6920 = vpack.c.b16 %v6794, %v6792
    %v6921 = vpack.c.b16 %v6797, %v6795
    %v6922 = vpack.c.b16 %v6798, %v6796
    %v6923 = vpack.c.b16 %v6801, %v6799
    %v6924 = vpack.c.b16 %v6802, %v6800
    %v6925 = vpack.c.b16 %v6805, %v6803
    %v6926 = vpack.c.b16 %v6806, %v6804
    %v6927 = vpack.c.b16 %v6809, %v6807
    %v6928 = vpack.c.b16 %v6810, %v6808
    %v6929 = vpack.c.b16 %v6813, %v6811
    %v6930 = vpack.c.b16 %v6814, %v6812
    %v6931 = vpack.c.b16 %v6817, %v6815
    %v6932 = vpack.c.b16 %v6818, %v6816
    %v6933 = vpack.c.b16 %v6821, %v6819
    %v6934 = vpack.c.b16 %v6822, %v6820
    %v6935 = vpack.c.b16 %v6825, %v6823
    %v6936 = vpack.c.b16 %v6826, %v6824
    %v6937 = vpack.c.b16 %v6829, %v6827
    %v6938 = vpack.c.b16 %v6830, %v6828
    %v6939 = vpack.c.b16 %v6833, %v6831
    %v6940 = vpack.c.b16 %v6834, %v6832
    %v6941 = vpack.c.b16 %v6837, %v6835
    %v6942 = vpack.c.b16 %v6838, %v6836
    %v6943 = vpack.c.b16 %v6841, %v6839
    %v6944 = vpack.c.b16 %v6842, %v6840
    %v6945 = vpack.c.b16 %v6845, %v6843
    %v6946 = vpack.c.b16 %v6846, %v6844
    %v6947 = vpack.c.b16 %v6849, %v6847
    %v6948 = vpack.c.b16 %v6850, %v6848
    %v6949 = vpack.c.b16 %v6853, %v6851
    %v6950 = vpack.c.b16 %v6854, %v6852
    %v6951 = vpack.c.b16 %v6857, %v6855
    %v6952 = vpack.c.b16 %v6858, %v6856
    %v6953 = vpack.c.b16 %v6861, %v6859
    %v6954 = vpack.c.b16 %v6862, %v6860
    %v6955 = vpack.c.b16 %v6865, %v6863
    %v6956 = vpack.c.b16 %v6866, %v6864
    %v6957 = vpack.c.b16 %v6869, %v6867
    %v6958 = vpack.c.b16 %v6870, %v6868
    %v6959 = vpack.c.b16 %v6873, %v6871
    %v6960 = vpack.c.b16 %v6874, %v6872
    %v6961 = vpack.c.b16 %v6877, %v6875
    %v6962 = vpack.c.b16 %v6878, %v6876
    %v6963 = vpack.c.b16 %v6881, %v6879
    %v6964 = vpack.c.b16 %v6882, %v6880
    %v6965 = vpack.c.b16 %v6885, %v6883
    %v6966 = vpack.c.b16 %v6886, %v6884
    %v6967 = vpack.c.b16 %v6889, %v6887
    %v6968 = vpack.c.b16 %v6890, %v6888
    %v6969 = vpack.c.b16 %v6893, %v6891
    %v6970 = vpack.c.b16 %v6894, %v6892
    %v6971 = vpack.c.b16 %v6897, %v6895
    %v6972 = vpack.c.b16 %v6898, %v6896
    %v6973 = vpack.c.b16 %v6901, %v6899
    %v6974 = vpack.c.b16 %v6902, %v6900
    %v6975 = vpack.c.b16 %v6905, %v6903
    %v6976 = vpack.c.b16 %v6906, %v6904
    %v6977 = vpack.c.b16 %v6909, %v6907
    %v6978 = vpack.c.b16 %v6910, %v6908
    %v6979 = vpack.c.b16 %v6913, %v6911
    %v6980 = vpack.c.b16 %v6914, %v6912
    %v6981 = vpack.c.b16 %v6917, %v6915
    %v6982 = vpack.c.b16 %v6918, %v6916
    %7047 = vmatprep.subr.bf16.mxu0 %v6934
    %7048 = vmatpush1.bf16.msra.mxu0 %v6933
    %7049 = vmatprep.subr.bf16.mxu0 %v6932
    %7050 = vmatpush1.bf16.msra.mxu0 %v6931
    %7051 = vmatprep.subr.bf16.mxu0 %v6930
    %7052 = vmatpush1.bf16.msra.mxu0 %v6929
    %7053 = vmatprep.subr.bf16.mxu0 %v6928
    %7054 = vmatpush1.bf16.msra.mxu0 %v6927
    %7055 = vmatprep.subr.bf16.mxu0 %v6926
    %7056 = vmatpush1.bf16.msra.mxu0 %v6925
    %7057 = vmatprep.subr.bf16.mxu0 %v6924
    %7058 = vmatpush1.bf16.msra.mxu0 %v6923
    %7059 = vmatprep.subr.bf16.mxu0 %v6922
    %7060 = vmatpush1.bf16.msra.mxu0 %v6921
    %7061 = vmatprep.subr.bf16.mxu0 %v6920
    %7062 = vmatpush1.bf16.msra.mxu0 %v6919
    %7063 = vmatprep.subr.bf16.mxu0 %v6950
    %7064 = vmatpush2.bf16.msra.mxu0 %v6949
    %7065 = vmatprep.subr.bf16.mxu0 %v6948
    %7066 = vmatpush2.bf16.msra.mxu0 %v6947
    %7067 = vmatprep.subr.bf16.mxu0 %v6946
    %7068 = vmatpush2.bf16.msra.mxu0 %v6945
    %7069 = vmatprep.subr.bf16.mxu0 %v6944
    %7070 = vmatpush2.bf16.msra.mxu0 %v6943
    %7071 = vmatprep.subr.bf16.mxu0 %v6942
    %7072 = vmatpush2.bf16.msra.mxu0 %v6941
    %7073 = vmatprep.subr.bf16.mxu0 %v6940
    %7074 = vmatpush2.bf16.msra.mxu0 %v6939
    %7075 = vmatprep.subr.bf16.mxu0 %v6938
    %7076 = vmatpush2.bf16.msra.mxu0 %v6937
    %7077 = vmatprep.subr.bf16.mxu0 %v6936
    %7078 = vmatpush2.bf16.msra.mxu0 %v6935
    %7079 = vmatprep.mubr.bf16.mxu0 %v6648
    %7080 = vmatmul.mubr.bf16.gmra.mxu0 %v6647
    %v7081 = vpop.f32.mrf.mxu0
    %v7082 = vadd.f32 %v6720, %v7081
    %v7083 = vpop.f32.mrf.mxu0
    %v7084 = vadd.f32 %v6724, %v7083
    %v7085 = vpop.f32.mrf.mxu0
    %v7086 = vadd.f32 %v6720, %v7085
    %v7087 = vpop.f32.mrf.mxu0
    %v7088 = vadd.f32 %v6724, %v7087
    %7089 = vdwg.mxu0
    %7090 = vmatprep.subr.bf16.mxu0 %v6966
    %7091 = vmatpush1.bf16.msra.mxu0 %v6965
    %7092 = vmatprep.subr.bf16.mxu0 %v6964
    %7093 = vmatpush1.bf16.msra.mxu0 %v6963
    %7094 = vmatprep.subr.bf16.mxu0 %v6962
    %7095 = vmatpush1.bf16.msra.mxu0 %v6961
    %7096 = vmatprep.subr.bf16.mxu0 %v6960
    %7097 = vmatpush1.bf16.msra.mxu0 %v6959
    %7098 = vmatprep.subr.bf16.mxu0 %v6958
    %7099 = vmatpush1.bf16.msra.mxu0 %v6957
    %7100 = vmatprep.subr.bf16.mxu0 %v6956
    %7101 = vmatpush1.bf16.msra.mxu0 %v6955
    %7102 = vmatprep.subr.bf16.mxu0 %v6954
    %7103 = vmatpush1.bf16.msra.mxu0 %v6953
    %7104 = vmatprep.subr.bf16.mxu0 %v6952
    %7105 = vmatpush1.bf16.msra.mxu0 %v6951
    %7106 = vmatprep.subr.bf16.mxu0 %v6982
    %7107 = vmatpush2.bf16.msra.mxu0 %v6981
    %7108 = vmatprep.subr.bf16.mxu0 %v6980
    %7109 = vmatpush2.bf16.msra.mxu0 %v6979
    %7110 = vmatprep.subr.bf16.mxu0 %v6978
    %7111 = vmatpush2.bf16.msra.mxu0 %v6977
    %7112 = vmatprep.subr.bf16.mxu0 %v6976
    %7113 = vmatpush2.bf16.msra.mxu0 %v6975
    %7114 = vmatprep.subr.bf16.mxu0 %v6974
    %7115 = vmatpush2.bf16.msra.mxu0 %v6973
    %7116 = vmatprep.subr.bf16.mxu0 %v6972
    %7117 = vmatpush2.bf16.msra.mxu0 %v6971
    %7118 = vmatprep.subr.bf16.mxu0 %v6970
    %7119 = vmatpush2.bf16.msra.mxu0 %v6969
    %7120 = vmatprep.subr.bf16.mxu0 %v6968
    %7121 = vmatpush2.bf16.msra.mxu0 %v6967
    %7122 = vmatprep.mubr.bf16.mxu0 %v6650
    %7123 = vmatmul.mubr.bf16.gmra.mxu0 %v6649
    %v7124 = vpop.f32.mrf.mxu0
    %v7125 = vadd.f32 %v7082, %v7124
    %v7126 = vpop.f32.mrf.mxu0
    %v7127 = vadd.f32 %v7084, %v7126
    %v7128 = vpop.f32.mrf.mxu0
    %v7129 = vadd.f32 %v7086, %v7128
    %v7130 = vpop.f32.mrf.mxu0
    %v7131 = vadd.f32 %v7088, %v7130
    %7132 = vdwg.mxu0
    %v7133 = vmax.f32 %v7125, 0.0
    %v7134 = vmax.f32 %v7127, 0.0
    %v7135 = vmax.f32 %v7129, 0.0
    %v7136 = vmax.f32 %v7131, 0.0
    %v7137 = vpack.c.bf16 %v7135, %v7133
    %v7138 = vpack.c.bf16 %v7136, %v7134
    %v7139 = vld [vmem:[#allocation7] sm:$0xf]
    %v7140 = vld [vmem:[#allocation7 + $0x4] sm:$0xf]
    %v7141 = vld [vmem:[#allocation7 + $0x8] sm:$0xf]
    %v7142 = vld [vmem:[#allocation7 + $0xc] sm:$0xf]
    %v7143 = vld [vmem:[#allocation7 + $0x10] sm:$0xf]
    %v7144 = vld [vmem:[#allocation7 + $0x14] sm:$0xf]
    %v7145 = vld [vmem:[#allocation7 + $0x18] sm:$0xf]
    %v7146 = vld [vmem:[#allocation7 + $0x1c] sm:$0xf]
    %v7147 = vld [vmem:[#allocation7 + $0x20] sm:$0xf]
    %v7148 = vld [vmem:[#allocation7 + $0x24] sm:$0xf]
    %v7149 = vld [vmem:[#allocation7 + $0x28] sm:$0xf]
    %v7150 = vld [vmem:[#allocation7 + $0x2c] sm:$0xf]
    %v7151 = vld [vmem:[#allocation7 + $0x30] sm:$0xf]
    %v7152 = vld [vmem:[#allocation7 + $0x34] sm:$0xf]
    %v7153 = vld [vmem:[#allocation7 + $0x38] sm:$0xf]
    %v7154 = vld [vmem:[#allocation7 + $0x3c] sm:$0xf]
    %v7155 = vld [vmem:[#allocation7 + $0x40] sm:$0xf]
    %v7156 = vld [vmem:[#allocation7 + $0x44] sm:$0xf]
    %v7157 = vld [vmem:[#allocation7 + $0x48] sm:$0xf]
    %v7158 = vld [vmem:[#allocation7 + $0x4c] sm:$0xf]
    %v7159 = vld [vmem:[#allocation7 + $0x50] sm:$0xf]
    %v7160 = vld [vmem:[#allocation7 + $0x54] sm:$0xf]
    %v7161 = vld [vmem:[#allocation7 + $0x58] sm:$0xf]
    %v7162 = vld [vmem:[#allocation7 + $0x5c] sm:$0xf]
    %v7163 = vld [vmem:[#allocation7 + $0x60] sm:$0xf]
    %v7164 = vld [vmem:[#allocation7 + $0x64] sm:$0xf]
    %v7165 = vld [vmem:[#allocation7 + $0x68] sm:$0xf]
    %v7166 = vld [vmem:[#allocation7 + $0x6c] sm:$0xf]
    %v7167 = vld [vmem:[#allocation7 + $0x70] sm:$0xf]
    %v7168 = vld [vmem:[#allocation7 + $0x74] sm:$0xf]
    %v7169 = vld [vmem:[#allocation7 + $0x78] sm:$0xf]
    %v7170 = vld [vmem:[#allocation7 + $0x7c] sm:$0xf]
    %v7171 = vld [vmem:[%s10] sm:$0x1]
    %v7173 = vlaneseq
    %v7174 = vshrl.u32 %v7173, 7
    %v7175 = vsub.s32 0, %v7174
    %v7176 = vrot.slane %v7171, %v7175
    %v7210 = vunpack.c.l.b16 %v7139
    %v7211 = vunpack.c.l.b16 %v7140
    %v7212 = vunpack.c.l.b16 %v7141
    %v7213 = vunpack.c.l.b16 %v7142
    %v7214 = vunpack.c.l.b16 %v7143
    %v7215 = vunpack.c.l.b16 %v7144
    %v7216 = vunpack.c.l.b16 %v7145
    %v7217 = vunpack.c.l.b16 %v7146
    %v7218 = vunpack.c.l.b16 %v7147
    %v7219 = vunpack.c.l.b16 %v7148
    %v7220 = vunpack.c.l.b16 %v7149
    %v7221 = vunpack.c.l.b16 %v7150
    %v7222 = vunpack.c.l.b16 %v7151
    %v7223 = vunpack.c.l.b16 %v7152
    %v7224 = vunpack.c.l.b16 %v7153
    %v7225 = vunpack.c.l.b16 %v7154
    %v7226 = vunpack.c.l.b16 %v7155
    %v7227 = vunpack.c.l.b16 %v7156
    %v7228 = vunpack.c.l.b16 %v7157
    %v7229 = vunpack.c.l.b16 %v7158
    %v7230 = vunpack.c.l.b16 %v7159
    %v7231 = vunpack.c.l.b16 %v7160
    %v7232 = vunpack.c.l.b16 %v7161
    %v7233 = vunpack.c.l.b16 %v7162
    %v7234 = vunpack.c.l.b16 %v7163
    %v7235 = vunpack.c.l.b16 %v7164
    %v7236 = vunpack.c.l.b16 %v7165
    %v7237 = vunpack.c.l.b16 %v7166
    %v7238 = vunpack.c.l.b16 %v7167
    %v7239 = vunpack.c.l.b16 %v7168
    %v7240 = vunpack.c.l.b16 %v7169
    %v7241 = vunpack.c.l.b16 %v7170
    %v7242 = vpack.c.b16 %v7211, %v7210
    %v7243 = vpack.c.b16 %v7213, %v7212
    %v7244 = vpack.c.b16 %v7215, %v7214
    %v7245 = vpack.c.b16 %v7217, %v7216
    %v7246 = vpack.c.b16 %v7219, %v7218
    %v7247 = vpack.c.b16 %v7221, %v7220
    %v7248 = vpack.c.b16 %v7223, %v7222
    %v7249 = vpack.c.b16 %v7225, %v7224
    %v7250 = vpack.c.b16 %v7227, %v7226
    %v7251 = vpack.c.b16 %v7229, %v7228
    %v7252 = vpack.c.b16 %v7231, %v7230
    %v7253 = vpack.c.b16 %v7233, %v7232
    %v7254 = vpack.c.b16 %v7235, %v7234
    %v7255 = vpack.c.b16 %v7237, %v7236
    %v7256 = vpack.c.b16 %v7239, %v7238
    %v7257 = vpack.c.b16 %v7241, %v7240
    %7274 = vmatprep.subr.bf16.mxu0 0
    %7275 = vmatpush1.bf16.msra.mxu0 %v7249
    %7276 = vmatprep.subr.bf16.mxu0 0
    %7277 = vmatpush1.bf16.msra.mxu0 %v7248
    %7278 = vmatprep.subr.bf16.mxu0 0
    %7279 = vmatpush1.bf16.msra.mxu0 %v7247
    %7280 = vmatprep.subr.bf16.mxu0 0
    %7281 = vmatpush1.bf16.msra.mxu0 %v7246
    %7282 = vmatprep.subr.bf16.mxu0 0
    %7283 = vmatpush1.bf16.msra.mxu0 %v7245
    %7284 = vmatprep.subr.bf16.mxu0 0
    %7285 = vmatpush1.bf16.msra.mxu0 %v7244
    %7286 = vmatprep.subr.bf16.mxu0 0
    %7287 = vmatpush1.bf16.msra.mxu0 %v7243
    %7288 = vmatprep.subr.bf16.mxu0 0
    %7289 = vmatpush1.bf16.msra.mxu0 %v7242
    %7290 = vmatprep.subr.bf16.mxu0 0
    %7291 = vmatpush2.bf16.msra.mxu0 %v7257
    %7292 = vmatprep.subr.bf16.mxu0 0
    %7293 = vmatpush2.bf16.msra.mxu0 %v7256
    %7294 = vmatprep.subr.bf16.mxu0 0
    %7295 = vmatpush2.bf16.msra.mxu0 %v7255
    %7296 = vmatprep.subr.bf16.mxu0 0
    %7297 = vmatpush2.bf16.msra.mxu0 %v7254
    %7298 = vmatprep.subr.bf16.mxu0 0
    %7299 = vmatpush2.bf16.msra.mxu0 %v7253
    %7300 = vmatprep.subr.bf16.mxu0 0
    %7301 = vmatpush2.bf16.msra.mxu0 %v7252
    %7302 = vmatprep.subr.bf16.mxu0 0
    %7303 = vmatpush2.bf16.msra.mxu0 %v7251
    %7304 = vmatprep.subr.bf16.mxu0 0
    %7305 = vmatpush2.bf16.msra.mxu0 %v7250
    %7306 = vmatprep.mubr.bf16.mxu0 %v7138
    %7307 = vmatmul.mubr.bf16.gmra.mxu0 %v7137
    %v7308 = vpop.f32.mrf.mxu0
    %v7309 = vadd.f32 %v7176, %v7308
    %v7310 = vpop.f32.mrf.mxu0
    %v7311 = vpop.f32.mrf.mxu0
    %v7312 = vadd.f32 %v7176, %v7311
    %v7313 = vpop.f32.mrf.mxu0
    %7314 = vdwg.mxu0
    %7315 = vst [vmem:[%s11] sm:$0xff] %v7309
    %7316 = vst [vmem:[%s11 + $0x8] sm:$0xff] %v7312
    // Predicated region
    $region62: #{simple_conv_emb_net.1} parent=1 // pred_check
      _
    $region63: #{simple_conv_emb_net.1} parent=1 // pred_check_branch
      %7318 = sbr.rel (0) target = $region65
    $region64: #{simple_conv_emb_net.1} parent=1 // pred_region
      _
    $region65: #{simple_conv_emb_net.1} parent=1 // pred_fallthru
      _
    // Predicated region
    $region66: #{simple_conv_emb_net.1} parent=1 // pred_check
      _
    $region67: #{simple_conv_emb_net.1} parent=1 // pred_check_branch
      %7320 = sbr.rel (0) target = $region69
    $region68: #{simple_conv_emb_net.1} parent=1 // pred_region
      _
    $region69: #{simple_conv_emb_net.1} parent=1 // pred_fallthru
      _
    %7321 = vsyncpa [#allocation3], 1
    %7322 = vsyncpa [#allocation5], 1
    %7323 = vsyncpa [#allocation8], 1

</llo_original>
